<compile_context>
chip_gen: v5e
topology: v5e:2x2
jax: 0.10.0
libtpu: 0.0.40
codegen_flags: <defaults>
</compile_context>

<pallas_src>
import jax
import jax.numpy as jnp
from jax.experimental import pallas as pl
from jax.experimental.pallas import tpu as pltpu


# ---------------------------------------------------------------------------
# Fused forward kernel (single launch, everything in VMEM)
# ---------------------------------------------------------------------------
def _fused_forward_kernel(x_ref, wc1_ref, bc1_ref, wc2_ref, bc2_ref,
                          wc3_ref, bc3_ref,
                          wih_ref, brz_ref, whh_ref, bhn_ref,
                          w1_ref, b1_ref, w2_ref, b2_ref,
                          o_ref, pad_ref, im_ref, hc_ref, hflat_ref):
    f32 = jnp.float32
    B = x_ref.shape[0]
    H = bhn_ref.shape[1] // 2

    def sigmoid(v):
        # numerically stable, single EUP op
        return 0.5 * (jnp.tanh(0.5 * v) + 1.0)

    def pool2(y2d, Bq, Lq, C):
        # MaxPool1d(kernel=2, stride=2) as a vreg epilogue.
        r = y2d.reshape(Bq, Lq // 2, 2, C)
        return jnp.maximum(r[:, :, 0, :], r[:, :, 1, :])        # (Bq, Lq//2, C)

    # ---- conv (+bias, padding='same') + pool -------------------------------
    # Tap-grouped im2col: all K taps are staged side by side in im_ref, then a
    # SINGLE matmul with contraction depth K*Cin feeds the MXU (instead of K
    # shallow Cin-deep matmuls).  Only the halo rows of pad_ref are zeroed.
    def conv_pool(hin, w_ref, b_ref):
        Bq, Lq, Cin = hin.shape
        KC, Cout = w_ref.shape
        K = KC // Cin
        pad_l = (K - 1) // 2                  # PyTorch padding='same' (even K)
        pad_r = (K - 1) - pad_l
        Lp = Lq + K - 1
        if pad_l > 0:
            pad_ref[:, 0:pad_l, 0:Cin] = jnp.zeros((Bq, pad_l, Cin), f32)
        if pad_r > 0:
            pad_ref[:, pad_l + Lq:Lp, 0:Cin] = jnp.zeros((Bq, pad_r, Cin), f32)
        pad_ref[:, pad_l:pad_l + Lq, 0:Cin] = hin
        hp = pad_ref[:, 0:Lp, 0:Cin]                            # (Bq, Lp, Cin)
        for k in range(K):                    # static unroll: cheap masked vst
            im_ref[0:Bq * Lq, k * Cin:(k + 1) * Cin] = (
                hp[:, k:k + Lq, :].reshape(Bq * Lq, Cin))
        patches = im_ref[0:Bq * Lq, 0:KC]                       # (Bq*Lq, K*Cin)
        y = jnp.dot(patches, w_ref[...],
                    preferred_element_type=f32) + b_ref[...]    # one matmul
        return pool2(y, Bq, Lq, Cout)

    h = conv_pool(x_ref[...], wc1_ref, bc1_ref)                 # (B, L/2, 16)
    h = conv_pool(h, wc2_ref, bc2_ref)                          # (B, L/4, 16)
    h = conv_pool(h, wc3_ref, bc3_ref)                          # (B, L/8, 32)
    T = h.shape[1]
    D = h.shape[2]

    # ---- bidirectional GRU --------------------------------------------------
    # Fused input projection for BOTH directions: one (B*T, D) x (D, 6H) matmul
    # (columns = [fwd r,z,n | bwd r,z,n]); b_hr/b_hz folded into the bias.
    gx = (jnp.dot(h.reshape(B * T, D), wih_ref[...],
                  preferred_element_type=f32)
          + brz_ref[...]).reshape(B, T, 6 * H)

    whh = whh_ref[...]          # block-diagonal (2H, 6H): 1 MXU op per step
    bhn = bhn_ref[...]          # (1, 2H) = [b_hn_f | b_hn_b]
    hc_ref[...] = jnp.zeros(hc_ref.shape, f32)                  # [hf | hb]

    for s in range(T):          # fully unrolled; reversal is pure index math
        tf, tb = s, T - 1 - s
        hc = hc_ref[...]                                        # (B, 2H)
        gh = jnp.dot(hc, whh, preferred_element_type=f32)       # (B, 6H)
        gxf = gx[:, tf, 0:3 * H]          # forward gates read time tf
        gxb = gx[:, tb, 3 * H:6 * H]      # backward gates read time tb
        rf = sigmoid(gxf[:, 0:H] + gh[:, 0:H])
        zf = sigmoid(gxf[:, H:2 * H] + gh[:, H:2 * H])
        nf = jnp.tanh(gxf[:, 2 * H:3 * H]
                      + rf * (gh[:, 2 * H:3 * H] + bhn[:, 0:H]))
        rb = sigmoid(gxb[:, 0:H] + gh[:, 3 * H:4 * H])
        zb = sigmoid(gxb[:, H:2 * H] + gh[:, 4 * H:5 * H])
        nb = jnp.tanh(gxb[:, 2 * H:3 * H]
                      + rb * (gh[:, 5 * H:6 * H] + bhn[:, H:2 * H]))
        hf = (1.0 - zf) * nf + zf * hc[:, 0:H]
        hb = (1.0 - zb) * nb + zb * hc[:, H:2 * H]
        hc_ref[:, 0:H] = hf
        hc_ref[:, H:2 * H] = hb
        # Scatter this step's outputs into the flat FC1 input row (replaces
        # 2*T*B serial (1,H)x(H,F1) matmuls with cheap masked stores).
        for b in range(B):
            of = (tf * B + b) * 2 * H
            ob = (tb * B + b) * 2 * H + H
            hflat_ref[0:1, of:of + H] = hf[b:b + 1, :]
            hflat_ref[0:1, ob:ob + H] = hb[b:b + 1, :]

    # ---- FC head: Linear -> ReLU -> (Dropout = identity) -> Linear -> Sigmoid
    # TODO(synk): Dropout(0.5) is identity here (inference mode).
    h1 = jnp.maximum(jnp.dot(hflat_ref[...], w1_ref[...],
                             preferred_element_type=f32) + b1_ref[...], 0.0)
    y = sigmoid(jnp.dot(h1, w2_ref[...], preferred_element_type=f32)
                + b2_ref[...])                                  # (1, 1)
    o_ref[...] = y


# ---------------------------------------------------------------------------
# Wrapper: weight re-layout (XLA-side, negligible) + single pallas_call
# ---------------------------------------------------------------------------
def cnn_gru_forward(params, x):
    B, L = x.shape
    assert L % 8 == 0, "three stride-2 pools require L divisible by 8"
    H = params["w_hh_f"].shape[1]
    T = L // 8
    F1 = params["w_fc1"].shape[0]
    n_flat = T * B * 2 * H
    assert params["w_fc1"].shape[1] == n_flat
    f32 = jnp.float32

    # conv weight (Cout, Cin, K) -> (K*Cin, Cout), tap-major (matches im2col).
    def conv_flat(w):
        return jnp.transpose(w, (2, 1, 0)).reshape(-1, w.shape[0])

    x3 = x[:, :, None]                      # (B, L, 1); im2col happens in-kernel

    wc1 = conv_flat(params["w_c1"]); bc1 = params["b_c1"].reshape(1, -1)
    wc2 = conv_flat(params["w_c2"]); bc2 = params["b_c2"].reshape(1, -1)
    wc3 = conv_flat(params["w_c3"]); bc3 = params["b_c3"].reshape(1, -1)

    # Fused bidirectional GRU weights (PyTorch gate order r, z, n per
    # direction; columns = [fwd r,z,n | bwd r,z,n]).  b_hr/b_hz fold into the
    # input-projection bias; b_hn stays separate (it sits inside r*(...)).
    def brz(tag):
        return params[f"b_ih_{tag}"] + jnp.concatenate(
            [params[f"b_hh_{tag}"][:2 * H], jnp.zeros((H,), f32)])

    wih = jnp.concatenate([params["w_ih_f"].T, params["w_ih_b"].T], axis=1)
    brz_all = jnp.concatenate([brz("f"), brz("b")]).reshape(1, 6 * H)
    whh_bd = jnp.zeros((2 * H, 6 * H), f32)
    whh_bd = whh_bd.at[0:H, 0:3 * H].set(params["w_hh_f"].T)
    whh_bd = whh_bd.at[H:2 * H, 3 * H:6 * H].set(params["w_hh_b"].T)
    bhn = jnp.concatenate([params["b_hh_f"][2 * H:],
                           params["b_hh_b"][2 * H:]]).reshape(1, 2 * H)

    w1 = params["w_fc1"].T                  # (n_flat, F1); flat order matches
    b1 = params["b_fc1"].reshape(1, F1)     # Flatten(0,-1) of (T, B, 2H)
    w2 = params["w_fc2"].T                  # (F1, 1)
    b2 = params["b_fc2"].reshape(1, 1)

    # VMEM scratch sizing shared by all three conv layers.
    layers = [(L, 1, params["w_c1"].shape[2]),
              (L // 2, params["w_c2"].shape[1], params["w_c2"].shape[2]),
              (L // 4, params["w_c3"].shape[1], params["w_c3"].shape[2])]
    pad_rows = max(lq + k - 1 for lq, _, k in layers)
    pad_cols = max(cin for _, cin, _ in layers)
    im_rows = max(B * lq for lq, _, _ in layers)
    im_cols = max(k * cin for _, cin, k in layers)

    out = pl.pallas_call(
        _fused_forward_kernel,
        out_shape=jax.ShapeDtypeStruct((1, 1), jnp.float32),
        scratch_shapes=[
            pltpu.VMEM((B, pad_rows, pad_cols), jnp.float32),   # padded slab
            pltpu.VMEM((im_rows, im_cols), jnp.float32),        # im2col stage
            pltpu.VMEM((B, 2 * H), jnp.float32),                # GRU state
            pltpu.VMEM((1, n_flat), jnp.float32),               # FC1 input row
        ],
        # Tiny footprint here; explicit limit documents the budget headroom so
        # the same design stays within v7x's 64 MiB VMEM when scaled up.
        compiler_params=pltpu.CompilerParams(
            vmem_limit_bytes=32 * 1024 * 1024),
    )(x3, wc1, bc1, wc2, bc2, wc3, bc3,
      wih, brz_all, whh_bd, bhn, w1, b1, w2, b2)
    return out.reshape(1)


# ---------------------------------------------------------------------------
# Parameters (deterministic, PyTorch-style uniform fan-in init)
# ---------------------------------------------------------------------------
def init_params(key, n_flat):
    def u(k, shape, fan_in):
        bound = 1.0 / jnp.sqrt(jnp.float32(fan_in))
        return jax.random.uniform(k, shape, jnp.float32, -bound, bound)

    ks = jax.random.split(key, 18)
    p = {}
    # TODO(synk): reference declares Conv1d(32,16)/Conv1d(32,16)/Conv1d(16,32),
    # inconsistent with unsqueeze(1); in_channels fixed to 1 / 16 / 16.
    p["w_c1"] = u(ks[0], (16, 1, 32), 1 * 32);   p["b_c1"] = u(ks[1], (16,), 1 * 32)
    p["w_c2"] = u(ks[2], (16, 16, 32), 16 * 32); p["b_c2"] = u(ks[3], (16,), 16 * 32)
    p["w_c3"] = u(ks[4], (32, 16, 3), 16 * 3);   p["b_c3"] = u(ks[5], (32,), 16 * 3)
    H, D = 8, 32
    for i, tag in enumerate(("f", "b")):   # forward / backward GRU directions
        o = 6 + 4 * i
        p[f"w_ih_{tag}"] = u(ks[o + 0], (3 * H, D), H)
        p[f"w_hh_{tag}"] = u(ks[o + 1], (3 * H, H), H)
        p[f"b_ih_{tag}"] = u(ks[o + 2], (3 * H,), H)
        p[f"b_hh_{tag}"] = u(ks[o + 3], (3 * H,), H)
    # TODO(synk): reference uses Linear(5120, 64); scaled to the actual
    # flattened size at these self-consistent shapes.
    p["w_fc1"] = u(ks[14], (64, n_flat), n_flat); p["b_fc1"] = u(ks[15], (64,), n_flat)
    p["w_fc2"] = u(ks[16], (1, 64), 64);          p["b_fc2"] = u(ks[17], (1,), 64)
    return p


if __name__ == "__main__":
    B, L = 2, 64                  # small shapes; T = L/8 = 8 after 3 pools
    T = L // 8
    H = 8
    n_flat = T * B * 2 * H        # Flatten(0,-1) of the (T, B, 2H) GRU output

    key = jax.random.PRNGKey(0)
    kx, kp = jax.random.split(key)
    x = jax.random.normal(kx, (B, L), jnp.float32)
    params = init_params(kp, n_flat)

    y = jax.jit(cnn_gru_forward)(params, x)
    jax.block_until_ready(y)
    assert y.shape == (1,)
    assert bool(jnp.all(jnp.isfinite(y)))
    print("KERNEL_OK")
</pallas_src>

<mosaic_0001>
module attributes {stable_mosaic.version = 11 : i64} {
  func.func @_fused_forward_kernel(%arg0: memref<2x64x1xf32, #tpu.memory_space<vmem>>, %arg1: memref<32x16xf32, #tpu.memory_space<vmem>>, %arg2: memref<1x16xf32, #tpu.memory_space<vmem>>, %arg3: memref<512x16xf32, #tpu.memory_space<vmem>>, %arg4: memref<1x16xf32, #tpu.memory_space<vmem>>, %arg5: memref<48x32xf32, #tpu.memory_space<vmem>>, %arg6: memref<1x32xf32, #tpu.memory_space<vmem>>, %arg7: memref<32x48xf32, #tpu.memory_space<vmem>>, %arg8: memref<1x48xf32, #tpu.memory_space<vmem>>, %arg9: memref<16x48xf32, #tpu.memory_space<vmem>>, %arg10: memref<1x16xf32, #tpu.memory_space<vmem>>, %arg11: memref<256x64xf32, #tpu.memory_space<vmem>>, %arg12: memref<1x64xf32, #tpu.memory_space<vmem>>, %arg13: memref<64x1xf32, #tpu.memory_space<vmem>>, %arg14: memref<1x1xf32, #tpu.memory_space<vmem>>, %arg15: memref<1x1xf32, #tpu.memory_space<vmem>>, %arg16: memref<2x95x16xf32, #tpu.memory_space<vmem>>, %arg17: memref<128x512xf32, #tpu.memory_space<vmem>>, %arg18: memref<2x16xf32, #tpu.memory_space<vmem>>, %arg19: memref<1x256xf32, #tpu.memory_space<vmem>>) attributes {dimension_semantics = [], scalar_prefetch = 0 : i64, scratch_operands = 4 : i64, tpu.core_type = #tpu.core_type<tc>} {
    %c0 = arith.constant 0 : index
    %c0_0 = arith.constant 0 : index
    %c0_1 = arith.constant 0 : index
    %0 = vector.load %arg0[%c0, %c0_0, %c0_1] : memref<2x64x1xf32, #tpu.memory_space<vmem>>, vector<2x64x1xf32>
    %cst = arith.constant 0.000000e+00 : f32
    %1 = vector.broadcast %cst : f32 to vector<2x15x1xf32>
    %c0_2 = arith.constant 0 : index
    %c0_3 = arith.constant 0 : index
    %c0_4 = arith.constant 0 : index
    %2 = vector.load %arg16[%c0_2, %c0_3, %c0_4] : memref<2x95x16xf32, #tpu.memory_space<vmem>>, vector<2x15x1xf32>
    tpu.vector_store %arg16[%c0_2, %c0_3, %c0_4], %1 {strides = array<i32>} : memref<2x95x16xf32, #tpu.memory_space<vmem>>, vector<2x15x1xf32>,
    %cst_5 = arith.constant 0.000000e+00 : f32
    %3 = vector.broadcast %cst_5 : f32 to vector<2x16x1xf32>
    %c0_6 = arith.constant 0 : index
    %c79 = arith.constant 79 : index
    %c0_7 = arith.constant 0 : index
    %4 = vector.load %arg16[%c0_6, %c79, %c0_7] : memref<2x95x16xf32, #tpu.memory_space<vmem>>, vector<2x16x1xf32>
    tpu.vector_store %arg16[%c0_6, %c79, %c0_7], %3 {strides = array<i32>} : memref<2x95x16xf32, #tpu.memory_space<vmem>>, vector<2x16x1xf32>,
    %c0_8 = arith.constant 0 : index
    %c15 = arith.constant 15 : index
    %c0_9 = arith.constant 0 : index
    %5 = vector.load %arg16[%c0_8, %c15, %c0_9] : memref<2x95x16xf32, #tpu.memory_space<vmem>>, vector<2x64x1xf32>
    tpu.vector_store %arg16[%c0_8, %c15, %c0_9], %0 {strides = array<i32>} : memref<2x95x16xf32, #tpu.memory_space<vmem>>, vector<2x64x1xf32>,
    %c0_10 = arith.constant 0 : index
    %c0_11 = arith.constant 0 : index
    %c0_12 = arith.constant 0 : index
    %6 = vector.load %arg16[%c0_10, %c0_11, %c0_12] : memref<2x95x16xf32, #tpu.memory_space<vmem>>, vector<2x95x1xf32>
    %7 = vector.extract_strided_slice %6 {offsets = [0, 0, 0], sizes = [2, 64, 1], strides = [1, 1, 1]} : vector<2x95x1xf32> to vector<2x64x1xf32>
    %8 = vector.shape_cast %7 : vector<2x64x1xf32> to vector<128x1xf32>
    %c0_13 = arith.constant 0 : index
    %c0_14 = arith.constant 0 : index
    %9 = vector.load %arg17[%c0_13, %c0_14] : memref<128x512xf32, #tpu.memory_space<vmem>>, vector<128x1xf32>
    tpu.vector_store %arg17[%c0_13, %c0_14], %8 {strides = array<i32>} : memref<128x512xf32, #tpu.memory_space<vmem>>, vector<128x1xf32>,
    %10 = vector.extract_strided_slice %6 {offsets = [0, 1, 0], sizes = [2, 64, 1], strides = [1, 1, 1]} : vector<2x95x1xf32> to vector<2x64x1xf32>
    %11 = vector.shape_cast %10 : vector<2x64x1xf32> to vector<128x1xf32>
    %c0_15 = arith.constant 0 : index
    %c1 = arith.constant 1 : index
    %12 = vector.load %arg17[%c0_15, %c1] : memref<128x512xf32, #tpu.memory_space<vmem>>, vector<128x1xf32>
    tpu.vector_store %arg17[%c0_15, %c1], %11 {strides = array<i32>} : memref<128x512xf32, #tpu.memory_space<vmem>>, vector<128x1xf32>,
    %13 = vector.extract_strided_slice %6 {offsets = [0, 2, 0], sizes = [2, 64, 1], strides = [1, 1, 1]} : vector<2x95x1xf32> to vector<2x64x1xf32>
    %14 = vector.shape_cast %13 : vector<2x64x1xf32> to vector<128x1xf32>
    %c0_16 = arith.constant 0 : index
    %c2 = arith.constant 2 : index
    %15 = vector.load %arg17[%c0_16, %c2] : memref<128x512xf32, #tpu.memory_space<vmem>>, vector<128x1xf32>
    tpu.vector_store %arg17[%c0_16, %c2], %14 {strides = array<i32>} : memref<128x512xf32, #tpu.memory_space<vmem>>, vector<128x1xf32>,
    %16 = vector.extract_strided_slice %6 {offsets = [0, 3, 0], sizes = [2, 64, 1], strides = [1, 1, 1]} : vector<2x95x1xf32> to vector<2x64x1xf32>
    %17 = vector.shape_cast %16 : vector<2x64x1xf32> to vector<128x1xf32>
    %c0_17 = arith.constant 0 : index
    %c3 = arith.constant 3 : index
    %18 = vector.load %arg17[%c0_17, %c3] : memref<128x512xf32, #tpu.memory_space<vmem>>, vector<128x1xf32>
    tpu.vector_store %arg17[%c0_17, %c3], %17 {strides = array<i32>} : memref<128x512xf32, #tpu.memory_space<vmem>>, vector<128x1xf32>,
    %19 = vector.extract_strided_slice %6 {offsets = [0, 4, 0], sizes = [2, 64, 1], strides = [1, 1, 1]} : vector<2x95x1xf32> to vector<2x64x1xf32>
    %20 = vector.shape_cast %19 : vector<2x64x1xf32> to vector<128x1xf32>
    %c0_18 = arith.constant 0 : index
    %c4 = arith.constant 4 : index
    %21 = vector.load %arg17[%c0_18, %c4] : memref<128x512xf32, #tpu.memory_space<vmem>>, vector<128x1xf32>
    tpu.vector_store %arg17[%c0_18, %c4], %20 {strides = array<i32>} : memref<128x512xf32, #tpu.memory_space<vmem>>, vector<128x1xf32>,
    %22 = vector.extract_strided_slice %6 {offsets = [0, 5, 0], sizes = [2, 64, 1], strides = [1, 1, 1]} : vector<2x95x1xf32> to vector<2x64x1xf32>
    %23 = vector.shape_cast %22 : vector<2x64x1xf32> to vector<128x1xf32>
    %c0_19 = arith.constant 0 : index
    %c5 = arith.constant 5 : index
    %24 = vector.load %arg17[%c0_19, %c5] : memref<128x512xf32, #tpu.memory_space<vmem>>, vector<128x1xf32>
    tpu.vector_store %arg17[%c0_19, %c5], %23 {strides = array<i32>} : memref<128x512xf32, #tpu.memory_space<vmem>>, vector<128x1xf32>,
    %25 = vector.extract_strided_slice %6 {offsets = [0, 6, 0], sizes = [2, 64, 1], strides = [1, 1, 1]} : vector<2x95x1xf32> to vector<2x64x1xf32>
    %26 = vector.shape_cast %25 : vector<2x64x1xf32> to vector<128x1xf32>
    %c0_20 = arith.constant 0 : index
    %c6 = arith.constant 6 : index
    %27 = vector.load %arg17[%c0_20, %c6] : memref<128x512xf32, #tpu.memory_space<vmem>>, vector<128x1xf32>
    tpu.vector_store %arg17[%c0_20, %c6], %26 {strides = array<i32>} : memref<128x512xf32, #tpu.memory_space<vmem>>, vector<128x1xf32>,
    %28 = vector.extract_strided_slice %6 {offsets = [0, 7, 0], sizes = [2, 64, 1], strides = [1, 1, 1]} : vector<2x95x1xf32> to vector<2x64x1xf32>
    %29 = vector.shape_cast %28 : vector<2x64x1xf32> to vector<128x1xf32>
    %c0_21 = arith.constant 0 : index
    %c7 = arith.constant 7 : index
    %30 = vector.load %arg17[%c0_21, %c7] : memref<128x512xf32, #tpu.memory_space<vmem>>, vector<128x1xf32>
    tpu.vector_store %arg17[%c0_21, %c7], %29 {strides = array<i32>} : memref<128x512xf32, #tpu.memory_space<vmem>>, vector<128x1xf32>,
    %31 = vector.extract_strided_slice %6 {offsets = [0, 8, 0], sizes = [2, 64, 1], strides = [1, 1, 1]} : vector<2x95x1xf32> to vector<2x64x1xf32>
    %32 = vector.shape_cast %31 : vector<2x64x1xf32> to vector<128x1xf32>
    %c0_22 = arith.constant 0 : index
    %c8 = arith.constant 8 : index
    %33 = vector.load %arg17[%c0_22, %c8] : memref<128x512xf32, #tpu.memory_space<vmem>>, vector<128x1xf32>
    tpu.vector_store %arg17[%c0_22, %c8], %32 {strides = array<i32>} : memref<128x512xf32, #tpu.memory_space<vmem>>, vector<128x1xf32>,
    %34 = vector.extract_strided_slice %6 {offsets = [0, 9, 0], sizes = [2, 64, 1], strides = [1, 1, 1]} : vector<2x95x1xf32> to vector<2x64x1xf32>
    %35 = vector.shape_cast %34 : vector<2x64x1xf32> to vector<128x1xf32>
    %c0_23 = arith.constant 0 : index
    %c9 = arith.constant 9 : index
    %36 = vector.load %arg17[%c0_23, %c9] : memref<128x512xf32, #tpu.memory_space<vmem>>, vector<128x1xf32>
    tpu.vector_store %arg17[%c0_23, %c9], %35 {strides = array<i32>} : memref<128x512xf32, #tpu.memory_space<vmem>>, vector<128x1xf32>,
    %37 = vector.extract_strided_slice %6 {offsets = [0, 10, 0], sizes = [2, 64, 1], strides = [1, 1, 1]} : vector<2x95x1xf32> to vector<2x64x1xf32>
    %38 = vector.shape_cast %37 : vector<2x64x1xf32> to vector<128x1xf32>
    %c0_24 = arith.constant 0 : index
    %c10 = arith.constant 10 : index
    %39 = vector.load %arg17[%c0_24, %c10] : memref<128x512xf32, #tpu.memory_space<vmem>>, vector<128x1xf32>
    tpu.vector_store %arg17[%c0_24, %c10], %38 {strides = array<i32>} : memref<128x512xf32, #tpu.memory_space<vmem>>, vector<128x1xf32>,
    %40 = vector.extract_strided_slice %6 {offsets = [0, 11, 0], sizes = [2, 64, 1], strides = [1, 1, 1]} : vector<2x95x1xf32> to vector<2x64x1xf32>
    %41 = vector.shape_cast %40 : vector<2x64x1xf32> to vector<128x1xf32>
    %c0_25 = arith.constant 0 : index
    %c11 = arith.constant 11 : index
    %42 = vector.load %arg17[%c0_25, %c11] : memref<128x512xf32, #tpu.memory_space<vmem>>, vector<128x1xf32>
    tpu.vector_store %arg17[%c0_25, %c11], %41 {strides = array<i32>} : memref<128x512xf32, #tpu.memory_space<vmem>>, vector<128x1xf32>,
    %43 = vector.extract_strided_slice %6 {offsets = [0, 12, 0], sizes = [2, 64, 1], strides = [1, 1, 1]} : vector<2x95x1xf32> to vector<2x64x1xf32>
    %44 = vector.shape_cast %43 : vector<2x64x1xf32> to vector<128x1xf32>
    %c0_26 = arith.constant 0 : index
    %c12 = arith.constant 12 : index
    %45 = vector.load %arg17[%c0_26, %c12] : memref<128x512xf32, #tpu.memory_space<vmem>>, vector<128x1xf32>
    tpu.vector_store %arg17[%c0_26, %c12], %44 {strides = array<i32>} : memref<128x512xf32, #tpu.memory_space<vmem>>, vector<128x1xf32>,
    %46 = vector.extract_strided_slice %6 {offsets = [0, 13, 0], sizes = [2, 64, 1], strides = [1, 1, 1]} : vector<2x95x1xf32> to vector<2x64x1xf32>
    %47 = vector.shape_cast %46 : vector<2x64x1xf32> to vector<128x1xf32>
    %c0_27 = arith.constant 0 : index
    %c13 = arith.constant 13 : index
    %48 = vector.load %arg17[%c0_27, %c13] : memref<128x512xf32, #tpu.memory_space<vmem>>, vector<128x1xf32>
    tpu.vector_store %arg17[%c0_27, %c13], %47 {strides = array<i32>} : memref<128x512xf32, #tpu.memory_space<vmem>>, vector<128x1xf32>,
    %49 = vector.extract_strided_slice %6 {offsets = [0, 14, 0], sizes = [2, 64, 1], strides = [1, 1, 1]} : vector<2x95x1xf32> to vector<2x64x1xf32>
    %50 = vector.shape_cast %49 : vector<2x64x1xf32> to vector<128x1xf32>
    %c0_28 = arith.constant 0 : index
    %c14 = arith.constant 14 : index
    %51 = vector.load %arg17[%c0_28, %c14] : memref<128x512xf32, #tpu.memory_space<vmem>>, vector<128x1xf32>
    tpu.vector_store %arg17[%c0_28, %c14], %50 {strides = array<i32>} : memref<128x512xf32, #tpu.memory_space<vmem>>, vector<128x1xf32>,
    %52 = vector.extract_strided_slice %6 {offsets = [0, 15, 0], sizes = [2, 64, 1], strides = [1, 1, 1]} : vector<2x95x1xf32> to vector<2x64x1xf32>
    %53 = vector.shape_cast %52 : vector<2x64x1xf32> to vector<128x1xf32>
    %c0_29 = arith.constant 0 : index
    %c15_30 = arith.constant 15 : index
    %54 = vector.load %arg17[%c0_29, %c15_30] : memref<128x512xf32, #tpu.memory_space<vmem>>, vector<128x1xf32>
    tpu.vector_store %arg17[%c0_29, %c15_30], %53 {strides = array<i32>} : memref<128x512xf32, #tpu.memory_space<vmem>>, vector<128x1xf32>,
    %55 = vector.extract_strided_slice %6 {offsets = [0, 16, 0], sizes = [2, 64, 1], strides = [1, 1, 1]} : vector<2x95x1xf32> to vector<2x64x1xf32>
    %56 = vector.shape_cast %55 : vector<2x64x1xf32> to vector<128x1xf32>
    %c0_31 = arith.constant 0 : index
    %c16 = arith.constant 16 : index
    %57 = vector.load %arg17[%c0_31, %c16] : memref<128x512xf32, #tpu.memory_space<vmem>>, vector<128x1xf32>
    tpu.vector_store %arg17[%c0_31, %c16], %56 {strides = array<i32>} : memref<128x512xf32, #tpu.memory_space<vmem>>, vector<128x1xf32>,
    %58 = vector.extract_strided_slice %6 {offsets = [0, 17, 0], sizes = [2, 64, 1], strides = [1, 1, 1]} : vector<2x95x1xf32> to vector<2x64x1xf32>
    %59 = vector.shape_cast %58 : vector<2x64x1xf32> to vector<128x1xf32>
    %c0_32 = arith.constant 0 : index
    %c17 = arith.constant 17 : index
    %60 = vector.load %arg17[%c0_32, %c17] : memref<128x512xf32, #tpu.memory_space<vmem>>, vector<128x1xf32>
    tpu.vector_store %arg17[%c0_32, %c17], %59 {strides = array<i32>} : memref<128x512xf32, #tpu.memory_space<vmem>>, vector<128x1xf32>,
    %61 = vector.extract_strided_slice %6 {offsets = [0, 18, 0], sizes = [2, 64, 1], strides = [1, 1, 1]} : vector<2x95x1xf32> to vector<2x64x1xf32>
    %62 = vector.shape_cast %61 : vector<2x64x1xf32> to vector<128x1xf32>
    %c0_33 = arith.constant 0 : index
    %c18 = arith.constant 18 : index
    %63 = vector.load %arg17[%c0_33, %c18] : memref<128x512xf32, #tpu.memory_space<vmem>>, vector<128x1xf32>
    tpu.vector_store %arg17[%c0_33, %c18], %62 {strides = array<i32>} : memref<128x512xf32, #tpu.memory_space<vmem>>, vector<128x1xf32>,
    %64 = vector.extract_strided_slice %6 {offsets = [0, 19, 0], sizes = [2, 64, 1], strides = [1, 1, 1]} : vector<2x95x1xf32> to vector<2x64x1xf32>
    %65 = vector.shape_cast %64 : vector<2x64x1xf32> to vector<128x1xf32>
    %c0_34 = arith.constant 0 : index
    %c19 = arith.constant 19 : index
    %66 = vector.load %arg17[%c0_34, %c19] : memref<128x512xf32, #tpu.memory_space<vmem>>, vector<128x1xf32>
    tpu.vector_store %arg17[%c0_34, %c19], %65 {strides = array<i32>} : memref<128x512xf32, #tpu.memory_space<vmem>>, vector<128x1xf32>,
    %67 = vector.extract_strided_slice %6 {offsets = [0, 20, 0], sizes = [2, 64, 1], strides = [1, 1, 1]} : vector<2x95x1xf32> to vector<2x64x1xf32>
    %68 = vector.shape_cast %67 : vector<2x64x1xf32> to vector<128x1xf32>
    %c0_35 = arith.constant 0 : index
    %c20 = arith.constant 20 : index
    %69 = vector.load %arg17[%c0_35, %c20] : memref<128x512xf32, #tpu.memory_space<vmem>>, vector<128x1xf32>
    tpu.vector_store %arg17[%c0_35, %c20], %68 {strides = array<i32>} : memref<128x512xf32, #tpu.memory_space<vmem>>, vector<128x1xf32>,
    %70 = vector.extract_strided_slice %6 {offsets = [0, 21, 0], sizes = [2, 64, 1], strides = [1, 1, 1]} : vector<2x95x1xf32> to vector<2x64x1xf32>
    %71 = vector.shape_cast %70 : vector<2x64x1xf32> to vector<128x1xf32>
    %c0_36 = arith.constant 0 : index
    %c21 = arith.constant 21 : index
    %72 = vector.load %arg17[%c0_36, %c21] : memref<128x512xf32, #tpu.memory_space<vmem>>, vector<128x1xf32>
    tpu.vector_store %arg17[%c0_36, %c21], %71 {strides = array<i32>} : memref<128x512xf32, #tpu.memory_space<vmem>>, vector<128x1xf32>,
    %73 = vector.extract_strided_slice %6 {offsets = [0, 22, 0], sizes = [2, 64, 1], strides = [1, 1, 1]} : vector<2x95x1xf32> to vector<2x64x1xf32>
    %74 = vector.shape_cast %73 : vector<2x64x1xf32> to vector<128x1xf32>
    %c0_37 = arith.constant 0 : index
    %c22 = arith.constant 22 : index
    %75 = vector.load %arg17[%c0_37, %c22] : memref<128x512xf32, #tpu.memory_space<vmem>>, vector<128x1xf32>
    tpu.vector_store %arg17[%c0_37, %c22], %74 {strides = array<i32>} : memref<128x512xf32, #tpu.memory_space<vmem>>, vector<128x1xf32>,
    %76 = vector.extract_strided_slice %6 {offsets = [0, 23, 0], sizes = [2, 64, 1], strides = [1, 1, 1]} : vector<2x95x1xf32> to vector<2x64x1xf32>
    %77 = vector.shape_cast %76 : vector<2x64x1xf32> to vector<128x1xf32>
    %c0_38 = arith.constant 0 : index
    %c23 = arith.constant 23 : index
    %78 = vector.load %arg17[%c0_38, %c23] : memref<128x512xf32, #tpu.memory_space<vmem>>, vector<128x1xf32>
    tpu.vector_store %arg17[%c0_38, %c23], %77 {strides = array<i32>} : memref<128x512xf32, #tpu.memory_space<vmem>>, vector<128x1xf32>,
    %79 = vector.extract_strided_slice %6 {offsets = [0, 24, 0], sizes = [2, 64, 1], strides = [1, 1, 1]} : vector<2x95x1xf32> to vector<2x64x1xf32>
    %80 = vector.shape_cast %79 : vector<2x64x1xf32> to vector<128x1xf32>
    %c0_39 = arith.constant 0 : index
    %c24 = arith.constant 24 : index
    %81 = vector.load %arg17[%c0_39, %c24] : memref<128x512xf32, #tpu.memory_space<vmem>>, vector<128x1xf32>
    tpu.vector_store %arg17[%c0_39, %c24], %80 {strides = array<i32>} : memref<128x512xf32, #tpu.memory_space<vmem>>, vector<128x1xf32>,
    %82 = vector.extract_strided_slice %6 {offsets = [0, 25, 0], sizes = [2, 64, 1], strides = [1, 1, 1]} : vector<2x95x1xf32> to vector<2x64x1xf32>
    %83 = vector.shape_cast %82 : vector<2x64x1xf32> to vector<128x1xf32>
    %c0_40 = arith.constant 0 : index
    %c25 = arith.constant 25 : index
    %84 = vector.load %arg17[%c0_40, %c25] : memref<128x512xf32, #tpu.memory_space<vmem>>, vector<128x1xf32>
    tpu.vector_store %arg17[%c0_40, %c25], %83 {strides = array<i32>} : memref<128x512xf32, #tpu.memory_space<vmem>>, vector<128x1xf32>,
    %85 = vector.extract_strided_slice %6 {offsets = [0, 26, 0], sizes = [2, 64, 1], strides = [1, 1, 1]} : vector<2x95x1xf32> to vector<2x64x1xf32>
    %86 = vector.shape_cast %85 : vector<2x64x1xf32> to vector<128x1xf32>
    %c0_41 = arith.constant 0 : index
    %c26 = arith.constant 26 : index
    %87 = vector.load %arg17[%c0_41, %c26] : memref<128x512xf32, #tpu.memory_space<vmem>>, vector<128x1xf32>
    tpu.vector_store %arg17[%c0_41, %c26], %86 {strides = array<i32>} : memref<128x512xf32, #tpu.memory_space<vmem>>, vector<128x1xf32>,
    %88 = vector.extract_strided_slice %6 {offsets = [0, 27, 0], sizes = [2, 64, 1], strides = [1, 1, 1]} : vector<2x95x1xf32> to vector<2x64x1xf32>
    %89 = vector.shape_cast %88 : vector<2x64x1xf32> to vector<128x1xf32>
    %c0_42 = arith.constant 0 : index
    %c27 = arith.constant 27 : index
    %90 = vector.load %arg17[%c0_42, %c27] : memref<128x512xf32, #tpu.memory_space<vmem>>, vector<128x1xf32>
    tpu.vector_store %arg17[%c0_42, %c27], %89 {strides = array<i32>} : memref<128x512xf32, #tpu.memory_space<vmem>>, vector<128x1xf32>,
    %91 = vector.extract_strided_slice %6 {offsets = [0, 28, 0], sizes = [2, 64, 1], strides = [1, 1, 1]} : vector<2x95x1xf32> to vector<2x64x1xf32>
    %92 = vector.shape_cast %91 : vector<2x64x1xf32> to vector<128x1xf32>
    %c0_43 = arith.constant 0 : index
    %c28 = arith.constant 28 : index
    %93 = vector.load %arg17[%c0_43, %c28] : memref<128x512xf32, #tpu.memory_space<vmem>>, vector<128x1xf32>
    tpu.vector_store %arg17[%c0_43, %c28], %92 {strides = array<i32>} : memref<128x512xf32, #tpu.memory_space<vmem>>, vector<128x1xf32>,
    %94 = vector.extract_strided_slice %6 {offsets = [0, 29, 0], sizes = [2, 64, 1], strides = [1, 1, 1]} : vector<2x95x1xf32> to vector<2x64x1xf32>
    %95 = vector.shape_cast %94 : vector<2x64x1xf32> to vector<128x1xf32>
    %c0_44 = arith.constant 0 : index
    %c29 = arith.constant 29 : index
    %96 = vector.load %arg17[%c0_44, %c29] : memref<128x512xf32, #tpu.memory_space<vmem>>, vector<128x1xf32>
    tpu.vector_store %arg17[%c0_44, %c29], %95 {strides = array<i32>} : memref<128x512xf32, #tpu.memory_space<vmem>>, vector<128x1xf32>,
    %97 = vector.extract_strided_slice %6 {offsets = [0, 30, 0], sizes = [2, 64, 1], strides = [1, 1, 1]} : vector<2x95x1xf32> to vector<2x64x1xf32>
    %98 = vector.shape_cast %97 : vector<2x64x1xf32> to vector<128x1xf32>
    %c0_45 = arith.constant 0 : index
    %c30 = arith.constant 30 : index
    %99 = vector.load %arg17[%c0_45, %c30] : memref<128x512xf32, #tpu.memory_space<vmem>>, vector<128x1xf32>
    tpu.vector_store %arg17[%c0_45, %c30], %98 {strides = array<i32>} : memref<128x512xf32, #tpu.memory_space<vmem>>, vector<128x1xf32>,
    %100 = vector.extract_strided_slice %6 {offsets = [0, 31, 0], sizes = [2, 64, 1], strides = [1, 1, 1]} : vector<2x95x1xf32> to vector<2x64x1xf32>
    %101 = vector.shape_cast %100 : vector<2x64x1xf32> to vector<128x1xf32>
    %c0_46 = arith.constant 0 : index
    %c31 = arith.constant 31 : index
    %102 = vector.load %arg17[%c0_46, %c31] : memref<128x512xf32, #tpu.memory_space<vmem>>, vector<128x1xf32>
    tpu.vector_store %arg17[%c0_46, %c31], %101 {strides = array<i32>} : memref<128x512xf32, #tpu.memory_space<vmem>>, vector<128x1xf32>,
    %c0_47 = arith.constant 0 : index
    %c0_48 = arith.constant 0 : index
    %103 = vector.load %arg17[%c0_47, %c0_48] : memref<128x512xf32, #tpu.memory_space<vmem>>, vector<128x32xf32>
    %c0_49 = arith.constant 0 : index
    %c0_50 = arith.constant 0 : index
    %104 = vector.load %arg1[%c0_49, %c0_50] : memref<32x16xf32, #tpu.memory_space<vmem>>, vector<32x16xf32>
    %cst_51 = arith.constant dense<0.000000e+00> : vector<128x16xf32>
    %105 = tpu.matmul %103, %104, %cst_51 {dimension_numbers = #tpu.dot_dimension_numbers<[1], [0], [0], [1], [0, 0, 1, 1], [], []>} : vector<128x32xf32>, vector<32x16xf32>, vector<128x16xf32> -> vector<128x16xf32>
    %c0_52 = arith.constant 0 : index
    %c0_53 = arith.constant 0 : index
    %106 = vector.load %arg2[%c0_52, %c0_53] : memref<1x16xf32, #tpu.memory_space<vmem>>, vector<1x16xf32>
    %107 = vector.broadcast %106 : vector<1x16xf32> to vector<128x16xf32>
    %108 = arith.addf %105, %107 : vector<128x16xf32>
    %109 = vector.shape_cast %108 : vector<128x16xf32> to vector<2x32x2x16xf32>
    %110 = vector.extract_strided_slice %109 {offsets = [0, 0, 0, 0], sizes = [2, 32, 1, 16], strides = [1, 1, 1, 1]} : vector<2x32x2x16xf32> to vector<2x32x1x16xf32>
    %111 = vector.shape_cast %110 : vector<2x32x1x16xf32> to vector<2x32x16xf32>
    %112 = vector.extract_strided_slice %109 {offsets = [0, 0, 1, 0], sizes = [2, 32, 1, 16], strides = [1, 1, 1, 1]} : vector<2x32x2x16xf32> to vector<2x32x1x16xf32>
    %113 = vector.shape_cast %112 : vector<2x32x1x16xf32> to vector<2x32x16xf32>
    %114 = arith.maximumf %111, %113 : vector<2x32x16xf32>
    %cst_54 = arith.constant 0.000000e+00 : f32
    %115 = vector.broadcast %cst_54 : f32 to vector<2x15x16xf32>
    %c0_55 = arith.constant 0 : index
    %c0_56 = arith.constant 0 : index
    %c0_57 = arith.constant 0 : index
    %116 = vector.load %arg16[%c0_55, %c0_56, %c0_57] : memref<2x95x16xf32, #tpu.memory_space<vmem>>, vector<2x15x16xf32>
    tpu.vector_store %arg16[%c0_55, %c0_56, %c0_57], %115 {strides = array<i32>} : memref<2x95x16xf32, #tpu.memory_space<vmem>>, vector<2x15x16xf32>,
    %cst_58 = arith.constant 0.000000e+00 : f32
    %117 = vector.broadcast %cst_58 : f32 to vector<2x16x16xf32>
    %c0_59 = arith.constant 0 : index
    %c47 = arith.constant 47 : index
    %c0_60 = arith.constant 0 : index
    %118 = vector.load %arg16[%c0_59, %c47, %c0_60] : memref<2x95x16xf32, #tpu.memory_space<vmem>>, vector<2x16x16xf32>
    tpu.vector_store %arg16[%c0_59, %c47, %c0_60], %117 {strides = array<i32>} : memref<2x95x16xf32, #tpu.memory_space<vmem>>, vector<2x16x16xf32>,
    %c0_61 = arith.constant 0 : index
    %c15_62 = arith.constant 15 : index
    %c0_63 = arith.constant 0 : index
    %119 = vector.load %arg16[%c0_61, %c15_62, %c0_63] : memref<2x95x16xf32, #tpu.memory_space<vmem>>, vector<2x32x16xf32>
    tpu.vector_store %arg16[%c0_61, %c15_62, %c0_63], %114 {strides = array<i32>} : memref<2x95x16xf32, #tpu.memory_space<vmem>>, vector<2x32x16xf32>,
    %c0_64 = arith.constant 0 : index
    %c0_65 = arith.constant 0 : index
    %c0_66 = arith.constant 0 : index
    %120 = vector.load %arg16[%c0_64, %c0_65, %c0_66] : memref<2x95x16xf32, #tpu.memory_space<vmem>>, vector<2x63x16xf32>
    %121 = vector.extract_strided_slice %120 {offsets = [0, 0, 0], sizes = [2, 32, 16], strides = [1, 1, 1]} : vector<2x63x16xf32> to vector<2x32x16xf32>
    %122 = vector.shape_cast %121 : vector<2x32x16xf32> to vector<64x16xf32>
    %c0_67 = arith.constant 0 : index
    %c0_68 = arith.constant 0 : index
    %123 = vector.load %arg17[%c0_67, %c0_68] : memref<128x512xf32, #tpu.memory_space<vmem>>, vector<64x16xf32>
    tpu.vector_store %arg17[%c0_67, %c0_68], %122 {strides = array<i32>} : memref<128x512xf32, #tpu.memory_space<vmem>>, vector<64x16xf32>,
    %124 = vector.extract_strided_slice %120 {offsets = [0, 1, 0], sizes = [2, 32, 16], strides = [1, 1, 1]} : vector<2x63x16xf32> to vector<2x32x16xf32>
    %125 = vector.shape_cast %124 : vector<2x32x16xf32> to vector<64x16xf32>
    %c0_69 = arith.constant 0 : index
    %c16_70 = arith.constant 16 : index
    %126 = vector.load %arg17[%c0_69, %c16_70] : memref<128x512xf32, #tpu.memory_space<vmem>>, vector<64x16xf32>
    tpu.vector_store %arg17[%c0_69, %c16_70], %125 {strides = array<i32>} : memref<128x512xf32, #tpu.memory_space<vmem>>, vector<64x16xf32>,
    %127 = vector.extract_strided_slice %120 {offsets = [0, 2, 0], sizes = [2, 32, 16], strides = [1, 1, 1]} : vector<2x63x16xf32> to vector<2x32x16xf32>
    %128 = vector.shape_cast %127 : vector<2x32x16xf32> to vector<64x16xf32>
    %c0_71 = arith.constant 0 : index
    %c32 = arith.constant 32 : index
    %129 = vector.load %arg17[%c0_71, %c32] : memref<128x512xf32, #tpu.memory_space<vmem>>, vector<64x16xf32>
    tpu.vector_store %arg17[%c0_71, %c32], %128 {strides = array<i32>} : memref<128x512xf32, #tpu.memory_space<vmem>>, vector<64x16xf32>,
    %130 = vector.extract_strided_slice %120 {offsets = [0, 3, 0], sizes = [2, 32, 16], strides = [1, 1, 1]} : vector<2x63x16xf32> to vector<2x32x16xf32>
    %131 = vector.shape_cast %130 : vector<2x32x16xf32> to vector<64x16xf32>
    %c0_72 = arith.constant 0 : index
    %c48 = arith.constant 48 : index
    %132 = vector.load %arg17[%c0_72, %c48] : memref<128x512xf32, #tpu.memory_space<vmem>>, vector<64x16xf32>
    tpu.vector_store %arg17[%c0_72, %c48], %131 {strides = array<i32>} : memref<128x512xf32, #tpu.memory_space<vmem>>, vector<64x16xf32>,
    %133 = vector.extract_strided_slice %120 {offsets = [0, 4, 0], sizes = [2, 32, 16], strides = [1, 1, 1]} : vector<2x63x16xf32> to vector<2x32x16xf32>
    %134 = vector.shape_cast %133 : vector<2x32x16xf32> to vector<64x16xf32>
    %c0_73 = arith.constant 0 : index
    %c64 = arith.constant 64 : index
    %135 = vector.load %arg17[%c0_73, %c64] : memref<128x512xf32, #tpu.memory_space<vmem>>, vector<64x16xf32>
    tpu.vector_store %arg17[%c0_73, %c64], %134 {strides = array<i32>} : memref<128x512xf32, #tpu.memory_space<vmem>>, vector<64x16xf32>,
    %136 = vector.extract_strided_slice %120 {offsets = [0, 5, 0], sizes = [2, 32, 16], strides = [1, 1, 1]} : vector<2x63x16xf32> to vector<2x32x16xf32>
    %137 = vector.shape_cast %136 : vector<2x32x16xf32> to vector<64x16xf32>
    %c0_74 = arith.constant 0 : index
    %c80 = arith.constant 80 : index
    %138 = vector.load %arg17[%c0_74, %c80] : memref<128x512xf32, #tpu.memory_space<vmem>>, vector<64x16xf32>
    tpu.vector_store %arg17[%c0_74, %c80], %137 {strides = array<i32>} : memref<128x512xf32, #tpu.memory_space<vmem>>, vector<64x16xf32>,
    %139 = vector.extract_strided_slice %120 {offsets = [0, 6, 0], sizes = [2, 32, 16], strides = [1, 1, 1]} : vector<2x63x16xf32> to vector<2x32x16xf32>
    %140 = vector.shape_cast %139 : vector<2x32x16xf32> to vector<64x16xf32>
    %c0_75 = arith.constant 0 : index
    %c96 = arith.constant 96 : index
    %141 = vector.load %arg17[%c0_75, %c96] : memref<128x512xf32, #tpu.memory_space<vmem>>, vector<64x16xf32>
    tpu.vector_store %arg17[%c0_75, %c96], %140 {strides = array<i32>} : memref<128x512xf32, #tpu.memory_space<vmem>>, vector<64x16xf32>,
    %142 = vector.extract_strided_slice %120 {offsets = [0, 7, 0], sizes = [2, 32, 16], strides = [1, 1, 1]} : vector<2x63x16xf32> to vector<2x32x16xf32>
    %143 = vector.shape_cast %142 : vector<2x32x16xf32> to vector<64x16xf32>
    %c0_76 = arith.constant 0 : index
    %c112 = arith.constant 112 : index
    %144 = vector.load %arg17[%c0_76, %c112] : memref<128x512xf32, #tpu.memory_space<vmem>>, vector<64x16xf32>
    tpu.vector_store %arg17[%c0_76, %c112], %143 {strides = array<i32>} : memref<128x512xf32, #tpu.memory_space<vmem>>, vector<64x16xf32>,
    %145 = vector.extract_strided_slice %120 {offsets = [0, 8, 0], sizes = [2, 32, 16], strides = [1, 1, 1]} : vector<2x63x16xf32> to vector<2x32x16xf32>
    %146 = vector.shape_cast %145 : vector<2x32x16xf32> to vector<64x16xf32>
    %c0_77 = arith.constant 0 : index
    %c128 = arith.constant 128 : index
    %147 = vector.load %arg17[%c0_77, %c128] : memref<128x512xf32, #tpu.memory_space<vmem>>, vector<64x16xf32>
    tpu.vector_store %arg17[%c0_77, %c128], %146 {strides = array<i32>} : memref<128x512xf32, #tpu.memory_space<vmem>>, vector<64x16xf32>,
    %148 = vector.extract_strided_slice %120 {offsets = [0, 9, 0], sizes = [2, 32, 16], strides = [1, 1, 1]} : vector<2x63x16xf32> to vector<2x32x16xf32>
    %149 = vector.shape_cast %148 : vector<2x32x16xf32> to vector<64x16xf32>
    %c0_78 = arith.constant 0 : index
    %c144 = arith.constant 144 : index
    %150 = vector.load %arg17[%c0_78, %c144] : memref<128x512xf32, #tpu.memory_space<vmem>>, vector<64x16xf32>
    tpu.vector_store %arg17[%c0_78, %c144], %149 {strides = array<i32>} : memref<128x512xf32, #tpu.memory_space<vmem>>, vector<64x16xf32>,
    %151 = vector.extract_strided_slice %120 {offsets = [0, 10, 0], sizes = [2, 32, 16], strides = [1, 1, 1]} : vector<2x63x16xf32> to vector<2x32x16xf32>
    %152 = vector.shape_cast %151 : vector<2x32x16xf32> to vector<64x16xf32>
    %c0_79 = arith.constant 0 : index
    %c160 = arith.constant 160 : index
    %153 = vector.load %arg17[%c0_79, %c160] : memref<128x512xf32, #tpu.memory_space<vmem>>, vector<64x16xf32>
    tpu.vector_store %arg17[%c0_79, %c160], %152 {strides = array<i32>} : memref<128x512xf32, #tpu.memory_space<vmem>>, vector<64x16xf32>,
    %154 = vector.extract_strided_slice %120 {offsets = [0, 11, 0], sizes = [2, 32, 16], strides = [1, 1, 1]} : vector<2x63x16xf32> to vector<2x32x16xf32>
    %155 = vector.shape_cast %154 : vector<2x32x16xf32> to vector<64x16xf32>
    %c0_80 = arith.constant 0 : index
    %c176 = arith.constant 176 : index
    %156 = vector.load %arg17[%c0_80, %c176] : memref<128x512xf32, #tpu.memory_space<vmem>>, vector<64x16xf32>
    tpu.vector_store %arg17[%c0_80, %c176], %155 {strides = array<i32>} : memref<128x512xf32, #tpu.memory_space<vmem>>, vector<64x16xf32>,
    %157 = vector.extract_strided_slice %120 {offsets = [0, 12, 0], sizes = [2, 32, 16], strides = [1, 1, 1]} : vector<2x63x16xf32> to vector<2x32x16xf32>
    %158 = vector.shape_cast %157 : vector<2x32x16xf32> to vector<64x16xf32>
    %c0_81 = arith.constant 0 : index
    %c192 = arith.constant 192 : index
    %159 = vector.load %arg17[%c0_81, %c192] : memref<128x512xf32, #tpu.memory_space<vmem>>, vector<64x16xf32>
    tpu.vector_store %arg17[%c0_81, %c192], %158 {strides = array<i32>} : memref<128x512xf32, #tpu.memory_space<vmem>>, vector<64x16xf32>,
    %160 = vector.extract_strided_slice %120 {offsets = [0, 13, 0], sizes = [2, 32, 16], strides = [1, 1, 1]} : vector<2x63x16xf32> to vector<2x32x16xf32>
    %161 = vector.shape_cast %160 : vector<2x32x16xf32> to vector<64x16xf32>
    %c0_82 = arith.constant 0 : index
    %c208 = arith.constant 208 : index
    %162 = vector.load %arg17[%c0_82, %c208] : memref<128x512xf32, #tpu.memory_space<vmem>>, vector<64x16xf32>
    tpu.vector_store %arg17[%c0_82, %c208], %161 {strides = array<i32>} : memref<128x512xf32, #tpu.memory_space<vmem>>, vector<64x16xf32>,
    %163 = vector.extract_strided_slice %120 {offsets = [0, 14, 0], sizes = [2, 32, 16], strides = [1, 1, 1]} : vector<2x63x16xf32> to vector<2x32x16xf32>
    %164 = vector.shape_cast %163 : vector<2x32x16xf32> to vector<64x16xf32>
    %c0_83 = arith.constant 0 : index
    %c224 = arith.constant 224 : index
    %165 = vector.load %arg17[%c0_83, %c224] : memref<128x512xf32, #tpu.memory_space<vmem>>, vector<64x16xf32>
    tpu.vector_store %arg17[%c0_83, %c224], %164 {strides = array<i32>} : memref<128x512xf32, #tpu.memory_space<vmem>>, vector<64x16xf32>,
    %166 = vector.extract_strided_slice %120 {offsets = [0, 15, 0], sizes = [2, 32, 16], strides = [1, 1, 1]} : vector<2x63x16xf32> to vector<2x32x16xf32>
    %167 = vector.shape_cast %166 : vector<2x32x16xf32> to vector<64x16xf32>
    %c0_84 = arith.constant 0 : index
    %c240 = arith.constant 240 : index
    %168 = vector.load %arg17[%c0_84, %c240] : memref<128x512xf32, #tpu.memory_space<vmem>>, vector<64x16xf32>
    tpu.vector_store %arg17[%c0_84, %c240], %167 {strides = array<i32>} : memref<128x512xf32, #tpu.memory_space<vmem>>, vector<64x16xf32>,
    %169 = vector.extract_strided_slice %120 {offsets = [0, 16, 0], sizes = [2, 32, 16], strides = [1, 1, 1]} : vector<2x63x16xf32> to vector<2x32x16xf32>
    %170 = vector.shape_cast %169 : vector<2x32x16xf32> to vector<64x16xf32>
    %c0_85 = arith.constant 0 : index
    %c256 = arith.constant 256 : index
    %171 = vector.load %arg17[%c0_85, %c256] : memref<128x512xf32, #tpu.memory_space<vmem>>, vector<64x16xf32>
    tpu.vector_store %arg17[%c0_85, %c256], %170 {strides = array<i32>} : memref<128x512xf32, #tpu.memory_space<vmem>>, vector<64x16xf32>,
    %172 = vector.extract_strided_slice %120 {offsets = [0, 17, 0], sizes = [2, 32, 16], strides = [1, 1, 1]} : vector<2x63x16xf32> to vector<2x32x16xf32>
    %173 = vector.shape_cast %172 : vector<2x32x16xf32> to vector<64x16xf32>
    %c0_86 = arith.constant 0 : index
    %c272 = arith.constant 272 : index
    %174 = vector.load %arg17[%c0_86, %c272] : memref<128x512xf32, #tpu.memory_space<vmem>>, vector<64x16xf32>
    tpu.vector_store %arg17[%c0_86, %c272], %173 {strides = array<i32>} : memref<128x512xf32, #tpu.memory_space<vmem>>, vector<64x16xf32>,
    %175 = vector.extract_strided_slice %120 {offsets = [0, 18, 0], sizes = [2, 32, 16], strides = [1, 1, 1]} : vector<2x63x16xf32> to vector<2x32x16xf32>
    %176 = vector.shape_cast %175 : vector<2x32x16xf32> to vector<64x16xf32>
    %c0_87 = arith.constant 0 : index
    %c288 = arith.constant 288 : index
    %177 = vector.load %arg17[%c0_87, %c288] : memref<128x512xf32, #tpu.memory_space<vmem>>, vector<64x16xf32>
    tpu.vector_store %arg17[%c0_87, %c288], %176 {strides = array<i32>} : memref<128x512xf32, #tpu.memory_space<vmem>>, vector<64x16xf32>,
    %178 = vector.extract_strided_slice %120 {offsets = [0, 19, 0], sizes = [2, 32, 16], strides = [1, 1, 1]} : vector<2x63x16xf32> to vector<2x32x16xf32>
    %179 = vector.shape_cast %178 : vector<2x32x16xf32> to vector<64x16xf32>
    %c0_88 = arith.constant 0 : index
    %c304 = arith.constant 304 : index
    %180 = vector.load %arg17[%c0_88, %c304] : memref<128x512xf32, #tpu.memory_space<vmem>>, vector<64x16xf32>
    tpu.vector_store %arg17[%c0_88, %c304], %179 {strides = array<i32>} : memref<128x512xf32, #tpu.memory_space<vmem>>, vector<64x16xf32>,
    %181 = vector.extract_strided_slice %120 {offsets = [0, 20, 0], sizes = [2, 32, 16], strides = [1, 1, 1]} : vector<2x63x16xf32> to vector<2x32x16xf32>
    %182 = vector.shape_cast %181 : vector<2x32x16xf32> to vector<64x16xf32>
    %c0_89 = arith.constant 0 : index
    %c320 = arith.constant 320 : index
    %183 = vector.load %arg17[%c0_89, %c320] : memref<128x512xf32, #tpu.memory_space<vmem>>, vector<64x16xf32>
    tpu.vector_store %arg17[%c0_89, %c320], %182 {strides = array<i32>} : memref<128x512xf32, #tpu.memory_space<vmem>>, vector<64x16xf32>,
    %184 = vector.extract_strided_slice %120 {offsets = [0, 21, 0], sizes = [2, 32, 16], strides = [1, 1, 1]} : vector<2x63x16xf32> to vector<2x32x16xf32>
    %185 = vector.shape_cast %184 : vector<2x32x16xf32> to vector<64x16xf32>
    %c0_90 = arith.constant 0 : index
    %c336 = arith.constant 336 : index
    %186 = vector.load %arg17[%c0_90, %c336] : memref<128x512xf32, #tpu.memory_space<vmem>>, vector<64x16xf32>
    tpu.vector_store %arg17[%c0_90, %c336], %185 {strides = array<i32>} : memref<128x512xf32, #tpu.memory_space<vmem>>, vector<64x16xf32>,
    %187 = vector.extract_strided_slice %120 {offsets = [0, 22, 0], sizes = [2, 32, 16], strides = [1, 1, 1]} : vector<2x63x16xf32> to vector<2x32x16xf32>
    %188 = vector.shape_cast %187 : vector<2x32x16xf32> to vector<64x16xf32>
    %c0_91 = arith.constant 0 : index
    %c352 = arith.constant 352 : index
    %189 = vector.load %arg17[%c0_91, %c352] : memref<128x512xf32, #tpu.memory_space<vmem>>, vector<64x16xf32>
    tpu.vector_store %arg17[%c0_91, %c352], %188 {strides = array<i32>} : memref<128x512xf32, #tpu.memory_space<vmem>>, vector<64x16xf32>,
    %190 = vector.extract_strided_slice %120 {offsets = [0, 23, 0], sizes = [2, 32, 16], strides = [1, 1, 1]} : vector<2x63x16xf32> to vector<2x32x16xf32>
    %191 = vector.shape_cast %190 : vector<2x32x16xf32> to vector<64x16xf32>
    %c0_92 = arith.constant 0 : index
    %c368 = arith.constant 368 : index
    %192 = vector.load %arg17[%c0_92, %c368] : memref<128x512xf32, #tpu.memory_space<vmem>>, vector<64x16xf32>
    tpu.vector_store %arg17[%c0_92, %c368], %191 {strides = array<i32>} : memref<128x512xf32, #tpu.memory_space<vmem>>, vector<64x16xf32>,
    %193 = vector.extract_strided_slice %120 {offsets = [0, 24, 0], sizes = [2, 32, 16], strides = [1, 1, 1]} : vector<2x63x16xf32> to vector<2x32x16xf32>
    %194 = vector.shape_cast %193 : vector<2x32x16xf32> to vector<64x16xf32>
    %c0_93 = arith.constant 0 : index
    %c384 = arith.constant 384 : index
    %195 = vector.load %arg17[%c0_93, %c384] : memref<128x512xf32, #tpu.memory_space<vmem>>, vector<64x16xf32>
    tpu.vector_store %arg17[%c0_93, %c384], %194 {strides = array<i32>} : memref<128x512xf32, #tpu.memory_space<vmem>>, vector<64x16xf32>,
    %196 = vector.extract_strided_slice %120 {offsets = [0, 25, 0], sizes = [2, 32, 16], strides = [1, 1, 1]} : vector<2x63x16xf32> to vector<2x32x16xf32>
    %197 = vector.shape_cast %196 : vector<2x32x16xf32> to vector<64x16xf32>
    %c0_94 = arith.constant 0 : index
    %c400 = arith.constant 400 : index
    %198 = vector.load %arg17[%c0_94, %c400] : memref<128x512xf32, #tpu.memory_space<vmem>>, vector<64x16xf32>
    tpu.vector_store %arg17[%c0_94, %c400], %197 {strides = array<i32>} : memref<128x512xf32, #tpu.memory_space<vmem>>, vector<64x16xf32>,
    %199 = vector.extract_strided_slice %120 {offsets = [0, 26, 0], sizes = [2, 32, 16], strides = [1, 1, 1]} : vector<2x63x16xf32> to vector<2x32x16xf32>
    %200 = vector.shape_cast %199 : vector<2x32x16xf32> to vector<64x16xf32>
    %c0_95 = arith.constant 0 : index
    %c416 = arith.constant 416 : index
    %201 = vector.load %arg17[%c0_95, %c416] : memref<128x512xf32, #tpu.memory_space<vmem>>, vector<64x16xf32>
    tpu.vector_store %arg17[%c0_95, %c416], %200 {strides = array<i32>} : memref<128x512xf32, #tpu.memory_space<vmem>>, vector<64x16xf32>,
    %202 = vector.extract_strided_slice %120 {offsets = [0, 27, 0], sizes = [2, 32, 16], strides = [1, 1, 1]} : vector<2x63x16xf32> to vector<2x32x16xf32>
    %203 = vector.shape_cast %202 : vector<2x32x16xf32> to vector<64x16xf32>
    %c0_96 = arith.constant 0 : index
    %c432 = arith.constant 432 : index
    %204 = vector.load %arg17[%c0_96, %c432] : memref<128x512xf32, #tpu.memory_space<vmem>>, vector<64x16xf32>
    tpu.vector_store %arg17[%c0_96, %c432], %203 {strides = array<i32>} : memref<128x512xf32, #tpu.memory_space<vmem>>, vector<64x16xf32>,
    %205 = vector.extract_strided_slice %120 {offsets = [0, 28, 0], sizes = [2, 32, 16], strides = [1, 1, 1]} : vector<2x63x16xf32> to vector<2x32x16xf32>
    %206 = vector.shape_cast %205 : vector<2x32x16xf32> to vector<64x16xf32>
    %c0_97 = arith.constant 0 : index
    %c448 = arith.constant 448 : index
    %207 = vector.load %arg17[%c0_97, %c448] : memref<128x512xf32, #tpu.memory_space<vmem>>, vector<64x16xf32>
    tpu.vector_store %arg17[%c0_97, %c448], %206 {strides = array<i32>} : memref<128x512xf32, #tpu.memory_space<vmem>>, vector<64x16xf32>,
    %208 = vector.extract_strided_slice %120 {offsets = [0, 29, 0], sizes = [2, 32, 16], strides = [1, 1, 1]} : vector<2x63x16xf32> to vector<2x32x16xf32>
    %209 = vector.shape_cast %208 : vector<2x32x16xf32> to vector<64x16xf32>
    %c0_98 = arith.constant 0 : index
    %c464 = arith.constant 464 : index
    %210 = vector.load %arg17[%c0_98, %c464] : memref<128x512xf32, #tpu.memory_space<vmem>>, vector<64x16xf32>
    tpu.vector_store %arg17[%c0_98, %c464], %209 {strides = array<i32>} : memref<128x512xf32, #tpu.memory_space<vmem>>, vector<64x16xf32>,
    %211 = vector.extract_strided_slice %120 {offsets = [0, 30, 0], sizes = [2, 32, 16], strides = [1, 1, 1]} : vector<2x63x16xf32> to vector<2x32x16xf32>
    %212 = vector.shape_cast %211 : vector<2x32x16xf32> to vector<64x16xf32>
    %c0_99 = arith.constant 0 : index
    %c480 = arith.constant 480 : index
    %213 = vector.load %arg17[%c0_99, %c480] : memref<128x512xf32, #tpu.memory_space<vmem>>, vector<64x16xf32>
    tpu.vector_store %arg17[%c0_99, %c480], %212 {strides = array<i32>} : memref<128x512xf32, #tpu.memory_space<vmem>>, vector<64x16xf32>,
    %214 = vector.extract_strided_slice %120 {offsets = [0, 31, 0], sizes = [2, 32, 16], strides = [1, 1, 1]} : vector<2x63x16xf32> to vector<2x32x16xf32>
    %215 = vector.shape_cast %214 : vector<2x32x16xf32> to vector<64x16xf32>
    %c0_100 = arith.constant 0 : index
    %c496 = arith.constant 496 : index
    %216 = vector.load %arg17[%c0_100, %c496] : memref<128x512xf32, #tpu.memory_space<vmem>>, vector<64x16xf32>
    tpu.vector_store %arg17[%c0_100, %c496], %215 {strides = array<i32>} : memref<128x512xf32, #tpu.memory_space<vmem>>, vector<64x16xf32>,
    %c0_101 = arith.constant 0 : index
    %c0_102 = arith.constant 0 : index
    %217 = vector.load %arg17[%c0_101, %c0_102] : memref<128x512xf32, #tpu.memory_space<vmem>>, vector<64x512xf32>
    %c0_103 = arith.constant 0 : index
    %c0_104 = arith.constant 0 : index
    %218 = vector.load %arg3[%c0_103, %c0_104] : memref<512x16xf32, #tpu.memory_space<vmem>>, vector<512x16xf32>
    %cst_105 = arith.constant dense<0.000000e+00> : vector<64x16xf32>
    %219 = tpu.matmul %217, %218, %cst_105 {dimension_numbers = #tpu.dot_dimension_numbers<[1], [0], [0], [1], [0, 0, 1, 1], [], []>} : vector<64x512xf32>, vector<512x16xf32>, vector<64x16xf32> -> vector<64x16xf32>
    %c0_106 = arith.constant 0 : index
    %c0_107 = arith.constant 0 : index
    %220 = vector.load %arg4[%c0_106, %c0_107] : memref<1x16xf32, #tpu.memory_space<vmem>>, vector<1x16xf32>
    %221 = vector.broadcast %220 : vector<1x16xf32> to vector<64x16xf32>
    %222 = arith.addf %219, %221 : vector<64x16xf32>
    %223 = vector.shape_cast %222 : vector<64x16xf32> to vector<2x16x2x16xf32>
    %224 = vector.extract_strided_slice %223 {offsets = [0, 0, 0, 0], sizes = [2, 16, 1, 16], strides = [1, 1, 1, 1]} : vector<2x16x2x16xf32> to vector<2x16x1x16xf32>
    %225 = vector.shape_cast %224 : vector<2x16x1x16xf32> to vector<2x16x16xf32>
    %226 = vector.extract_strided_slice %223 {offsets = [0, 0, 1, 0], sizes = [2, 16, 1, 16], strides = [1, 1, 1, 1]} : vector<2x16x2x16xf32> to vector<2x16x1x16xf32>
    %227 = vector.shape_cast %226 : vector<2x16x1x16xf32> to vector<2x16x16xf32>
    %228 = arith.maximumf %225, %227 : vector<2x16x16xf32>
    %cst_108 = arith.constant 0.000000e+00 : f32
    %229 = vector.broadcast %cst_108 : f32 to vector<2x1x16xf32>
    %c0_109 = arith.constant 0 : index
    %c0_110 = arith.constant 0 : index
    %c0_111 = arith.constant 0 : index
    %230 = vector.load %arg16[%c0_109, %c0_110, %c0_111] : memref<2x95x16xf32, #tpu.memory_space<vmem>>, vector<2x1x16xf32>
    tpu.vector_store %arg16[%c0_109, %c0_110, %c0_111], %229 {strides = array<i32>} : memref<2x95x16xf32, #tpu.memory_space<vmem>>, vector<2x1x16xf32>,
    %cst_112 = arith.constant 0.000000e+00 : f32
    %231 = vector.broadcast %cst_112 : f32 to vector<2x1x16xf32>
    %c0_113 = arith.constant 0 : index
    %c17_114 = arith.constant 17 : index
    %c0_115 = arith.constant 0 : index
    %232 = vector.load %arg16[%c0_113, %c17_114, %c0_115] : memref<2x95x16xf32, #tpu.memory_space<vmem>>, vector<2x1x16xf32>
    tpu.vector_store %arg16[%c0_113, %c17_114, %c0_115], %231 {strides = array<i32>} : memref<2x95x16xf32, #tpu.memory_space<vmem>>, vector<2x1x16xf32>,
    %c0_116 = arith.constant 0 : index
    %c1_117 = arith.constant 1 : index
    %c0_118 = arith.constant 0 : index
    %233 = vector.load %arg16[%c0_116, %c1_117, %c0_118] : memref<2x95x16xf32, #tpu.memory_space<vmem>>, vector<2x16x16xf32>
    tpu.vector_store %arg16[%c0_116, %c1_117, %c0_118], %228 {strides = array<i32>} : memref<2x95x16xf32, #tpu.memory_space<vmem>>, vector<2x16x16xf32>,
    %c0_119 = arith.constant 0 : index
    %c0_120 = arith.constant 0 : index
    %c0_121 = arith.constant 0 : index
    %234 = vector.load %arg16[%c0_119, %c0_120, %c0_121] : memref<2x95x16xf32, #tpu.memory_space<vmem>>, vector<2x18x16xf32>
    %235 = vector.extract_strided_slice %234 {offsets = [0, 0, 0], sizes = [2, 16, 16], strides = [1, 1, 1]} : vector<2x18x16xf32> to vector<2x16x16xf32>
    %236 = vector.shape_cast %235 : vector<2x16x16xf32> to vector<32x16xf32>
    %c0_122 = arith.constant 0 : index
    %c0_123 = arith.constant 0 : index
    %237 = vector.load %arg17[%c0_122, %c0_123] : memref<128x512xf32, #tpu.memory_space<vmem>>, vector<32x16xf32>
    tpu.vector_store %arg17[%c0_122, %c0_123], %236 {strides = array<i32>} : memref<128x512xf32, #tpu.memory_space<vmem>>, vector<32x16xf32>,
    %238 = vector.extract_strided_slice %234 {offsets = [0, 1, 0], sizes = [2, 16, 16], strides = [1, 1, 1]} : vector<2x18x16xf32> to vector<2x16x16xf32>
    %239 = vector.shape_cast %238 : vector<2x16x16xf32> to vector<32x16xf32>
    %c0_124 = arith.constant 0 : index
    %c16_125 = arith.constant 16 : index
    %240 = vector.load %arg17[%c0_124, %c16_125] : memref<128x512xf32, #tpu.memory_space<vmem>>, vector<32x16xf32>
    tpu.vector_store %arg17[%c0_124, %c16_125], %239 {strides = array<i32>} : memref<128x512xf32, #tpu.memory_space<vmem>>, vector<32x16xf32>,
    %241 = vector.extract_strided_slice %234 {offsets = [0, 2, 0], sizes = [2, 16, 16], strides = [1, 1, 1]} : vector<2x18x16xf32> to vector<2x16x16xf32>
    %242 = vector.shape_cast %241 : vector<2x16x16xf32> to vector<32x16xf32>
    %c0_126 = arith.constant 0 : index
    %c32_127 = arith.constant 32 : index
    %243 = vector.load %arg17[%c0_126, %c32_127] : memref<128x512xf32, #tpu.memory_space<vmem>>, vector<32x16xf32>
    tpu.vector_store %arg17[%c0_126, %c32_127], %242 {strides = array<i32>} : memref<128x512xf32, #tpu.memory_space<vmem>>, vector<32x16xf32>,
    %c0_128 = arith.constant 0 : index
    %c0_129 = arith.constant 0 : index
    %244 = vector.load %arg17[%c0_128, %c0_129] : memref<128x512xf32, #tpu.memory_space<vmem>>, vector<32x48xf32>
    %c0_130 = arith.constant 0 : index
    %c0_131 = arith.constant 0 : index
    %245 = vector.load %arg5[%c0_130, %c0_131] : memref<48x32xf32, #tpu.memory_space<vmem>>, vector<48x32xf32>
    %cst_132 = arith.constant dense<0.000000e+00> : vector<32x32xf32>
    %246 = tpu.matmul %244, %245, %cst_132 {dimension_numbers = #tpu.dot_dimension_numbers<[1], [0], [0], [1], [0, 0, 1, 1], [], []>} : vector<32x48xf32>, vector<48x32xf32>, vector<32x32xf32> -> vector<32x32xf32>
    %c0_133 = arith.constant 0 : index
    %c0_134 = arith.constant 0 : index
    %247 = vector.load %arg6[%c0_133, %c0_134] : memref<1x32xf32, #tpu.memory_space<vmem>>, vector<1x32xf32>
    %248 = vector.broadcast %247 : vector<1x32xf32> to vector<32x32xf32>
    %249 = arith.addf %246, %248 : vector<32x32xf32>
    %250 = vector.shape_cast %249 : vector<32x32xf32> to vector<2x8x2x32xf32>
    %251 = vector.extract_strided_slice %250 {offsets = [0, 0, 0, 0], sizes = [2, 8, 1, 32], strides = [1, 1, 1, 1]} : vector<2x8x2x32xf32> to vector<2x8x1x32xf32>
    %252 = vector.shape_cast %251 : vector<2x8x1x32xf32> to vector<2x8x32xf32>
    %253 = vector.extract_strided_slice %250 {offsets = [0, 0, 1, 0], sizes = [2, 8, 1, 32], strides = [1, 1, 1, 1]} : vector<2x8x2x32xf32> to vector<2x8x1x32xf32>
    %254 = vector.shape_cast %253 : vector<2x8x1x32xf32> to vector<2x8x32xf32>
    %255 = arith.maximumf %252, %254 : vector<2x8x32xf32>
    %256 = vector.shape_cast %255 : vector<2x8x32xf32> to vector<16x32xf32>
    %c0_135 = arith.constant 0 : index
    %c0_136 = arith.constant 0 : index
    %257 = vector.load %arg7[%c0_135, %c0_136] : memref<32x48xf32, #tpu.memory_space<vmem>>, vector<32x48xf32>
    %cst_137 = arith.constant dense<0.000000e+00> : vector<16x48xf32>
    %258 = tpu.matmul %256, %257, %cst_137 {dimension_numbers = #tpu.dot_dimension_numbers<[1], [0], [0], [1], [0, 0, 1, 1], [], []>} : vector<16x32xf32>, vector<32x48xf32>, vector<16x48xf32> -> vector<16x48xf32>
    %c0_138 = arith.constant 0 : index
    %c0_139 = arith.constant 0 : index
    %259 = vector.load %arg8[%c0_138, %c0_139] : memref<1x48xf32, #tpu.memory_space<vmem>>, vector<1x48xf32>
    %260 = vector.broadcast %259 : vector<1x48xf32> to vector<16x48xf32>
    %261 = arith.addf %258, %260 : vector<16x48xf32>
    %262 = vector.shape_cast %261 : vector<16x48xf32> to vector<2x8x48xf32>
    %c0_140 = arith.constant 0 : index
    %c0_141 = arith.constant 0 : index
    %263 = vector.load %arg9[%c0_140, %c0_141] : memref<16x48xf32, #tpu.memory_space<vmem>>, vector<16x48xf32>
    %c0_142 = arith.constant 0 : index
    %c0_143 = arith.constant 0 : index
    %264 = vector.load %arg10[%c0_142, %c0_143] : memref<1x16xf32, #tpu.memory_space<vmem>>, vector<1x16xf32>
    %cst_144 = arith.constant 0.000000e+00 : f32
    %265 = vector.broadcast %cst_144 : f32 to vector<2x16xf32>
    %c0_145 = arith.constant 0 : index
    %c0_146 = arith.constant 0 : index
    %266 = vector.load %arg18[%c0_145, %c0_146] : memref<2x16xf32, #tpu.memory_space<vmem>>, vector<2x16xf32>
    tpu.vector_store %arg18[%c0_145, %c0_146], %265 {strides = array<i32>} : memref<2x16xf32, #tpu.memory_space<vmem>>, vector<2x16xf32>,
    %c0_147 = arith.constant 0 : index
    %c0_148 = arith.constant 0 : index
    %267 = vector.load %arg18[%c0_147, %c0_148] : memref<2x16xf32, #tpu.memory_space<vmem>>, vector<2x16xf32>
    %cst_149 = arith.constant dense<0.000000e+00> : vector<2x48xf32>
    %268 = tpu.matmul %267, %263, %cst_149 {dimension_numbers = #tpu.dot_dimension_numbers<[1], [0], [0], [1], [0, 0, 1, 1], [], []>} : vector<2x16xf32>, vector<16x48xf32>, vector<2x48xf32> -> vector<2x48xf32>
    %269 = vector.extract_strided_slice %262 {offsets = [0, 0, 0], sizes = [2, 1, 24], strides = [1, 1, 1]} : vector<2x8x48xf32> to vector<2x1x24xf32>
    %270 = vector.shape_cast %269 : vector<2x1x24xf32> to vector<2x24xf32>
    %271 = vector.extract_strided_slice %262 {offsets = [0, 7, 24], sizes = [2, 1, 24], strides = [1, 1, 1]} : vector<2x8x48xf32> to vector<2x1x24xf32>
    %272 = vector.shape_cast %271 : vector<2x1x24xf32> to vector<2x24xf32>
    %273 = vector.extract_strided_slice %270 {offsets = [0, 0], sizes = [2, 8], strides = [1, 1]} : vector<2x24xf32> to vector<2x8xf32>
    %274 = vector.extract_strided_slice %268 {offsets = [0, 0], sizes = [2, 8], strides = [1, 1]} : vector<2x48xf32> to vector<2x8xf32>
    %275 = arith.addf %273, %274 : vector<2x8xf32>
    %cst_150 = arith.constant 5.000000e-01 : f32
    %276 = vector.broadcast %cst_150 : f32 to vector<2x8xf32>
    %277 = arith.mulf %276, %275 : vector<2x8xf32>
    %278 = math.tanh %277 : vector<2x8xf32>
    %cst_151 = arith.constant 1.000000e+00 : f32
    %279 = vector.broadcast %cst_151 : f32 to vector<2x8xf32>
    %280 = arith.addf %278, %279 : vector<2x8xf32>
    %cst_152 = arith.constant 5.000000e-01 : f32
    %281 = vector.broadcast %cst_152 : f32 to vector<2x8xf32>
    %282 = arith.mulf %281, %280 : vector<2x8xf32>
    %283 = vector.extract_strided_slice %270 {offsets = [0, 8], sizes = [2, 8], strides = [1, 1]} : vector<2x24xf32> to vector<2x8xf32>
    %284 = vector.extract_strided_slice %268 {offsets = [0, 8], sizes = [2, 8], strides = [1, 1]} : vector<2x48xf32> to vector<2x8xf32>
    %285 = arith.addf %283, %284 : vector<2x8xf32>
    %cst_153 = arith.constant 5.000000e-01 : f32
    %286 = vector.broadcast %cst_153 : f32 to vector<2x8xf32>
    %287 = arith.mulf %286, %285 : vector<2x8xf32>
    %288 = math.tanh %287 : vector<2x8xf32>
    %cst_154 = arith.constant 1.000000e+00 : f32
    %289 = vector.broadcast %cst_154 : f32 to vector<2x8xf32>
    %290 = arith.addf %288, %289 : vector<2x8xf32>
    %cst_155 = arith.constant 5.000000e-01 : f32
    %291 = vector.broadcast %cst_155 : f32 to vector<2x8xf32>
    %292 = arith.mulf %291, %290 : vector<2x8xf32>
    %293 = vector.extract_strided_slice %270 {offsets = [0, 16], sizes = [2, 8], strides = [1, 1]} : vector<2x24xf32> to vector<2x8xf32>
    %294 = vector.extract_strided_slice %268 {offsets = [0, 16], sizes = [2, 8], strides = [1, 1]} : vector<2x48xf32> to vector<2x8xf32>
    %295 = vector.extract_strided_slice %264 {offsets = [0, 0], sizes = [1, 8], strides = [1, 1]} : vector<1x16xf32> to vector<1x8xf32>
    %296 = vector.broadcast %295 : vector<1x8xf32> to vector<2x8xf32>
    %297 = arith.addf %294, %296 : vector<2x8xf32>
    %298 = arith.mulf %282, %297 : vector<2x8xf32>
    %299 = arith.addf %293, %298 : vector<2x8xf32>
    %300 = math.tanh %299 : vector<2x8xf32>
    %301 = vector.extract_strided_slice %272 {offsets = [0, 0], sizes = [2, 8], strides = [1, 1]} : vector<2x24xf32> to vector<2x8xf32>
    %302 = vector.extract_strided_slice %268 {offsets = [0, 24], sizes = [2, 8], strides = [1, 1]} : vector<2x48xf32> to vector<2x8xf32>
    %303 = arith.addf %301, %302 : vector<2x8xf32>
    %cst_156 = arith.constant 5.000000e-01 : f32
    %304 = vector.broadcast %cst_156 : f32 to vector<2x8xf32>
    %305 = arith.mulf %304, %303 : vector<2x8xf32>
    %306 = math.tanh %305 : vector<2x8xf32>
    %cst_157 = arith.constant 1.000000e+00 : f32
    %307 = vector.broadcast %cst_157 : f32 to vector<2x8xf32>
    %308 = arith.addf %306, %307 : vector<2x8xf32>
    %cst_158 = arith.constant 5.000000e-01 : f32
    %309 = vector.broadcast %cst_158 : f32 to vector<2x8xf32>
    %310 = arith.mulf %309, %308 : vector<2x8xf32>
    %311 = vector.extract_strided_slice %272 {offsets = [0, 8], sizes = [2, 8], strides = [1, 1]} : vector<2x24xf32> to vector<2x8xf32>
    %312 = vector.extract_strided_slice %268 {offsets = [0, 32], sizes = [2, 8], strides = [1, 1]} : vector<2x48xf32> to vector<2x8xf32>
    %313 = arith.addf %311, %312 : vector<2x8xf32>
    %cst_159 = arith.constant 5.000000e-01 : f32
    %314 = vector.broadcast %cst_159 : f32 to vector<2x8xf32>
    %315 = arith.mulf %314, %313 : vector<2x8xf32>
    %316 = math.tanh %315 : vector<2x8xf32>
    %cst_160 = arith.constant 1.000000e+00 : f32
    %317 = vector.broadcast %cst_160 : f32 to vector<2x8xf32>
    %318 = arith.addf %316, %317 : vector<2x8xf32>
    %cst_161 = arith.constant 5.000000e-01 : f32
    %319 = vector.broadcast %cst_161 : f32 to vector<2x8xf32>
    %320 = arith.mulf %319, %318 : vector<2x8xf32>
    %321 = vector.extract_strided_slice %272 {offsets = [0, 16], sizes = [2, 8], strides = [1, 1]} : vector<2x24xf32> to vector<2x8xf32>
    %322 = vector.extract_strided_slice %268 {offsets = [0, 40], sizes = [2, 8], strides = [1, 1]} : vector<2x48xf32> to vector<2x8xf32>
    %323 = vector.extract_strided_slice %264 {offsets = [0, 8], sizes = [1, 8], strides = [1, 1]} : vector<1x16xf32> to vector<1x8xf32>
    %324 = vector.broadcast %323 : vector<1x8xf32> to vector<2x8xf32>
    %325 = arith.addf %322, %324 : vector<2x8xf32>
    %326 = arith.mulf %310, %325 : vector<2x8xf32>
    %327 = arith.addf %321, %326 : vector<2x8xf32>
    %328 = math.tanh %327 : vector<2x8xf32>
    %cst_162 = arith.constant 1.000000e+00 : f32
    %329 = vector.broadcast %cst_162 : f32 to vector<2x8xf32>
    %330 = arith.subf %329, %292 : vector<2x8xf32>
    %331 = arith.mulf %330, %300 : vector<2x8xf32>
    %332 = vector.extract_strided_slice %267 {offsets = [0, 0], sizes = [2, 8], strides = [1, 1]} : vector<2x16xf32> to vector<2x8xf32>
    %333 = arith.mulf %292, %332 : vector<2x8xf32>
    %334 = arith.addf %331, %333 : vector<2x8xf32>
    %cst_163 = arith.constant 1.000000e+00 : f32
    %335 = vector.broadcast %cst_163 : f32 to vector<2x8xf32>
    %336 = arith.subf %335, %320 : vector<2x8xf32>
    %337 = arith.mulf %336, %328 : vector<2x8xf32>
    %338 = vector.extract_strided_slice %267 {offsets = [0, 8], sizes = [2, 8], strides = [1, 1]} : vector<2x16xf32> to vector<2x8xf32>
    %339 = arith.mulf %320, %338 : vector<2x8xf32>
    %340 = arith.addf %337, %339 : vector<2x8xf32>
    %c0_164 = arith.constant 0 : index
    %c0_165 = arith.constant 0 : index
    %341 = vector.load %arg18[%c0_164, %c0_165] : memref<2x16xf32, #tpu.memory_space<vmem>>, vector<2x8xf32>
    tpu.vector_store %arg18[%c0_164, %c0_165], %334 {strides = array<i32>} : memref<2x16xf32, #tpu.memory_space<vmem>>, vector<2x8xf32>,
    %c0_166 = arith.constant 0 : index
    %c8_167 = arith.constant 8 : index
    %342 = vector.load %arg18[%c0_166, %c8_167] : memref<2x16xf32, #tpu.memory_space<vmem>>, vector<2x8xf32>
    tpu.vector_store %arg18[%c0_166, %c8_167], %340 {strides = array<i32>} : memref<2x16xf32, #tpu.memory_space<vmem>>, vector<2x8xf32>,
    %343 = vector.extract_strided_slice %334 {offsets = [0, 0], sizes = [1, 8], strides = [1, 1]} : vector<2x8xf32> to vector<1x8xf32>
    %c0_168 = arith.constant 0 : index
    %c0_169 = arith.constant 0 : index
    %344 = vector.load %arg19[%c0_168, %c0_169] : memref<1x256xf32, #tpu.memory_space<vmem>>, vector<1x8xf32>
    tpu.vector_store %arg19[%c0_168, %c0_169], %343 {strides = array<i32>} : memref<1x256xf32, #tpu.memory_space<vmem>>, vector<1x8xf32>,
    %345 = vector.extract_strided_slice %340 {offsets = [0, 0], sizes = [1, 8], strides = [1, 1]} : vector<2x8xf32> to vector<1x8xf32>
    %c0_170 = arith.constant 0 : index
    %c232 = arith.constant 232 : index
    %346 = vector.load %arg19[%c0_170, %c232] : memref<1x256xf32, #tpu.memory_space<vmem>>, vector<1x8xf32>
    tpu.vector_store %arg19[%c0_170, %c232], %345 {strides = array<i32>} : memref<1x256xf32, #tpu.memory_space<vmem>>, vector<1x8xf32>,
    %347 = vector.extract_strided_slice %334 {offsets = [1, 0], sizes = [1, 8], strides = [1, 1]} : vector<2x8xf32> to vector<1x8xf32>
    %c0_171 = arith.constant 0 : index
    %c16_172 = arith.constant 16 : index
    %348 = vector.load %arg19[%c0_171, %c16_172] : memref<1x256xf32, #tpu.memory_space<vmem>>, vector<1x8xf32>
    tpu.vector_store %arg19[%c0_171, %c16_172], %347 {strides = array<i32>} : memref<1x256xf32, #tpu.memory_space<vmem>>, vector<1x8xf32>,
    %349 = vector.extract_strided_slice %340 {offsets = [1, 0], sizes = [1, 8], strides = [1, 1]} : vector<2x8xf32> to vector<1x8xf32>
    %c0_173 = arith.constant 0 : index
    %c248 = arith.constant 248 : index
    %350 = vector.load %arg19[%c0_173, %c248] : memref<1x256xf32, #tpu.memory_space<vmem>>, vector<1x8xf32>
    tpu.vector_store %arg19[%c0_173, %c248], %349 {strides = array<i32>} : memref<1x256xf32, #tpu.memory_space<vmem>>, vector<1x8xf32>,
    %c0_174 = arith.constant 0 : index
    %c0_175 = arith.constant 0 : index
    %351 = vector.load %arg18[%c0_174, %c0_175] : memref<2x16xf32, #tpu.memory_space<vmem>>, vector<2x16xf32>
    %cst_176 = arith.constant dense<0.000000e+00> : vector<2x48xf32>
    %352 = tpu.matmul %351, %263, %cst_176 {dimension_numbers = #tpu.dot_dimension_numbers<[1], [0], [0], [1], [0, 0, 1, 1], [], []>} : vector<2x16xf32>, vector<16x48xf32>, vector<2x48xf32> -> vector<2x48xf32>
    %353 = vector.extract_strided_slice %262 {offsets = [0, 1, 0], sizes = [2, 1, 24], strides = [1, 1, 1]} : vector<2x8x48xf32> to vector<2x1x24xf32>
    %354 = vector.shape_cast %353 : vector<2x1x24xf32> to vector<2x24xf32>
    %355 = vector.extract_strided_slice %262 {offsets = [0, 6, 24], sizes = [2, 1, 24], strides = [1, 1, 1]} : vector<2x8x48xf32> to vector<2x1x24xf32>
    %356 = vector.shape_cast %355 : vector<2x1x24xf32> to vector<2x24xf32>
    %357 = vector.extract_strided_slice %354 {offsets = [0, 0], sizes = [2, 8], strides = [1, 1]} : vector<2x24xf32> to vector<2x8xf32>
    %358 = vector.extract_strided_slice %352 {offsets = [0, 0], sizes = [2, 8], strides = [1, 1]} : vector<2x48xf32> to vector<2x8xf32>
    %359 = arith.addf %357, %358 : vector<2x8xf32>
    %cst_177 = arith.constant 5.000000e-01 : f32
    %360 = vector.broadcast %cst_177 : f32 to vector<2x8xf32>
    %361 = arith.mulf %360, %359 : vector<2x8xf32>
    %362 = math.tanh %361 : vector<2x8xf32>
    %cst_178 = arith.constant 1.000000e+00 : f32
    %363 = vector.broadcast %cst_178 : f32 to vector<2x8xf32>
    %364 = arith.addf %362, %363 : vector<2x8xf32>
    %cst_179 = arith.constant 5.000000e-01 : f32
    %365 = vector.broadcast %cst_179 : f32 to vector<2x8xf32>
    %366 = arith.mulf %365, %364 : vector<2x8xf32>
    %367 = vector.extract_strided_slice %354 {offsets = [0, 8], sizes = [2, 8], strides = [1, 1]} : vector<2x24xf32> to vector<2x8xf32>
    %368 = vector.extract_strided_slice %352 {offsets = [0, 8], sizes = [2, 8], strides = [1, 1]} : vector<2x48xf32> to vector<2x8xf32>
    %369 = arith.addf %367, %368 : vector<2x8xf32>
    %cst_180 = arith.constant 5.000000e-01 : f32
    %370 = vector.broadcast %cst_180 : f32 to vector<2x8xf32>
    %371 = arith.mulf %370, %369 : vector<2x8xf32>
    %372 = math.tanh %371 : vector<2x8xf32>
    %cst_181 = arith.constant 1.000000e+00 : f32
    %373 = vector.broadcast %cst_181 : f32 to vector<2x8xf32>
    %374 = arith.addf %372, %373 : vector<2x8xf32>
    %cst_182 = arith.constant 5.000000e-01 : f32
    %375 = vector.broadcast %cst_182 : f32 to vector<2x8xf32>
    %376 = arith.mulf %375, %374 : vector<2x8xf32>
    %377 = vector.extract_strided_slice %354 {offsets = [0, 16], sizes = [2, 8], strides = [1, 1]} : vector<2x24xf32> to vector<2x8xf32>
    %378 = vector.extract_strided_slice %352 {offsets = [0, 16], sizes = [2, 8], strides = [1, 1]} : vector<2x48xf32> to vector<2x8xf32>
    %379 = vector.extract_strided_slice %264 {offsets = [0, 0], sizes = [1, 8], strides = [1, 1]} : vector<1x16xf32> to vector<1x8xf32>
    %380 = vector.broadcast %379 : vector<1x8xf32> to vector<2x8xf32>
    %381 = arith.addf %378, %380 : vector<2x8xf32>
    %382 = arith.mulf %366, %381 : vector<2x8xf32>
    %383 = arith.addf %377, %382 : vector<2x8xf32>
    %384 = math.tanh %383 : vector<2x8xf32>
    %385 = vector.extract_strided_slice %356 {offsets = [0, 0], sizes = [2, 8], strides = [1, 1]} : vector<2x24xf32> to vector<2x8xf32>
    %386 = vector.extract_strided_slice %352 {offsets = [0, 24], sizes = [2, 8], strides = [1, 1]} : vector<2x48xf32> to vector<2x8xf32>
    %387 = arith.addf %385, %386 : vector<2x8xf32>
    %cst_183 = arith.constant 5.000000e-01 : f32
    %388 = vector.broadcast %cst_183 : f32 to vector<2x8xf32>
    %389 = arith.mulf %388, %387 : vector<2x8xf32>
    %390 = math.tanh %389 : vector<2x8xf32>
    %cst_184 = arith.constant 1.000000e+00 : f32
    %391 = vector.broadcast %cst_184 : f32 to vector<2x8xf32>
    %392 = arith.addf %390, %391 : vector<2x8xf32>
    %cst_185 = arith.constant 5.000000e-01 : f32
    %393 = vector.broadcast %cst_185 : f32 to vector<2x8xf32>
    %394 = arith.mulf %393, %392 : vector<2x8xf32>
    %395 = vector.extract_strided_slice %356 {offsets = [0, 8], sizes = [2, 8], strides = [1, 1]} : vector<2x24xf32> to vector<2x8xf32>
    %396 = vector.extract_strided_slice %352 {offsets = [0, 32], sizes = [2, 8], strides = [1, 1]} : vector<2x48xf32> to vector<2x8xf32>
    %397 = arith.addf %395, %396 : vector<2x8xf32>
    %cst_186 = arith.constant 5.000000e-01 : f32
    %398 = vector.broadcast %cst_186 : f32 to vector<2x8xf32>
    %399 = arith.mulf %398, %397 : vector<2x8xf32>
    %400 = math.tanh %399 : vector<2x8xf32>
    %cst_187 = arith.constant 1.000000e+00 : f32
    %401 = vector.broadcast %cst_187 : f32 to vector<2x8xf32>
    %402 = arith.addf %400, %401 : vector<2x8xf32>
    %cst_188 = arith.constant 5.000000e-01 : f32
    %403 = vector.broadcast %cst_188 : f32 to vector<2x8xf32>
    %404 = arith.mulf %403, %402 : vector<2x8xf32>
    %405 = vector.extract_strided_slice %356 {offsets = [0, 16], sizes = [2, 8], strides = [1, 1]} : vector<2x24xf32> to vector<2x8xf32>
    %406 = vector.extract_strided_slice %352 {offsets = [0, 40], sizes = [2, 8], strides = [1, 1]} : vector<2x48xf32> to vector<2x8xf32>
    %407 = vector.extract_strided_slice %264 {offsets = [0, 8], sizes = [1, 8], strides = [1, 1]} : vector<1x16xf32> to vector<1x8xf32>
    %408 = vector.broadcast %407 : vector<1x8xf32> to vector<2x8xf32>
    %409 = arith.addf %406, %408 : vector<2x8xf32>
    %410 = arith.mulf %394, %409 : vector<2x8xf32>
    %411 = arith.addf %405, %410 : vector<2x8xf32>
    %412 = math.tanh %411 : vector<2x8xf32>
    %cst_189 = arith.constant 1.000000e+00 : f32
    %413 = vector.broadcast %cst_189 : f32 to vector<2x8xf32>
    %414 = arith.subf %413, %376 : vector<2x8xf32>
    %415 = arith.mulf %414, %384 : vector<2x8xf32>
    %416 = vector.extract_strided_slice %351 {offsets = [0, 0], sizes = [2, 8], strides = [1, 1]} : vector<2x16xf32> to vector<2x8xf32>
    %417 = arith.mulf %376, %416 : vector<2x8xf32>
    %418 = arith.addf %415, %417 : vector<2x8xf32>
    %cst_190 = arith.constant 1.000000e+00 : f32
    %419 = vector.broadcast %cst_190 : f32 to vector<2x8xf32>
    %420 = arith.subf %419, %404 : vector<2x8xf32>
    %421 = arith.mulf %420, %412 : vector<2x8xf32>
    %422 = vector.extract_strided_slice %351 {offsets = [0, 8], sizes = [2, 8], strides = [1, 1]} : vector<2x16xf32> to vector<2x8xf32>
    %423 = arith.mulf %404, %422 : vector<2x8xf32>
    %424 = arith.addf %421, %423 : vector<2x8xf32>
    %c0_191 = arith.constant 0 : index
    %c0_192 = arith.constant 0 : index
    %425 = vector.load %arg18[%c0_191, %c0_192] : memref<2x16xf32, #tpu.memory_space<vmem>>, vector<2x8xf32>
    tpu.vector_store %arg18[%c0_191, %c0_192], %418 {strides = array<i32>} : memref<2x16xf32, #tpu.memory_space<vmem>>, vector<2x8xf32>,
    %c0_193 = arith.constant 0 : index
    %c8_194 = arith.constant 8 : index
    %426 = vector.load %arg18[%c0_193, %c8_194] : memref<2x16xf32, #tpu.memory_space<vmem>>, vector<2x8xf32>
    tpu.vector_store %arg18[%c0_193, %c8_194], %424 {strides = array<i32>} : memref<2x16xf32, #tpu.memory_space<vmem>>, vector<2x8xf32>,
    %427 = vector.extract_strided_slice %418 {offsets = [0, 0], sizes = [1, 8], strides = [1, 1]} : vector<2x8xf32> to vector<1x8xf32>
    %c0_195 = arith.constant 0 : index
    %c32_196 = arith.constant 32 : index
    %428 = vector.load %arg19[%c0_195, %c32_196] : memref<1x256xf32, #tpu.memory_space<vmem>>, vector<1x8xf32>
    tpu.vector_store %arg19[%c0_195, %c32_196], %427 {strides = array<i32>} : memref<1x256xf32, #tpu.memory_space<vmem>>, vector<1x8xf32>,
    %429 = vector.extract_strided_slice %424 {offsets = [0, 0], sizes = [1, 8], strides = [1, 1]} : vector<2x8xf32> to vector<1x8xf32>
    %c0_197 = arith.constant 0 : index
    %c200 = arith.constant 200 : index
    %430 = vector.load %arg19[%c0_197, %c200] : memref<1x256xf32, #tpu.memory_space<vmem>>, vector<1x8xf32>
    tpu.vector_store %arg19[%c0_197, %c200], %429 {strides = array<i32>} : memref<1x256xf32, #tpu.memory_space<vmem>>, vector<1x8xf32>,
    %431 = vector.extract_strided_slice %418 {offsets = [1, 0], sizes = [1, 8], strides = [1, 1]} : vector<2x8xf32> to vector<1x8xf32>
    %c0_198 = arith.constant 0 : index
    %c48_199 = arith.constant 48 : index
    %432 = vector.load %arg19[%c0_198, %c48_199] : memref<1x256xf32, #tpu.memory_space<vmem>>, vector<1x8xf32>
    tpu.vector_store %arg19[%c0_198, %c48_199], %431 {strides = array<i32>} : memref<1x256xf32, #tpu.memory_space<vmem>>, vector<1x8xf32>,
    %433 = vector.extract_strided_slice %424 {offsets = [1, 0], sizes = [1, 8], strides = [1, 1]} : vector<2x8xf32> to vector<1x8xf32>
    %c0_200 = arith.constant 0 : index
    %c216 = arith.constant 216 : index
    %434 = vector.load %arg19[%c0_200, %c216] : memref<1x256xf32, #tpu.memory_space<vmem>>, vector<1x8xf32>
    tpu.vector_store %arg19[%c0_200, %c216], %433 {strides = array<i32>} : memref<1x256xf32, #tpu.memory_space<vmem>>, vector<1x8xf32>,
    %c0_201 = arith.constant 0 : index
    %c0_202 = arith.constant 0 : index
    %435 = vector.load %arg18[%c0_201, %c0_202] : memref<2x16xf32, #tpu.memory_space<vmem>>, vector<2x16xf32>
    %cst_203 = arith.constant dense<0.000000e+00> : vector<2x48xf32>
    %436 = tpu.matmul %435, %263, %cst_203 {dimension_numbers = #tpu.dot_dimension_numbers<[1], [0], [0], [1], [0, 0, 1, 1], [], []>} : vector<2x16xf32>, vector<16x48xf32>, vector<2x48xf32> -> vector<2x48xf32>
    %437 = vector.extract_strided_slice %262 {offsets = [0, 2, 0], sizes = [2, 1, 24], strides = [1, 1, 1]} : vector<2x8x48xf32> to vector<2x1x24xf32>
    %438 = vector.shape_cast %437 : vector<2x1x24xf32> to vector<2x24xf32>
    %439 = vector.extract_strided_slice %262 {offsets = [0, 5, 24], sizes = [2, 1, 24], strides = [1, 1, 1]} : vector<2x8x48xf32> to vector<2x1x24xf32>
    %440 = vector.shape_cast %439 : vector<2x1x24xf32> to vector<2x24xf32>
    %441 = vector.extract_strided_slice %438 {offsets = [0, 0], sizes = [2, 8], strides = [1, 1]} : vector<2x24xf32> to vector<2x8xf32>
    %442 = vector.extract_strided_slice %436 {offsets = [0, 0], sizes = [2, 8], strides = [1, 1]} : vector<2x48xf32> to vector<2x8xf32>
    %443 = arith.addf %441, %442 : vector<2x8xf32>
    %cst_204 = arith.constant 5.000000e-01 : f32
    %444 = vector.broadcast %cst_204 : f32 to vector<2x8xf32>
    %445 = arith.mulf %444, %443 : vector<2x8xf32>
    %446 = math.tanh %445 : vector<2x8xf32>
    %cst_205 = arith.constant 1.000000e+00 : f32
    %447 = vector.broadcast %cst_205 : f32 to vector<2x8xf32>
    %448 = arith.addf %446, %447 : vector<2x8xf32>
    %cst_206 = arith.constant 5.000000e-01 : f32
    %449 = vector.broadcast %cst_206 : f32 to vector<2x8xf32>
    %450 = arith.mulf %449, %448 : vector<2x8xf32>
    %451 = vector.extract_strided_slice %438 {offsets = [0, 8], sizes = [2, 8], strides = [1, 1]} : vector<2x24xf32> to vector<2x8xf32>
    %452 = vector.extract_strided_slice %436 {offsets = [0, 8], sizes = [2, 8], strides = [1, 1]} : vector<2x48xf32> to vector<2x8xf32>
    %453 = arith.addf %451, %452 : vector<2x8xf32>
    %cst_207 = arith.constant 5.000000e-01 : f32
    %454 = vector.broadcast %cst_207 : f32 to vector<2x8xf32>
    %455 = arith.mulf %454, %453 : vector<2x8xf32>
    %456 = math.tanh %455 : vector<2x8xf32>
    %cst_208 = arith.constant 1.000000e+00 : f32
    %457 = vector.broadcast %cst_208 : f32 to vector<2x8xf32>
    %458 = arith.addf %456, %457 : vector<2x8xf32>
    %cst_209 = arith.constant 5.000000e-01 : f32
    %459 = vector.broadcast %cst_209 : f32 to vector<2x8xf32>
    %460 = arith.mulf %459, %458 : vector<2x8xf32>
    %461 = vector.extract_strided_slice %438 {offsets = [0, 16], sizes = [2, 8], strides = [1, 1]} : vector<2x24xf32> to vector<2x8xf32>
    %462 = vector.extract_strided_slice %436 {offsets = [0, 16], sizes = [2, 8], strides = [1, 1]} : vector<2x48xf32> to vector<2x8xf32>
    %463 = vector.extract_strided_slice %264 {offsets = [0, 0], sizes = [1, 8], strides = [1, 1]} : vector<1x16xf32> to vector<1x8xf32>
    %464 = vector.broadcast %463 : vector<1x8xf32> to vector<2x8xf32>
    %465 = arith.addf %462, %464 : vector<2x8xf32>
    %466 = arith.mulf %450, %465 : vector<2x8xf32>
    %467 = arith.addf %461, %466 : vector<2x8xf32>
    %468 = math.tanh %467 : vector<2x8xf32>
    %469 = vector.extract_strided_slice %440 {offsets = [0, 0], sizes = [2, 8], strides = [1, 1]} : vector<2x24xf32> to vector<2x8xf32>
    %470 = vector.extract_strided_slice %436 {offsets = [0, 24], sizes = [2, 8], strides = [1, 1]} : vector<2x48xf32> to vector<2x8xf32>
    %471 = arith.addf %469, %470 : vector<2x8xf32>
    %cst_210 = arith.constant 5.000000e-01 : f32
    %472 = vector.broadcast %cst_210 : f32 to vector<2x8xf32>
    %473 = arith.mulf %472, %471 : vector<2x8xf32>
    %474 = math.tanh %473 : vector<2x8xf32>
    %cst_211 = arith.constant 1.000000e+00 : f32
    %475 = vector.broadcast %cst_211 : f32 to vector<2x8xf32>
    %476 = arith.addf %474, %475 : vector<2x8xf32>
    %cst_212 = arith.constant 5.000000e-01 : f32
    %477 = vector.broadcast %cst_212 : f32 to vector<2x8xf32>
    %478 = arith.mulf %477, %476 : vector<2x8xf32>
    %479 = vector.extract_strided_slice %440 {offsets = [0, 8], sizes = [2, 8], strides = [1, 1]} : vector<2x24xf32> to vector<2x8xf32>
    %480 = vector.extract_strided_slice %436 {offsets = [0, 32], sizes = [2, 8], strides = [1, 1]} : vector<2x48xf32> to vector<2x8xf32>
    %481 = arith.addf %479, %480 : vector<2x8xf32>
    %cst_213 = arith.constant 5.000000e-01 : f32
    %482 = vector.broadcast %cst_213 : f32 to vector<2x8xf32>
    %483 = arith.mulf %482, %481 : vector<2x8xf32>
    %484 = math.tanh %483 : vector<2x8xf32>
    %cst_214 = arith.constant 1.000000e+00 : f32
    %485 = vector.broadcast %cst_214 : f32 to vector<2x8xf32>
    %486 = arith.addf %484, %485 : vector<2x8xf32>
    %cst_215 = arith.constant 5.000000e-01 : f32
    %487 = vector.broadcast %cst_215 : f32 to vector<2x8xf32>
    %488 = arith.mulf %487, %486 : vector<2x8xf32>
    %489 = vector.extract_strided_slice %440 {offsets = [0, 16], sizes = [2, 8], strides = [1, 1]} : vector<2x24xf32> to vector<2x8xf32>
    %490 = vector.extract_strided_slice %436 {offsets = [0, 40], sizes = [2, 8], strides = [1, 1]} : vector<2x48xf32> to vector<2x8xf32>
    %491 = vector.extract_strided_slice %264 {offsets = [0, 8], sizes = [1, 8], strides = [1, 1]} : vector<1x16xf32> to vector<1x8xf32>
    %492 = vector.broadcast %491 : vector<1x8xf32> to vector<2x8xf32>
    %493 = arith.addf %490, %492 : vector<2x8xf32>
    %494 = arith.mulf %478, %493 : vector<2x8xf32>
    %495 = arith.addf %489, %494 : vector<2x8xf32>
    %496 = math.tanh %495 : vector<2x8xf32>
    %cst_216 = arith.constant 1.000000e+00 : f32
    %497 = vector.broadcast %cst_216 : f32 to vector<2x8xf32>
    %498 = arith.subf %497, %460 : vector<2x8xf32>
    %499 = arith.mulf %498, %468 : vector<2x8xf32>
    %500 = vector.extract_strided_slice %435 {offsets = [0, 0], sizes = [2, 8], strides = [1, 1]} : vector<2x16xf32> to vector<2x8xf32>
    %501 = arith.mulf %460, %500 : vector<2x8xf32>
    %502 = arith.addf %499, %501 : vector<2x8xf32>
    %cst_217 = arith.constant 1.000000e+00 : f32
    %503 = vector.broadcast %cst_217 : f32 to vector<2x8xf32>
    %504 = arith.subf %503, %488 : vector<2x8xf32>
    %505 = arith.mulf %504, %496 : vector<2x8xf32>
    %506 = vector.extract_strided_slice %435 {offsets = [0, 8], sizes = [2, 8], strides = [1, 1]} : vector<2x16xf32> to vector<2x8xf32>
    %507 = arith.mulf %488, %506 : vector<2x8xf32>
    %508 = arith.addf %505, %507 : vector<2x8xf32>
    %c0_218 = arith.constant 0 : index
    %c0_219 = arith.constant 0 : index
    %509 = vector.load %arg18[%c0_218, %c0_219] : memref<2x16xf32, #tpu.memory_space<vmem>>, vector<2x8xf32>
    tpu.vector_store %arg18[%c0_218, %c0_219], %502 {strides = array<i32>} : memref<2x16xf32, #tpu.memory_space<vmem>>, vector<2x8xf32>,
    %c0_220 = arith.constant 0 : index
    %c8_221 = arith.constant 8 : index
    %510 = vector.load %arg18[%c0_220, %c8_221] : memref<2x16xf32, #tpu.memory_space<vmem>>, vector<2x8xf32>
    tpu.vector_store %arg18[%c0_220, %c8_221], %508 {strides = array<i32>} : memref<2x16xf32, #tpu.memory_space<vmem>>, vector<2x8xf32>,
    %511 = vector.extract_strided_slice %502 {offsets = [0, 0], sizes = [1, 8], strides = [1, 1]} : vector<2x8xf32> to vector<1x8xf32>
    %c0_222 = arith.constant 0 : index
    %c64_223 = arith.constant 64 : index
    %512 = vector.load %arg19[%c0_222, %c64_223] : memref<1x256xf32, #tpu.memory_space<vmem>>, vector<1x8xf32>
    tpu.vector_store %arg19[%c0_222, %c64_223], %511 {strides = array<i32>} : memref<1x256xf32, #tpu.memory_space<vmem>>, vector<1x8xf32>,
    %513 = vector.extract_strided_slice %508 {offsets = [0, 0], sizes = [1, 8], strides = [1, 1]} : vector<2x8xf32> to vector<1x8xf32>
    %c0_224 = arith.constant 0 : index
    %c168 = arith.constant 168 : index
    %514 = vector.load %arg19[%c0_224, %c168] : memref<1x256xf32, #tpu.memory_space<vmem>>, vector<1x8xf32>
    tpu.vector_store %arg19[%c0_224, %c168], %513 {strides = array<i32>} : memref<1x256xf32, #tpu.memory_space<vmem>>, vector<1x8xf32>,
    %515 = vector.extract_strided_slice %502 {offsets = [1, 0], sizes = [1, 8], strides = [1, 1]} : vector<2x8xf32> to vector<1x8xf32>
    %c0_225 = arith.constant 0 : index
    %c80_226 = arith.constant 80 : index
    %516 = vector.load %arg19[%c0_225, %c80_226] : memref<1x256xf32, #tpu.memory_space<vmem>>, vector<1x8xf32>
    tpu.vector_store %arg19[%c0_225, %c80_226], %515 {strides = array<i32>} : memref<1x256xf32, #tpu.memory_space<vmem>>, vector<1x8xf32>,
    %517 = vector.extract_strided_slice %508 {offsets = [1, 0], sizes = [1, 8], strides = [1, 1]} : vector<2x8xf32> to vector<1x8xf32>
    %c0_227 = arith.constant 0 : index
    %c184 = arith.constant 184 : index
    %518 = vector.load %arg19[%c0_227, %c184] : memref<1x256xf32, #tpu.memory_space<vmem>>, vector<1x8xf32>
    tpu.vector_store %arg19[%c0_227, %c184], %517 {strides = array<i32>} : memref<1x256xf32, #tpu.memory_space<vmem>>, vector<1x8xf32>,
    %c0_228 = arith.constant 0 : index
    %c0_229 = arith.constant 0 : index
    %519 = vector.load %arg18[%c0_228, %c0_229] : memref<2x16xf32, #tpu.memory_space<vmem>>, vector<2x16xf32>
    %cst_230 = arith.constant dense<0.000000e+00> : vector<2x48xf32>
    %520 = tpu.matmul %519, %263, %cst_230 {dimension_numbers = #tpu.dot_dimension_numbers<[1], [0], [0], [1], [0, 0, 1, 1], [], []>} : vector<2x16xf32>, vector<16x48xf32>, vector<2x48xf32> -> vector<2x48xf32>
    %521 = vector.extract_strided_slice %262 {offsets = [0, 3, 0], sizes = [2, 1, 24], strides = [1, 1, 1]} : vector<2x8x48xf32> to vector<2x1x24xf32>
    %522 = vector.shape_cast %521 : vector<2x1x24xf32> to vector<2x24xf32>
    %523 = vector.extract_strided_slice %262 {offsets = [0, 4, 24], sizes = [2, 1, 24], strides = [1, 1, 1]} : vector<2x8x48xf32> to vector<2x1x24xf32>
    %524 = vector.shape_cast %523 : vector<2x1x24xf32> to vector<2x24xf32>
    %525 = vector.extract_strided_slice %522 {offsets = [0, 0], sizes = [2, 8], strides = [1, 1]} : vector<2x24xf32> to vector<2x8xf32>
    %526 = vector.extract_strided_slice %520 {offsets = [0, 0], sizes = [2, 8], strides = [1, 1]} : vector<2x48xf32> to vector<2x8xf32>
    %527 = arith.addf %525, %526 : vector<2x8xf32>
    %cst_231 = arith.constant 5.000000e-01 : f32
    %528 = vector.broadcast %cst_231 : f32 to vector<2x8xf32>
    %529 = arith.mulf %528, %527 : vector<2x8xf32>
    %530 = math.tanh %529 : vector<2x8xf32>
    %cst_232 = arith.constant 1.000000e+00 : f32
    %531 = vector.broadcast %cst_232 : f32 to vector<2x8xf32>
    %532 = arith.addf %530, %531 : vector<2x8xf32>
    %cst_233 = arith.constant 5.000000e-01 : f32
    %533 = vector.broadcast %cst_233 : f32 to vector<2x8xf32>
    %534 = arith.mulf %533, %532 : vector<2x8xf32>
    %535 = vector.extract_strided_slice %522 {offsets = [0, 8], sizes = [2, 8], strides = [1, 1]} : vector<2x24xf32> to vector<2x8xf32>
    %536 = vector.extract_strided_slice %520 {offsets = [0, 8], sizes = [2, 8], strides = [1, 1]} : vector<2x48xf32> to vector<2x8xf32>
    %537 = arith.addf %535, %536 : vector<2x8xf32>
    %cst_234 = arith.constant 5.000000e-01 : f32
    %538 = vector.broadcast %cst_234 : f32 to vector<2x8xf32>
    %539 = arith.mulf %538, %537 : vector<2x8xf32>
    %540 = math.tanh %539 : vector<2x8xf32>
    %cst_235 = arith.constant 1.000000e+00 : f32
    %541 = vector.broadcast %cst_235 : f32 to vector<2x8xf32>
    %542 = arith.addf %540, %541 : vector<2x8xf32>
    %cst_236 = arith.constant 5.000000e-01 : f32
    %543 = vector.broadcast %cst_236 : f32 to vector<2x8xf32>
    %544 = arith.mulf %543, %542 : vector<2x8xf32>
    %545 = vector.extract_strided_slice %522 {offsets = [0, 16], sizes = [2, 8], strides = [1, 1]} : vector<2x24xf32> to vector<2x8xf32>
    %546 = vector.extract_strided_slice %520 {offsets = [0, 16], sizes = [2, 8], strides = [1, 1]} : vector<2x48xf32> to vector<2x8xf32>
    %547 = vector.extract_strided_slice %264 {offsets = [0, 0], sizes = [1, 8], strides = [1, 1]} : vector<1x16xf32> to vector<1x8xf32>
    %548 = vector.broadcast %547 : vector<1x8xf32> to vector<2x8xf32>
    %549 = arith.addf %546, %548 : vector<2x8xf32>
    %550 = arith.mulf %534, %549 : vector<2x8xf32>
    %551 = arith.addf %545, %550 : vector<2x8xf32>
    %552 = math.tanh %551 : vector<2x8xf32>
    %553 = vector.extract_strided_slice %524 {offsets = [0, 0], sizes = [2, 8], strides = [1, 1]} : vector<2x24xf32> to vector<2x8xf32>
    %554 = vector.extract_strided_slice %520 {offsets = [0, 24], sizes = [2, 8], strides = [1, 1]} : vector<2x48xf32> to vector<2x8xf32>
    %555 = arith.addf %553, %554 : vector<2x8xf32>
    %cst_237 = arith.constant 5.000000e-01 : f32
    %556 = vector.broadcast %cst_237 : f32 to vector<2x8xf32>
    %557 = arith.mulf %556, %555 : vector<2x8xf32>
    %558 = math.tanh %557 : vector<2x8xf32>
    %cst_238 = arith.constant 1.000000e+00 : f32
    %559 = vector.broadcast %cst_238 : f32 to vector<2x8xf32>
    %560 = arith.addf %558, %559 : vector<2x8xf32>
    %cst_239 = arith.constant 5.000000e-01 : f32
    %561 = vector.broadcast %cst_239 : f32 to vector<2x8xf32>
    %562 = arith.mulf %561, %560 : vector<2x8xf32>
    %563 = vector.extract_strided_slice %524 {offsets = [0, 8], sizes = [2, 8], strides = [1, 1]} : vector<2x24xf32> to vector<2x8xf32>
    %564 = vector.extract_strided_slice %520 {offsets = [0, 32], sizes = [2, 8], strides = [1, 1]} : vector<2x48xf32> to vector<2x8xf32>
    %565 = arith.addf %563, %564 : vector<2x8xf32>
    %cst_240 = arith.constant 5.000000e-01 : f32
    %566 = vector.broadcast %cst_240 : f32 to vector<2x8xf32>
    %567 = arith.mulf %566, %565 : vector<2x8xf32>
    %568 = math.tanh %567 : vector<2x8xf32>
    %cst_241 = arith.constant 1.000000e+00 : f32
    %569 = vector.broadcast %cst_241 : f32 to vector<2x8xf32>
    %570 = arith.addf %568, %569 : vector<2x8xf32>
    %cst_242 = arith.constant 5.000000e-01 : f32
    %571 = vector.broadcast %cst_242 : f32 to vector<2x8xf32>
    %572 = arith.mulf %571, %570 : vector<2x8xf32>
    %573 = vector.extract_strided_slice %524 {offsets = [0, 16], sizes = [2, 8], strides = [1, 1]} : vector<2x24xf32> to vector<2x8xf32>
    %574 = vector.extract_strided_slice %520 {offsets = [0, 40], sizes = [2, 8], strides = [1, 1]} : vector<2x48xf32> to vector<2x8xf32>
    %575 = vector.extract_strided_slice %264 {offsets = [0, 8], sizes = [1, 8], strides = [1, 1]} : vector<1x16xf32> to vector<1x8xf32>
    %576 = vector.broadcast %575 : vector<1x8xf32> to vector<2x8xf32>
    %577 = arith.addf %574, %576 : vector<2x8xf32>
    %578 = arith.mulf %562, %577 : vector<2x8xf32>
    %579 = arith.addf %573, %578 : vector<2x8xf32>
    %580 = math.tanh %579 : vector<2x8xf32>
    %cst_243 = arith.constant 1.000000e+00 : f32
    %581 = vector.broadcast %cst_243 : f32 to vector<2x8xf32>
    %582 = arith.subf %581, %544 : vector<2x8xf32>
    %583 = arith.mulf %582, %552 : vector<2x8xf32>
    %584 = vector.extract_strided_slice %519 {offsets = [0, 0], sizes = [2, 8], strides = [1, 1]} : vector<2x16xf32> to vector<2x8xf32>
    %585 = arith.mulf %544, %584 : vector<2x8xf32>
    %586 = arith.addf %583, %585 : vector<2x8xf32>
    %cst_244 = arith.constant 1.000000e+00 : f32
    %587 = vector.broadcast %cst_244 : f32 to vector<2x8xf32>
    %588 = arith.subf %587, %572 : vector<2x8xf32>
    %589 = arith.mulf %588, %580 : vector<2x8xf32>
    %590 = vector.extract_strided_slice %519 {offsets = [0, 8], sizes = [2, 8], strides = [1, 1]} : vector<2x16xf32> to vector<2x8xf32>
    %591 = arith.mulf %572, %590 : vector<2x8xf32>
    %592 = arith.addf %589, %591 : vector<2x8xf32>
    %c0_245 = arith.constant 0 : index
    %c0_246 = arith.constant 0 : index
    %593 = vector.load %arg18[%c0_245, %c0_246] : memref<2x16xf32, #tpu.memory_space<vmem>>, vector<2x8xf32>
    tpu.vector_store %arg18[%c0_245, %c0_246], %586 {strides = array<i32>} : memref<2x16xf32, #tpu.memory_space<vmem>>, vector<2x8xf32>,
    %c0_247 = arith.constant 0 : index
    %c8_248 = arith.constant 8 : index
    %594 = vector.load %arg18[%c0_247, %c8_248] : memref<2x16xf32, #tpu.memory_space<vmem>>, vector<2x8xf32>
    tpu.vector_store %arg18[%c0_247, %c8_248], %592 {strides = array<i32>} : memref<2x16xf32, #tpu.memory_space<vmem>>, vector<2x8xf32>,
    %595 = vector.extract_strided_slice %586 {offsets = [0, 0], sizes = [1, 8], strides = [1, 1]} : vector<2x8xf32> to vector<1x8xf32>
    %c0_249 = arith.constant 0 : index
    %c96_250 = arith.constant 96 : index
    %596 = vector.load %arg19[%c0_249, %c96_250] : memref<1x256xf32, #tpu.memory_space<vmem>>, vector<1x8xf32>
    tpu.vector_store %arg19[%c0_249, %c96_250], %595 {strides = array<i32>} : memref<1x256xf32, #tpu.memory_space<vmem>>, vector<1x8xf32>,
    %597 = vector.extract_strided_slice %592 {offsets = [0, 0], sizes = [1, 8], strides = [1, 1]} : vector<2x8xf32> to vector<1x8xf32>
    %c0_251 = arith.constant 0 : index
    %c136 = arith.constant 136 : index
    %598 = vector.load %arg19[%c0_251, %c136] : memref<1x256xf32, #tpu.memory_space<vmem>>, vector<1x8xf32>
    tpu.vector_store %arg19[%c0_251, %c136], %597 {strides = array<i32>} : memref<1x256xf32, #tpu.memory_space<vmem>>, vector<1x8xf32>,
    %599 = vector.extract_strided_slice %586 {offsets = [1, 0], sizes = [1, 8], strides = [1, 1]} : vector<2x8xf32> to vector<1x8xf32>
    %c0_252 = arith.constant 0 : index
    %c112_253 = arith.constant 112 : index
    %600 = vector.load %arg19[%c0_252, %c112_253] : memref<1x256xf32, #tpu.memory_space<vmem>>, vector<1x8xf32>
    tpu.vector_store %arg19[%c0_252, %c112_253], %599 {strides = array<i32>} : memref<1x256xf32, #tpu.memory_space<vmem>>, vector<1x8xf32>,
    %601 = vector.extract_strided_slice %592 {offsets = [1, 0], sizes = [1, 8], strides = [1, 1]} : vector<2x8xf32> to vector<1x8xf32>
    %c0_254 = arith.constant 0 : index
    %c152 = arith.constant 152 : index
    %602 = vector.load %arg19[%c0_254, %c152] : memref<1x256xf32, #tpu.memory_space<vmem>>, vector<1x8xf32>
    tpu.vector_store %arg19[%c0_254, %c152], %601 {strides = array<i32>} : memref<1x256xf32, #tpu.memory_space<vmem>>, vector<1x8xf32>,
    %c0_255 = arith.constant 0 : index
    %c0_256 = arith.constant 0 : index
    %603 = vector.load %arg18[%c0_255, %c0_256] : memref<2x16xf32, #tpu.memory_space<vmem>>, vector<2x16xf32>
    %cst_257 = arith.constant dense<0.000000e+00> : vector<2x48xf32>
    %604 = tpu.matmul %603, %263, %cst_257 {dimension_numbers = #tpu.dot_dimension_numbers<[1], [0], [0], [1], [0, 0, 1, 1], [], []>} : vector<2x16xf32>, vector<16x48xf32>, vector<2x48xf32> -> vector<2x48xf32>
    %605 = vector.extract_strided_slice %262 {offsets = [0, 4, 0], sizes = [2, 1, 24], strides = [1, 1, 1]} : vector<2x8x48xf32> to vector<2x1x24xf32>
    %606 = vector.shape_cast %605 : vector<2x1x24xf32> to vector<2x24xf32>
    %607 = vector.extract_strided_slice %262 {offsets = [0, 3, 24], sizes = [2, 1, 24], strides = [1, 1, 1]} : vector<2x8x48xf32> to vector<2x1x24xf32>
    %608 = vector.shape_cast %607 : vector<2x1x24xf32> to vector<2x24xf32>
    %609 = vector.extract_strided_slice %606 {offsets = [0, 0], sizes = [2, 8], strides = [1, 1]} : vector<2x24xf32> to vector<2x8xf32>
    %610 = vector.extract_strided_slice %604 {offsets = [0, 0], sizes = [2, 8], strides = [1, 1]} : vector<2x48xf32> to vector<2x8xf32>
    %611 = arith.addf %609, %610 : vector<2x8xf32>
    %cst_258 = arith.constant 5.000000e-01 : f32
    %612 = vector.broadcast %cst_258 : f32 to vector<2x8xf32>
    %613 = arith.mulf %612, %611 : vector<2x8xf32>
    %614 = math.tanh %613 : vector<2x8xf32>
    %cst_259 = arith.constant 1.000000e+00 : f32
    %615 = vector.broadcast %cst_259 : f32 to vector<2x8xf32>
    %616 = arith.addf %614, %615 : vector<2x8xf32>
    %cst_260 = arith.constant 5.000000e-01 : f32
    %617 = vector.broadcast %cst_260 : f32 to vector<2x8xf32>
    %618 = arith.mulf %617, %616 : vector<2x8xf32>
    %619 = vector.extract_strided_slice %606 {offsets = [0, 8], sizes = [2, 8], strides = [1, 1]} : vector<2x24xf32> to vector<2x8xf32>
    %620 = vector.extract_strided_slice %604 {offsets = [0, 8], sizes = [2, 8], strides = [1, 1]} : vector<2x48xf32> to vector<2x8xf32>
    %621 = arith.addf %619, %620 : vector<2x8xf32>
    %cst_261 = arith.constant 5.000000e-01 : f32
    %622 = vector.broadcast %cst_261 : f32 to vector<2x8xf32>
    %623 = arith.mulf %622, %621 : vector<2x8xf32>
    %624 = math.tanh %623 : vector<2x8xf32>
    %cst_262 = arith.constant 1.000000e+00 : f32
    %625 = vector.broadcast %cst_262 : f32 to vector<2x8xf32>
    %626 = arith.addf %624, %625 : vector<2x8xf32>
    %cst_263 = arith.constant 5.000000e-01 : f32
    %627 = vector.broadcast %cst_263 : f32 to vector<2x8xf32>
    %628 = arith.mulf %627, %626 : vector<2x8xf32>
    %629 = vector.extract_strided_slice %606 {offsets = [0, 16], sizes = [2, 8], strides = [1, 1]} : vector<2x24xf32> to vector<2x8xf32>
    %630 = vector.extract_strided_slice %604 {offsets = [0, 16], sizes = [2, 8], strides = [1, 1]} : vector<2x48xf32> to vector<2x8xf32>
    %631 = vector.extract_strided_slice %264 {offsets = [0, 0], sizes = [1, 8], strides = [1, 1]} : vector<1x16xf32> to vector<1x8xf32>
    %632 = vector.broadcast %631 : vector<1x8xf32> to vector<2x8xf32>
    %633 = arith.addf %630, %632 : vector<2x8xf32>
    %634 = arith.mulf %618, %633 : vector<2x8xf32>
    %635 = arith.addf %629, %634 : vector<2x8xf32>
    %636 = math.tanh %635 : vector<2x8xf32>
    %637 = vector.extract_strided_slice %608 {offsets = [0, 0], sizes = [2, 8], strides = [1, 1]} : vector<2x24xf32> to vector<2x8xf32>
    %638 = vector.extract_strided_slice %604 {offsets = [0, 24], sizes = [2, 8], strides = [1, 1]} : vector<2x48xf32> to vector<2x8xf32>
    %639 = arith.addf %637, %638 : vector<2x8xf32>
    %cst_264 = arith.constant 5.000000e-01 : f32
    %640 = vector.broadcast %cst_264 : f32 to vector<2x8xf32>
    %641 = arith.mulf %640, %639 : vector<2x8xf32>
    %642 = math.tanh %641 : vector<2x8xf32>
    %cst_265 = arith.constant 1.000000e+00 : f32
    %643 = vector.broadcast %cst_265 : f32 to vector<2x8xf32>
    %644 = arith.addf %642, %643 : vector<2x8xf32>
    %cst_266 = arith.constant 5.000000e-01 : f32
    %645 = vector.broadcast %cst_266 : f32 to vector<2x8xf32>
    %646 = arith.mulf %645, %644 : vector<2x8xf32>
    %647 = vector.extract_strided_slice %608 {offsets = [0, 8], sizes = [2, 8], strides = [1, 1]} : vector<2x24xf32> to vector<2x8xf32>
    %648 = vector.extract_strided_slice %604 {offsets = [0, 32], sizes = [2, 8], strides = [1, 1]} : vector<2x48xf32> to vector<2x8xf32>
    %649 = arith.addf %647, %648 : vector<2x8xf32>
    %cst_267 = arith.constant 5.000000e-01 : f32
    %650 = vector.broadcast %cst_267 : f32 to vector<2x8xf32>
    %651 = arith.mulf %650, %649 : vector<2x8xf32>
    %652 = math.tanh %651 : vector<2x8xf32>
    %cst_268 = arith.constant 1.000000e+00 : f32
    %653 = vector.broadcast %cst_268 : f32 to vector<2x8xf32>
    %654 = arith.addf %652, %653 : vector<2x8xf32>
    %cst_269 = arith.constant 5.000000e-01 : f32
    %655 = vector.broadcast %cst_269 : f32 to vector<2x8xf32>
    %656 = arith.mulf %655, %654 : vector<2x8xf32>
    %657 = vector.extract_strided_slice %608 {offsets = [0, 16], sizes = [2, 8], strides = [1, 1]} : vector<2x24xf32> to vector<2x8xf32>
    %658 = vector.extract_strided_slice %604 {offsets = [0, 40], sizes = [2, 8], strides = [1, 1]} : vector<2x48xf32> to vector<2x8xf32>
    %659 = vector.extract_strided_slice %264 {offsets = [0, 8], sizes = [1, 8], strides = [1, 1]} : vector<1x16xf32> to vector<1x8xf32>
    %660 = vector.broadcast %659 : vector<1x8xf32> to vector<2x8xf32>
    %661 = arith.addf %658, %660 : vector<2x8xf32>
    %662 = arith.mulf %646, %661 : vector<2x8xf32>
    %663 = arith.addf %657, %662 : vector<2x8xf32>
    %664 = math.tanh %663 : vector<2x8xf32>
    %cst_270 = arith.constant 1.000000e+00 : f32
    %665 = vector.broadcast %cst_270 : f32 to vector<2x8xf32>
    %666 = arith.subf %665, %628 : vector<2x8xf32>
    %667 = arith.mulf %666, %636 : vector<2x8xf32>
    %668 = vector.extract_strided_slice %603 {offsets = [0, 0], sizes = [2, 8], strides = [1, 1]} : vector<2x16xf32> to vector<2x8xf32>
    %669 = arith.mulf %628, %668 : vector<2x8xf32>
    %670 = arith.addf %667, %669 : vector<2x8xf32>
    %cst_271 = arith.constant 1.000000e+00 : f32
    %671 = vector.broadcast %cst_271 : f32 to vector<2x8xf32>
    %672 = arith.subf %671, %656 : vector<2x8xf32>
    %673 = arith.mulf %672, %664 : vector<2x8xf32>
    %674 = vector.extract_strided_slice %603 {offsets = [0, 8], sizes = [2, 8], strides = [1, 1]} : vector<2x16xf32> to vector<2x8xf32>
    %675 = arith.mulf %656, %674 : vector<2x8xf32>
    %676 = arith.addf %673, %675 : vector<2x8xf32>
    %c0_272 = arith.constant 0 : index
    %c0_273 = arith.constant 0 : index
    %677 = vector.load %arg18[%c0_272, %c0_273] : memref<2x16xf32, #tpu.memory_space<vmem>>, vector<2x8xf32>
    tpu.vector_store %arg18[%c0_272, %c0_273], %670 {strides = array<i32>} : memref<2x16xf32, #tpu.memory_space<vmem>>, vector<2x8xf32>,
    %c0_274 = arith.constant 0 : index
    %c8_275 = arith.constant 8 : index
    %678 = vector.load %arg18[%c0_274, %c8_275] : memref<2x16xf32, #tpu.memory_space<vmem>>, vector<2x8xf32>
    tpu.vector_store %arg18[%c0_274, %c8_275], %676 {strides = array<i32>} : memref<2x16xf32, #tpu.memory_space<vmem>>, vector<2x8xf32>,
    %679 = vector.extract_strided_slice %670 {offsets = [0, 0], sizes = [1, 8], strides = [1, 1]} : vector<2x8xf32> to vector<1x8xf32>
    %c0_276 = arith.constant 0 : index
    %c128_277 = arith.constant 128 : index
    %680 = vector.load %arg19[%c0_276, %c128_277] : memref<1x256xf32, #tpu.memory_space<vmem>>, vector<1x8xf32>
    tpu.vector_store %arg19[%c0_276, %c128_277], %679 {strides = array<i32>} : memref<1x256xf32, #tpu.memory_space<vmem>>, vector<1x8xf32>,
    %681 = vector.extract_strided_slice %676 {offsets = [0, 0], sizes = [1, 8], strides = [1, 1]} : vector<2x8xf32> to vector<1x8xf32>
    %c0_278 = arith.constant 0 : index
    %c104 = arith.constant 104 : index
    %682 = vector.load %arg19[%c0_278, %c104] : memref<1x256xf32, #tpu.memory_space<vmem>>, vector<1x8xf32>
    tpu.vector_store %arg19[%c0_278, %c104], %681 {strides = array<i32>} : memref<1x256xf32, #tpu.memory_space<vmem>>, vector<1x8xf32>,
    %683 = vector.extract_strided_slice %670 {offsets = [1, 0], sizes = [1, 8], strides = [1, 1]} : vector<2x8xf32> to vector<1x8xf32>
    %c0_279 = arith.constant 0 : index
    %c144_280 = arith.constant 144 : index
    %684 = vector.load %arg19[%c0_279, %c144_280] : memref<1x256xf32, #tpu.memory_space<vmem>>, vector<1x8xf32>
    tpu.vector_store %arg19[%c0_279, %c144_280], %683 {strides = array<i32>} : memref<1x256xf32, #tpu.memory_space<vmem>>, vector<1x8xf32>,
    %685 = vector.extract_strided_slice %676 {offsets = [1, 0], sizes = [1, 8], strides = [1, 1]} : vector<2x8xf32> to vector<1x8xf32>
    %c0_281 = arith.constant 0 : index
    %c120 = arith.constant 120 : index
    %686 = vector.load %arg19[%c0_281, %c120] : memref<1x256xf32, #tpu.memory_space<vmem>>, vector<1x8xf32>
    tpu.vector_store %arg19[%c0_281, %c120], %685 {strides = array<i32>} : memref<1x256xf32, #tpu.memory_space<vmem>>, vector<1x8xf32>,
    %c0_282 = arith.constant 0 : index
    %c0_283 = arith.constant 0 : index
    %687 = vector.load %arg18[%c0_282, %c0_283] : memref<2x16xf32, #tpu.memory_space<vmem>>, vector<2x16xf32>
    %cst_284 = arith.constant dense<0.000000e+00> : vector<2x48xf32>
    %688 = tpu.matmul %687, %263, %cst_284 {dimension_numbers = #tpu.dot_dimension_numbers<[1], [0], [0], [1], [0, 0, 1, 1], [], []>} : vector<2x16xf32>, vector<16x48xf32>, vector<2x48xf32> -> vector<2x48xf32>
    %689 = vector.extract_strided_slice %262 {offsets = [0, 5, 0], sizes = [2, 1, 24], strides = [1, 1, 1]} : vector<2x8x48xf32> to vector<2x1x24xf32>
    %690 = vector.shape_cast %689 : vector<2x1x24xf32> to vector<2x24xf32>
    %691 = vector.extract_strided_slice %262 {offsets = [0, 2, 24], sizes = [2, 1, 24], strides = [1, 1, 1]} : vector<2x8x48xf32> to vector<2x1x24xf32>
    %692 = vector.shape_cast %691 : vector<2x1x24xf32> to vector<2x24xf32>
    %693 = vector.extract_strided_slice %690 {offsets = [0, 0], sizes = [2, 8], strides = [1, 1]} : vector<2x24xf32> to vector<2x8xf32>
    %694 = vector.extract_strided_slice %688 {offsets = [0, 0], sizes = [2, 8], strides = [1, 1]} : vector<2x48xf32> to vector<2x8xf32>
    %695 = arith.addf %693, %694 : vector<2x8xf32>
    %cst_285 = arith.constant 5.000000e-01 : f32
    %696 = vector.broadcast %cst_285 : f32 to vector<2x8xf32>
    %697 = arith.mulf %696, %695 : vector<2x8xf32>
    %698 = math.tanh %697 : vector<2x8xf32>
    %cst_286 = arith.constant 1.000000e+00 : f32
    %699 = vector.broadcast %cst_286 : f32 to vector<2x8xf32>
    %700 = arith.addf %698, %699 : vector<2x8xf32>
    %cst_287 = arith.constant 5.000000e-01 : f32
    %701 = vector.broadcast %cst_287 : f32 to vector<2x8xf32>
    %702 = arith.mulf %701, %700 : vector<2x8xf32>
    %703 = vector.extract_strided_slice %690 {offsets = [0, 8], sizes = [2, 8], strides = [1, 1]} : vector<2x24xf32> to vector<2x8xf32>
    %704 = vector.extract_strided_slice %688 {offsets = [0, 8], sizes = [2, 8], strides = [1, 1]} : vector<2x48xf32> to vector<2x8xf32>
    %705 = arith.addf %703, %704 : vector<2x8xf32>
    %cst_288 = arith.constant 5.000000e-01 : f32
    %706 = vector.broadcast %cst_288 : f32 to vector<2x8xf32>
    %707 = arith.mulf %706, %705 : vector<2x8xf32>
    %708 = math.tanh %707 : vector<2x8xf32>
    %cst_289 = arith.constant 1.000000e+00 : f32
    %709 = vector.broadcast %cst_289 : f32 to vector<2x8xf32>
    %710 = arith.addf %708, %709 : vector<2x8xf32>
    %cst_290 = arith.constant 5.000000e-01 : f32
    %711 = vector.broadcast %cst_290 : f32 to vector<2x8xf32>
    %712 = arith.mulf %711, %710 : vector<2x8xf32>
    %713 = vector.extract_strided_slice %690 {offsets = [0, 16], sizes = [2, 8], strides = [1, 1]} : vector<2x24xf32> to vector<2x8xf32>
    %714 = vector.extract_strided_slice %688 {offsets = [0, 16], sizes = [2, 8], strides = [1, 1]} : vector<2x48xf32> to vector<2x8xf32>
    %715 = vector.extract_strided_slice %264 {offsets = [0, 0], sizes = [1, 8], strides = [1, 1]} : vector<1x16xf32> to vector<1x8xf32>
    %716 = vector.broadcast %715 : vector<1x8xf32> to vector<2x8xf32>
    %717 = arith.addf %714, %716 : vector<2x8xf32>
    %718 = arith.mulf %702, %717 : vector<2x8xf32>
    %719 = arith.addf %713, %718 : vector<2x8xf32>
    %720 = math.tanh %719 : vector<2x8xf32>
    %721 = vector.extract_strided_slice %692 {offsets = [0, 0], sizes = [2, 8], strides = [1, 1]} : vector<2x24xf32> to vector<2x8xf32>
    %722 = vector.extract_strided_slice %688 {offsets = [0, 24], sizes = [2, 8], strides = [1, 1]} : vector<2x48xf32> to vector<2x8xf32>
    %723 = arith.addf %721, %722 : vector<2x8xf32>
    %cst_291 = arith.constant 5.000000e-01 : f32
    %724 = vector.broadcast %cst_291 : f32 to vector<2x8xf32>
    %725 = arith.mulf %724, %723 : vector<2x8xf32>
    %726 = math.tanh %725 : vector<2x8xf32>
    %cst_292 = arith.constant 1.000000e+00 : f32
    %727 = vector.broadcast %cst_292 : f32 to vector<2x8xf32>
    %728 = arith.addf %726, %727 : vector<2x8xf32>
    %cst_293 = arith.constant 5.000000e-01 : f32
    %729 = vector.broadcast %cst_293 : f32 to vector<2x8xf32>
    %730 = arith.mulf %729, %728 : vector<2x8xf32>
    %731 = vector.extract_strided_slice %692 {offsets = [0, 8], sizes = [2, 8], strides = [1, 1]} : vector<2x24xf32> to vector<2x8xf32>
    %732 = vector.extract_strided_slice %688 {offsets = [0, 32], sizes = [2, 8], strides = [1, 1]} : vector<2x48xf32> to vector<2x8xf32>
    %733 = arith.addf %731, %732 : vector<2x8xf32>
    %cst_294 = arith.constant 5.000000e-01 : f32
    %734 = vector.broadcast %cst_294 : f32 to vector<2x8xf32>
    %735 = arith.mulf %734, %733 : vector<2x8xf32>
    %736 = math.tanh %735 : vector<2x8xf32>
    %cst_295 = arith.constant 1.000000e+00 : f32
    %737 = vector.broadcast %cst_295 : f32 to vector<2x8xf32>
    %738 = arith.addf %736, %737 : vector<2x8xf32>
    %cst_296 = arith.constant 5.000000e-01 : f32
    %739 = vector.broadcast %cst_296 : f32 to vector<2x8xf32>
    %740 = arith.mulf %739, %738 : vector<2x8xf32>
    %741 = vector.extract_strided_slice %692 {offsets = [0, 16], sizes = [2, 8], strides = [1, 1]} : vector<2x24xf32> to vector<2x8xf32>
    %742 = vector.extract_strided_slice %688 {offsets = [0, 40], sizes = [2, 8], strides = [1, 1]} : vector<2x48xf32> to vector<2x8xf32>
    %743 = vector.extract_strided_slice %264 {offsets = [0, 8], sizes = [1, 8], strides = [1, 1]} : vector<1x16xf32> to vector<1x8xf32>
    %744 = vector.broadcast %743 : vector<1x8xf32> to vector<2x8xf32>
    %745 = arith.addf %742, %744 : vector<2x8xf32>
    %746 = arith.mulf %730, %745 : vector<2x8xf32>
    %747 = arith.addf %741, %746 : vector<2x8xf32>
    %748 = math.tanh %747 : vector<2x8xf32>
    %cst_297 = arith.constant 1.000000e+00 : f32
    %749 = vector.broadcast %cst_297 : f32 to vector<2x8xf32>
    %750 = arith.subf %749, %712 : vector<2x8xf32>
    %751 = arith.mulf %750, %720 : vector<2x8xf32>
    %752 = vector.extract_strided_slice %687 {offsets = [0, 0], sizes = [2, 8], strides = [1, 1]} : vector<2x16xf32> to vector<2x8xf32>
    %753 = arith.mulf %712, %752 : vector<2x8xf32>
    %754 = arith.addf %751, %753 : vector<2x8xf32>
    %cst_298 = arith.constant 1.000000e+00 : f32
    %755 = vector.broadcast %cst_298 : f32 to vector<2x8xf32>
    %756 = arith.subf %755, %740 : vector<2x8xf32>
    %757 = arith.mulf %756, %748 : vector<2x8xf32>
    %758 = vector.extract_strided_slice %687 {offsets = [0, 8], sizes = [2, 8], strides = [1, 1]} : vector<2x16xf32> to vector<2x8xf32>
    %759 = arith.mulf %740, %758 : vector<2x8xf32>
    %760 = arith.addf %757, %759 : vector<2x8xf32>
    %c0_299 = arith.constant 0 : index
    %c0_300 = arith.constant 0 : index
    %761 = vector.load %arg18[%c0_299, %c0_300] : memref<2x16xf32, #tpu.memory_space<vmem>>, vector<2x8xf32>
    tpu.vector_store %arg18[%c0_299, %c0_300], %754 {strides = array<i32>} : memref<2x16xf32, #tpu.memory_space<vmem>>, vector<2x8xf32>,
    %c0_301 = arith.constant 0 : index
    %c8_302 = arith.constant 8 : index
    %762 = vector.load %arg18[%c0_301, %c8_302] : memref<2x16xf32, #tpu.memory_space<vmem>>, vector<2x8xf32>
    tpu.vector_store %arg18[%c0_301, %c8_302], %760 {strides = array<i32>} : memref<2x16xf32, #tpu.memory_space<vmem>>, vector<2x8xf32>,
    %763 = vector.extract_strided_slice %754 {offsets = [0, 0], sizes = [1, 8], strides = [1, 1]} : vector<2x8xf32> to vector<1x8xf32>
    %c0_303 = arith.constant 0 : index
    %c160_304 = arith.constant 160 : index
    %764 = vector.load %arg19[%c0_303, %c160_304] : memref<1x256xf32, #tpu.memory_space<vmem>>, vector<1x8xf32>
    tpu.vector_store %arg19[%c0_303, %c160_304], %763 {strides = array<i32>} : memref<1x256xf32, #tpu.memory_space<vmem>>, vector<1x8xf32>,
    %765 = vector.extract_strided_slice %760 {offsets = [0, 0], sizes = [1, 8], strides = [1, 1]} : vector<2x8xf32> to vector<1x8xf32>
    %c0_305 = arith.constant 0 : index
    %c72 = arith.constant 72 : index
    %766 = vector.load %arg19[%c0_305, %c72] : memref<1x256xf32, #tpu.memory_space<vmem>>, vector<1x8xf32>
    tpu.vector_store %arg19[%c0_305, %c72], %765 {strides = array<i32>} : memref<1x256xf32, #tpu.memory_space<vmem>>, vector<1x8xf32>,
    %767 = vector.extract_strided_slice %754 {offsets = [1, 0], sizes = [1, 8], strides = [1, 1]} : vector<2x8xf32> to vector<1x8xf32>
    %c0_306 = arith.constant 0 : index
    %c176_307 = arith.constant 176 : index
    %768 = vector.load %arg19[%c0_306, %c176_307] : memref<1x256xf32, #tpu.memory_space<vmem>>, vector<1x8xf32>
    tpu.vector_store %arg19[%c0_306, %c176_307], %767 {strides = array<i32>} : memref<1x256xf32, #tpu.memory_space<vmem>>, vector<1x8xf32>,
    %769 = vector.extract_strided_slice %760 {offsets = [1, 0], sizes = [1, 8], strides = [1, 1]} : vector<2x8xf32> to vector<1x8xf32>
    %c0_308 = arith.constant 0 : index
    %c88 = arith.constant 88 : index
    %770 = vector.load %arg19[%c0_308, %c88] : memref<1x256xf32, #tpu.memory_space<vmem>>, vector<1x8xf32>
    tpu.vector_store %arg19[%c0_308, %c88], %769 {strides = array<i32>} : memref<1x256xf32, #tpu.memory_space<vmem>>, vector<1x8xf32>,
    %c0_309 = arith.constant 0 : index
    %c0_310 = arith.constant 0 : index
    %771 = vector.load %arg18[%c0_309, %c0_310] : memref<2x16xf32, #tpu.memory_space<vmem>>, vector<2x16xf32>
    %cst_311 = arith.constant dense<0.000000e+00> : vector<2x48xf32>
    %772 = tpu.matmul %771, %263, %cst_311 {dimension_numbers = #tpu.dot_dimension_numbers<[1], [0], [0], [1], [0, 0, 1, 1], [], []>} : vector<2x16xf32>, vector<16x48xf32>, vector<2x48xf32> -> vector<2x48xf32>
    %773 = vector.extract_strided_slice %262 {offsets = [0, 6, 0], sizes = [2, 1, 24], strides = [1, 1, 1]} : vector<2x8x48xf32> to vector<2x1x24xf32>
    %774 = vector.shape_cast %773 : vector<2x1x24xf32> to vector<2x24xf32>
    %775 = vector.extract_strided_slice %262 {offsets = [0, 1, 24], sizes = [2, 1, 24], strides = [1, 1, 1]} : vector<2x8x48xf32> to vector<2x1x24xf32>
    %776 = vector.shape_cast %775 : vector<2x1x24xf32> to vector<2x24xf32>
    %777 = vector.extract_strided_slice %774 {offsets = [0, 0], sizes = [2, 8], strides = [1, 1]} : vector<2x24xf32> to vector<2x8xf32>
    %778 = vector.extract_strided_slice %772 {offsets = [0, 0], sizes = [2, 8], strides = [1, 1]} : vector<2x48xf32> to vector<2x8xf32>
    %779 = arith.addf %777, %778 : vector<2x8xf32>
    %cst_312 = arith.constant 5.000000e-01 : f32
    %780 = vector.broadcast %cst_312 : f32 to vector<2x8xf32>
    %781 = arith.mulf %780, %779 : vector<2x8xf32>
    %782 = math.tanh %781 : vector<2x8xf32>
    %cst_313 = arith.constant 1.000000e+00 : f32
    %783 = vector.broadcast %cst_313 : f32 to vector<2x8xf32>
    %784 = arith.addf %782, %783 : vector<2x8xf32>
    %cst_314 = arith.constant 5.000000e-01 : f32
    %785 = vector.broadcast %cst_314 : f32 to vector<2x8xf32>
    %786 = arith.mulf %785, %784 : vector<2x8xf32>
    %787 = vector.extract_strided_slice %774 {offsets = [0, 8], sizes = [2, 8], strides = [1, 1]} : vector<2x24xf32> to vector<2x8xf32>
    %788 = vector.extract_strided_slice %772 {offsets = [0, 8], sizes = [2, 8], strides = [1, 1]} : vector<2x48xf32> to vector<2x8xf32>
    %789 = arith.addf %787, %788 : vector<2x8xf32>
    %cst_315 = arith.constant 5.000000e-01 : f32
    %790 = vector.broadcast %cst_315 : f32 to vector<2x8xf32>
    %791 = arith.mulf %790, %789 : vector<2x8xf32>
    %792 = math.tanh %791 : vector<2x8xf32>
    %cst_316 = arith.constant 1.000000e+00 : f32
    %793 = vector.broadcast %cst_316 : f32 to vector<2x8xf32>
    %794 = arith.addf %792, %793 : vector<2x8xf32>
    %cst_317 = arith.constant 5.000000e-01 : f32
    %795 = vector.broadcast %cst_317 : f32 to vector<2x8xf32>
    %796 = arith.mulf %795, %794 : vector<2x8xf32>
    %797 = vector.extract_strided_slice %774 {offsets = [0, 16], sizes = [2, 8], strides = [1, 1]} : vector<2x24xf32> to vector<2x8xf32>
    %798 = vector.extract_strided_slice %772 {offsets = [0, 16], sizes = [2, 8], strides = [1, 1]} : vector<2x48xf32> to vector<2x8xf32>
    %799 = vector.extract_strided_slice %264 {offsets = [0, 0], sizes = [1, 8], strides = [1, 1]} : vector<1x16xf32> to vector<1x8xf32>
    %800 = vector.broadcast %799 : vector<1x8xf32> to vector<2x8xf32>
    %801 = arith.addf %798, %800 : vector<2x8xf32>
    %802 = arith.mulf %786, %801 : vector<2x8xf32>
    %803 = arith.addf %797, %802 : vector<2x8xf32>
    %804 = math.tanh %803 : vector<2x8xf32>
    %805 = vector.extract_strided_slice %776 {offsets = [0, 0], sizes = [2, 8], strides = [1, 1]} : vector<2x24xf32> to vector<2x8xf32>
    %806 = vector.extract_strided_slice %772 {offsets = [0, 24], sizes = [2, 8], strides = [1, 1]} : vector<2x48xf32> to vector<2x8xf32>
    %807 = arith.addf %805, %806 : vector<2x8xf32>
    %cst_318 = arith.constant 5.000000e-01 : f32
    %808 = vector.broadcast %cst_318 : f32 to vector<2x8xf32>
    %809 = arith.mulf %808, %807 : vector<2x8xf32>
    %810 = math.tanh %809 : vector<2x8xf32>
    %cst_319 = arith.constant 1.000000e+00 : f32
    %811 = vector.broadcast %cst_319 : f32 to vector<2x8xf32>
    %812 = arith.addf %810, %811 : vector<2x8xf32>
    %cst_320 = arith.constant 5.000000e-01 : f32
    %813 = vector.broadcast %cst_320 : f32 to vector<2x8xf32>
    %814 = arith.mulf %813, %812 : vector<2x8xf32>
    %815 = vector.extract_strided_slice %776 {offsets = [0, 8], sizes = [2, 8], strides = [1, 1]} : vector<2x24xf32> to vector<2x8xf32>
    %816 = vector.extract_strided_slice %772 {offsets = [0, 32], sizes = [2, 8], strides = [1, 1]} : vector<2x48xf32> to vector<2x8xf32>
    %817 = arith.addf %815, %816 : vector<2x8xf32>
    %cst_321 = arith.constant 5.000000e-01 : f32
    %818 = vector.broadcast %cst_321 : f32 to vector<2x8xf32>
    %819 = arith.mulf %818, %817 : vector<2x8xf32>
    %820 = math.tanh %819 : vector<2x8xf32>
    %cst_322 = arith.constant 1.000000e+00 : f32
    %821 = vector.broadcast %cst_322 : f32 to vector<2x8xf32>
    %822 = arith.addf %820, %821 : vector<2x8xf32>
    %cst_323 = arith.constant 5.000000e-01 : f32
    %823 = vector.broadcast %cst_323 : f32 to vector<2x8xf32>
    %824 = arith.mulf %823, %822 : vector<2x8xf32>
    %825 = vector.extract_strided_slice %776 {offsets = [0, 16], sizes = [2, 8], strides = [1, 1]} : vector<2x24xf32> to vector<2x8xf32>
    %826 = vector.extract_strided_slice %772 {offsets = [0, 40], sizes = [2, 8], strides = [1, 1]} : vector<2x48xf32> to vector<2x8xf32>
    %827 = vector.extract_strided_slice %264 {offsets = [0, 8], sizes = [1, 8], strides = [1, 1]} : vector<1x16xf32> to vector<1x8xf32>
    %828 = vector.broadcast %827 : vector<1x8xf32> to vector<2x8xf32>
    %829 = arith.addf %826, %828 : vector<2x8xf32>
    %830 = arith.mulf %814, %829 : vector<2x8xf32>
    %831 = arith.addf %825, %830 : vector<2x8xf32>
    %832 = math.tanh %831 : vector<2x8xf32>
    %cst_324 = arith.constant 1.000000e+00 : f32
    %833 = vector.broadcast %cst_324 : f32 to vector<2x8xf32>
    %834 = arith.subf %833, %796 : vector<2x8xf32>
    %835 = arith.mulf %834, %804 : vector<2x8xf32>
    %836 = vector.extract_strided_slice %771 {offsets = [0, 0], sizes = [2, 8], strides = [1, 1]} : vector<2x16xf32> to vector<2x8xf32>
    %837 = arith.mulf %796, %836 : vector<2x8xf32>
    %838 = arith.addf %835, %837 : vector<2x8xf32>
    %cst_325 = arith.constant 1.000000e+00 : f32
    %839 = vector.broadcast %cst_325 : f32 to vector<2x8xf32>
    %840 = arith.subf %839, %824 : vector<2x8xf32>
    %841 = arith.mulf %840, %832 : vector<2x8xf32>
    %842 = vector.extract_strided_slice %771 {offsets = [0, 8], sizes = [2, 8], strides = [1, 1]} : vector<2x16xf32> to vector<2x8xf32>
    %843 = arith.mulf %824, %842 : vector<2x8xf32>
    %844 = arith.addf %841, %843 : vector<2x8xf32>
    %c0_326 = arith.constant 0 : index
    %c0_327 = arith.constant 0 : index
    %845 = vector.load %arg18[%c0_326, %c0_327] : memref<2x16xf32, #tpu.memory_space<vmem>>, vector<2x8xf32>
    tpu.vector_store %arg18[%c0_326, %c0_327], %838 {strides = array<i32>} : memref<2x16xf32, #tpu.memory_space<vmem>>, vector<2x8xf32>,
    %c0_328 = arith.constant 0 : index
    %c8_329 = arith.constant 8 : index
    %846 = vector.load %arg18[%c0_328, %c8_329] : memref<2x16xf32, #tpu.memory_space<vmem>>, vector<2x8xf32>
    tpu.vector_store %arg18[%c0_328, %c8_329], %844 {strides = array<i32>} : memref<2x16xf32, #tpu.memory_space<vmem>>, vector<2x8xf32>,
    %847 = vector.extract_strided_slice %838 {offsets = [0, 0], sizes = [1, 8], strides = [1, 1]} : vector<2x8xf32> to vector<1x8xf32>
    %c0_330 = arith.constant 0 : index
    %c192_331 = arith.constant 192 : index
    %848 = vector.load %arg19[%c0_330, %c192_331] : memref<1x256xf32, #tpu.memory_space<vmem>>, vector<1x8xf32>
    tpu.vector_store %arg19[%c0_330, %c192_331], %847 {strides = array<i32>} : memref<1x256xf32, #tpu.memory_space<vmem>>, vector<1x8xf32>,
    %849 = vector.extract_strided_slice %844 {offsets = [0, 0], sizes = [1, 8], strides = [1, 1]} : vector<2x8xf32> to vector<1x8xf32>
    %c0_332 = arith.constant 0 : index
    %c40 = arith.constant 40 : index
    %850 = vector.load %arg19[%c0_332, %c40] : memref<1x256xf32, #tpu.memory_space<vmem>>, vector<1x8xf32>
    tpu.vector_store %arg19[%c0_332, %c40], %849 {strides = array<i32>} : memref<1x256xf32, #tpu.memory_space<vmem>>, vector<1x8xf32>,
    %851 = vector.extract_strided_slice %838 {offsets = [1, 0], sizes = [1, 8], strides = [1, 1]} : vector<2x8xf32> to vector<1x8xf32>
    %c0_333 = arith.constant 0 : index
    %c208_334 = arith.constant 208 : index
    %852 = vector.load %arg19[%c0_333, %c208_334] : memref<1x256xf32, #tpu.memory_space<vmem>>, vector<1x8xf32>
    tpu.vector_store %arg19[%c0_333, %c208_334], %851 {strides = array<i32>} : memref<1x256xf32, #tpu.memory_space<vmem>>, vector<1x8xf32>,
    %853 = vector.extract_strided_slice %844 {offsets = [1, 0], sizes = [1, 8], strides = [1, 1]} : vector<2x8xf32> to vector<1x8xf32>
    %c0_335 = arith.constant 0 : index
    %c56 = arith.constant 56 : index
    %854 = vector.load %arg19[%c0_335, %c56] : memref<1x256xf32, #tpu.memory_space<vmem>>, vector<1x8xf32>
    tpu.vector_store %arg19[%c0_335, %c56], %853 {strides = array<i32>} : memref<1x256xf32, #tpu.memory_space<vmem>>, vector<1x8xf32>,
    %c0_336 = arith.constant 0 : index
    %c0_337 = arith.constant 0 : index
    %855 = vector.load %arg18[%c0_336, %c0_337] : memref<2x16xf32, #tpu.memory_space<vmem>>, vector<2x16xf32>
    %cst_338 = arith.constant dense<0.000000e+00> : vector<2x48xf32>
    %856 = tpu.matmul %855, %263, %cst_338 {dimension_numbers = #tpu.dot_dimension_numbers<[1], [0], [0], [1], [0, 0, 1, 1], [], []>} : vector<2x16xf32>, vector<16x48xf32>, vector<2x48xf32> -> vector<2x48xf32>
    %857 = vector.extract_strided_slice %262 {offsets = [0, 7, 0], sizes = [2, 1, 24], strides = [1, 1, 1]} : vector<2x8x48xf32> to vector<2x1x24xf32>
    %858 = vector.shape_cast %857 : vector<2x1x24xf32> to vector<2x24xf32>
    %859 = vector.extract_strided_slice %262 {offsets = [0, 0, 24], sizes = [2, 1, 24], strides = [1, 1, 1]} : vector<2x8x48xf32> to vector<2x1x24xf32>
    %860 = vector.shape_cast %859 : vector<2x1x24xf32> to vector<2x24xf32>
    %861 = vector.extract_strided_slice %858 {offsets = [0, 0], sizes = [2, 8], strides = [1, 1]} : vector<2x24xf32> to vector<2x8xf32>
    %862 = vector.extract_strided_slice %856 {offsets = [0, 0], sizes = [2, 8], strides = [1, 1]} : vector<2x48xf32> to vector<2x8xf32>
    %863 = arith.addf %861, %862 : vector<2x8xf32>
    %cst_339 = arith.constant 5.000000e-01 : f32
    %864 = vector.broadcast %cst_339 : f32 to vector<2x8xf32>
    %865 = arith.mulf %864, %863 : vector<2x8xf32>
    %866 = math.tanh %865 : vector<2x8xf32>
    %cst_340 = arith.constant 1.000000e+00 : f32
    %867 = vector.broadcast %cst_340 : f32 to vector<2x8xf32>
    %868 = arith.addf %866, %867 : vector<2x8xf32>
    %cst_341 = arith.constant 5.000000e-01 : f32
    %869 = vector.broadcast %cst_341 : f32 to vector<2x8xf32>
    %870 = arith.mulf %869, %868 : vector<2x8xf32>
    %871 = vector.extract_strided_slice %858 {offsets = [0, 8], sizes = [2, 8], strides = [1, 1]} : vector<2x24xf32> to vector<2x8xf32>
    %872 = vector.extract_strided_slice %856 {offsets = [0, 8], sizes = [2, 8], strides = [1, 1]} : vector<2x48xf32> to vector<2x8xf32>
    %873 = arith.addf %871, %872 : vector<2x8xf32>
    %cst_342 = arith.constant 5.000000e-01 : f32
    %874 = vector.broadcast %cst_342 : f32 to vector<2x8xf32>
    %875 = arith.mulf %874, %873 : vector<2x8xf32>
    %876 = math.tanh %875 : vector<2x8xf32>
    %cst_343 = arith.constant 1.000000e+00 : f32
    %877 = vector.broadcast %cst_343 : f32 to vector<2x8xf32>
    %878 = arith.addf %876, %877 : vector<2x8xf32>
    %cst_344 = arith.constant 5.000000e-01 : f32
    %879 = vector.broadcast %cst_344 : f32 to vector<2x8xf32>
    %880 = arith.mulf %879, %878 : vector<2x8xf32>
    %881 = vector.extract_strided_slice %858 {offsets = [0, 16], sizes = [2, 8], strides = [1, 1]} : vector<2x24xf32> to vector<2x8xf32>
    %882 = vector.extract_strided_slice %856 {offsets = [0, 16], sizes = [2, 8], strides = [1, 1]} : vector<2x48xf32> to vector<2x8xf32>
    %883 = vector.extract_strided_slice %264 {offsets = [0, 0], sizes = [1, 8], strides = [1, 1]} : vector<1x16xf32> to vector<1x8xf32>
    %884 = vector.broadcast %883 : vector<1x8xf32> to vector<2x8xf32>
    %885 = arith.addf %882, %884 : vector<2x8xf32>
    %886 = arith.mulf %870, %885 : vector<2x8xf32>
    %887 = arith.addf %881, %886 : vector<2x8xf32>
    %888 = math.tanh %887 : vector<2x8xf32>
    %889 = vector.extract_strided_slice %860 {offsets = [0, 0], sizes = [2, 8], strides = [1, 1]} : vector<2x24xf32> to vector<2x8xf32>
    %890 = vector.extract_strided_slice %856 {offsets = [0, 24], sizes = [2, 8], strides = [1, 1]} : vector<2x48xf32> to vector<2x8xf32>
    %891 = arith.addf %889, %890 : vector<2x8xf32>
    %cst_345 = arith.constant 5.000000e-01 : f32
    %892 = vector.broadcast %cst_345 : f32 to vector<2x8xf32>
    %893 = arith.mulf %892, %891 : vector<2x8xf32>
    %894 = math.tanh %893 : vector<2x8xf32>
    %cst_346 = arith.constant 1.000000e+00 : f32
    %895 = vector.broadcast %cst_346 : f32 to vector<2x8xf32>
    %896 = arith.addf %894, %895 : vector<2x8xf32>
    %cst_347 = arith.constant 5.000000e-01 : f32
    %897 = vector.broadcast %cst_347 : f32 to vector<2x8xf32>
    %898 = arith.mulf %897, %896 : vector<2x8xf32>
    %899 = vector.extract_strided_slice %860 {offsets = [0, 8], sizes = [2, 8], strides = [1, 1]} : vector<2x24xf32> to vector<2x8xf32>
    %900 = vector.extract_strided_slice %856 {offsets = [0, 32], sizes = [2, 8], strides = [1, 1]} : vector<2x48xf32> to vector<2x8xf32>
    %901 = arith.addf %899, %900 : vector<2x8xf32>
    %cst_348 = arith.constant 5.000000e-01 : f32
    %902 = vector.broadcast %cst_348 : f32 to vector<2x8xf32>
    %903 = arith.mulf %902, %901 : vector<2x8xf32>
    %904 = math.tanh %903 : vector<2x8xf32>
    %cst_349 = arith.constant 1.000000e+00 : f32
    %905 = vector.broadcast %cst_349 : f32 to vector<2x8xf32>
    %906 = arith.addf %904, %905 : vector<2x8xf32>
    %cst_350 = arith.constant 5.000000e-01 : f32
    %907 = vector.broadcast %cst_350 : f32 to vector<2x8xf32>
    %908 = arith.mulf %907, %906 : vector<2x8xf32>
    %909 = vector.extract_strided_slice %860 {offsets = [0, 16], sizes = [2, 8], strides = [1, 1]} : vector<2x24xf32> to vector<2x8xf32>
    %910 = vector.extract_strided_slice %856 {offsets = [0, 40], sizes = [2, 8], strides = [1, 1]} : vector<2x48xf32> to vector<2x8xf32>
    %911 = vector.extract_strided_slice %264 {offsets = [0, 8], sizes = [1, 8], strides = [1, 1]} : vector<1x16xf32> to vector<1x8xf32>
    %912 = vector.broadcast %911 : vector<1x8xf32> to vector<2x8xf32>
    %913 = arith.addf %910, %912 : vector<2x8xf32>
    %914 = arith.mulf %898, %913 : vector<2x8xf32>
    %915 = arith.addf %909, %914 : vector<2x8xf32>
    %916 = math.tanh %915 : vector<2x8xf32>
    %cst_351 = arith.constant 1.000000e+00 : f32
    %917 = vector.broadcast %cst_351 : f32 to vector<2x8xf32>
    %918 = arith.subf %917, %880 : vector<2x8xf32>
    %919 = arith.mulf %918, %888 : vector<2x8xf32>
    %920 = vector.extract_strided_slice %855 {offsets = [0, 0], sizes = [2, 8], strides = [1, 1]} : vector<2x16xf32> to vector<2x8xf32>
    %921 = arith.mulf %880, %920 : vector<2x8xf32>
    %922 = arith.addf %919, %921 : vector<2x8xf32>
    %cst_352 = arith.constant 1.000000e+00 : f32
    %923 = vector.broadcast %cst_352 : f32 to vector<2x8xf32>
    %924 = arith.subf %923, %908 : vector<2x8xf32>
    %925 = arith.mulf %924, %916 : vector<2x8xf32>
    %926 = vector.extract_strided_slice %855 {offsets = [0, 8], sizes = [2, 8], strides = [1, 1]} : vector<2x16xf32> to vector<2x8xf32>
    %927 = arith.mulf %908, %926 : vector<2x8xf32>
    %928 = arith.addf %925, %927 : vector<2x8xf32>
    %c0_353 = arith.constant 0 : index
    %c0_354 = arith.constant 0 : index
    %929 = vector.load %arg18[%c0_353, %c0_354] : memref<2x16xf32, #tpu.memory_space<vmem>>, vector<2x8xf32>
    tpu.vector_store %arg18[%c0_353, %c0_354], %922 {strides = array<i32>} : memref<2x16xf32, #tpu.memory_space<vmem>>, vector<2x8xf32>,
    %c0_355 = arith.constant 0 : index
    %c8_356 = arith.constant 8 : index
    %930 = vector.load %arg18[%c0_355, %c8_356] : memref<2x16xf32, #tpu.memory_space<vmem>>, vector<2x8xf32>
    tpu.vector_store %arg18[%c0_355, %c8_356], %928 {strides = array<i32>} : memref<2x16xf32, #tpu.memory_space<vmem>>, vector<2x8xf32>,
    %931 = vector.extract_strided_slice %922 {offsets = [0, 0], sizes = [1, 8], strides = [1, 1]} : vector<2x8xf32> to vector<1x8xf32>
    %c0_357 = arith.constant 0 : index
    %c224_358 = arith.constant 224 : index
    %932 = vector.load %arg19[%c0_357, %c224_358] : memref<1x256xf32, #tpu.memory_space<vmem>>, vector<1x8xf32>
    tpu.vector_store %arg19[%c0_357, %c224_358], %931 {strides = array<i32>} : memref<1x256xf32, #tpu.memory_space<vmem>>, vector<1x8xf32>,
    %933 = vector.extract_strided_slice %928 {offsets = [0, 0], sizes = [1, 8], strides = [1, 1]} : vector<2x8xf32> to vector<1x8xf32>
    %c0_359 = arith.constant 0 : index
    %c8_360 = arith.constant 8 : index
    %934 = vector.load %arg19[%c0_359, %c8_360] : memref<1x256xf32, #tpu.memory_space<vmem>>, vector<1x8xf32>
    tpu.vector_store %arg19[%c0_359, %c8_360], %933 {strides = array<i32>} : memref<1x256xf32, #tpu.memory_space<vmem>>, vector<1x8xf32>,
    %935 = vector.extract_strided_slice %922 {offsets = [1, 0], sizes = [1, 8], strides = [1, 1]} : vector<2x8xf32> to vector<1x8xf32>
    %c0_361 = arith.constant 0 : index
    %c240_362 = arith.constant 240 : index
    %936 = vector.load %arg19[%c0_361, %c240_362] : memref<1x256xf32, #tpu.memory_space<vmem>>, vector<1x8xf32>
    tpu.vector_store %arg19[%c0_361, %c240_362], %935 {strides = array<i32>} : memref<1x256xf32, #tpu.memory_space<vmem>>, vector<1x8xf32>,
    %937 = vector.extract_strided_slice %928 {offsets = [1, 0], sizes = [1, 8], strides = [1, 1]} : vector<2x8xf32> to vector<1x8xf32>
    %c0_363 = arith.constant 0 : index
    %c24_364 = arith.constant 24 : index
    %938 = vector.load %arg19[%c0_363, %c24_364] : memref<1x256xf32, #tpu.memory_space<vmem>>, vector<1x8xf32>
    tpu.vector_store %arg19[%c0_363, %c24_364], %937 {strides = array<i32>} : memref<1x256xf32, #tpu.memory_space<vmem>>, vector<1x8xf32>,
    %c0_365 = arith.constant 0 : index
    %c0_366 = arith.constant 0 : index
    %939 = vector.load %arg19[%c0_365, %c0_366] : memref<1x256xf32, #tpu.memory_space<vmem>>, vector<1x256xf32>
    %c0_367 = arith.constant 0 : index
    %c0_368 = arith.constant 0 : index
    %940 = vector.load %arg11[%c0_367, %c0_368] : memref<256x64xf32, #tpu.memory_space<vmem>>, vector<256x64xf32>
    %cst_369 = arith.constant dense<0.000000e+00> : vector<1x64xf32>
    %941 = tpu.matmul %939, %940, %cst_369 {dimension_numbers = #tpu.dot_dimension_numbers<[1], [0], [0], [1], [0, 0, 1, 1], [], []>} : vector<1x256xf32>, vector<256x64xf32>, vector<1x64xf32> -> vector<1x64xf32>
    %c0_370 = arith.constant 0 : index
    %c0_371 = arith.constant 0 : index
    %942 = vector.load %arg12[%c0_370, %c0_371] : memref<1x64xf32, #tpu.memory_space<vmem>>, vector<1x64xf32>
    %943 = arith.addf %941, %942 : vector<1x64xf32>
    %cst_372 = arith.constant 0.000000e+00 : f32
    %944 = vector.broadcast %cst_372 : f32 to vector<1x64xf32>
    %945 = arith.maximumf %943, %944 : vector<1x64xf32>
    %c0_373 = arith.constant 0 : index
    %c0_374 = arith.constant 0 : index
    %946 = vector.load %arg13[%c0_373, %c0_374] : memref<64x1xf32, #tpu.memory_space<vmem>>, vector<64x1xf32>
    %cst_375 = arith.constant dense<0.000000e+00> : vector<1x1xf32>
    %947 = tpu.matmul %945, %946, %cst_375 {dimension_numbers = #tpu.dot_dimension_numbers<[1], [0], [0], [1], [0, 0, 1, 1], [], []>} : vector<1x64xf32>, vector<64x1xf32>, vector<1x1xf32> -> vector<1x1xf32>
    %c0_376 = arith.constant 0 : index
    %c0_377 = arith.constant 0 : index
    %948 = vector.load %arg14[%c0_376, %c0_377] : memref<1x1xf32, #tpu.memory_space<vmem>>, vector<1x1xf32>
    %949 = arith.addf %947, %948 : vector<1x1xf32>
    %cst_378 = arith.constant 5.000000e-01 : f32
    %950 = vector.broadcast %cst_378 : f32 to vector<1x1xf32>
    %951 = arith.mulf %950, %949 : vector<1x1xf32>
    %952 = math.tanh %951 : vector<1x1xf32>
    %cst_379 = arith.constant 1.000000e+00 : f32
    %953 = vector.broadcast %cst_379 : f32 to vector<1x1xf32>
    %954 = arith.addf %952, %953 : vector<1x1xf32>
    %cst_380 = arith.constant 5.000000e-01 : f32
    %955 = vector.broadcast %cst_380 : f32 to vector<1x1xf32>
    %956 = arith.mulf %955, %954 : vector<1x1xf32>
    %c0_381 = arith.constant 0 : index
    %c0_382 = arith.constant 0 : index
    %957 = vector.load %arg15[%c0_381, %c0_382] : memref<1x1xf32, #tpu.memory_space<vmem>>, vector<1x1xf32>
    tpu.vector_store %arg15[%c0_381, %c0_382], %956 {strides = array<i32>} : memref<1x1xf32, #tpu.memory_space<vmem>>, vector<1x1xf32>,
    return
  }
}

</mosaic_0001>

<llo_original>
// kernel: cnn_gru_forward.1
$region0: #{cnn_gru_forward.1}
  #allocation0 [shape = 'u32[]', space=smem, size = 0x4, offset = 0x4, fixed_abs, tag = 'smem constant byte address 0x4 - core index']
  #allocation1 [shape = 'u32[72,128]{1,0:T(1,128)}', space=vmem, size = 0x9000, scoped, tag = 'internal scratch']
  #allocation2 [shape = 'f32[2,95,16]{2,1,0:T(8,128)}', space=vmem, size = 0x18000, scoped, tag = 'scratch operand']
  #allocation3 [shape = 'f32[128,512]{1,0:T(8,128)}', space=vmem, size = 0x40000, scoped, tag = 'scratch operand']
  #allocation4 [shape = 'f32[2,16]{1,0:T(2,128)}', space=vmem, size = 0x400, scoped, tag = 'scratch operand']
  #allocation5 [shape = 'f32[1,256]{1,0:T(1,128)}', space=vmem, size = 0x400, scoped, tag = 'scratch operand']
  #allocation6 [shape = 'f32[1,1]{1,0:T(1,128)S(1)}', space=vmem, size = 0x200, scoped, tag = 'scoped memory for cnn_gru_forward.1']
  %s0 = inlined_call_operand.vmem [shape: f32[2,64,1], index: 0, kind: input, shape index: {}]
  %s1 = inlined_call_operand.vmem [shape: f32[32,16], index: 1, kind: input, shape index: {}]
  %s2 = inlined_call_operand.vmem [shape: f32[1,16], index: 2, kind: input, shape index: {}]
  %s3 = inlined_call_operand.vmem [shape: f32[512,16], index: 3, kind: input, shape index: {}]
  %s4 = inlined_call_operand.vmem [shape: f32[1,16], index: 4, kind: input, shape index: {}]
  %s5 = inlined_call_operand.vmem [shape: f32[48,32], index: 5, kind: input, shape index: {}]
  %s6 = inlined_call_operand.vmem [shape: f32[1,32], index: 6, kind: input, shape index: {}]
  %s7 = inlined_call_operand.vmem [shape: f32[32,48], index: 7, kind: input, shape index: {}]
  %s8 = inlined_call_operand.vmem [shape: f32[1,48], index: 8, kind: input, shape index: {}]
  %s9 = inlined_call_operand.vmem [shape: f32[16,48], index: 9, kind: input, shape index: {}]
  %s10 = inlined_call_operand.vmem [shape: f32[1,16], index: 10, kind: input, shape index: {}]
  %s11 = inlined_call_operand.vmem [shape: f32[256,64], index: 11, kind: input, shape index: {}]
  %s12 = inlined_call_operand.vmem [shape: f32[1,64], index: 12, kind: input, shape index: {}]
  %s13 = inlined_call_operand.vmem [shape: f32[64,1], index: 13, kind: input, shape index: {}]
  %s14 = inlined_call_operand.<no memory space> [shape: f32[1,1], index: 14, kind: input, shape index: {}]
  %s15 = inlined_call_operand.hbm [shape: f32[1,1], index: 15, kind: output, shape index: {}]
  %s16 = sld [smem:[#allocation0]]
  $region70: #{cnn_gru_forward.1} parent=0
    _
  %s18 = ssub.s32 1, %s16
  %s19 = scalar_select 0, %s18, %s16
  %v20 = vstv %s14
  %21 = vst [vmem:[#allocation6] sm:$0x1] %v20
  $region1: #{cnn_gru_forward.1} parent=0
    #allocation7 [shape = 'u8[512]{0}', space=vmem, size = 0x400, scoped, tag = 'output window, operand 0, single buffered']
    #allocation8 [shape = 's32[1]{0}', space=sflag, size = 0x4, scoped, tag = 'scoped memory for cnn_gru_forward.1']
    %22 = vsyncpa [#allocation8], 0
    // Predicated region
    $region2: #{cnn_gru_forward.1} parent=1 // pred_check
      _
    $region3: #{cnn_gru_forward.1} parent=1 // pred_check_branch
      %24 = sbr.rel (0) target = $region5
    $region4: #{cnn_gru_forward.1} parent=1 // pred_region
      _
    $region5: #{cnn_gru_forward.1} parent=1 // pred_fallthru
      _
    // Predicated region
    $region6: #{cnn_gru_forward.1} parent=1 // pred_check
      _
    $region7: #{cnn_gru_forward.1} parent=1 // pred_check_branch
      %26 = sbr.rel (0) target = $region9
    $region8: #{cnn_gru_forward.1} parent=1 // pred_region
      _
    $region9: #{cnn_gru_forward.1} parent=1 // pred_fallthru
      _
    // Predicated region
    $region10: #{cnn_gru_forward.1} parent=1 // pred_check
      _
    $region11: #{cnn_gru_forward.1} parent=1 // pred_check_branch
      %28 = sbr.rel (0) target = $region13
    $region12: #{cnn_gru_forward.1} parent=1 // pred_region
      _
    $region13: #{cnn_gru_forward.1} parent=1 // pred_fallthru
      _
    // Predicated region
    $region14: #{cnn_gru_forward.1} parent=1 // pred_check
      _
    $region15: #{cnn_gru_forward.1} parent=1 // pred_check_branch
      %30 = sbr.rel (0) target = $region17
    $region16: #{cnn_gru_forward.1} parent=1 // pred_region
      _
    $region17: #{cnn_gru_forward.1} parent=1 // pred_fallthru
      _
    // Predicated region
    $region18: #{cnn_gru_forward.1} parent=1 // pred_check
      _
    $region19: #{cnn_gru_forward.1} parent=1 // pred_check_branch
      %32 = sbr.rel (0) target = $region21
    $region20: #{cnn_gru_forward.1} parent=1 // pred_region
      _
    $region21: #{cnn_gru_forward.1} parent=1 // pred_fallthru
      _
    // Predicated region
    $region22: #{cnn_gru_forward.1} parent=1 // pred_check
      _
    $region23: #{cnn_gru_forward.1} parent=1 // pred_check_branch
      %34 = sbr.rel (0) target = $region25
    $region24: #{cnn_gru_forward.1} parent=1 // pred_region
      _
    $region25: #{cnn_gru_forward.1} parent=1 // pred_fallthru
      _
    // Predicated region
    $region26: #{cnn_gru_forward.1} parent=1 // pred_check
      _
    $region27: #{cnn_gru_forward.1} parent=1 // pred_check_branch
      %36 = sbr.rel (0) target = $region29
    $region28: #{cnn_gru_forward.1} parent=1 // pred_region
      _
    $region29: #{cnn_gru_forward.1} parent=1 // pred_fallthru
      _
    // Predicated region
    $region30: #{cnn_gru_forward.1} parent=1 // pred_check
      _
    $region31: #{cnn_gru_forward.1} parent=1 // pred_check_branch
      %38 = sbr.rel (0) target = $region33
    $region32: #{cnn_gru_forward.1} parent=1 // pred_region
      _
    $region33: #{cnn_gru_forward.1} parent=1 // pred_fallthru
      _
    // Predicated region
    $region34: #{cnn_gru_forward.1} parent=1 // pred_check
      _
    $region35: #{cnn_gru_forward.1} parent=1 // pred_check_branch
      %40 = sbr.rel (0) target = $region37
    $region36: #{cnn_gru_forward.1} parent=1 // pred_region
      _
    $region37: #{cnn_gru_forward.1} parent=1 // pred_fallthru
      _
    // Predicated region
    $region38: #{cnn_gru_forward.1} parent=1 // pred_check
      _
    $region39: #{cnn_gru_forward.1} parent=1 // pred_check_branch
      %42 = sbr.rel (0) target = $region41
    $region40: #{cnn_gru_forward.1} parent=1 // pred_region
      _
    $region41: #{cnn_gru_forward.1} parent=1 // pred_fallthru
      _
    // Predicated region
    $region42: #{cnn_gru_forward.1} parent=1 // pred_check
      _
    $region43: #{cnn_gru_forward.1} parent=1 // pred_check_branch
      %44 = sbr.rel (0) target = $region45
    $region44: #{cnn_gru_forward.1} parent=1 // pred_region
      _
    $region45: #{cnn_gru_forward.1} parent=1 // pred_fallthru
      _
    // Predicated region
    $region46: #{cnn_gru_forward.1} parent=1 // pred_check
      _
    $region47: #{cnn_gru_forward.1} parent=1 // pred_check_branch
      %46 = sbr.rel (0) target = $region49
    $region48: #{cnn_gru_forward.1} parent=1 // pred_region
      _
    $region49: #{cnn_gru_forward.1} parent=1 // pred_fallthru
      _
    // Predicated region
    $region50: #{cnn_gru_forward.1} parent=1 // pred_check
      _
    $region51: #{cnn_gru_forward.1} parent=1 // pred_check_branch
      %48 = sbr.rel (0) target = $region53
    $region52: #{cnn_gru_forward.1} parent=1 // pred_region
      _
    $region53: #{cnn_gru_forward.1} parent=1 // pred_fallthru
      _
    // Predicated region
    $region54: #{cnn_gru_forward.1} parent=1 // pred_check
      _
    $region55: #{cnn_gru_forward.1} parent=1 // pred_check_branch
      %50 = sbr.rel (0) target = $region57
    $region56: #{cnn_gru_forward.1} parent=1 // pred_region
      _
    $region57: #{cnn_gru_forward.1} parent=1 // pred_fallthru
      _
    // Predicated region
    $region58: #{cnn_gru_forward.1} parent=1 // pred_check
      _
    $region59: #{cnn_gru_forward.1} parent=1 // pred_check_branch
      %52 = sbr.rel (0) target = $region61
    $region60: #{cnn_gru_forward.1} parent=1 // pred_region
      _
    $region61: #{cnn_gru_forward.1} parent=1 // pred_fallthru
      _
    %v53 = vld [vmem:[%s0] sm:$0xff]
    %v54 = vld [vmem:[%s0 + $0x8] sm:$0xff]
    %v55 = vld [vmem:[%s0 + $0x10] sm:$0xff]
    %v56 = vld [vmem:[%s0 + $0x18] sm:$0xff]
    %v57 = vld [vmem:[%s0 + $0x20] sm:$0xff]
    %v58 = vld [vmem:[%s0 + $0x28] sm:$0xff]
    %v59 = vld [vmem:[%s0 + $0x30] sm:$0xff]
    %v60 = vld [vmem:[%s0 + $0x38] sm:$0xff]
    %v61 = vld [vmem:[%s0 + $0x40] sm:$0xff]
    %v62 = vld [vmem:[%s0 + $0x48] sm:$0xff]
    %v63 = vld [vmem:[%s0 + $0x50] sm:$0xff]
    %v64 = vld [vmem:[%s0 + $0x58] sm:$0xff]
    %v65 = vld [vmem:[%s0 + $0x60] sm:$0xff]
    %v66 = vld [vmem:[%s0 + $0x68] sm:$0xff]
    %v67 = vld [vmem:[%s0 + $0x70] sm:$0xff]
    %v68 = vld [vmem:[%s0 + $0x78] sm:$0xff]
    %vm69 = vcmask 7168
    %70 = vst.msk [vmem:[#allocation2] sm:$0xff] %vm69, 0.0
    %vm71 = vcmask 6144
    %72 = vst.msk [vmem:[#allocation2 + $0x8] sm:$0x7f] %vm71, 0.0
    %73 = vst.msk [vmem:[#allocation2 + $0x60] sm:$0xff] %vm69, 0.0
    %74 = vst.msk [vmem:[#allocation2 + $0x68] sm:$0x7f] %vm71, 0.0
    %75 = vst.msk [vmem:[#allocation2 + $0x4f] sm:$0xff] %vm69, 0.0
    %76 = vst.msk [vmem:[#allocation2 + $0x57] sm:$0xff] %vm69, 0.0
    %77 = vst.msk [vmem:[#allocation2 + $0xaf] sm:$0xff] %vm69, 0.0
    %78 = vst.msk [vmem:[#allocation2 + $0xb7] sm:$0xff] %vm69, 0.0
    %79 = vst.msk [vmem:[#allocation2 + $0xf] sm:$0xff] %vm69, %v53
    %80 = vst.msk [vmem:[#allocation2 + $0x17] sm:$0xff] %vm69, %v54
    %81 = vst.msk [vmem:[#allocation2 + $0x1f] sm:$0xff] %vm69, %v55
    %82 = vst.msk [vmem:[#allocation2 + $0x27] sm:$0xff] %vm69, %v56
    %83 = vst.msk [vmem:[#allocation2 + $0x2f] sm:$0xff] %vm69, %v57
    %84 = vst.msk [vmem:[#allocation2 + $0x37] sm:$0xff] %vm69, %v58
    %85 = vst.msk [vmem:[#allocation2 + $0x3f] sm:$0xff] %vm69, %v59
    %86 = vst.msk [vmem:[#allocation2 + $0x47] sm:$0xff] %vm69, %v60
    %87 = vst.msk [vmem:[#allocation2 + $0x6f] sm:$0xff] %vm69, %v61
    %88 = vst.msk [vmem:[#allocation2 + $0x77] sm:$0xff] %vm69, %v62
    %89 = vst.msk [vmem:[#allocation2 + $0x7f] sm:$0xff] %vm69, %v63
    %90 = vst.msk [vmem:[#allocation2 + $0x87] sm:$0xff] %vm69, %v64
    %91 = vst.msk [vmem:[#allocation2 + $0x8f] sm:$0xff] %vm69, %v65
    %92 = vst.msk [vmem:[#allocation2 + $0x97] sm:$0xff] %vm69, %v66
    %93 = vst.msk [vmem:[#allocation2 + $0x9f] sm:$0xff] %vm69, %v67
    %94 = vst.msk [vmem:[#allocation2 + $0xa7] sm:$0xff] %vm69, %v68
    %v95 = vld [vmem:[#allocation2] sm:$0xff]
    %v96 = vld [vmem:[#allocation2 + $0x8] sm:$0xff]
    %v97 = vld [vmem:[#allocation2 + $0x10] sm:$0xff]
    %v98 = vld [vmem:[#allocation2 + $0x18] sm:$0xff]
    %v99 = vld [vmem:[#allocation2 + $0x20] sm:$0xff]
    %v100 = vld [vmem:[#allocation2 + $0x28] sm:$0xff]
    %v101 = vld [vmem:[#allocation2 + $0x30] sm:$0xff]
    %v102 = vld [vmem:[#allocation2 + $0x38] sm:$0xff]
    %v103 = vld [vmem:[#allocation2 + $0x40] sm:$0xff]
    %v104 = vld [vmem:[#allocation2 + $0x48] sm:$0xff]
    %v105 = vld [vmem:[#allocation2 + $0x50] sm:$0xff]
    %v106 = vld [vmem:[#allocation2 + $0x58] sm:$0x7f]
    %v107 = vld [vmem:[#allocation2 + $0x60] sm:$0xff]
    %v108 = vld [vmem:[#allocation2 + $0x68] sm:$0xff]
    %v109 = vld [vmem:[#allocation2 + $0x70] sm:$0xff]
    %v110 = vld [vmem:[#allocation2 + $0x78] sm:$0xff]
    %v111 = vld [vmem:[#allocation2 + $0x80] sm:$0xff]
    %v112 = vld [vmem:[#allocation2 + $0x88] sm:$0xff]
    %v113 = vld [vmem:[#allocation2 + $0x90] sm:$0xff]
    %v114 = vld [vmem:[#allocation2 + $0x98] sm:$0xff]
    %v115 = vld [vmem:[#allocation2 + $0xa0] sm:$0xff]
    %v116 = vld [vmem:[#allocation2 + $0xa8] sm:$0xff]
    %v117 = vld [vmem:[#allocation2 + $0xb0] sm:$0xff]
    %v118 = vld [vmem:[#allocation2 + $0xb8] sm:$0x7f]
    %119 = vst.msk [vmem:[#allocation3] sm:$0xff] %vm69, %v95
    %120 = vst.msk [vmem:[#allocation3 + $0x20] sm:$0xff] %vm69, %v96
    %121 = vst.msk [vmem:[#allocation3 + $0x40] sm:$0xff] %vm69, %v97
    %122 = vst.msk [vmem:[#allocation3 + $0x60] sm:$0xff] %vm69, %v98
    %123 = vst.msk [vmem:[#allocation3 + $0x80] sm:$0xff] %vm69, %v99
    %124 = vst.msk [vmem:[#allocation3 + $0xa0] sm:$0xff] %vm69, %v100
    %125 = vst.msk [vmem:[#allocation3 + $0xc0] sm:$0xff] %vm69, %v101
    %126 = vst.msk [vmem:[#allocation3 + $0xe0] sm:$0xff] %vm69, %v102
    %127 = vst.msk [vmem:[#allocation3 + $0x100] sm:$0xff] %vm69, %v107
    %128 = vst.msk [vmem:[#allocation3 + $0x120] sm:$0xff] %vm69, %v108
    %129 = vst.msk [vmem:[#allocation3 + $0x140] sm:$0xff] %vm69, %v109
    %130 = vst.msk [vmem:[#allocation3 + $0x160] sm:$0xff] %vm69, %v110
    %131 = vst.msk [vmem:[#allocation3 + $0x180] sm:$0xff] %vm69, %v111
    %132 = vst.msk [vmem:[#allocation3 + $0x1a0] sm:$0xff] %vm69, %v112
    %133 = vst.msk [vmem:[#allocation3 + $0x1c0] sm:$0xff] %vm69, %v113
    %134 = vst.msk [vmem:[#allocation3 + $0x1e0] sm:$0xff] %vm69, %v114
    %vm153 = vcmask 1046528
    %v154 = vrot.slane %v95, 1
    %v155 = vrot.slane %v96, 1
    %v156 = vsel %vm153, %v154, %v155
    %v157 = vrot.slane %v97, 1
    %v158 = vsel %vm153, %v155, %v157
    %v159 = vrot.slane %v98, 1
    %v160 = vsel %vm153, %v157, %v159
    %v161 = vrot.slane %v99, 1
    %v162 = vsel %vm153, %v159, %v161
    %v163 = vrot.slane %v100, 1
    %v164 = vsel %vm153, %v161, %v163
    %v165 = vrot.slane %v101, 1
    %v166 = vsel %vm153, %v163, %v165
    %v167 = vrot.slane %v102, 1
    %v168 = vsel %vm153, %v165, %v167
    %v169 = vrot.slane %v103, 1
    %v170 = vsel %vm153, %v167, %v169
    %v171 = vrot.slane %v107, 1
    %v172 = vrot.slane %v108, 1
    %v173 = vsel %vm153, %v171, %v172
    %v174 = vrot.slane %v109, 1
    %v175 = vsel %vm153, %v172, %v174
    %v176 = vrot.slane %v110, 1
    %v177 = vsel %vm153, %v174, %v176
    %v178 = vrot.slane %v111, 1
    %v179 = vsel %vm153, %v176, %v178
    %v180 = vrot.slane %v112, 1
    %v181 = vsel %vm153, %v178, %v180
    %v182 = vrot.slane %v113, 1
    %v183 = vsel %vm153, %v180, %v182
    %v184 = vrot.slane %v114, 1
    %v185 = vsel %vm153, %v182, %v184
    %v186 = vrot.slane %v115, 1
    %v187 = vsel %vm153, %v184, %v186
    %188 = vrot.lane.b32.xlu0 %v156, 1
    %v189 = vpop.permute.xlu0 %188
    %190 = vrot.lane.b32.xlu0 %v158, 1
    %v191 = vpop.permute.xlu0 %190
    %192 = vrot.lane.b32.xlu0 %v160, 1
    %v193 = vpop.permute.xlu0 %192
    %194 = vrot.lane.b32.xlu0 %v162, 1
    %v195 = vpop.permute.xlu0 %194
    %196 = vrot.lane.b32.xlu0 %v164, 1
    %v197 = vpop.permute.xlu0 %196
    %198 = vrot.lane.b32.xlu0 %v166, 1
    %v199 = vpop.permute.xlu0 %198
    %200 = vrot.lane.b32.xlu0 %v168, 1
    %v201 = vpop.permute.xlu0 %200
    %202 = vrot.lane.b32.xlu0 %v170, 1
    %v203 = vpop.permute.xlu0 %202
    %204 = vrot.lane.b32.xlu0 %v173, 1
    %v205 = vpop.permute.xlu0 %204
    %206 = vrot.lane.b32.xlu0 %v175, 1
    %v207 = vpop.permute.xlu0 %206
    %208 = vrot.lane.b32.xlu0 %v177, 1
    %v209 = vpop.permute.xlu0 %208
    %210 = vrot.lane.b32.xlu0 %v179, 1
    %v211 = vpop.permute.xlu0 %210
    %212 = vrot.lane.b32.xlu0 %v181, 1
    %v213 = vpop.permute.xlu0 %212
    %214 = vrot.lane.b32.xlu0 %v183, 1
    %v215 = vpop.permute.xlu0 %214
    %216 = vrot.lane.b32.xlu0 %v185, 1
    %v217 = vpop.permute.xlu0 %216
    %218 = vrot.lane.b32.xlu0 %v187, 1
    %v219 = vpop.permute.xlu0 %218
    %vm236 = vcmask 15368
    %237 = vst.msk [vmem:[#allocation3] sm:$0xff] %vm236, %v189
    %238 = vst.msk [vmem:[#allocation3 + $0x20] sm:$0xff] %vm236, %v191
    %239 = vst.msk [vmem:[#allocation3 + $0x40] sm:$0xff] %vm236, %v193
    %240 = vst.msk [vmem:[#allocation3 + $0x60] sm:$0xff] %vm236, %v195
    %241 = vst.msk [vmem:[#allocation3 + $0x80] sm:$0xff] %vm236, %v197
    %242 = vst.msk [vmem:[#allocation3 + $0xa0] sm:$0xff] %vm236, %v199
    %243 = vst.msk [vmem:[#allocation3 + $0xc0] sm:$0xff] %vm236, %v201
    %244 = vst.msk [vmem:[#allocation3 + $0xe0] sm:$0xff] %vm236, %v203
    %245 = vst.msk [vmem:[#allocation3 + $0x100] sm:$0xff] %vm236, %v205
    %246 = vst.msk [vmem:[#allocation3 + $0x120] sm:$0xff] %vm236, %v207
    %247 = vst.msk [vmem:[#allocation3 + $0x140] sm:$0xff] %vm236, %v209
    %248 = vst.msk [vmem:[#allocation3 + $0x160] sm:$0xff] %vm236, %v211
    %249 = vst.msk [vmem:[#allocation3 + $0x180] sm:$0xff] %vm236, %v213
    %250 = vst.msk [vmem:[#allocation3 + $0x1a0] sm:$0xff] %vm236, %v215
    %251 = vst.msk [vmem:[#allocation3 + $0x1c0] sm:$0xff] %vm236, %v217
    %252 = vst.msk [vmem:[#allocation3 + $0x1e0] sm:$0xff] %vm236, %v219
    %vm253 = vcmask 1045504
    %v254 = vrot.slane %v95, 2
    %v255 = vrot.slane %v96, 2
    %v256 = vsel %vm253, %v254, %v255
    %v257 = vrot.slane %v97, 2
    %v258 = vsel %vm253, %v255, %v257
    %v259 = vrot.slane %v98, 2
    %v260 = vsel %vm253, %v257, %v259
    %v261 = vrot.slane %v99, 2
    %v262 = vsel %vm253, %v259, %v261
    %v263 = vrot.slane %v100, 2
    %v264 = vsel %vm253, %v261, %v263
    %v265 = vrot.slane %v101, 2
    %v266 = vsel %vm253, %v263, %v265
    %v267 = vrot.slane %v102, 2
    %v268 = vsel %vm253, %v265, %v267
    %v269 = vrot.slane %v103, 2
    %v270 = vsel %vm253, %v267, %v269
    %v271 = vrot.slane %v107, 2
    %v272 = vrot.slane %v108, 2
    %v273 = vsel %vm253, %v271, %v272
    %v274 = vrot.slane %v109, 2
    %v275 = vsel %vm253, %v272, %v274
    %v276 = vrot.slane %v110, 2
    %v277 = vsel %vm253, %v274, %v276
    %v278 = vrot.slane %v111, 2
    %v279 = vsel %vm253, %v276, %v278
    %v280 = vrot.slane %v112, 2
    %v281 = vsel %vm253, %v278, %v280
    %v282 = vrot.slane %v113, 2
    %v283 = vsel %vm253, %v280, %v282
    %v284 = vrot.slane %v114, 2
    %v285 = vsel %vm253, %v282, %v284
    %v286 = vrot.slane %v115, 2
    %v287 = vsel %vm253, %v284, %v286
    %288 = vrot.lane.b32.xlu0 %v256, 2
    %v289 = vpop.permute.xlu0 %288
    %290 = vrot.lane.b32.xlu0 %v258, 2
    %v291 = vpop.permute.xlu0 %290
    %292 = vrot.lane.b32.xlu0 %v260, 2
    %v293 = vpop.permute.xlu0 %292
    %294 = vrot.lane.b32.xlu0 %v262, 2
    %v295 = vpop.permute.xlu0 %294
    %296 = vrot.lane.b32.xlu0 %v264, 2
    %v297 = vpop.permute.xlu0 %296
    %298 = vrot.lane.b32.xlu0 %v266, 2
    %v299 = vpop.permute.xlu0 %298
    %300 = vrot.lane.b32.xlu0 %v268, 2
    %v301 = vpop.permute.xlu0 %300
    %302 = vrot.lane.b32.xlu0 %v270, 2
    %v303 = vpop.permute.xlu0 %302
    %304 = vrot.lane.b32.xlu0 %v273, 2
    %v305 = vpop.permute.xlu0 %304
    %306 = vrot.lane.b32.xlu0 %v275, 2
    %v307 = vpop.permute.xlu0 %306
    %308 = vrot.lane.b32.xlu0 %v277, 2
    %v309 = vpop.permute.xlu0 %308
    %310 = vrot.lane.b32.xlu0 %v279, 2
    %v311 = vpop.permute.xlu0 %310
    %312 = vrot.lane.b32.xlu0 %v281, 2
    %v313 = vpop.permute.xlu0 %312
    %314 = vrot.lane.b32.xlu0 %v283, 2
    %v315 = vpop.permute.xlu0 %314
    %316 = vrot.lane.b32.xlu0 %v285, 2
    %v317 = vpop.permute.xlu0 %316
    %318 = vrot.lane.b32.xlu0 %v287, 2
    %v319 = vpop.permute.xlu0 %318
    %vm336 = vcmask 23568
    %337 = vst.msk [vmem:[#allocation3] sm:$0xff] %vm336, %v289
    %338 = vst.msk [vmem:[#allocation3 + $0x20] sm:$0xff] %vm336, %v291
    %339 = vst.msk [vmem:[#allocation3 + $0x40] sm:$0xff] %vm336, %v293
    %340 = vst.msk [vmem:[#allocation3 + $0x60] sm:$0xff] %vm336, %v295
    %341 = vst.msk [vmem:[#allocation3 + $0x80] sm:$0xff] %vm336, %v297
    %342 = vst.msk [vmem:[#allocation3 + $0xa0] sm:$0xff] %vm336, %v299
    %343 = vst.msk [vmem:[#allocation3 + $0xc0] sm:$0xff] %vm336, %v301
    %344 = vst.msk [vmem:[#allocation3 + $0xe0] sm:$0xff] %vm336, %v303
    %345 = vst.msk [vmem:[#allocation3 + $0x100] sm:$0xff] %vm336, %v305
    %346 = vst.msk [vmem:[#allocation3 + $0x120] sm:$0xff] %vm336, %v307
    %347 = vst.msk [vmem:[#allocation3 + $0x140] sm:$0xff] %vm336, %v309
    %348 = vst.msk [vmem:[#allocation3 + $0x160] sm:$0xff] %vm336, %v311
    %349 = vst.msk [vmem:[#allocation3 + $0x180] sm:$0xff] %vm336, %v313
    %350 = vst.msk [vmem:[#allocation3 + $0x1a0] sm:$0xff] %vm336, %v315
    %351 = vst.msk [vmem:[#allocation3 + $0x1c0] sm:$0xff] %vm336, %v317
    %352 = vst.msk [vmem:[#allocation3 + $0x1e0] sm:$0xff] %vm336, %v319
    %vm353 = vcmask 1044480
    %v354 = vrot.slane %v95, 3
    %v355 = vrot.slane %v96, 3
    %v356 = vsel %vm353, %v354, %v355
    %v357 = vrot.slane %v97, 3
    %v358 = vsel %vm353, %v355, %v357
    %v359 = vrot.slane %v98, 3
    %v360 = vsel %vm353, %v357, %v359
    %v361 = vrot.slane %v99, 3
    %v362 = vsel %vm353, %v359, %v361
    %v363 = vrot.slane %v100, 3
    %v364 = vsel %vm353, %v361, %v363
    %v365 = vrot.slane %v101, 3
    %v366 = vsel %vm353, %v363, %v365
    %v367 = vrot.slane %v102, 3
    %v368 = vsel %vm353, %v365, %v367
    %v369 = vrot.slane %v103, 3
    %v370 = vsel %vm353, %v367, %v369
    %v371 = vrot.slane %v107, 3
    %v372 = vrot.slane %v108, 3
    %v373 = vsel %vm353, %v371, %v372
    %v374 = vrot.slane %v109, 3
    %v375 = vsel %vm353, %v372, %v374
    %v376 = vrot.slane %v110, 3
    %v377 = vsel %vm353, %v374, %v376
    %v378 = vrot.slane %v111, 3
    %v379 = vsel %vm353, %v376, %v378
    %v380 = vrot.slane %v112, 3
    %v381 = vsel %vm353, %v378, %v380
    %v382 = vrot.slane %v113, 3
    %v383 = vsel %vm353, %v380, %v382
    %v384 = vrot.slane %v114, 3
    %v385 = vsel %vm353, %v382, %v384
    %v386 = vrot.slane %v115, 3
    %v387 = vsel %vm353, %v384, %v386
    %388 = vrot.lane.b32.xlu0 %v356, 3
    %v389 = vpop.permute.xlu0 %388
    %390 = vrot.lane.b32.xlu0 %v358, 3
    %v391 = vpop.permute.xlu0 %390
    %392 = vrot.lane.b32.xlu0 %v360, 3
    %v393 = vpop.permute.xlu0 %392
    %394 = vrot.lane.b32.xlu0 %v362, 3
    %v395 = vpop.permute.xlu0 %394
    %396 = vrot.lane.b32.xlu0 %v364, 3
    %v397 = vpop.permute.xlu0 %396
    %398 = vrot.lane.b32.xlu0 %v366, 3
    %v399 = vpop.permute.xlu0 %398
    %400 = vrot.lane.b32.xlu0 %v368, 3
    %v401 = vpop.permute.xlu0 %400
    %402 = vrot.lane.b32.xlu0 %v370, 3
    %v403 = vpop.permute.xlu0 %402
    %404 = vrot.lane.b32.xlu0 %v373, 3
    %v405 = vpop.permute.xlu0 %404
    %406 = vrot.lane.b32.xlu0 %v375, 3
    %v407 = vpop.permute.xlu0 %406
    %408 = vrot.lane.b32.xlu0 %v377, 3
    %v409 = vpop.permute.xlu0 %408
    %410 = vrot.lane.b32.xlu0 %v379, 3
    %v411 = vpop.permute.xlu0 %410
    %412 = vrot.lane.b32.xlu0 %v381, 3
    %v413 = vpop.permute.xlu0 %412
    %414 = vrot.lane.b32.xlu0 %v383, 3
    %v415 = vpop.permute.xlu0 %414
    %416 = vrot.lane.b32.xlu0 %v385, 3
    %v417 = vpop.permute.xlu0 %416
    %418 = vrot.lane.b32.xlu0 %v387, 3
    %v419 = vpop.permute.xlu0 %418
    %vm436 = vcmask 31768
    %437 = vst.msk [vmem:[#allocation3] sm:$0xff] %vm436, %v389
    %438 = vst.msk [vmem:[#allocation3 + $0x20] sm:$0xff] %vm436, %v391
    %439 = vst.msk [vmem:[#allocation3 + $0x40] sm:$0xff] %vm436, %v393
    %440 = vst.msk [vmem:[#allocation3 + $0x60] sm:$0xff] %vm436, %v395
    %441 = vst.msk [vmem:[#allocation3 + $0x80] sm:$0xff] %vm436, %v397
    %442 = vst.msk [vmem:[#allocation3 + $0xa0] sm:$0xff] %vm436, %v399
    %443 = vst.msk [vmem:[#allocation3 + $0xc0] sm:$0xff] %vm436, %v401
    %444 = vst.msk [vmem:[#allocation3 + $0xe0] sm:$0xff] %vm436, %v403
    %445 = vst.msk [vmem:[#allocation3 + $0x100] sm:$0xff] %vm436, %v405
    %446 = vst.msk [vmem:[#allocation3 + $0x120] sm:$0xff] %vm436, %v407
    %447 = vst.msk [vmem:[#allocation3 + $0x140] sm:$0xff] %vm436, %v409
    %448 = vst.msk [vmem:[#allocation3 + $0x160] sm:$0xff] %vm436, %v411
    %449 = vst.msk [vmem:[#allocation3 + $0x180] sm:$0xff] %vm436, %v413
    %450 = vst.msk [vmem:[#allocation3 + $0x1a0] sm:$0xff] %vm436, %v415
    %451 = vst.msk [vmem:[#allocation3 + $0x1c0] sm:$0xff] %vm436, %v417
    %452 = vst.msk [vmem:[#allocation3 + $0x1e0] sm:$0xff] %vm436, %v419
    %vm453 = vcmask 1043456
    %v454 = vrot.slane %v95, 4
    %v455 = vrot.slane %v96, 4
    %v456 = vsel %vm453, %v454, %v455
    %v457 = vrot.slane %v97, 4
    %v458 = vsel %vm453, %v455, %v457
    %v459 = vrot.slane %v98, 4
    %v460 = vsel %vm453, %v457, %v459
    %v461 = vrot.slane %v99, 4
    %v462 = vsel %vm453, %v459, %v461
    %v463 = vrot.slane %v100, 4
    %v464 = vsel %vm453, %v461, %v463
    %v465 = vrot.slane %v101, 4
    %v466 = vsel %vm453, %v463, %v465
    %v467 = vrot.slane %v102, 4
    %v468 = vsel %vm453, %v465, %v467
    %v469 = vrot.slane %v103, 4
    %v470 = vsel %vm453, %v467, %v469
    %v471 = vrot.slane %v107, 4
    %v472 = vrot.slane %v108, 4
    %v473 = vsel %vm453, %v471, %v472
    %v474 = vrot.slane %v109, 4
    %v475 = vsel %vm453, %v472, %v474
    %v476 = vrot.slane %v110, 4
    %v477 = vsel %vm453, %v474, %v476
    %v478 = vrot.slane %v111, 4
    %v479 = vsel %vm453, %v476, %v478
    %v480 = vrot.slane %v112, 4
    %v481 = vsel %vm453, %v478, %v480
    %v482 = vrot.slane %v113, 4
    %v483 = vsel %vm453, %v480, %v482
    %v484 = vrot.slane %v114, 4
    %v485 = vsel %vm453, %v482, %v484
    %v486 = vrot.slane %v115, 4
    %v487 = vsel %vm453, %v484, %v486
    %488 = vrot.lane.b32.xlu0 %v456, 4
    %v489 = vpop.permute.xlu0 %488
    %490 = vrot.lane.b32.xlu0 %v458, 4
    %v491 = vpop.permute.xlu0 %490
    %492 = vrot.lane.b32.xlu0 %v460, 4
    %v493 = vpop.permute.xlu0 %492
    %494 = vrot.lane.b32.xlu0 %v462, 4
    %v495 = vpop.permute.xlu0 %494
    %496 = vrot.lane.b32.xlu0 %v464, 4
    %v497 = vpop.permute.xlu0 %496
    %498 = vrot.lane.b32.xlu0 %v466, 4
    %v499 = vpop.permute.xlu0 %498
    %500 = vrot.lane.b32.xlu0 %v468, 4
    %v501 = vpop.permute.xlu0 %500
    %502 = vrot.lane.b32.xlu0 %v470, 4
    %v503 = vpop.permute.xlu0 %502
    %504 = vrot.lane.b32.xlu0 %v473, 4
    %v505 = vpop.permute.xlu0 %504
    %506 = vrot.lane.b32.xlu0 %v475, 4
    %v507 = vpop.permute.xlu0 %506
    %508 = vrot.lane.b32.xlu0 %v477, 4
    %v509 = vpop.permute.xlu0 %508
    %510 = vrot.lane.b32.xlu0 %v479, 4
    %v511 = vpop.permute.xlu0 %510
    %512 = vrot.lane.b32.xlu0 %v481, 4
    %v513 = vpop.permute.xlu0 %512
    %514 = vrot.lane.b32.xlu0 %v483, 4
    %v515 = vpop.permute.xlu0 %514
    %516 = vrot.lane.b32.xlu0 %v485, 4
    %v517 = vpop.permute.xlu0 %516
    %518 = vrot.lane.b32.xlu0 %v487, 4
    %v519 = vpop.permute.xlu0 %518
    %vm536 = vcmask 39968
    %537 = vst.msk [vmem:[#allocation3] sm:$0xff] %vm536, %v489
    %538 = vst.msk [vmem:[#allocation3 + $0x20] sm:$0xff] %vm536, %v491
    %539 = vst.msk [vmem:[#allocation3 + $0x40] sm:$0xff] %vm536, %v493
    %540 = vst.msk [vmem:[#allocation3 + $0x60] sm:$0xff] %vm536, %v495
    %541 = vst.msk [vmem:[#allocation3 + $0x80] sm:$0xff] %vm536, %v497
    %542 = vst.msk [vmem:[#allocation3 + $0xa0] sm:$0xff] %vm536, %v499
    %543 = vst.msk [vmem:[#allocation3 + $0xc0] sm:$0xff] %vm536, %v501
    %544 = vst.msk [vmem:[#allocation3 + $0xe0] sm:$0xff] %vm536, %v503
    %545 = vst.msk [vmem:[#allocation3 + $0x100] sm:$0xff] %vm536, %v505
    %546 = vst.msk [vmem:[#allocation3 + $0x120] sm:$0xff] %vm536, %v507
    %547 = vst.msk [vmem:[#allocation3 + $0x140] sm:$0xff] %vm536, %v509
    %548 = vst.msk [vmem:[#allocation3 + $0x160] sm:$0xff] %vm536, %v511
    %549 = vst.msk [vmem:[#allocation3 + $0x180] sm:$0xff] %vm536, %v513
    %550 = vst.msk [vmem:[#allocation3 + $0x1a0] sm:$0xff] %vm536, %v515
    %551 = vst.msk [vmem:[#allocation3 + $0x1c0] sm:$0xff] %vm536, %v517
    %552 = vst.msk [vmem:[#allocation3 + $0x1e0] sm:$0xff] %vm536, %v519
    %vm553 = vcmask 1042432
    %v554 = vrot.slane %v95, 5
    %v555 = vrot.slane %v96, 5
    %v556 = vsel %vm553, %v554, %v555
    %v557 = vrot.slane %v97, 5
    %v558 = vsel %vm553, %v555, %v557
    %v559 = vrot.slane %v98, 5
    %v560 = vsel %vm553, %v557, %v559
    %v561 = vrot.slane %v99, 5
    %v562 = vsel %vm553, %v559, %v561
    %v563 = vrot.slane %v100, 5
    %v564 = vsel %vm553, %v561, %v563
    %v565 = vrot.slane %v101, 5
    %v566 = vsel %vm553, %v563, %v565
    %v567 = vrot.slane %v102, 5
    %v568 = vsel %vm553, %v565, %v567
    %v569 = vrot.slane %v103, 5
    %v570 = vsel %vm553, %v567, %v569
    %v571 = vrot.slane %v107, 5
    %v572 = vrot.slane %v108, 5
    %v573 = vsel %vm553, %v571, %v572
    %v574 = vrot.slane %v109, 5
    %v575 = vsel %vm553, %v572, %v574
    %v576 = vrot.slane %v110, 5
    %v577 = vsel %vm553, %v574, %v576
    %v578 = vrot.slane %v111, 5
    %v579 = vsel %vm553, %v576, %v578
    %v580 = vrot.slane %v112, 5
    %v581 = vsel %vm553, %v578, %v580
    %v582 = vrot.slane %v113, 5
    %v583 = vsel %vm553, %v580, %v582
    %v584 = vrot.slane %v114, 5
    %v585 = vsel %vm553, %v582, %v584
    %v586 = vrot.slane %v115, 5
    %v587 = vsel %vm553, %v584, %v586
    %588 = vrot.lane.b32.xlu0 %v556, 5
    %v589 = vpop.permute.xlu0 %588
    %590 = vrot.lane.b32.xlu0 %v558, 5
    %v591 = vpop.permute.xlu0 %590
    %592 = vrot.lane.b32.xlu0 %v560, 5
    %v593 = vpop.permute.xlu0 %592
    %594 = vrot.lane.b32.xlu0 %v562, 5
    %v595 = vpop.permute.xlu0 %594
    %596 = vrot.lane.b32.xlu0 %v564, 5
    %v597 = vpop.permute.xlu0 %596
    %598 = vrot.lane.b32.xlu0 %v566, 5
    %v599 = vpop.permute.xlu0 %598
    %600 = vrot.lane.b32.xlu0 %v568, 5
    %v601 = vpop.permute.xlu0 %600
    %602 = vrot.lane.b32.xlu0 %v570, 5
    %v603 = vpop.permute.xlu0 %602
    %604 = vrot.lane.b32.xlu0 %v573, 5
    %v605 = vpop.permute.xlu0 %604
    %606 = vrot.lane.b32.xlu0 %v575, 5
    %v607 = vpop.permute.xlu0 %606
    %608 = vrot.lane.b32.xlu0 %v577, 5
    %v609 = vpop.permute.xlu0 %608
    %610 = vrot.lane.b32.xlu0 %v579, 5
    %v611 = vpop.permute.xlu0 %610
    %612 = vrot.lane.b32.xlu0 %v581, 5
    %v613 = vpop.permute.xlu0 %612
    %614 = vrot.lane.b32.xlu0 %v583, 5
    %v615 = vpop.permute.xlu0 %614
    %616 = vrot.lane.b32.xlu0 %v585, 5
    %v617 = vpop.permute.xlu0 %616
    %618 = vrot.lane.b32.xlu0 %v587, 5
    %v619 = vpop.permute.xlu0 %618
    %vm636 = vcmask 48168
    %637 = vst.msk [vmem:[#allocation3] sm:$0xff] %vm636, %v589
    %638 = vst.msk [vmem:[#allocation3 + $0x20] sm:$0xff] %vm636, %v591
    %639 = vst.msk [vmem:[#allocation3 + $0x40] sm:$0xff] %vm636, %v593
    %640 = vst.msk [vmem:[#allocation3 + $0x60] sm:$0xff] %vm636, %v595
    %641 = vst.msk [vmem:[#allocation3 + $0x80] sm:$0xff] %vm636, %v597
    %642 = vst.msk [vmem:[#allocation3 + $0xa0] sm:$0xff] %vm636, %v599
    %643 = vst.msk [vmem:[#allocation3 + $0xc0] sm:$0xff] %vm636, %v601
    %644 = vst.msk [vmem:[#allocation3 + $0xe0] sm:$0xff] %vm636, %v603
    %645 = vst.msk [vmem:[#allocation3 + $0x100] sm:$0xff] %vm636, %v605
    %646 = vst.msk [vmem:[#allocation3 + $0x120] sm:$0xff] %vm636, %v607
    %647 = vst.msk [vmem:[#allocation3 + $0x140] sm:$0xff] %vm636, %v609
    %648 = vst.msk [vmem:[#allocation3 + $0x160] sm:$0xff] %vm636, %v611
    %649 = vst.msk [vmem:[#allocation3 + $0x180] sm:$0xff] %vm636, %v613
    %650 = vst.msk [vmem:[#allocation3 + $0x1a0] sm:$0xff] %vm636, %v615
    %651 = vst.msk [vmem:[#allocation3 + $0x1c0] sm:$0xff] %vm636, %v617
    %652 = vst.msk [vmem:[#allocation3 + $0x1e0] sm:$0xff] %vm636, %v619
    %vm653 = vcmask 1041408
    %v654 = vrot.slane %v95, 6
    %v655 = vrot.slane %v96, 6
    %v656 = vsel %vm653, %v654, %v655
    %v657 = vrot.slane %v97, 6
    %v658 = vsel %vm653, %v655, %v657
    %v659 = vrot.slane %v98, 6
    %v660 = vsel %vm653, %v657, %v659
    %v661 = vrot.slane %v99, 6
    %v662 = vsel %vm653, %v659, %v661
    %v663 = vrot.slane %v100, 6
    %v664 = vsel %vm653, %v661, %v663
    %v665 = vrot.slane %v101, 6
    %v666 = vsel %vm653, %v663, %v665
    %v667 = vrot.slane %v102, 6
    %v668 = vsel %vm653, %v665, %v667
    %v669 = vrot.slane %v103, 6
    %v670 = vsel %vm653, %v667, %v669
    %v671 = vrot.slane %v107, 6
    %v672 = vrot.slane %v108, 6
    %v673 = vsel %vm653, %v671, %v672
    %v674 = vrot.slane %v109, 6
    %v675 = vsel %vm653, %v672, %v674
    %v676 = vrot.slane %v110, 6
    %v677 = vsel %vm653, %v674, %v676
    %v678 = vrot.slane %v111, 6
    %v679 = vsel %vm653, %v676, %v678
    %v680 = vrot.slane %v112, 6
    %v681 = vsel %vm653, %v678, %v680
    %v682 = vrot.slane %v113, 6
    %v683 = vsel %vm653, %v680, %v682
    %v684 = vrot.slane %v114, 6
    %v685 = vsel %vm653, %v682, %v684
    %v686 = vrot.slane %v115, 6
    %v687 = vsel %vm653, %v684, %v686
    %688 = vrot.lane.b32.xlu0 %v656, 6
    %v689 = vpop.permute.xlu0 %688
    %690 = vrot.lane.b32.xlu0 %v658, 6
    %v691 = vpop.permute.xlu0 %690
    %692 = vrot.lane.b32.xlu0 %v660, 6
    %v693 = vpop.permute.xlu0 %692
    %694 = vrot.lane.b32.xlu0 %v662, 6
    %v695 = vpop.permute.xlu0 %694
    %696 = vrot.lane.b32.xlu0 %v664, 6
    %v697 = vpop.permute.xlu0 %696
    %698 = vrot.lane.b32.xlu0 %v666, 6
    %v699 = vpop.permute.xlu0 %698
    %700 = vrot.lane.b32.xlu0 %v668, 6
    %v701 = vpop.permute.xlu0 %700
    %702 = vrot.lane.b32.xlu0 %v670, 6
    %v703 = vpop.permute.xlu0 %702
    %704 = vrot.lane.b32.xlu0 %v673, 6
    %v705 = vpop.permute.xlu0 %704
    %706 = vrot.lane.b32.xlu0 %v675, 6
    %v707 = vpop.permute.xlu0 %706
    %708 = vrot.lane.b32.xlu0 %v677, 6
    %v709 = vpop.permute.xlu0 %708
    %710 = vrot.lane.b32.xlu0 %v679, 6
    %v711 = vpop.permute.xlu0 %710
    %712 = vrot.lane.b32.xlu0 %v681, 6
    %v713 = vpop.permute.xlu0 %712
    %714 = vrot.lane.b32.xlu0 %v683, 6
    %v715 = vpop.permute.xlu0 %714
    %716 = vrot.lane.b32.xlu0 %v685, 6
    %v717 = vpop.permute.xlu0 %716
    %718 = vrot.lane.b32.xlu0 %v687, 6
    %v719 = vpop.permute.xlu0 %718
    %vm736 = vcmask 56368
    %737 = vst.msk [vmem:[#allocation3] sm:$0xff] %vm736, %v689
    %738 = vst.msk [vmem:[#allocation3 + $0x20] sm:$0xff] %vm736, %v691
    %739 = vst.msk [vmem:[#allocation3 + $0x40] sm:$0xff] %vm736, %v693
    %740 = vst.msk [vmem:[#allocation3 + $0x60] sm:$0xff] %vm736, %v695
    %741 = vst.msk [vmem:[#allocation3 + $0x80] sm:$0xff] %vm736, %v697
    %742 = vst.msk [vmem:[#allocation3 + $0xa0] sm:$0xff] %vm736, %v699
    %743 = vst.msk [vmem:[#allocation3 + $0xc0] sm:$0xff] %vm736, %v701
    %744 = vst.msk [vmem:[#allocation3 + $0xe0] sm:$0xff] %vm736, %v703
    %745 = vst.msk [vmem:[#allocation3 + $0x100] sm:$0xff] %vm736, %v705
    %746 = vst.msk [vmem:[#allocation3 + $0x120] sm:$0xff] %vm736, %v707
    %747 = vst.msk [vmem:[#allocation3 + $0x140] sm:$0xff] %vm736, %v709
    %748 = vst.msk [vmem:[#allocation3 + $0x160] sm:$0xff] %vm736, %v711
    %749 = vst.msk [vmem:[#allocation3 + $0x180] sm:$0xff] %vm736, %v713
    %750 = vst.msk [vmem:[#allocation3 + $0x1a0] sm:$0xff] %vm736, %v715
    %751 = vst.msk [vmem:[#allocation3 + $0x1c0] sm:$0xff] %vm736, %v717
    %752 = vst.msk [vmem:[#allocation3 + $0x1e0] sm:$0xff] %vm736, %v719
    %vm753 = vcmask 1040384
    %v754 = vrot.slane %v95, 7
    %v755 = vrot.slane %v96, 7
    %v756 = vsel %vm753, %v754, %v755
    %v757 = vrot.slane %v97, 7
    %v758 = vsel %vm753, %v755, %v757
    %v759 = vrot.slane %v98, 7
    %v760 = vsel %vm753, %v757, %v759
    %v761 = vrot.slane %v99, 7
    %v762 = vsel %vm753, %v759, %v761
    %v763 = vrot.slane %v100, 7
    %v764 = vsel %vm753, %v761, %v763
    %v765 = vrot.slane %v101, 7
    %v766 = vsel %vm753, %v763, %v765
    %v767 = vrot.slane %v102, 7
    %v768 = vsel %vm753, %v765, %v767
    %v769 = vrot.slane %v103, 7
    %v770 = vsel %vm753, %v767, %v769
    %v771 = vrot.slane %v107, 7
    %v772 = vrot.slane %v108, 7
    %v773 = vsel %vm753, %v771, %v772
    %v774 = vrot.slane %v109, 7
    %v775 = vsel %vm753, %v772, %v774
    %v776 = vrot.slane %v110, 7
    %v777 = vsel %vm753, %v774, %v776
    %v778 = vrot.slane %v111, 7
    %v779 = vsel %vm753, %v776, %v778
    %v780 = vrot.slane %v112, 7
    %v781 = vsel %vm753, %v778, %v780
    %v782 = vrot.slane %v113, 7
    %v783 = vsel %vm753, %v780, %v782
    %v784 = vrot.slane %v114, 7
    %v785 = vsel %vm753, %v782, %v784
    %v786 = vrot.slane %v115, 7
    %v787 = vsel %vm753, %v784, %v786
    %788 = vrot.lane.b32.xlu0 %v756, 7
    %v789 = vpop.permute.xlu0 %788
    %790 = vrot.lane.b32.xlu0 %v758, 7
    %v791 = vpop.permute.xlu0 %790
    %792 = vrot.lane.b32.xlu0 %v760, 7
    %v793 = vpop.permute.xlu0 %792
    %794 = vrot.lane.b32.xlu0 %v762, 7
    %v795 = vpop.permute.xlu0 %794
    %796 = vrot.lane.b32.xlu0 %v764, 7
    %v797 = vpop.permute.xlu0 %796
    %798 = vrot.lane.b32.xlu0 %v766, 7
    %v799 = vpop.permute.xlu0 %798
    %800 = vrot.lane.b32.xlu0 %v768, 7
    %v801 = vpop.permute.xlu0 %800
    %802 = vrot.lane.b32.xlu0 %v770, 7
    %v803 = vpop.permute.xlu0 %802
    %804 = vrot.lane.b32.xlu0 %v773, 7
    %v805 = vpop.permute.xlu0 %804
    %806 = vrot.lane.b32.xlu0 %v775, 7
    %v807 = vpop.permute.xlu0 %806
    %808 = vrot.lane.b32.xlu0 %v777, 7
    %v809 = vpop.permute.xlu0 %808
    %810 = vrot.lane.b32.xlu0 %v779, 7
    %v811 = vpop.permute.xlu0 %810
    %812 = vrot.lane.b32.xlu0 %v781, 7
    %v813 = vpop.permute.xlu0 %812
    %814 = vrot.lane.b32.xlu0 %v783, 7
    %v815 = vpop.permute.xlu0 %814
    %816 = vrot.lane.b32.xlu0 %v785, 7
    %v817 = vpop.permute.xlu0 %816
    %818 = vrot.lane.b32.xlu0 %v787, 7
    %v819 = vpop.permute.xlu0 %818
    %vm836 = vcmask 64568
    %837 = vst.msk [vmem:[#allocation3] sm:$0xff] %vm836, %v789
    %838 = vst.msk [vmem:[#allocation3 + $0x20] sm:$0xff] %vm836, %v791
    %839 = vst.msk [vmem:[#allocation3 + $0x40] sm:$0xff] %vm836, %v793
    %840 = vst.msk [vmem:[#allocation3 + $0x60] sm:$0xff] %vm836, %v795
    %841 = vst.msk [vmem:[#allocation3 + $0x80] sm:$0xff] %vm836, %v797
    %842 = vst.msk [vmem:[#allocation3 + $0xa0] sm:$0xff] %vm836, %v799
    %843 = vst.msk [vmem:[#allocation3 + $0xc0] sm:$0xff] %vm836, %v801
    %844 = vst.msk [vmem:[#allocation3 + $0xe0] sm:$0xff] %vm836, %v803
    %845 = vst.msk [vmem:[#allocation3 + $0x100] sm:$0xff] %vm836, %v805
    %846 = vst.msk [vmem:[#allocation3 + $0x120] sm:$0xff] %vm836, %v807
    %847 = vst.msk [vmem:[#allocation3 + $0x140] sm:$0xff] %vm836, %v809
    %848 = vst.msk [vmem:[#allocation3 + $0x160] sm:$0xff] %vm836, %v811
    %849 = vst.msk [vmem:[#allocation3 + $0x180] sm:$0xff] %vm836, %v813
    %850 = vst.msk [vmem:[#allocation3 + $0x1a0] sm:$0xff] %vm836, %v815
    %851 = vst.msk [vmem:[#allocation3 + $0x1c0] sm:$0xff] %vm836, %v817
    %852 = vst.msk [vmem:[#allocation3 + $0x1e0] sm:$0xff] %vm836, %v819
    %853 = vrot.lane.b32.xlu0 %v96, 8
    %v854 = vpop.permute.xlu0 %853
    %855 = vrot.lane.b32.xlu0 %v97, 8
    %v856 = vpop.permute.xlu0 %855
    %857 = vrot.lane.b32.xlu0 %v98, 8
    %v858 = vpop.permute.xlu0 %857
    %859 = vrot.lane.b32.xlu0 %v99, 8
    %v860 = vpop.permute.xlu0 %859
    %861 = vrot.lane.b32.xlu0 %v100, 8
    %v862 = vpop.permute.xlu0 %861
    %863 = vrot.lane.b32.xlu0 %v101, 8
    %v864 = vpop.permute.xlu0 %863
    %865 = vrot.lane.b32.xlu0 %v102, 8
    %v866 = vpop.permute.xlu0 %865
    %867 = vrot.lane.b32.xlu0 %v103, 8
    %v868 = vpop.permute.xlu0 %867
    %869 = vrot.lane.b32.xlu0 %v108, 8
    %v870 = vpop.permute.xlu0 %869
    %871 = vrot.lane.b32.xlu0 %v109, 8
    %v872 = vpop.permute.xlu0 %871
    %873 = vrot.lane.b32.xlu0 %v110, 8
    %v874 = vpop.permute.xlu0 %873
    %875 = vrot.lane.b32.xlu0 %v111, 8
    %v876 = vpop.permute.xlu0 %875
    %877 = vrot.lane.b32.xlu0 %v112, 8
    %v878 = vpop.permute.xlu0 %877
    %879 = vrot.lane.b32.xlu0 %v113, 8
    %v880 = vpop.permute.xlu0 %879
    %881 = vrot.lane.b32.xlu0 %v114, 8
    %v882 = vpop.permute.xlu0 %881
    %883 = vrot.lane.b32.xlu0 %v115, 8
    %v884 = vpop.permute.xlu0 %883
    %vm901 = vcmask 72768
    %902 = vst.msk [vmem:[#allocation3] sm:$0xff] %vm901, %v854
    %903 = vst.msk [vmem:[#allocation3 + $0x20] sm:$0xff] %vm901, %v856
    %904 = vst.msk [vmem:[#allocation3 + $0x40] sm:$0xff] %vm901, %v858
    %905 = vst.msk [vmem:[#allocation3 + $0x60] sm:$0xff] %vm901, %v860
    %906 = vst.msk [vmem:[#allocation3 + $0x80] sm:$0xff] %vm901, %v862
    %907 = vst.msk [vmem:[#allocation3 + $0xa0] sm:$0xff] %vm901, %v864
    %908 = vst.msk [vmem:[#allocation3 + $0xc0] sm:$0xff] %vm901, %v866
    %909 = vst.msk [vmem:[#allocation3 + $0xe0] sm:$0xff] %vm901, %v868
    %910 = vst.msk [vmem:[#allocation3 + $0x100] sm:$0xff] %vm901, %v870
    %911 = vst.msk [vmem:[#allocation3 + $0x120] sm:$0xff] %vm901, %v872
    %912 = vst.msk [vmem:[#allocation3 + $0x140] sm:$0xff] %vm901, %v874
    %913 = vst.msk [vmem:[#allocation3 + $0x160] sm:$0xff] %vm901, %v876
    %914 = vst.msk [vmem:[#allocation3 + $0x180] sm:$0xff] %vm901, %v878
    %915 = vst.msk [vmem:[#allocation3 + $0x1a0] sm:$0xff] %vm901, %v880
    %916 = vst.msk [vmem:[#allocation3 + $0x1c0] sm:$0xff] %vm901, %v882
    %917 = vst.msk [vmem:[#allocation3 + $0x1e0] sm:$0xff] %vm901, %v884
    %v920 = vrot.slane %v104, 1
    %v921 = vsel %vm153, %v169, %v920
    %v922 = vrot.slane %v116, 1
    %v923 = vsel %vm153, %v186, %v922
    %924 = vrot.lane.b32.xlu0 %v158, 9
    %v925 = vpop.permute.xlu0 %924
    %926 = vrot.lane.b32.xlu0 %v160, 9
    %v927 = vpop.permute.xlu0 %926
    %928 = vrot.lane.b32.xlu0 %v162, 9
    %v929 = vpop.permute.xlu0 %928
    %930 = vrot.lane.b32.xlu0 %v164, 9
    %v931 = vpop.permute.xlu0 %930
    %932 = vrot.lane.b32.xlu0 %v166, 9
    %v933 = vpop.permute.xlu0 %932
    %934 = vrot.lane.b32.xlu0 %v168, 9
    %v935 = vpop.permute.xlu0 %934
    %936 = vrot.lane.b32.xlu0 %v170, 9
    %v937 = vpop.permute.xlu0 %936
    %938 = vrot.lane.b32.xlu0 %v921, 9
    %v939 = vpop.permute.xlu0 %938
    %940 = vrot.lane.b32.xlu0 %v175, 9
    %v941 = vpop.permute.xlu0 %940
    %942 = vrot.lane.b32.xlu0 %v177, 9
    %v943 = vpop.permute.xlu0 %942
    %944 = vrot.lane.b32.xlu0 %v179, 9
    %v945 = vpop.permute.xlu0 %944
    %946 = vrot.lane.b32.xlu0 %v181, 9
    %v947 = vpop.permute.xlu0 %946
    %948 = vrot.lane.b32.xlu0 %v183, 9
    %v949 = vpop.permute.xlu0 %948
    %950 = vrot.lane.b32.xlu0 %v185, 9
    %v951 = vpop.permute.xlu0 %950
    %952 = vrot.lane.b32.xlu0 %v187, 9
    %v953 = vpop.permute.xlu0 %952
    %954 = vrot.lane.b32.xlu0 %v923, 9
    %v955 = vpop.permute.xlu0 %954
    %vm972 = vcmask 80968
    %973 = vst.msk [vmem:[#allocation3] sm:$0xff] %vm972, %v925
    %974 = vst.msk [vmem:[#allocation3 + $0x20] sm:$0xff] %vm972, %v927
    %975 = vst.msk [vmem:[#allocation3 + $0x40] sm:$0xff] %vm972, %v929
    %976 = vst.msk [vmem:[#allocation3 + $0x60] sm:$0xff] %vm972, %v931
    %977 = vst.msk [vmem:[#allocation3 + $0x80] sm:$0xff] %vm972, %v933
    %978 = vst.msk [vmem:[#allocation3 + $0xa0] sm:$0xff] %vm972, %v935
    %979 = vst.msk [vmem:[#allocation3 + $0xc0] sm:$0xff] %vm972, %v937
    %980 = vst.msk [vmem:[#allocation3 + $0xe0] sm:$0xff] %vm972, %v939
    %981 = vst.msk [vmem:[#allocation3 + $0x100] sm:$0xff] %vm972, %v941
    %982 = vst.msk [vmem:[#allocation3 + $0x120] sm:$0xff] %vm972, %v943
    %983 = vst.msk [vmem:[#allocation3 + $0x140] sm:$0xff] %vm972, %v945
    %984 = vst.msk [vmem:[#allocation3 + $0x160] sm:$0xff] %vm972, %v947
    %985 = vst.msk [vmem:[#allocation3 + $0x180] sm:$0xff] %vm972, %v949
    %986 = vst.msk [vmem:[#allocation3 + $0x1a0] sm:$0xff] %vm972, %v951
    %987 = vst.msk [vmem:[#allocation3 + $0x1c0] sm:$0xff] %vm972, %v953
    %988 = vst.msk [vmem:[#allocation3 + $0x1e0] sm:$0xff] %vm972, %v955
    %v989 = vrot.slane %v104, 2
    %v990 = vsel %vm253, %v269, %v989
    %v991 = vrot.slane %v116, 2
    %v992 = vsel %vm253, %v286, %v991
    %993 = vrot.lane.b32.xlu0 %v258, 10
    %v994 = vpop.permute.xlu0 %993
    %995 = vrot.lane.b32.xlu0 %v260, 10
    %v996 = vpop.permute.xlu0 %995
    %997 = vrot.lane.b32.xlu0 %v262, 10
    %v998 = vpop.permute.xlu0 %997
    %999 = vrot.lane.b32.xlu0 %v264, 10
    %v1000 = vpop.permute.xlu0 %999
    %1001 = vrot.lane.b32.xlu0 %v266, 10
    %v1002 = vpop.permute.xlu0 %1001
    %1003 = vrot.lane.b32.xlu0 %v268, 10
    %v1004 = vpop.permute.xlu0 %1003
    %1005 = vrot.lane.b32.xlu0 %v270, 10
    %v1006 = vpop.permute.xlu0 %1005
    %1007 = vrot.lane.b32.xlu0 %v990, 10
    %v1008 = vpop.permute.xlu0 %1007
    %1009 = vrot.lane.b32.xlu0 %v275, 10
    %v1010 = vpop.permute.xlu0 %1009
    %1011 = vrot.lane.b32.xlu0 %v277, 10
    %v1012 = vpop.permute.xlu0 %1011
    %1013 = vrot.lane.b32.xlu0 %v279, 10
    %v1014 = vpop.permute.xlu0 %1013
    %1015 = vrot.lane.b32.xlu0 %v281, 10
    %v1016 = vpop.permute.xlu0 %1015
    %1017 = vrot.lane.b32.xlu0 %v283, 10
    %v1018 = vpop.permute.xlu0 %1017
    %1019 = vrot.lane.b32.xlu0 %v285, 10
    %v1020 = vpop.permute.xlu0 %1019
    %1021 = vrot.lane.b32.xlu0 %v287, 10
    %v1022 = vpop.permute.xlu0 %1021
    %1023 = vrot.lane.b32.xlu0 %v992, 10
    %v1024 = vpop.permute.xlu0 %1023
    %vm1041 = vcmask 89168
    %1042 = vst.msk [vmem:[#allocation3] sm:$0xff] %vm1041, %v994
    %1043 = vst.msk [vmem:[#allocation3 + $0x20] sm:$0xff] %vm1041, %v996
    %1044 = vst.msk [vmem:[#allocation3 + $0x40] sm:$0xff] %vm1041, %v998
    %1045 = vst.msk [vmem:[#allocation3 + $0x60] sm:$0xff] %vm1041, %v1000
    %1046 = vst.msk [vmem:[#allocation3 + $0x80] sm:$0xff] %vm1041, %v1002
    %1047 = vst.msk [vmem:[#allocation3 + $0xa0] sm:$0xff] %vm1041, %v1004
    %1048 = vst.msk [vmem:[#allocation3 + $0xc0] sm:$0xff] %vm1041, %v1006
    %1049 = vst.msk [vmem:[#allocation3 + $0xe0] sm:$0xff] %vm1041, %v1008
    %1050 = vst.msk [vmem:[#allocation3 + $0x100] sm:$0xff] %vm1041, %v1010
    %1051 = vst.msk [vmem:[#allocation3 + $0x120] sm:$0xff] %vm1041, %v1012
    %1052 = vst.msk [vmem:[#allocation3 + $0x140] sm:$0xff] %vm1041, %v1014
    %1053 = vst.msk [vmem:[#allocation3 + $0x160] sm:$0xff] %vm1041, %v1016
    %1054 = vst.msk [vmem:[#allocation3 + $0x180] sm:$0xff] %vm1041, %v1018
    %1055 = vst.msk [vmem:[#allocation3 + $0x1a0] sm:$0xff] %vm1041, %v1020
    %1056 = vst.msk [vmem:[#allocation3 + $0x1c0] sm:$0xff] %vm1041, %v1022
    %1057 = vst.msk [vmem:[#allocation3 + $0x1e0] sm:$0xff] %vm1041, %v1024
    %v1058 = vrot.slane %v104, 3
    %v1059 = vsel %vm353, %v369, %v1058
    %v1060 = vrot.slane %v116, 3
    %v1061 = vsel %vm353, %v386, %v1060
    %1062 = vrot.lane.b32.xlu0 %v358, 11
    %v1063 = vpop.permute.xlu0 %1062
    %1064 = vrot.lane.b32.xlu0 %v360, 11
    %v1065 = vpop.permute.xlu0 %1064
    %1066 = vrot.lane.b32.xlu0 %v362, 11
    %v1067 = vpop.permute.xlu0 %1066
    %1068 = vrot.lane.b32.xlu0 %v364, 11
    %v1069 = vpop.permute.xlu0 %1068
    %1070 = vrot.lane.b32.xlu0 %v366, 11
    %v1071 = vpop.permute.xlu0 %1070
    %1072 = vrot.lane.b32.xlu0 %v368, 11
    %v1073 = vpop.permute.xlu0 %1072
    %1074 = vrot.lane.b32.xlu0 %v370, 11
    %v1075 = vpop.permute.xlu0 %1074
    %1076 = vrot.lane.b32.xlu0 %v1059, 11
    %v1077 = vpop.permute.xlu0 %1076
    %1078 = vrot.lane.b32.xlu0 %v375, 11
    %v1079 = vpop.permute.xlu0 %1078
    %1080 = vrot.lane.b32.xlu0 %v377, 11
    %v1081 = vpop.permute.xlu0 %1080
    %1082 = vrot.lane.b32.xlu0 %v379, 11
    %v1083 = vpop.permute.xlu0 %1082
    %1084 = vrot.lane.b32.xlu0 %v381, 11
    %v1085 = vpop.permute.xlu0 %1084
    %1086 = vrot.lane.b32.xlu0 %v383, 11
    %v1087 = vpop.permute.xlu0 %1086
    %1088 = vrot.lane.b32.xlu0 %v385, 11
    %v1089 = vpop.permute.xlu0 %1088
    %1090 = vrot.lane.b32.xlu0 %v387, 11
    %v1091 = vpop.permute.xlu0 %1090
    %1092 = vrot.lane.b32.xlu0 %v1061, 11
    %v1093 = vpop.permute.xlu0 %1092
    %vm1110 = vcmask 97368
    %1111 = vst.msk [vmem:[#allocation3] sm:$0xff] %vm1110, %v1063
    %1112 = vst.msk [vmem:[#allocation3 + $0x20] sm:$0xff] %vm1110, %v1065
    %1113 = vst.msk [vmem:[#allocation3 + $0x40] sm:$0xff] %vm1110, %v1067
    %1114 = vst.msk [vmem:[#allocation3 + $0x60] sm:$0xff] %vm1110, %v1069
    %1115 = vst.msk [vmem:[#allocation3 + $0x80] sm:$0xff] %vm1110, %v1071
    %1116 = vst.msk [vmem:[#allocation3 + $0xa0] sm:$0xff] %vm1110, %v1073
    %1117 = vst.msk [vmem:[#allocation3 + $0xc0] sm:$0xff] %vm1110, %v1075
    %1118 = vst.msk [vmem:[#allocation3 + $0xe0] sm:$0xff] %vm1110, %v1077
    %1119 = vst.msk [vmem:[#allocation3 + $0x100] sm:$0xff] %vm1110, %v1079
    %1120 = vst.msk [vmem:[#allocation3 + $0x120] sm:$0xff] %vm1110, %v1081
    %1121 = vst.msk [vmem:[#allocation3 + $0x140] sm:$0xff] %vm1110, %v1083
    %1122 = vst.msk [vmem:[#allocation3 + $0x160] sm:$0xff] %vm1110, %v1085
    %1123 = vst.msk [vmem:[#allocation3 + $0x180] sm:$0xff] %vm1110, %v1087
    %1124 = vst.msk [vmem:[#allocation3 + $0x1a0] sm:$0xff] %vm1110, %v1089
    %1125 = vst.msk [vmem:[#allocation3 + $0x1c0] sm:$0xff] %vm1110, %v1091
    %1126 = vst.msk [vmem:[#allocation3 + $0x1e0] sm:$0xff] %vm1110, %v1093
    %v1127 = vrot.slane %v104, 4
    %v1128 = vsel %vm453, %v469, %v1127
    %v1129 = vrot.slane %v116, 4
    %v1130 = vsel %vm453, %v486, %v1129
    %1131 = vrot.lane.b32.xlu0 %v458, 12
    %v1132 = vpop.permute.xlu0 %1131
    %1133 = vrot.lane.b32.xlu0 %v460, 12
    %v1134 = vpop.permute.xlu0 %1133
    %1135 = vrot.lane.b32.xlu0 %v462, 12
    %v1136 = vpop.permute.xlu0 %1135
    %1137 = vrot.lane.b32.xlu0 %v464, 12
    %v1138 = vpop.permute.xlu0 %1137
    %1139 = vrot.lane.b32.xlu0 %v466, 12
    %v1140 = vpop.permute.xlu0 %1139
    %1141 = vrot.lane.b32.xlu0 %v468, 12
    %v1142 = vpop.permute.xlu0 %1141
    %1143 = vrot.lane.b32.xlu0 %v470, 12
    %v1144 = vpop.permute.xlu0 %1143
    %1145 = vrot.lane.b32.xlu0 %v1128, 12
    %v1146 = vpop.permute.xlu0 %1145
    %1147 = vrot.lane.b32.xlu0 %v475, 12
    %v1148 = vpop.permute.xlu0 %1147
    %1149 = vrot.lane.b32.xlu0 %v477, 12
    %v1150 = vpop.permute.xlu0 %1149
    %1151 = vrot.lane.b32.xlu0 %v479, 12
    %v1152 = vpop.permute.xlu0 %1151
    %1153 = vrot.lane.b32.xlu0 %v481, 12
    %v1154 = vpop.permute.xlu0 %1153
    %1155 = vrot.lane.b32.xlu0 %v483, 12
    %v1156 = vpop.permute.xlu0 %1155
    %1157 = vrot.lane.b32.xlu0 %v485, 12
    %v1158 = vpop.permute.xlu0 %1157
    %1159 = vrot.lane.b32.xlu0 %v487, 12
    %v1160 = vpop.permute.xlu0 %1159
    %1161 = vrot.lane.b32.xlu0 %v1130, 12
    %v1162 = vpop.permute.xlu0 %1161
    %vm1179 = vcmask 105568
    %1180 = vst.msk [vmem:[#allocation3] sm:$0xff] %vm1179, %v1132
    %1181 = vst.msk [vmem:[#allocation3 + $0x20] sm:$0xff] %vm1179, %v1134
    %1182 = vst.msk [vmem:[#allocation3 + $0x40] sm:$0xff] %vm1179, %v1136
    %1183 = vst.msk [vmem:[#allocation3 + $0x60] sm:$0xff] %vm1179, %v1138
    %1184 = vst.msk [vmem:[#allocation3 + $0x80] sm:$0xff] %vm1179, %v1140
    %1185 = vst.msk [vmem:[#allocation3 + $0xa0] sm:$0xff] %vm1179, %v1142
    %1186 = vst.msk [vmem:[#allocation3 + $0xc0] sm:$0xff] %vm1179, %v1144
    %1187 = vst.msk [vmem:[#allocation3 + $0xe0] sm:$0xff] %vm1179, %v1146
    %1188 = vst.msk [vmem:[#allocation3 + $0x100] sm:$0xff] %vm1179, %v1148
    %1189 = vst.msk [vmem:[#allocation3 + $0x120] sm:$0xff] %vm1179, %v1150
    %1190 = vst.msk [vmem:[#allocation3 + $0x140] sm:$0xff] %vm1179, %v1152
    %1191 = vst.msk [vmem:[#allocation3 + $0x160] sm:$0xff] %vm1179, %v1154
    %1192 = vst.msk [vmem:[#allocation3 + $0x180] sm:$0xff] %vm1179, %v1156
    %1193 = vst.msk [vmem:[#allocation3 + $0x1a0] sm:$0xff] %vm1179, %v1158
    %1194 = vst.msk [vmem:[#allocation3 + $0x1c0] sm:$0xff] %vm1179, %v1160
    %1195 = vst.msk [vmem:[#allocation3 + $0x1e0] sm:$0xff] %vm1179, %v1162
    %v1196 = vrot.slane %v104, 5
    %v1197 = vsel %vm553, %v569, %v1196
    %v1198 = vrot.slane %v116, 5
    %v1199 = vsel %vm553, %v586, %v1198
    %1200 = vrot.lane.b32.xlu0 %v558, 13
    %v1201 = vpop.permute.xlu0 %1200
    %1202 = vrot.lane.b32.xlu0 %v560, 13
    %v1203 = vpop.permute.xlu0 %1202
    %1204 = vrot.lane.b32.xlu0 %v562, 13
    %v1205 = vpop.permute.xlu0 %1204
    %1206 = vrot.lane.b32.xlu0 %v564, 13
    %v1207 = vpop.permute.xlu0 %1206
    %1208 = vrot.lane.b32.xlu0 %v566, 13
    %v1209 = vpop.permute.xlu0 %1208
    %1210 = vrot.lane.b32.xlu0 %v568, 13
    %v1211 = vpop.permute.xlu0 %1210
    %1212 = vrot.lane.b32.xlu0 %v570, 13
    %v1213 = vpop.permute.xlu0 %1212
    %1214 = vrot.lane.b32.xlu0 %v1197, 13
    %v1215 = vpop.permute.xlu0 %1214
    %1216 = vrot.lane.b32.xlu0 %v575, 13
    %v1217 = vpop.permute.xlu0 %1216
    %1218 = vrot.lane.b32.xlu0 %v577, 13
    %v1219 = vpop.permute.xlu0 %1218
    %1220 = vrot.lane.b32.xlu0 %v579, 13
    %v1221 = vpop.permute.xlu0 %1220
    %1222 = vrot.lane.b32.xlu0 %v581, 13
    %v1223 = vpop.permute.xlu0 %1222
    %1224 = vrot.lane.b32.xlu0 %v583, 13
    %v1225 = vpop.permute.xlu0 %1224
    %1226 = vrot.lane.b32.xlu0 %v585, 13
    %v1227 = vpop.permute.xlu0 %1226
    %1228 = vrot.lane.b32.xlu0 %v587, 13
    %v1229 = vpop.permute.xlu0 %1228
    %1230 = vrot.lane.b32.xlu0 %v1199, 13
    %v1231 = vpop.permute.xlu0 %1230
    %vm1248 = vcmask 113768
    %1249 = vst.msk [vmem:[#allocation3] sm:$0xff] %vm1248, %v1201
    %1250 = vst.msk [vmem:[#allocation3 + $0x20] sm:$0xff] %vm1248, %v1203
    %1251 = vst.msk [vmem:[#allocation3 + $0x40] sm:$0xff] %vm1248, %v1205
    %1252 = vst.msk [vmem:[#allocation3 + $0x60] sm:$0xff] %vm1248, %v1207
    %1253 = vst.msk [vmem:[#allocation3 + $0x80] sm:$0xff] %vm1248, %v1209
    %1254 = vst.msk [vmem:[#allocation3 + $0xa0] sm:$0xff] %vm1248, %v1211
    %1255 = vst.msk [vmem:[#allocation3 + $0xc0] sm:$0xff] %vm1248, %v1213
    %1256 = vst.msk [vmem:[#allocation3 + $0xe0] sm:$0xff] %vm1248, %v1215
    %1257 = vst.msk [vmem:[#allocation3 + $0x100] sm:$0xff] %vm1248, %v1217
    %1258 = vst.msk [vmem:[#allocation3 + $0x120] sm:$0xff] %vm1248, %v1219
    %1259 = vst.msk [vmem:[#allocation3 + $0x140] sm:$0xff] %vm1248, %v1221
    %1260 = vst.msk [vmem:[#allocation3 + $0x160] sm:$0xff] %vm1248, %v1223
    %1261 = vst.msk [vmem:[#allocation3 + $0x180] sm:$0xff] %vm1248, %v1225
    %1262 = vst.msk [vmem:[#allocation3 + $0x1a0] sm:$0xff] %vm1248, %v1227
    %1263 = vst.msk [vmem:[#allocation3 + $0x1c0] sm:$0xff] %vm1248, %v1229
    %1264 = vst.msk [vmem:[#allocation3 + $0x1e0] sm:$0xff] %vm1248, %v1231
    %v1265 = vrot.slane %v104, 6
    %v1266 = vsel %vm653, %v669, %v1265
    %v1267 = vrot.slane %v116, 6
    %v1268 = vsel %vm653, %v686, %v1267
    %1269 = vrot.lane.b32.xlu0 %v658, 14
    %v1270 = vpop.permute.xlu0 %1269
    %1271 = vrot.lane.b32.xlu0 %v660, 14
    %v1272 = vpop.permute.xlu0 %1271
    %1273 = vrot.lane.b32.xlu0 %v662, 14
    %v1274 = vpop.permute.xlu0 %1273
    %1275 = vrot.lane.b32.xlu0 %v664, 14
    %v1276 = vpop.permute.xlu0 %1275
    %1277 = vrot.lane.b32.xlu0 %v666, 14
    %v1278 = vpop.permute.xlu0 %1277
    %1279 = vrot.lane.b32.xlu0 %v668, 14
    %v1280 = vpop.permute.xlu0 %1279
    %1281 = vrot.lane.b32.xlu0 %v670, 14
    %v1282 = vpop.permute.xlu0 %1281
    %1283 = vrot.lane.b32.xlu0 %v1266, 14
    %v1284 = vpop.permute.xlu0 %1283
    %1285 = vrot.lane.b32.xlu0 %v675, 14
    %v1286 = vpop.permute.xlu0 %1285
    %1287 = vrot.lane.b32.xlu0 %v677, 14
    %v1288 = vpop.permute.xlu0 %1287
    %1289 = vrot.lane.b32.xlu0 %v679, 14
    %v1290 = vpop.permute.xlu0 %1289
    %1291 = vrot.lane.b32.xlu0 %v681, 14
    %v1292 = vpop.permute.xlu0 %1291
    %1293 = vrot.lane.b32.xlu0 %v683, 14
    %v1294 = vpop.permute.xlu0 %1293
    %1295 = vrot.lane.b32.xlu0 %v685, 14
    %v1296 = vpop.permute.xlu0 %1295
    %1297 = vrot.lane.b32.xlu0 %v687, 14
    %v1298 = vpop.permute.xlu0 %1297
    %1299 = vrot.lane.b32.xlu0 %v1268, 14
    %v1300 = vpop.permute.xlu0 %1299
    %vm1317 = vcmask 121968
    %1318 = vst.msk [vmem:[#allocation3] sm:$0xff] %vm1317, %v1270
    %1319 = vst.msk [vmem:[#allocation3 + $0x20] sm:$0xff] %vm1317, %v1272
    %1320 = vst.msk [vmem:[#allocation3 + $0x40] sm:$0xff] %vm1317, %v1274
    %1321 = vst.msk [vmem:[#allocation3 + $0x60] sm:$0xff] %vm1317, %v1276
    %1322 = vst.msk [vmem:[#allocation3 + $0x80] sm:$0xff] %vm1317, %v1278
    %1323 = vst.msk [vmem:[#allocation3 + $0xa0] sm:$0xff] %vm1317, %v1280
    %1324 = vst.msk [vmem:[#allocation3 + $0xc0] sm:$0xff] %vm1317, %v1282
    %1325 = vst.msk [vmem:[#allocation3 + $0xe0] sm:$0xff] %vm1317, %v1284
    %1326 = vst.msk [vmem:[#allocation3 + $0x100] sm:$0xff] %vm1317, %v1286
    %1327 = vst.msk [vmem:[#allocation3 + $0x120] sm:$0xff] %vm1317, %v1288
    %1328 = vst.msk [vmem:[#allocation3 + $0x140] sm:$0xff] %vm1317, %v1290
    %1329 = vst.msk [vmem:[#allocation3 + $0x160] sm:$0xff] %vm1317, %v1292
    %1330 = vst.msk [vmem:[#allocation3 + $0x180] sm:$0xff] %vm1317, %v1294
    %1331 = vst.msk [vmem:[#allocation3 + $0x1a0] sm:$0xff] %vm1317, %v1296
    %1332 = vst.msk [vmem:[#allocation3 + $0x1c0] sm:$0xff] %vm1317, %v1298
    %1333 = vst.msk [vmem:[#allocation3 + $0x1e0] sm:$0xff] %vm1317, %v1300
    %v1334 = vrot.slane %v104, 7
    %v1335 = vsel %vm753, %v769, %v1334
    %v1336 = vrot.slane %v116, 7
    %v1337 = vsel %vm753, %v786, %v1336
    %1338 = vrot.lane.b32.xlu0 %v758, 15
    %v1339 = vpop.permute.xlu0 %1338
    %1340 = vrot.lane.b32.xlu0 %v760, 15
    %v1341 = vpop.permute.xlu0 %1340
    %1342 = vrot.lane.b32.xlu0 %v762, 15
    %v1343 = vpop.permute.xlu0 %1342
    %1344 = vrot.lane.b32.xlu0 %v764, 15
    %v1345 = vpop.permute.xlu0 %1344
    %1346 = vrot.lane.b32.xlu0 %v766, 15
    %v1347 = vpop.permute.xlu0 %1346
    %1348 = vrot.lane.b32.xlu0 %v768, 15
    %v1349 = vpop.permute.xlu0 %1348
    %1350 = vrot.lane.b32.xlu0 %v770, 15
    %v1351 = vpop.permute.xlu0 %1350
    %1352 = vrot.lane.b32.xlu0 %v1335, 15
    %v1353 = vpop.permute.xlu0 %1352
    %1354 = vrot.lane.b32.xlu0 %v775, 15
    %v1355 = vpop.permute.xlu0 %1354
    %1356 = vrot.lane.b32.xlu0 %v777, 15
    %v1357 = vpop.permute.xlu0 %1356
    %1358 = vrot.lane.b32.xlu0 %v779, 15
    %v1359 = vpop.permute.xlu0 %1358
    %1360 = vrot.lane.b32.xlu0 %v781, 15
    %v1361 = vpop.permute.xlu0 %1360
    %1362 = vrot.lane.b32.xlu0 %v783, 15
    %v1363 = vpop.permute.xlu0 %1362
    %1364 = vrot.lane.b32.xlu0 %v785, 15
    %v1365 = vpop.permute.xlu0 %1364
    %1366 = vrot.lane.b32.xlu0 %v787, 15
    %v1367 = vpop.permute.xlu0 %1366
    %1368 = vrot.lane.b32.xlu0 %v1337, 15
    %v1369 = vpop.permute.xlu0 %1368
    %vm1386 = vcmask 130168
    %1387 = vst.msk [vmem:[#allocation3] sm:$0xff] %vm1386, %v1339
    %1388 = vst.msk [vmem:[#allocation3 + $0x20] sm:$0xff] %vm1386, %v1341
    %1389 = vst.msk [vmem:[#allocation3 + $0x40] sm:$0xff] %vm1386, %v1343
    %1390 = vst.msk [vmem:[#allocation3 + $0x60] sm:$0xff] %vm1386, %v1345
    %1391 = vst.msk [vmem:[#allocation3 + $0x80] sm:$0xff] %vm1386, %v1347
    %1392 = vst.msk [vmem:[#allocation3 + $0xa0] sm:$0xff] %vm1386, %v1349
    %1393 = vst.msk [vmem:[#allocation3 + $0xc0] sm:$0xff] %vm1386, %v1351
    %1394 = vst.msk [vmem:[#allocation3 + $0xe0] sm:$0xff] %vm1386, %v1353
    %1395 = vst.msk [vmem:[#allocation3 + $0x100] sm:$0xff] %vm1386, %v1355
    %1396 = vst.msk [vmem:[#allocation3 + $0x120] sm:$0xff] %vm1386, %v1357
    %1397 = vst.msk [vmem:[#allocation3 + $0x140] sm:$0xff] %vm1386, %v1359
    %1398 = vst.msk [vmem:[#allocation3 + $0x160] sm:$0xff] %vm1386, %v1361
    %1399 = vst.msk [vmem:[#allocation3 + $0x180] sm:$0xff] %vm1386, %v1363
    %1400 = vst.msk [vmem:[#allocation3 + $0x1a0] sm:$0xff] %vm1386, %v1365
    %1401 = vst.msk [vmem:[#allocation3 + $0x1c0] sm:$0xff] %vm1386, %v1367
    %1402 = vst.msk [vmem:[#allocation3 + $0x1e0] sm:$0xff] %vm1386, %v1369
    %1403 = vrot.lane.b32.xlu0 %v97, 16
    %v1404 = vpop.permute.xlu0 %1403
    %1405 = vrot.lane.b32.xlu0 %v98, 16
    %v1406 = vpop.permute.xlu0 %1405
    %1407 = vrot.lane.b32.xlu0 %v99, 16
    %v1408 = vpop.permute.xlu0 %1407
    %1409 = vrot.lane.b32.xlu0 %v100, 16
    %v1410 = vpop.permute.xlu0 %1409
    %1411 = vrot.lane.b32.xlu0 %v101, 16
    %v1412 = vpop.permute.xlu0 %1411
    %1413 = vrot.lane.b32.xlu0 %v102, 16
    %v1414 = vpop.permute.xlu0 %1413
    %1415 = vrot.lane.b32.xlu0 %v103, 16
    %v1416 = vpop.permute.xlu0 %1415
    %1417 = vrot.lane.b32.xlu0 %v104, 16
    %v1418 = vpop.permute.xlu0 %1417
    %1419 = vrot.lane.b32.xlu0 %v109, 16
    %v1420 = vpop.permute.xlu0 %1419
    %1421 = vrot.lane.b32.xlu0 %v110, 16
    %v1422 = vpop.permute.xlu0 %1421
    %1423 = vrot.lane.b32.xlu0 %v111, 16
    %v1424 = vpop.permute.xlu0 %1423
    %1425 = vrot.lane.b32.xlu0 %v112, 16
    %v1426 = vpop.permute.xlu0 %1425
    %1427 = vrot.lane.b32.xlu0 %v113, 16
    %v1428 = vpop.permute.xlu0 %1427
    %1429 = vrot.lane.b32.xlu0 %v114, 16
    %v1430 = vpop.permute.xlu0 %1429
    %1431 = vrot.lane.b32.xlu0 %v115, 16
    %v1432 = vpop.permute.xlu0 %1431
    %1433 = vrot.lane.b32.xlu0 %v116, 16
    %v1434 = vpop.permute.xlu0 %1433
    %vm1451 = vcmask 138368
    %1452 = vst.msk [vmem:[#allocation3] sm:$0xff] %vm1451, %v1404
    %1453 = vst.msk [vmem:[#allocation3 + $0x20] sm:$0xff] %vm1451, %v1406
    %1454 = vst.msk [vmem:[#allocation3 + $0x40] sm:$0xff] %vm1451, %v1408
    %1455 = vst.msk [vmem:[#allocation3 + $0x60] sm:$0xff] %vm1451, %v1410
    %1456 = vst.msk [vmem:[#allocation3 + $0x80] sm:$0xff] %vm1451, %v1412
    %1457 = vst.msk [vmem:[#allocation3 + $0xa0] sm:$0xff] %vm1451, %v1414
    %1458 = vst.msk [vmem:[#allocation3 + $0xc0] sm:$0xff] %vm1451, %v1416
    %1459 = vst.msk [vmem:[#allocation3 + $0xe0] sm:$0xff] %vm1451, %v1418
    %1460 = vst.msk [vmem:[#allocation3 + $0x100] sm:$0xff] %vm1451, %v1420
    %1461 = vst.msk [vmem:[#allocation3 + $0x120] sm:$0xff] %vm1451, %v1422
    %1462 = vst.msk [vmem:[#allocation3 + $0x140] sm:$0xff] %vm1451, %v1424
    %1463 = vst.msk [vmem:[#allocation3 + $0x160] sm:$0xff] %vm1451, %v1426
    %1464 = vst.msk [vmem:[#allocation3 + $0x180] sm:$0xff] %vm1451, %v1428
    %1465 = vst.msk [vmem:[#allocation3 + $0x1a0] sm:$0xff] %vm1451, %v1430
    %1466 = vst.msk [vmem:[#allocation3 + $0x1c0] sm:$0xff] %vm1451, %v1432
    %1467 = vst.msk [vmem:[#allocation3 + $0x1e0] sm:$0xff] %vm1451, %v1434
    %v1470 = vrot.slane %v105, 1
    %v1471 = vsel %vm153, %v920, %v1470
    %v1472 = vrot.slane %v117, 1
    %v1473 = vsel %vm153, %v922, %v1472
    %1474 = vrot.lane.b32.xlu0 %v160, 17
    %v1475 = vpop.permute.xlu0 %1474
    %1476 = vrot.lane.b32.xlu0 %v162, 17
    %v1477 = vpop.permute.xlu0 %1476
    %1478 = vrot.lane.b32.xlu0 %v164, 17
    %v1479 = vpop.permute.xlu0 %1478
    %1480 = vrot.lane.b32.xlu0 %v166, 17
    %v1481 = vpop.permute.xlu0 %1480
    %1482 = vrot.lane.b32.xlu0 %v168, 17
    %v1483 = vpop.permute.xlu0 %1482
    %1484 = vrot.lane.b32.xlu0 %v170, 17
    %v1485 = vpop.permute.xlu0 %1484
    %1486 = vrot.lane.b32.xlu0 %v921, 17
    %v1487 = vpop.permute.xlu0 %1486
    %1488 = vrot.lane.b32.xlu0 %v1471, 17
    %v1489 = vpop.permute.xlu0 %1488
    %1490 = vrot.lane.b32.xlu0 %v177, 17
    %v1491 = vpop.permute.xlu0 %1490
    %1492 = vrot.lane.b32.xlu0 %v179, 17
    %v1493 = vpop.permute.xlu0 %1492
    %1494 = vrot.lane.b32.xlu0 %v181, 17
    %v1495 = vpop.permute.xlu0 %1494
    %1496 = vrot.lane.b32.xlu0 %v183, 17
    %v1497 = vpop.permute.xlu0 %1496
    %1498 = vrot.lane.b32.xlu0 %v185, 17
    %v1499 = vpop.permute.xlu0 %1498
    %1500 = vrot.lane.b32.xlu0 %v187, 17
    %v1501 = vpop.permute.xlu0 %1500
    %1502 = vrot.lane.b32.xlu0 %v923, 17
    %v1503 = vpop.permute.xlu0 %1502
    %1504 = vrot.lane.b32.xlu0 %v1473, 17
    %v1505 = vpop.permute.xlu0 %1504
    %vm1522 = vcmask 146568
    %1523 = vst.msk [vmem:[#allocation3] sm:$0xff] %vm1522, %v1475
    %1524 = vst.msk [vmem:[#allocation3 + $0x20] sm:$0xff] %vm1522, %v1477
    %1525 = vst.msk [vmem:[#allocation3 + $0x40] sm:$0xff] %vm1522, %v1479
    %1526 = vst.msk [vmem:[#allocation3 + $0x60] sm:$0xff] %vm1522, %v1481
    %1527 = vst.msk [vmem:[#allocation3 + $0x80] sm:$0xff] %vm1522, %v1483
    %1528 = vst.msk [vmem:[#allocation3 + $0xa0] sm:$0xff] %vm1522, %v1485
    %1529 = vst.msk [vmem:[#allocation3 + $0xc0] sm:$0xff] %vm1522, %v1487
    %1530 = vst.msk [vmem:[#allocation3 + $0xe0] sm:$0xff] %vm1522, %v1489
    %1531 = vst.msk [vmem:[#allocation3 + $0x100] sm:$0xff] %vm1522, %v1491
    %1532 = vst.msk [vmem:[#allocation3 + $0x120] sm:$0xff] %vm1522, %v1493
    %1533 = vst.msk [vmem:[#allocation3 + $0x140] sm:$0xff] %vm1522, %v1495
    %1534 = vst.msk [vmem:[#allocation3 + $0x160] sm:$0xff] %vm1522, %v1497
    %1535 = vst.msk [vmem:[#allocation3 + $0x180] sm:$0xff] %vm1522, %v1499
    %1536 = vst.msk [vmem:[#allocation3 + $0x1a0] sm:$0xff] %vm1522, %v1501
    %1537 = vst.msk [vmem:[#allocation3 + $0x1c0] sm:$0xff] %vm1522, %v1503
    %1538 = vst.msk [vmem:[#allocation3 + $0x1e0] sm:$0xff] %vm1522, %v1505
    %v1539 = vrot.slane %v105, 2
    %v1540 = vsel %vm253, %v989, %v1539
    %v1541 = vrot.slane %v117, 2
    %v1542 = vsel %vm253, %v991, %v1541
    %1543 = vrot.lane.b32.xlu0 %v260, 18
    %v1544 = vpop.permute.xlu0 %1543
    %1545 = vrot.lane.b32.xlu0 %v262, 18
    %v1546 = vpop.permute.xlu0 %1545
    %1547 = vrot.lane.b32.xlu0 %v264, 18
    %v1548 = vpop.permute.xlu0 %1547
    %1549 = vrot.lane.b32.xlu0 %v266, 18
    %v1550 = vpop.permute.xlu0 %1549
    %1551 = vrot.lane.b32.xlu0 %v268, 18
    %v1552 = vpop.permute.xlu0 %1551
    %1553 = vrot.lane.b32.xlu0 %v270, 18
    %v1554 = vpop.permute.xlu0 %1553
    %1555 = vrot.lane.b32.xlu0 %v990, 18
    %v1556 = vpop.permute.xlu0 %1555
    %1557 = vrot.lane.b32.xlu0 %v1540, 18
    %v1558 = vpop.permute.xlu0 %1557
    %1559 = vrot.lane.b32.xlu0 %v277, 18
    %v1560 = vpop.permute.xlu0 %1559
    %1561 = vrot.lane.b32.xlu0 %v279, 18
    %v1562 = vpop.permute.xlu0 %1561
    %1563 = vrot.lane.b32.xlu0 %v281, 18
    %v1564 = vpop.permute.xlu0 %1563
    %1565 = vrot.lane.b32.xlu0 %v283, 18
    %v1566 = vpop.permute.xlu0 %1565
    %1567 = vrot.lane.b32.xlu0 %v285, 18
    %v1568 = vpop.permute.xlu0 %1567
    %1569 = vrot.lane.b32.xlu0 %v287, 18
    %v1570 = vpop.permute.xlu0 %1569
    %1571 = vrot.lane.b32.xlu0 %v992, 18
    %v1572 = vpop.permute.xlu0 %1571
    %1573 = vrot.lane.b32.xlu0 %v1542, 18
    %v1574 = vpop.permute.xlu0 %1573
    %vm1591 = vcmask 154768
    %1592 = vst.msk [vmem:[#allocation3] sm:$0xff] %vm1591, %v1544
    %1593 = vst.msk [vmem:[#allocation3 + $0x20] sm:$0xff] %vm1591, %v1546
    %1594 = vst.msk [vmem:[#allocation3 + $0x40] sm:$0xff] %vm1591, %v1548
    %1595 = vst.msk [vmem:[#allocation3 + $0x60] sm:$0xff] %vm1591, %v1550
    %1596 = vst.msk [vmem:[#allocation3 + $0x80] sm:$0xff] %vm1591, %v1552
    %1597 = vst.msk [vmem:[#allocation3 + $0xa0] sm:$0xff] %vm1591, %v1554
    %1598 = vst.msk [vmem:[#allocation3 + $0xc0] sm:$0xff] %vm1591, %v1556
    %1599 = vst.msk [vmem:[#allocation3 + $0xe0] sm:$0xff] %vm1591, %v1558
    %1600 = vst.msk [vmem:[#allocation3 + $0x100] sm:$0xff] %vm1591, %v1560
    %1601 = vst.msk [vmem:[#allocation3 + $0x120] sm:$0xff] %vm1591, %v1562
    %1602 = vst.msk [vmem:[#allocation3 + $0x140] sm:$0xff] %vm1591, %v1564
    %1603 = vst.msk [vmem:[#allocation3 + $0x160] sm:$0xff] %vm1591, %v1566
    %1604 = vst.msk [vmem:[#allocation3 + $0x180] sm:$0xff] %vm1591, %v1568
    %1605 = vst.msk [vmem:[#allocation3 + $0x1a0] sm:$0xff] %vm1591, %v1570
    %1606 = vst.msk [vmem:[#allocation3 + $0x1c0] sm:$0xff] %vm1591, %v1572
    %1607 = vst.msk [vmem:[#allocation3 + $0x1e0] sm:$0xff] %vm1591, %v1574
    %v1608 = vrot.slane %v105, 3
    %v1609 = vsel %vm353, %v1058, %v1608
    %v1610 = vrot.slane %v117, 3
    %v1611 = vsel %vm353, %v1060, %v1610
    %1612 = vrot.lane.b32.xlu0 %v360, 19
    %v1613 = vpop.permute.xlu0 %1612
    %1614 = vrot.lane.b32.xlu0 %v362, 19
    %v1615 = vpop.permute.xlu0 %1614
    %1616 = vrot.lane.b32.xlu0 %v364, 19
    %v1617 = vpop.permute.xlu0 %1616
    %1618 = vrot.lane.b32.xlu0 %v366, 19
    %v1619 = vpop.permute.xlu0 %1618
    %1620 = vrot.lane.b32.xlu0 %v368, 19
    %v1621 = vpop.permute.xlu0 %1620
    %1622 = vrot.lane.b32.xlu0 %v370, 19
    %v1623 = vpop.permute.xlu0 %1622
    %1624 = vrot.lane.b32.xlu0 %v1059, 19
    %v1625 = vpop.permute.xlu0 %1624
    %1626 = vrot.lane.b32.xlu0 %v1609, 19
    %v1627 = vpop.permute.xlu0 %1626
    %1628 = vrot.lane.b32.xlu0 %v377, 19
    %v1629 = vpop.permute.xlu0 %1628
    %1630 = vrot.lane.b32.xlu0 %v379, 19
    %v1631 = vpop.permute.xlu0 %1630
    %1632 = vrot.lane.b32.xlu0 %v381, 19
    %v1633 = vpop.permute.xlu0 %1632
    %1634 = vrot.lane.b32.xlu0 %v383, 19
    %v1635 = vpop.permute.xlu0 %1634
    %1636 = vrot.lane.b32.xlu0 %v385, 19
    %v1637 = vpop.permute.xlu0 %1636
    %1638 = vrot.lane.b32.xlu0 %v387, 19
    %v1639 = vpop.permute.xlu0 %1638
    %1640 = vrot.lane.b32.xlu0 %v1061, 19
    %v1641 = vpop.permute.xlu0 %1640
    %1642 = vrot.lane.b32.xlu0 %v1611, 19
    %v1643 = vpop.permute.xlu0 %1642
    %vm1660 = vcmask 162968
    %1661 = vst.msk [vmem:[#allocation3] sm:$0xff] %vm1660, %v1613
    %1662 = vst.msk [vmem:[#allocation3 + $0x20] sm:$0xff] %vm1660, %v1615
    %1663 = vst.msk [vmem:[#allocation3 + $0x40] sm:$0xff] %vm1660, %v1617
    %1664 = vst.msk [vmem:[#allocation3 + $0x60] sm:$0xff] %vm1660, %v1619
    %1665 = vst.msk [vmem:[#allocation3 + $0x80] sm:$0xff] %vm1660, %v1621
    %1666 = vst.msk [vmem:[#allocation3 + $0xa0] sm:$0xff] %vm1660, %v1623
    %1667 = vst.msk [vmem:[#allocation3 + $0xc0] sm:$0xff] %vm1660, %v1625
    %1668 = vst.msk [vmem:[#allocation3 + $0xe0] sm:$0xff] %vm1660, %v1627
    %1669 = vst.msk [vmem:[#allocation3 + $0x100] sm:$0xff] %vm1660, %v1629
    %1670 = vst.msk [vmem:[#allocation3 + $0x120] sm:$0xff] %vm1660, %v1631
    %1671 = vst.msk [vmem:[#allocation3 + $0x140] sm:$0xff] %vm1660, %v1633
    %1672 = vst.msk [vmem:[#allocation3 + $0x160] sm:$0xff] %vm1660, %v1635
    %1673 = vst.msk [vmem:[#allocation3 + $0x180] sm:$0xff] %vm1660, %v1637
    %1674 = vst.msk [vmem:[#allocation3 + $0x1a0] sm:$0xff] %vm1660, %v1639
    %1675 = vst.msk [vmem:[#allocation3 + $0x1c0] sm:$0xff] %vm1660, %v1641
    %1676 = vst.msk [vmem:[#allocation3 + $0x1e0] sm:$0xff] %vm1660, %v1643
    %v1677 = vrot.slane %v105, 4
    %v1678 = vsel %vm453, %v1127, %v1677
    %v1679 = vrot.slane %v117, 4
    %v1680 = vsel %vm453, %v1129, %v1679
    %1681 = vrot.lane.b32.xlu0 %v460, 20
    %v1682 = vpop.permute.xlu0 %1681
    %1683 = vrot.lane.b32.xlu0 %v462, 20
    %v1684 = vpop.permute.xlu0 %1683
    %1685 = vrot.lane.b32.xlu0 %v464, 20
    %v1686 = vpop.permute.xlu0 %1685
    %1687 = vrot.lane.b32.xlu0 %v466, 20
    %v1688 = vpop.permute.xlu0 %1687
    %1689 = vrot.lane.b32.xlu0 %v468, 20
    %v1690 = vpop.permute.xlu0 %1689
    %1691 = vrot.lane.b32.xlu0 %v470, 20
    %v1692 = vpop.permute.xlu0 %1691
    %1693 = vrot.lane.b32.xlu0 %v1128, 20
    %v1694 = vpop.permute.xlu0 %1693
    %1695 = vrot.lane.b32.xlu0 %v1678, 20
    %v1696 = vpop.permute.xlu0 %1695
    %1697 = vrot.lane.b32.xlu0 %v477, 20
    %v1698 = vpop.permute.xlu0 %1697
    %1699 = vrot.lane.b32.xlu0 %v479, 20
    %v1700 = vpop.permute.xlu0 %1699
    %1701 = vrot.lane.b32.xlu0 %v481, 20
    %v1702 = vpop.permute.xlu0 %1701
    %1703 = vrot.lane.b32.xlu0 %v483, 20
    %v1704 = vpop.permute.xlu0 %1703
    %1705 = vrot.lane.b32.xlu0 %v485, 20
    %v1706 = vpop.permute.xlu0 %1705
    %1707 = vrot.lane.b32.xlu0 %v487, 20
    %v1708 = vpop.permute.xlu0 %1707
    %1709 = vrot.lane.b32.xlu0 %v1130, 20
    %v1710 = vpop.permute.xlu0 %1709
    %1711 = vrot.lane.b32.xlu0 %v1680, 20
    %v1712 = vpop.permute.xlu0 %1711
    %vm1729 = vcmask 171168
    %1730 = vst.msk [vmem:[#allocation3] sm:$0xff] %vm1729, %v1682
    %1731 = vst.msk [vmem:[#allocation3 + $0x20] sm:$0xff] %vm1729, %v1684
    %1732 = vst.msk [vmem:[#allocation3 + $0x40] sm:$0xff] %vm1729, %v1686
    %1733 = vst.msk [vmem:[#allocation3 + $0x60] sm:$0xff] %vm1729, %v1688
    %1734 = vst.msk [vmem:[#allocation3 + $0x80] sm:$0xff] %vm1729, %v1690
    %1735 = vst.msk [vmem:[#allocation3 + $0xa0] sm:$0xff] %vm1729, %v1692
    %1736 = vst.msk [vmem:[#allocation3 + $0xc0] sm:$0xff] %vm1729, %v1694
    %1737 = vst.msk [vmem:[#allocation3 + $0xe0] sm:$0xff] %vm1729, %v1696
    %1738 = vst.msk [vmem:[#allocation3 + $0x100] sm:$0xff] %vm1729, %v1698
    %1739 = vst.msk [vmem:[#allocation3 + $0x120] sm:$0xff] %vm1729, %v1700
    %1740 = vst.msk [vmem:[#allocation3 + $0x140] sm:$0xff] %vm1729, %v1702
    %1741 = vst.msk [vmem:[#allocation3 + $0x160] sm:$0xff] %vm1729, %v1704
    %1742 = vst.msk [vmem:[#allocation3 + $0x180] sm:$0xff] %vm1729, %v1706
    %1743 = vst.msk [vmem:[#allocation3 + $0x1a0] sm:$0xff] %vm1729, %v1708
    %1744 = vst.msk [vmem:[#allocation3 + $0x1c0] sm:$0xff] %vm1729, %v1710
    %1745 = vst.msk [vmem:[#allocation3 + $0x1e0] sm:$0xff] %vm1729, %v1712
    %v1746 = vrot.slane %v105, 5
    %v1747 = vsel %vm553, %v1196, %v1746
    %v1748 = vrot.slane %v117, 5
    %v1749 = vsel %vm553, %v1198, %v1748
    %1750 = vrot.lane.b32.xlu0 %v560, 21
    %v1751 = vpop.permute.xlu0 %1750
    %1752 = vrot.lane.b32.xlu0 %v562, 21
    %v1753 = vpop.permute.xlu0 %1752
    %1754 = vrot.lane.b32.xlu0 %v564, 21
    %v1755 = vpop.permute.xlu0 %1754
    %1756 = vrot.lane.b32.xlu0 %v566, 21
    %v1757 = vpop.permute.xlu0 %1756
    %1758 = vrot.lane.b32.xlu0 %v568, 21
    %v1759 = vpop.permute.xlu0 %1758
    %1760 = vrot.lane.b32.xlu0 %v570, 21
    %v1761 = vpop.permute.xlu0 %1760
    %1762 = vrot.lane.b32.xlu0 %v1197, 21
    %v1763 = vpop.permute.xlu0 %1762
    %1764 = vrot.lane.b32.xlu0 %v1747, 21
    %v1765 = vpop.permute.xlu0 %1764
    %1766 = vrot.lane.b32.xlu0 %v577, 21
    %v1767 = vpop.permute.xlu0 %1766
    %1768 = vrot.lane.b32.xlu0 %v579, 21
    %v1769 = vpop.permute.xlu0 %1768
    %1770 = vrot.lane.b32.xlu0 %v581, 21
    %v1771 = vpop.permute.xlu0 %1770
    %1772 = vrot.lane.b32.xlu0 %v583, 21
    %v1773 = vpop.permute.xlu0 %1772
    %1774 = vrot.lane.b32.xlu0 %v585, 21
    %v1775 = vpop.permute.xlu0 %1774
    %1776 = vrot.lane.b32.xlu0 %v587, 21
    %v1777 = vpop.permute.xlu0 %1776
    %1778 = vrot.lane.b32.xlu0 %v1199, 21
    %v1779 = vpop.permute.xlu0 %1778
    %1780 = vrot.lane.b32.xlu0 %v1749, 21
    %v1781 = vpop.permute.xlu0 %1780
    %vm1798 = vcmask 179368
    %1799 = vst.msk [vmem:[#allocation3] sm:$0xff] %vm1798, %v1751
    %1800 = vst.msk [vmem:[#allocation3 + $0x20] sm:$0xff] %vm1798, %v1753
    %1801 = vst.msk [vmem:[#allocation3 + $0x40] sm:$0xff] %vm1798, %v1755
    %1802 = vst.msk [vmem:[#allocation3 + $0x60] sm:$0xff] %vm1798, %v1757
    %1803 = vst.msk [vmem:[#allocation3 + $0x80] sm:$0xff] %vm1798, %v1759
    %1804 = vst.msk [vmem:[#allocation3 + $0xa0] sm:$0xff] %vm1798, %v1761
    %1805 = vst.msk [vmem:[#allocation3 + $0xc0] sm:$0xff] %vm1798, %v1763
    %1806 = vst.msk [vmem:[#allocation3 + $0xe0] sm:$0xff] %vm1798, %v1765
    %1807 = vst.msk [vmem:[#allocation3 + $0x100] sm:$0xff] %vm1798, %v1767
    %1808 = vst.msk [vmem:[#allocation3 + $0x120] sm:$0xff] %vm1798, %v1769
    %1809 = vst.msk [vmem:[#allocation3 + $0x140] sm:$0xff] %vm1798, %v1771
    %1810 = vst.msk [vmem:[#allocation3 + $0x160] sm:$0xff] %vm1798, %v1773
    %1811 = vst.msk [vmem:[#allocation3 + $0x180] sm:$0xff] %vm1798, %v1775
    %1812 = vst.msk [vmem:[#allocation3 + $0x1a0] sm:$0xff] %vm1798, %v1777
    %1813 = vst.msk [vmem:[#allocation3 + $0x1c0] sm:$0xff] %vm1798, %v1779
    %1814 = vst.msk [vmem:[#allocation3 + $0x1e0] sm:$0xff] %vm1798, %v1781
    %v1815 = vrot.slane %v105, 6
    %v1816 = vsel %vm653, %v1265, %v1815
    %v1817 = vrot.slane %v117, 6
    %v1818 = vsel %vm653, %v1267, %v1817
    %1819 = vrot.lane.b32.xlu0 %v660, 22
    %v1820 = vpop.permute.xlu0 %1819
    %1821 = vrot.lane.b32.xlu0 %v662, 22
    %v1822 = vpop.permute.xlu0 %1821
    %1823 = vrot.lane.b32.xlu0 %v664, 22
    %v1824 = vpop.permute.xlu0 %1823
    %1825 = vrot.lane.b32.xlu0 %v666, 22
    %v1826 = vpop.permute.xlu0 %1825
    %1827 = vrot.lane.b32.xlu0 %v668, 22
    %v1828 = vpop.permute.xlu0 %1827
    %1829 = vrot.lane.b32.xlu0 %v670, 22
    %v1830 = vpop.permute.xlu0 %1829
    %1831 = vrot.lane.b32.xlu0 %v1266, 22
    %v1832 = vpop.permute.xlu0 %1831
    %1833 = vrot.lane.b32.xlu0 %v1816, 22
    %v1834 = vpop.permute.xlu0 %1833
    %1835 = vrot.lane.b32.xlu0 %v677, 22
    %v1836 = vpop.permute.xlu0 %1835
    %1837 = vrot.lane.b32.xlu0 %v679, 22
    %v1838 = vpop.permute.xlu0 %1837
    %1839 = vrot.lane.b32.xlu0 %v681, 22
    %v1840 = vpop.permute.xlu0 %1839
    %1841 = vrot.lane.b32.xlu0 %v683, 22
    %v1842 = vpop.permute.xlu0 %1841
    %1843 = vrot.lane.b32.xlu0 %v685, 22
    %v1844 = vpop.permute.xlu0 %1843
    %1845 = vrot.lane.b32.xlu0 %v687, 22
    %v1846 = vpop.permute.xlu0 %1845
    %1847 = vrot.lane.b32.xlu0 %v1268, 22
    %v1848 = vpop.permute.xlu0 %1847
    %1849 = vrot.lane.b32.xlu0 %v1818, 22
    %v1850 = vpop.permute.xlu0 %1849
    %vm1867 = vcmask 187568
    %1868 = vst.msk [vmem:[#allocation3] sm:$0xff] %vm1867, %v1820
    %1869 = vst.msk [vmem:[#allocation3 + $0x20] sm:$0xff] %vm1867, %v1822
    %1870 = vst.msk [vmem:[#allocation3 + $0x40] sm:$0xff] %vm1867, %v1824
    %1871 = vst.msk [vmem:[#allocation3 + $0x60] sm:$0xff] %vm1867, %v1826
    %1872 = vst.msk [vmem:[#allocation3 + $0x80] sm:$0xff] %vm1867, %v1828
    %1873 = vst.msk [vmem:[#allocation3 + $0xa0] sm:$0xff] %vm1867, %v1830
    %1874 = vst.msk [vmem:[#allocation3 + $0xc0] sm:$0xff] %vm1867, %v1832
    %1875 = vst.msk [vmem:[#allocation3 + $0xe0] sm:$0xff] %vm1867, %v1834
    %1876 = vst.msk [vmem:[#allocation3 + $0x100] sm:$0xff] %vm1867, %v1836
    %1877 = vst.msk [vmem:[#allocation3 + $0x120] sm:$0xff] %vm1867, %v1838
    %1878 = vst.msk [vmem:[#allocation3 + $0x140] sm:$0xff] %vm1867, %v1840
    %1879 = vst.msk [vmem:[#allocation3 + $0x160] sm:$0xff] %vm1867, %v1842
    %1880 = vst.msk [vmem:[#allocation3 + $0x180] sm:$0xff] %vm1867, %v1844
    %1881 = vst.msk [vmem:[#allocation3 + $0x1a0] sm:$0xff] %vm1867, %v1846
    %1882 = vst.msk [vmem:[#allocation3 + $0x1c0] sm:$0xff] %vm1867, %v1848
    %1883 = vst.msk [vmem:[#allocation3 + $0x1e0] sm:$0xff] %vm1867, %v1850
    %v1884 = vrot.slane %v105, 7
    %v1885 = vsel %vm753, %v1334, %v1884
    %v1886 = vrot.slane %v117, 7
    %v1887 = vsel %vm753, %v1336, %v1886
    %1888 = vrot.lane.b32.xlu0 %v760, 23
    %v1889 = vpop.permute.xlu0 %1888
    %1890 = vrot.lane.b32.xlu0 %v762, 23
    %v1891 = vpop.permute.xlu0 %1890
    %1892 = vrot.lane.b32.xlu0 %v764, 23
    %v1893 = vpop.permute.xlu0 %1892
    %1894 = vrot.lane.b32.xlu0 %v766, 23
    %v1895 = vpop.permute.xlu0 %1894
    %1896 = vrot.lane.b32.xlu0 %v768, 23
    %v1897 = vpop.permute.xlu0 %1896
    %1898 = vrot.lane.b32.xlu0 %v770, 23
    %v1899 = vpop.permute.xlu0 %1898
    %1900 = vrot.lane.b32.xlu0 %v1335, 23
    %v1901 = vpop.permute.xlu0 %1900
    %1902 = vrot.lane.b32.xlu0 %v1885, 23
    %v1903 = vpop.permute.xlu0 %1902
    %1904 = vrot.lane.b32.xlu0 %v777, 23
    %v1905 = vpop.permute.xlu0 %1904
    %1906 = vrot.lane.b32.xlu0 %v779, 23
    %v1907 = vpop.permute.xlu0 %1906
    %1908 = vrot.lane.b32.xlu0 %v781, 23
    %v1909 = vpop.permute.xlu0 %1908
    %1910 = vrot.lane.b32.xlu0 %v783, 23
    %v1911 = vpop.permute.xlu0 %1910
    %1912 = vrot.lane.b32.xlu0 %v785, 23
    %v1913 = vpop.permute.xlu0 %1912
    %1914 = vrot.lane.b32.xlu0 %v787, 23
    %v1915 = vpop.permute.xlu0 %1914
    %1916 = vrot.lane.b32.xlu0 %v1337, 23
    %v1917 = vpop.permute.xlu0 %1916
    %1918 = vrot.lane.b32.xlu0 %v1887, 23
    %v1919 = vpop.permute.xlu0 %1918
    %vm1936 = vcmask 195768
    %1937 = vst.msk [vmem:[#allocation3] sm:$0xff] %vm1936, %v1889
    %1938 = vst.msk [vmem:[#allocation3 + $0x20] sm:$0xff] %vm1936, %v1891
    %1939 = vst.msk [vmem:[#allocation3 + $0x40] sm:$0xff] %vm1936, %v1893
    %1940 = vst.msk [vmem:[#allocation3 + $0x60] sm:$0xff] %vm1936, %v1895
    %1941 = vst.msk [vmem:[#allocation3 + $0x80] sm:$0xff] %vm1936, %v1897
    %1942 = vst.msk [vmem:[#allocation3 + $0xa0] sm:$0xff] %vm1936, %v1899
    %1943 = vst.msk [vmem:[#allocation3 + $0xc0] sm:$0xff] %vm1936, %v1901
    %1944 = vst.msk [vmem:[#allocation3 + $0xe0] sm:$0xff] %vm1936, %v1903
    %1945 = vst.msk [vmem:[#allocation3 + $0x100] sm:$0xff] %vm1936, %v1905
    %1946 = vst.msk [vmem:[#allocation3 + $0x120] sm:$0xff] %vm1936, %v1907
    %1947 = vst.msk [vmem:[#allocation3 + $0x140] sm:$0xff] %vm1936, %v1909
    %1948 = vst.msk [vmem:[#allocation3 + $0x160] sm:$0xff] %vm1936, %v1911
    %1949 = vst.msk [vmem:[#allocation3 + $0x180] sm:$0xff] %vm1936, %v1913
    %1950 = vst.msk [vmem:[#allocation3 + $0x1a0] sm:$0xff] %vm1936, %v1915
    %1951 = vst.msk [vmem:[#allocation3 + $0x1c0] sm:$0xff] %vm1936, %v1917
    %1952 = vst.msk [vmem:[#allocation3 + $0x1e0] sm:$0xff] %vm1936, %v1919
    %1953 = vrot.lane.b32.xlu0 %v98, 24
    %v1954 = vpop.permute.xlu0 %1953
    %1955 = vrot.lane.b32.xlu0 %v99, 24
    %v1956 = vpop.permute.xlu0 %1955
    %1957 = vrot.lane.b32.xlu0 %v100, 24
    %v1958 = vpop.permute.xlu0 %1957
    %1959 = vrot.lane.b32.xlu0 %v101, 24
    %v1960 = vpop.permute.xlu0 %1959
    %1961 = vrot.lane.b32.xlu0 %v102, 24
    %v1962 = vpop.permute.xlu0 %1961
    %1963 = vrot.lane.b32.xlu0 %v103, 24
    %v1964 = vpop.permute.xlu0 %1963
    %1965 = vrot.lane.b32.xlu0 %v104, 24
    %v1966 = vpop.permute.xlu0 %1965
    %1967 = vrot.lane.b32.xlu0 %v105, 24
    %v1968 = vpop.permute.xlu0 %1967
    %1969 = vrot.lane.b32.xlu0 %v110, 24
    %v1970 = vpop.permute.xlu0 %1969
    %1971 = vrot.lane.b32.xlu0 %v111, 24
    %v1972 = vpop.permute.xlu0 %1971
    %1973 = vrot.lane.b32.xlu0 %v112, 24
    %v1974 = vpop.permute.xlu0 %1973
    %1975 = vrot.lane.b32.xlu0 %v113, 24
    %v1976 = vpop.permute.xlu0 %1975
    %1977 = vrot.lane.b32.xlu0 %v114, 24
    %v1978 = vpop.permute.xlu0 %1977
    %1979 = vrot.lane.b32.xlu0 %v115, 24
    %v1980 = vpop.permute.xlu0 %1979
    %1981 = vrot.lane.b32.xlu0 %v116, 24
    %v1982 = vpop.permute.xlu0 %1981
    %1983 = vrot.lane.b32.xlu0 %v117, 24
    %v1984 = vpop.permute.xlu0 %1983
    %vm2001 = vcmask 203968
    %2002 = vst.msk [vmem:[#allocation3] sm:$0xff] %vm2001, %v1954
    %2003 = vst.msk [vmem:[#allocation3 + $0x20] sm:$0xff] %vm2001, %v1956
    %2004 = vst.msk [vmem:[#allocation3 + $0x40] sm:$0xff] %vm2001, %v1958
    %2005 = vst.msk [vmem:[#allocation3 + $0x60] sm:$0xff] %vm2001, %v1960
    %2006 = vst.msk [vmem:[#allocation3 + $0x80] sm:$0xff] %vm2001, %v1962
    %2007 = vst.msk [vmem:[#allocation3 + $0xa0] sm:$0xff] %vm2001, %v1964
    %2008 = vst.msk [vmem:[#allocation3 + $0xc0] sm:$0xff] %vm2001, %v1966
    %2009 = vst.msk [vmem:[#allocation3 + $0xe0] sm:$0xff] %vm2001, %v1968
    %2010 = vst.msk [vmem:[#allocation3 + $0x100] sm:$0xff] %vm2001, %v1970
    %2011 = vst.msk [vmem:[#allocation3 + $0x120] sm:$0xff] %vm2001, %v1972
    %2012 = vst.msk [vmem:[#allocation3 + $0x140] sm:$0xff] %vm2001, %v1974
    %2013 = vst.msk [vmem:[#allocation3 + $0x160] sm:$0xff] %vm2001, %v1976
    %2014 = vst.msk [vmem:[#allocation3 + $0x180] sm:$0xff] %vm2001, %v1978
    %2015 = vst.msk [vmem:[#allocation3 + $0x1a0] sm:$0xff] %vm2001, %v1980
    %2016 = vst.msk [vmem:[#allocation3 + $0x1c0] sm:$0xff] %vm2001, %v1982
    %2017 = vst.msk [vmem:[#allocation3 + $0x1e0] sm:$0xff] %vm2001, %v1984
    %v2020 = vrot.slane %v106, 1
    %v2021 = vsel %vm153, %v1470, %v2020
    %v2022 = vrot.slane %v118, 1
    %v2023 = vsel %vm153, %v1472, %v2022
    %2024 = vrot.lane.b32.xlu0 %v162, 25
    %v2025 = vpop.permute.xlu0 %2024
    %2026 = vrot.lane.b32.xlu0 %v164, 25
    %v2027 = vpop.permute.xlu0 %2026
    %2028 = vrot.lane.b32.xlu0 %v166, 25
    %v2029 = vpop.permute.xlu0 %2028
    %2030 = vrot.lane.b32.xlu0 %v168, 25
    %v2031 = vpop.permute.xlu0 %2030
    %2032 = vrot.lane.b32.xlu0 %v170, 25
    %v2033 = vpop.permute.xlu0 %2032
    %2034 = vrot.lane.b32.xlu0 %v921, 25
    %v2035 = vpop.permute.xlu0 %2034
    %2036 = vrot.lane.b32.xlu0 %v1471, 25
    %v2037 = vpop.permute.xlu0 %2036
    %2038 = vrot.lane.b32.xlu0 %v2021, 25
    %v2039 = vpop.permute.xlu0 %2038
    %2040 = vrot.lane.b32.xlu0 %v179, 25
    %v2041 = vpop.permute.xlu0 %2040
    %2042 = vrot.lane.b32.xlu0 %v181, 25
    %v2043 = vpop.permute.xlu0 %2042
    %2044 = vrot.lane.b32.xlu0 %v183, 25
    %v2045 = vpop.permute.xlu0 %2044
    %2046 = vrot.lane.b32.xlu0 %v185, 25
    %v2047 = vpop.permute.xlu0 %2046
    %2048 = vrot.lane.b32.xlu0 %v187, 25
    %v2049 = vpop.permute.xlu0 %2048
    %2050 = vrot.lane.b32.xlu0 %v923, 25
    %v2051 = vpop.permute.xlu0 %2050
    %2052 = vrot.lane.b32.xlu0 %v1473, 25
    %v2053 = vpop.permute.xlu0 %2052
    %2054 = vrot.lane.b32.xlu0 %v2023, 25
    %v2055 = vpop.permute.xlu0 %2054
    %vm2072 = vcmask 212168
    %2073 = vst.msk [vmem:[#allocation3] sm:$0xff] %vm2072, %v2025
    %2074 = vst.msk [vmem:[#allocation3 + $0x20] sm:$0xff] %vm2072, %v2027
    %2075 = vst.msk [vmem:[#allocation3 + $0x40] sm:$0xff] %vm2072, %v2029
    %2076 = vst.msk [vmem:[#allocation3 + $0x60] sm:$0xff] %vm2072, %v2031
    %2077 = vst.msk [vmem:[#allocation3 + $0x80] sm:$0xff] %vm2072, %v2033
    %2078 = vst.msk [vmem:[#allocation3 + $0xa0] sm:$0xff] %vm2072, %v2035
    %2079 = vst.msk [vmem:[#allocation3 + $0xc0] sm:$0xff] %vm2072, %v2037
    %2080 = vst.msk [vmem:[#allocation3 + $0xe0] sm:$0xff] %vm2072, %v2039
    %2081 = vst.msk [vmem:[#allocation3 + $0x100] sm:$0xff] %vm2072, %v2041
    %2082 = vst.msk [vmem:[#allocation3 + $0x120] sm:$0xff] %vm2072, %v2043
    %2083 = vst.msk [vmem:[#allocation3 + $0x140] sm:$0xff] %vm2072, %v2045
    %2084 = vst.msk [vmem:[#allocation3 + $0x160] sm:$0xff] %vm2072, %v2047
    %2085 = vst.msk [vmem:[#allocation3 + $0x180] sm:$0xff] %vm2072, %v2049
    %2086 = vst.msk [vmem:[#allocation3 + $0x1a0] sm:$0xff] %vm2072, %v2051
    %2087 = vst.msk [vmem:[#allocation3 + $0x1c0] sm:$0xff] %vm2072, %v2053
    %2088 = vst.msk [vmem:[#allocation3 + $0x1e0] sm:$0xff] %vm2072, %v2055
    %v2089 = vrot.slane %v106, 2
    %v2090 = vsel %vm253, %v1539, %v2089
    %v2091 = vrot.slane %v118, 2
    %v2092 = vsel %vm253, %v1541, %v2091
    %2093 = vrot.lane.b32.xlu0 %v262, 26
    %v2094 = vpop.permute.xlu0 %2093
    %2095 = vrot.lane.b32.xlu0 %v264, 26
    %v2096 = vpop.permute.xlu0 %2095
    %2097 = vrot.lane.b32.xlu0 %v266, 26
    %v2098 = vpop.permute.xlu0 %2097
    %2099 = vrot.lane.b32.xlu0 %v268, 26
    %v2100 = vpop.permute.xlu0 %2099
    %2101 = vrot.lane.b32.xlu0 %v270, 26
    %v2102 = vpop.permute.xlu0 %2101
    %2103 = vrot.lane.b32.xlu0 %v990, 26
    %v2104 = vpop.permute.xlu0 %2103
    %2105 = vrot.lane.b32.xlu0 %v1540, 26
    %v2106 = vpop.permute.xlu0 %2105
    %2107 = vrot.lane.b32.xlu0 %v2090, 26
    %v2108 = vpop.permute.xlu0 %2107
    %2109 = vrot.lane.b32.xlu0 %v279, 26
    %v2110 = vpop.permute.xlu0 %2109
    %2111 = vrot.lane.b32.xlu0 %v281, 26
    %v2112 = vpop.permute.xlu0 %2111
    %2113 = vrot.lane.b32.xlu0 %v283, 26
    %v2114 = vpop.permute.xlu0 %2113
    %2115 = vrot.lane.b32.xlu0 %v285, 26
    %v2116 = vpop.permute.xlu0 %2115
    %2117 = vrot.lane.b32.xlu0 %v287, 26
    %v2118 = vpop.permute.xlu0 %2117
    %2119 = vrot.lane.b32.xlu0 %v992, 26
    %v2120 = vpop.permute.xlu0 %2119
    %2121 = vrot.lane.b32.xlu0 %v1542, 26
    %v2122 = vpop.permute.xlu0 %2121
    %2123 = vrot.lane.b32.xlu0 %v2092, 26
    %v2124 = vpop.permute.xlu0 %2123
    %vm2141 = vcmask 220368
    %2142 = vst.msk [vmem:[#allocation3] sm:$0xff] %vm2141, %v2094
    %2143 = vst.msk [vmem:[#allocation3 + $0x20] sm:$0xff] %vm2141, %v2096
    %2144 = vst.msk [vmem:[#allocation3 + $0x40] sm:$0xff] %vm2141, %v2098
    %2145 = vst.msk [vmem:[#allocation3 + $0x60] sm:$0xff] %vm2141, %v2100
    %2146 = vst.msk [vmem:[#allocation3 + $0x80] sm:$0xff] %vm2141, %v2102
    %2147 = vst.msk [vmem:[#allocation3 + $0xa0] sm:$0xff] %vm2141, %v2104
    %2148 = vst.msk [vmem:[#allocation3 + $0xc0] sm:$0xff] %vm2141, %v2106
    %2149 = vst.msk [vmem:[#allocation3 + $0xe0] sm:$0xff] %vm2141, %v2108
    %2150 = vst.msk [vmem:[#allocation3 + $0x100] sm:$0xff] %vm2141, %v2110
    %2151 = vst.msk [vmem:[#allocation3 + $0x120] sm:$0xff] %vm2141, %v2112
    %2152 = vst.msk [vmem:[#allocation3 + $0x140] sm:$0xff] %vm2141, %v2114
    %2153 = vst.msk [vmem:[#allocation3 + $0x160] sm:$0xff] %vm2141, %v2116
    %2154 = vst.msk [vmem:[#allocation3 + $0x180] sm:$0xff] %vm2141, %v2118
    %2155 = vst.msk [vmem:[#allocation3 + $0x1a0] sm:$0xff] %vm2141, %v2120
    %2156 = vst.msk [vmem:[#allocation3 + $0x1c0] sm:$0xff] %vm2141, %v2122
    %2157 = vst.msk [vmem:[#allocation3 + $0x1e0] sm:$0xff] %vm2141, %v2124
    %v2158 = vrot.slane %v106, 3
    %v2159 = vsel %vm353, %v1608, %v2158
    %v2160 = vrot.slane %v118, 3
    %v2161 = vsel %vm353, %v1610, %v2160
    %2162 = vrot.lane.b32.xlu0 %v362, 27
    %v2163 = vpop.permute.xlu0 %2162
    %2164 = vrot.lane.b32.xlu0 %v364, 27
    %v2165 = vpop.permute.xlu0 %2164
    %2166 = vrot.lane.b32.xlu0 %v366, 27
    %v2167 = vpop.permute.xlu0 %2166
    %2168 = vrot.lane.b32.xlu0 %v368, 27
    %v2169 = vpop.permute.xlu0 %2168
    %2170 = vrot.lane.b32.xlu0 %v370, 27
    %v2171 = vpop.permute.xlu0 %2170
    %2172 = vrot.lane.b32.xlu0 %v1059, 27
    %v2173 = vpop.permute.xlu0 %2172
    %2174 = vrot.lane.b32.xlu0 %v1609, 27
    %v2175 = vpop.permute.xlu0 %2174
    %2176 = vrot.lane.b32.xlu0 %v2159, 27
    %v2177 = vpop.permute.xlu0 %2176
    %2178 = vrot.lane.b32.xlu0 %v379, 27
    %v2179 = vpop.permute.xlu0 %2178
    %2180 = vrot.lane.b32.xlu0 %v381, 27
    %v2181 = vpop.permute.xlu0 %2180
    %2182 = vrot.lane.b32.xlu0 %v383, 27
    %v2183 = vpop.permute.xlu0 %2182
    %2184 = vrot.lane.b32.xlu0 %v385, 27
    %v2185 = vpop.permute.xlu0 %2184
    %2186 = vrot.lane.b32.xlu0 %v387, 27
    %v2187 = vpop.permute.xlu0 %2186
    %2188 = vrot.lane.b32.xlu0 %v1061, 27
    %v2189 = vpop.permute.xlu0 %2188
    %2190 = vrot.lane.b32.xlu0 %v1611, 27
    %v2191 = vpop.permute.xlu0 %2190
    %2192 = vrot.lane.b32.xlu0 %v2161, 27
    %v2193 = vpop.permute.xlu0 %2192
    %vm2210 = vcmask 228568
    %2211 = vst.msk [vmem:[#allocation3] sm:$0xff] %vm2210, %v2163
    %2212 = vst.msk [vmem:[#allocation3 + $0x20] sm:$0xff] %vm2210, %v2165
    %2213 = vst.msk [vmem:[#allocation3 + $0x40] sm:$0xff] %vm2210, %v2167
    %2214 = vst.msk [vmem:[#allocation3 + $0x60] sm:$0xff] %vm2210, %v2169
    %2215 = vst.msk [vmem:[#allocation3 + $0x80] sm:$0xff] %vm2210, %v2171
    %2216 = vst.msk [vmem:[#allocation3 + $0xa0] sm:$0xff] %vm2210, %v2173
    %2217 = vst.msk [vmem:[#allocation3 + $0xc0] sm:$0xff] %vm2210, %v2175
    %2218 = vst.msk [vmem:[#allocation3 + $0xe0] sm:$0xff] %vm2210, %v2177
    %2219 = vst.msk [vmem:[#allocation3 + $0x100] sm:$0xff] %vm2210, %v2179
    %2220 = vst.msk [vmem:[#allocation3 + $0x120] sm:$0xff] %vm2210, %v2181
    %2221 = vst.msk [vmem:[#allocation3 + $0x140] sm:$0xff] %vm2210, %v2183
    %2222 = vst.msk [vmem:[#allocation3 + $0x160] sm:$0xff] %vm2210, %v2185
    %2223 = vst.msk [vmem:[#allocation3 + $0x180] sm:$0xff] %vm2210, %v2187
    %2224 = vst.msk [vmem:[#allocation3 + $0x1a0] sm:$0xff] %vm2210, %v2189
    %2225 = vst.msk [vmem:[#allocation3 + $0x1c0] sm:$0xff] %vm2210, %v2191
    %2226 = vst.msk [vmem:[#allocation3 + $0x1e0] sm:$0xff] %vm2210, %v2193
    %v2227 = vrot.slane %v106, 4
    %v2228 = vsel %vm453, %v1677, %v2227
    %v2229 = vrot.slane %v118, 4
    %v2230 = vsel %vm453, %v1679, %v2229
    %2231 = vrot.lane.b32.xlu0 %v462, 28
    %v2232 = vpop.permute.xlu0 %2231
    %2233 = vrot.lane.b32.xlu0 %v464, 28
    %v2234 = vpop.permute.xlu0 %2233
    %2235 = vrot.lane.b32.xlu0 %v466, 28
    %v2236 = vpop.permute.xlu0 %2235
    %2237 = vrot.lane.b32.xlu0 %v468, 28
    %v2238 = vpop.permute.xlu0 %2237
    %2239 = vrot.lane.b32.xlu0 %v470, 28
    %v2240 = vpop.permute.xlu0 %2239
    %2241 = vrot.lane.b32.xlu0 %v1128, 28
    %v2242 = vpop.permute.xlu0 %2241
    %2243 = vrot.lane.b32.xlu0 %v1678, 28
    %v2244 = vpop.permute.xlu0 %2243
    %2245 = vrot.lane.b32.xlu0 %v2228, 28
    %v2246 = vpop.permute.xlu0 %2245
    %2247 = vrot.lane.b32.xlu0 %v479, 28
    %v2248 = vpop.permute.xlu0 %2247
    %2249 = vrot.lane.b32.xlu0 %v481, 28
    %v2250 = vpop.permute.xlu0 %2249
    %2251 = vrot.lane.b32.xlu0 %v483, 28
    %v2252 = vpop.permute.xlu0 %2251
    %2253 = vrot.lane.b32.xlu0 %v485, 28
    %v2254 = vpop.permute.xlu0 %2253
    %2255 = vrot.lane.b32.xlu0 %v487, 28
    %v2256 = vpop.permute.xlu0 %2255
    %2257 = vrot.lane.b32.xlu0 %v1130, 28
    %v2258 = vpop.permute.xlu0 %2257
    %2259 = vrot.lane.b32.xlu0 %v1680, 28
    %v2260 = vpop.permute.xlu0 %2259
    %2261 = vrot.lane.b32.xlu0 %v2230, 28
    %v2262 = vpop.permute.xlu0 %2261
    %vm2279 = vcmask 236768
    %2280 = vst.msk [vmem:[#allocation3] sm:$0xff] %vm2279, %v2232
    %2281 = vst.msk [vmem:[#allocation3 + $0x20] sm:$0xff] %vm2279, %v2234
    %2282 = vst.msk [vmem:[#allocation3 + $0x40] sm:$0xff] %vm2279, %v2236
    %2283 = vst.msk [vmem:[#allocation3 + $0x60] sm:$0xff] %vm2279, %v2238
    %2284 = vst.msk [vmem:[#allocation3 + $0x80] sm:$0xff] %vm2279, %v2240
    %2285 = vst.msk [vmem:[#allocation3 + $0xa0] sm:$0xff] %vm2279, %v2242
    %2286 = vst.msk [vmem:[#allocation3 + $0xc0] sm:$0xff] %vm2279, %v2244
    %2287 = vst.msk [vmem:[#allocation3 + $0xe0] sm:$0xff] %vm2279, %v2246
    %2288 = vst.msk [vmem:[#allocation3 + $0x100] sm:$0xff] %vm2279, %v2248
    %2289 = vst.msk [vmem:[#allocation3 + $0x120] sm:$0xff] %vm2279, %v2250
    %2290 = vst.msk [vmem:[#allocation3 + $0x140] sm:$0xff] %vm2279, %v2252
    %2291 = vst.msk [vmem:[#allocation3 + $0x160] sm:$0xff] %vm2279, %v2254
    %2292 = vst.msk [vmem:[#allocation3 + $0x180] sm:$0xff] %vm2279, %v2256
    %2293 = vst.msk [vmem:[#allocation3 + $0x1a0] sm:$0xff] %vm2279, %v2258
    %2294 = vst.msk [vmem:[#allocation3 + $0x1c0] sm:$0xff] %vm2279, %v2260
    %2295 = vst.msk [vmem:[#allocation3 + $0x1e0] sm:$0xff] %vm2279, %v2262
    %v2296 = vrot.slane %v106, 5
    %v2297 = vsel %vm553, %v1746, %v2296
    %v2298 = vrot.slane %v118, 5
    %v2299 = vsel %vm553, %v1748, %v2298
    %2300 = vrot.lane.b32.xlu0 %v562, 29
    %v2301 = vpop.permute.xlu0 %2300
    %2302 = vrot.lane.b32.xlu0 %v564, 29
    %v2303 = vpop.permute.xlu0 %2302
    %2304 = vrot.lane.b32.xlu0 %v566, 29
    %v2305 = vpop.permute.xlu0 %2304
    %2306 = vrot.lane.b32.xlu0 %v568, 29
    %v2307 = vpop.permute.xlu0 %2306
    %2308 = vrot.lane.b32.xlu0 %v570, 29
    %v2309 = vpop.permute.xlu0 %2308
    %2310 = vrot.lane.b32.xlu0 %v1197, 29
    %v2311 = vpop.permute.xlu0 %2310
    %2312 = vrot.lane.b32.xlu0 %v1747, 29
    %v2313 = vpop.permute.xlu0 %2312
    %2314 = vrot.lane.b32.xlu0 %v2297, 29
    %v2315 = vpop.permute.xlu0 %2314
    %2316 = vrot.lane.b32.xlu0 %v579, 29
    %v2317 = vpop.permute.xlu0 %2316
    %2318 = vrot.lane.b32.xlu0 %v581, 29
    %v2319 = vpop.permute.xlu0 %2318
    %2320 = vrot.lane.b32.xlu0 %v583, 29
    %v2321 = vpop.permute.xlu0 %2320
    %2322 = vrot.lane.b32.xlu0 %v585, 29
    %v2323 = vpop.permute.xlu0 %2322
    %2324 = vrot.lane.b32.xlu0 %v587, 29
    %v2325 = vpop.permute.xlu0 %2324
    %2326 = vrot.lane.b32.xlu0 %v1199, 29
    %v2327 = vpop.permute.xlu0 %2326
    %2328 = vrot.lane.b32.xlu0 %v1749, 29
    %v2329 = vpop.permute.xlu0 %2328
    %2330 = vrot.lane.b32.xlu0 %v2299, 29
    %v2331 = vpop.permute.xlu0 %2330
    %vm2348 = vcmask 244968
    %2349 = vst.msk [vmem:[#allocation3] sm:$0xff] %vm2348, %v2301
    %2350 = vst.msk [vmem:[#allocation3 + $0x20] sm:$0xff] %vm2348, %v2303
    %2351 = vst.msk [vmem:[#allocation3 + $0x40] sm:$0xff] %vm2348, %v2305
    %2352 = vst.msk [vmem:[#allocation3 + $0x60] sm:$0xff] %vm2348, %v2307
    %2353 = vst.msk [vmem:[#allocation3 + $0x80] sm:$0xff] %vm2348, %v2309
    %2354 = vst.msk [vmem:[#allocation3 + $0xa0] sm:$0xff] %vm2348, %v2311
    %2355 = vst.msk [vmem:[#allocation3 + $0xc0] sm:$0xff] %vm2348, %v2313
    %2356 = vst.msk [vmem:[#allocation3 + $0xe0] sm:$0xff] %vm2348, %v2315
    %2357 = vst.msk [vmem:[#allocation3 + $0x100] sm:$0xff] %vm2348, %v2317
    %2358 = vst.msk [vmem:[#allocation3 + $0x120] sm:$0xff] %vm2348, %v2319
    %2359 = vst.msk [vmem:[#allocation3 + $0x140] sm:$0xff] %vm2348, %v2321
    %2360 = vst.msk [vmem:[#allocation3 + $0x160] sm:$0xff] %vm2348, %v2323
    %2361 = vst.msk [vmem:[#allocation3 + $0x180] sm:$0xff] %vm2348, %v2325
    %2362 = vst.msk [vmem:[#allocation3 + $0x1a0] sm:$0xff] %vm2348, %v2327
    %2363 = vst.msk [vmem:[#allocation3 + $0x1c0] sm:$0xff] %vm2348, %v2329
    %2364 = vst.msk [vmem:[#allocation3 + $0x1e0] sm:$0xff] %vm2348, %v2331
    %v2365 = vrot.slane %v106, 6
    %v2366 = vsel %vm653, %v1815, %v2365
    %v2367 = vrot.slane %v118, 6
    %v2368 = vsel %vm653, %v1817, %v2367
    %2369 = vrot.lane.b32.xlu0 %v662, 30
    %v2370 = vpop.permute.xlu0 %2369
    %2371 = vrot.lane.b32.xlu0 %v664, 30
    %v2372 = vpop.permute.xlu0 %2371
    %2373 = vrot.lane.b32.xlu0 %v666, 30
    %v2374 = vpop.permute.xlu0 %2373
    %2375 = vrot.lane.b32.xlu0 %v668, 30
    %v2376 = vpop.permute.xlu0 %2375
    %2377 = vrot.lane.b32.xlu0 %v670, 30
    %v2378 = vpop.permute.xlu0 %2377
    %2379 = vrot.lane.b32.xlu0 %v1266, 30
    %v2380 = vpop.permute.xlu0 %2379
    %2381 = vrot.lane.b32.xlu0 %v1816, 30
    %v2382 = vpop.permute.xlu0 %2381
    %2383 = vrot.lane.b32.xlu0 %v2366, 30
    %v2384 = vpop.permute.xlu0 %2383
    %2385 = vrot.lane.b32.xlu0 %v679, 30
    %v2386 = vpop.permute.xlu0 %2385
    %2387 = vrot.lane.b32.xlu0 %v681, 30
    %v2388 = vpop.permute.xlu0 %2387
    %2389 = vrot.lane.b32.xlu0 %v683, 30
    %v2390 = vpop.permute.xlu0 %2389
    %2391 = vrot.lane.b32.xlu0 %v685, 30
    %v2392 = vpop.permute.xlu0 %2391
    %2393 = vrot.lane.b32.xlu0 %v687, 30
    %v2394 = vpop.permute.xlu0 %2393
    %2395 = vrot.lane.b32.xlu0 %v1268, 30
    %v2396 = vpop.permute.xlu0 %2395
    %2397 = vrot.lane.b32.xlu0 %v1818, 30
    %v2398 = vpop.permute.xlu0 %2397
    %2399 = vrot.lane.b32.xlu0 %v2368, 30
    %v2400 = vpop.permute.xlu0 %2399
    %vm2417 = vcmask 253168
    %2418 = vst.msk [vmem:[#allocation3] sm:$0xff] %vm2417, %v2370
    %2419 = vst.msk [vmem:[#allocation3 + $0x20] sm:$0xff] %vm2417, %v2372
    %2420 = vst.msk [vmem:[#allocation3 + $0x40] sm:$0xff] %vm2417, %v2374
    %2421 = vst.msk [vmem:[#allocation3 + $0x60] sm:$0xff] %vm2417, %v2376
    %2422 = vst.msk [vmem:[#allocation3 + $0x80] sm:$0xff] %vm2417, %v2378
    %2423 = vst.msk [vmem:[#allocation3 + $0xa0] sm:$0xff] %vm2417, %v2380
    %2424 = vst.msk [vmem:[#allocation3 + $0xc0] sm:$0xff] %vm2417, %v2382
    %2425 = vst.msk [vmem:[#allocation3 + $0xe0] sm:$0xff] %vm2417, %v2384
    %2426 = vst.msk [vmem:[#allocation3 + $0x100] sm:$0xff] %vm2417, %v2386
    %2427 = vst.msk [vmem:[#allocation3 + $0x120] sm:$0xff] %vm2417, %v2388
    %2428 = vst.msk [vmem:[#allocation3 + $0x140] sm:$0xff] %vm2417, %v2390
    %2429 = vst.msk [vmem:[#allocation3 + $0x160] sm:$0xff] %vm2417, %v2392
    %2430 = vst.msk [vmem:[#allocation3 + $0x180] sm:$0xff] %vm2417, %v2394
    %2431 = vst.msk [vmem:[#allocation3 + $0x1a0] sm:$0xff] %vm2417, %v2396
    %2432 = vst.msk [vmem:[#allocation3 + $0x1c0] sm:$0xff] %vm2417, %v2398
    %2433 = vst.msk [vmem:[#allocation3 + $0x1e0] sm:$0xff] %vm2417, %v2400
    %v2434 = vrot.slane %v106, 7
    %v2435 = vsel %vm753, %v1884, %v2434
    %v2436 = vrot.slane %v118, 7
    %v2437 = vsel %vm753, %v1886, %v2436
    %2438 = vrot.lane.b32.xlu0 %v762, 31
    %v2439 = vpop.permute.xlu0 %2438
    %2440 = vrot.lane.b32.xlu0 %v764, 31
    %v2441 = vpop.permute.xlu0 %2440
    %2442 = vrot.lane.b32.xlu0 %v766, 31
    %v2443 = vpop.permute.xlu0 %2442
    %2444 = vrot.lane.b32.xlu0 %v768, 31
    %v2445 = vpop.permute.xlu0 %2444
    %2446 = vrot.lane.b32.xlu0 %v770, 31
    %v2447 = vpop.permute.xlu0 %2446
    %2448 = vrot.lane.b32.xlu0 %v1335, 31
    %v2449 = vpop.permute.xlu0 %2448
    %2450 = vrot.lane.b32.xlu0 %v1885, 31
    %v2451 = vpop.permute.xlu0 %2450
    %2452 = vrot.lane.b32.xlu0 %v2435, 31
    %v2453 = vpop.permute.xlu0 %2452
    %2454 = vrot.lane.b32.xlu0 %v779, 31
    %v2455 = vpop.permute.xlu0 %2454
    %2456 = vrot.lane.b32.xlu0 %v781, 31
    %v2457 = vpop.permute.xlu0 %2456
    %2458 = vrot.lane.b32.xlu0 %v783, 31
    %v2459 = vpop.permute.xlu0 %2458
    %2460 = vrot.lane.b32.xlu0 %v785, 31
    %v2461 = vpop.permute.xlu0 %2460
    %2462 = vrot.lane.b32.xlu0 %v787, 31
    %v2463 = vpop.permute.xlu0 %2462
    %2464 = vrot.lane.b32.xlu0 %v1337, 31
    %v2465 = vpop.permute.xlu0 %2464
    %2466 = vrot.lane.b32.xlu0 %v1887, 31
    %v2467 = vpop.permute.xlu0 %2466
    %2468 = vrot.lane.b32.xlu0 %v2437, 31
    %v2469 = vpop.permute.xlu0 %2468
    %vm2486 = vcmask 261368
    %2487 = vst.msk [vmem:[#allocation3] sm:$0xff] %vm2486, %v2439
    %2488 = vst.msk [vmem:[#allocation3 + $0x20] sm:$0xff] %vm2486, %v2441
    %2489 = vst.msk [vmem:[#allocation3 + $0x40] sm:$0xff] %vm2486, %v2443
    %2490 = vst.msk [vmem:[#allocation3 + $0x60] sm:$0xff] %vm2486, %v2445
    %2491 = vst.msk [vmem:[#allocation3 + $0x80] sm:$0xff] %vm2486, %v2447
    %2492 = vst.msk [vmem:[#allocation3 + $0xa0] sm:$0xff] %vm2486, %v2449
    %2493 = vst.msk [vmem:[#allocation3 + $0xc0] sm:$0xff] %vm2486, %v2451
    %2494 = vst.msk [vmem:[#allocation3 + $0xe0] sm:$0xff] %vm2486, %v2453
    %2495 = vst.msk [vmem:[#allocation3 + $0x100] sm:$0xff] %vm2486, %v2455
    %2496 = vst.msk [vmem:[#allocation3 + $0x120] sm:$0xff] %vm2486, %v2457
    %2497 = vst.msk [vmem:[#allocation3 + $0x140] sm:$0xff] %vm2486, %v2459
    %2498 = vst.msk [vmem:[#allocation3 + $0x160] sm:$0xff] %vm2486, %v2461
    %2499 = vst.msk [vmem:[#allocation3 + $0x180] sm:$0xff] %vm2486, %v2463
    %2500 = vst.msk [vmem:[#allocation3 + $0x1a0] sm:$0xff] %vm2486, %v2465
    %2501 = vst.msk [vmem:[#allocation3 + $0x1c0] sm:$0xff] %vm2486, %v2467
    %2502 = vst.msk [vmem:[#allocation3 + $0x1e0] sm:$0xff] %vm2486, %v2469
    %v2503 = vld [vmem:[#allocation3] sm:$0xff]
    %v2504 = vld [vmem:[#allocation3 + $0x20] sm:$0xff]
    %v2505 = vld [vmem:[#allocation3 + $0x40] sm:$0xff]
    %v2506 = vld [vmem:[#allocation3 + $0x60] sm:$0xff]
    %v2507 = vld [vmem:[#allocation3 + $0x80] sm:$0xff]
    %v2508 = vld [vmem:[#allocation3 + $0xa0] sm:$0xff]
    %v2509 = vld [vmem:[#allocation3 + $0xc0] sm:$0xff]
    %v2510 = vld [vmem:[#allocation3 + $0xe0] sm:$0xff]
    %v2511 = vld [vmem:[#allocation3 + $0x100] sm:$0xff]
    %v2512 = vld [vmem:[#allocation3 + $0x120] sm:$0xff]
    %v2513 = vld [vmem:[#allocation3 + $0x140] sm:$0xff]
    %v2514 = vld [vmem:[#allocation3 + $0x160] sm:$0xff]
    %v2515 = vld [vmem:[#allocation3 + $0x180] sm:$0xff]
    %v2516 = vld [vmem:[#allocation3 + $0x1a0] sm:$0xff]
    %v2517 = vld [vmem:[#allocation3 + $0x1c0] sm:$0xff]
    %v2518 = vld [vmem:[#allocation3 + $0x1e0] sm:$0xff]
    %v2519 = vld [vmem:[%s1] sm:$0xff]
    %v2520 = vld [vmem:[%s1 + $0x8] sm:$0xff]
    %v2521 = vld [vmem:[%s1 + $0x10] sm:$0xff]
    %v2522 = vld [vmem:[%s1 + $0x18] sm:$0xff]
    %v2523 = vld [vmem:[%s2] sm:$0x1]
    %v2525 = vperm.slane %v2523, 0
    %vm2527 = vcmask 261120
    %v2529 = vsel %vm2527, %v2503, 0
    %v2532 = vsel %vm2527, %v2504, 0
    %v2535 = vsel %vm2527, %v2505, 0
    %v2538 = vsel %vm2527, %v2506, 0
    %v2541 = vsel %vm2527, %v2507, 0
    %v2544 = vsel %vm2527, %v2508, 0
    %v2547 = vsel %vm2527, %v2509, 0
    %v2550 = vsel %vm2527, %v2510, 0
    %v2553 = vsel %vm2527, %v2511, 0
    %v2556 = vsel %vm2527, %v2512, 0
    %v2559 = vsel %vm2527, %v2513, 0
    %v2562 = vsel %vm2527, %v2514, 0
    %v2565 = vsel %vm2527, %v2515, 0
    %v2568 = vsel %vm2527, %v2516, 0
    %v2571 = vsel %vm2527, %v2517, 0
    %v2574 = vsel %vm2527, %v2518, 0
    %2576 = vmatpush.msra.mxu0 0.0
    %2577 = vmatpush.msra.mxu0 0.0
    %2578 = vmatpush.msra.mxu0 0.0
    %2579 = vmatpush.msra.mxu0 0.0
    %2580 = vmatpush.msra.mxu0 0.0
    %2581 = vmatpush.msra.mxu0 0.0
    %2582 = vmatpush.msra.mxu0 0.0
    %2583 = vmatpush.msra.mxu0 0.0
    %2584 = vmatpush.msra.mxu0 0.0
    %2585 = vmatpush.msra.mxu0 0.0
    %2586 = vmatpush.msra.mxu0 0.0
    %2587 = vmatpush.msra.mxu0 0.0
    %2588 = vmatpush.msra.mxu0 %v2522
    %2589 = vmatpush.msra.mxu0 %v2521
    %2590 = vmatpush.msra.mxu0 %v2520
    %2591 = vmatpush.msra.mxu0 %v2519
    %2592 = vmatmul.f32.gmra.mxu0 %v2529
    %v2593 = vpop.f32.mrf.mxu0
    %v2594 = vadd.f32 %v2525, %v2593
    %2595 = vmatmul.f32.gmra.mxu0 %v2532
    %v2596 = vpop.f32.mrf.mxu0
    %v2597 = vadd.f32 %v2525, %v2596
    %2598 = vmatmul.f32.gmra.mxu0 %v2535
    %v2599 = vpop.f32.mrf.mxu0
    %v2600 = vadd.f32 %v2525, %v2599
    %2601 = vmatmul.f32.gmra.mxu0 %v2538
    %v2602 = vpop.f32.mrf.mxu0
    %v2603 = vadd.f32 %v2525, %v2602
    %2604 = vmatmul.f32.gmra.mxu0 %v2541
    %v2605 = vpop.f32.mrf.mxu0
    %v2606 = vadd.f32 %v2525, %v2605
    %2607 = vmatmul.f32.gmra.mxu0 %v2544
    %v2608 = vpop.f32.mrf.mxu0
    %v2609 = vadd.f32 %v2525, %v2608
    %2610 = vmatmul.f32.gmra.mxu0 %v2547
    %v2611 = vpop.f32.mrf.mxu0
    %v2612 = vadd.f32 %v2525, %v2611
    %2613 = vmatmul.f32.gmra.mxu0 %v2550
    %v2614 = vpop.f32.mrf.mxu0
    %v2615 = vadd.f32 %v2525, %v2614
    %2616 = vmatmul.f32.gmra.mxu0 %v2553
    %v2617 = vpop.f32.mrf.mxu0
    %v2618 = vadd.f32 %v2525, %v2617
    %2619 = vmatmul.f32.gmra.mxu0 %v2556
    %v2620 = vpop.f32.mrf.mxu0
    %v2621 = vadd.f32 %v2525, %v2620
    %2622 = vmatmul.f32.gmra.mxu0 %v2559
    %v2623 = vpop.f32.mrf.mxu0
    %v2624 = vadd.f32 %v2525, %v2623
    %2625 = vmatmul.f32.gmra.mxu0 %v2562
    %v2626 = vpop.f32.mrf.mxu0
    %v2627 = vadd.f32 %v2525, %v2626
    %2628 = vmatmul.f32.gmra.mxu0 %v2565
    %v2629 = vpop.f32.mrf.mxu0
    %v2630 = vadd.f32 %v2525, %v2629
    %2631 = vmatmul.f32.gmra.mxu0 %v2568
    %v2632 = vpop.f32.mrf.mxu0
    %v2633 = vadd.f32 %v2525, %v2632
    %2634 = vmatmul.f32.gmra.mxu0 %v2571
    %v2635 = vpop.f32.mrf.mxu0
    %v2636 = vadd.f32 %v2525, %v2635
    %2637 = vmatmul.f32.gmra.mxu0 %v2574
    %v2638 = vpop.f32.mrf.mxu0
    %v2639 = vadd.f32 %v2525, %v2638
    %2640 = vdwg.mxu0
    %v2657 = vrot.slane %v2594, 2
    %v2658 = vrot.slane %v2594, 4
    %v2659 = vrot.slane %v2594, 6
    %v2660 = vrot.slane %v2597, 2
    %v2661 = vrot.slane %v2597, 4
    %v2662 = vrot.slane %v2597, 6
    %v2663 = vrot.slane %v2600, 2
    %v2664 = vrot.slane %v2600, 4
    %v2665 = vrot.slane %v2600, 6
    %v2666 = vrot.slane %v2603, 2
    %v2667 = vrot.slane %v2603, 4
    %v2668 = vrot.slane %v2603, 6
    %v2669 = vrot.slane %v2606, 2
    %v2670 = vrot.slane %v2606, 4
    %v2671 = vrot.slane %v2606, 6
    %v2672 = vrot.slane %v2609, 2
    %v2673 = vrot.slane %v2609, 4
    %v2674 = vrot.slane %v2609, 6
    %v2675 = vrot.slane %v2612, 2
    %v2676 = vrot.slane %v2612, 4
    %v2677 = vrot.slane %v2612, 6
    %v2678 = vrot.slane %v2615, 2
    %v2679 = vrot.slane %v2615, 4
    %v2680 = vrot.slane %v2615, 6
    %v2681 = vrot.slane %v2618, 2
    %v2682 = vrot.slane %v2618, 4
    %v2683 = vrot.slane %v2618, 6
    %v2684 = vrot.slane %v2621, 2
    %v2685 = vrot.slane %v2621, 4
    %v2686 = vrot.slane %v2621, 6
    %v2687 = vrot.slane %v2624, 2
    %v2688 = vrot.slane %v2624, 4
    %v2689 = vrot.slane %v2624, 6
    %v2690 = vrot.slane %v2627, 2
    %v2691 = vrot.slane %v2627, 4
    %v2692 = vrot.slane %v2627, 6
    %v2693 = vrot.slane %v2630, 2
    %v2694 = vrot.slane %v2630, 4
    %v2695 = vrot.slane %v2630, 6
    %v2696 = vrot.slane %v2633, 2
    %v2697 = vrot.slane %v2633, 4
    %v2698 = vrot.slane %v2633, 6
    %v2699 = vrot.slane %v2636, 2
    %v2700 = vrot.slane %v2636, 4
    %v2701 = vrot.slane %v2636, 6
    %v2702 = vrot.slane %v2639, 2
    %v2703 = vrot.slane %v2639, 4
    %v2704 = vrot.slane %v2639, 6
    %v2753 = vrot.slane %v2594, 7
    %v2754 = vrot.slane %v2753, 2
    %v2755 = vrot.slane %v2657, 7
    %v2756 = vrot.slane %v2755, 2
    %v2757 = vrot.slane %v2658, 7
    %v2758 = vrot.slane %v2757, 2
    %v2759 = vrot.slane %v2659, 7
    %v2760 = vrot.slane %v2759, 2
    %v2761 = vrot.slane %v2597, 7
    %v2762 = vrot.slane %v2761, 2
    %v2763 = vrot.slane %v2660, 7
    %v2764 = vrot.slane %v2763, 2
    %v2765 = vrot.slane %v2661, 7
    %v2766 = vrot.slane %v2765, 2
    %v2767 = vrot.slane %v2662, 7
    %v2768 = vrot.slane %v2767, 2
    %v2769 = vrot.slane %v2600, 7
    %v2770 = vrot.slane %v2769, 2
    %v2771 = vrot.slane %v2663, 7
    %v2772 = vrot.slane %v2771, 2
    %v2773 = vrot.slane %v2664, 7
    %v2774 = vrot.slane %v2773, 2
    %v2775 = vrot.slane %v2665, 7
    %v2776 = vrot.slane %v2775, 2
    %v2777 = vrot.slane %v2603, 7
    %v2778 = vrot.slane %v2777, 2
    %v2779 = vrot.slane %v2666, 7
    %v2780 = vrot.slane %v2779, 2
    %v2781 = vrot.slane %v2667, 7
    %v2782 = vrot.slane %v2781, 2
    %v2783 = vrot.slane %v2668, 7
    %v2784 = vrot.slane %v2783, 2
    %v2785 = vrot.slane %v2606, 7
    %v2786 = vrot.slane %v2785, 2
    %v2787 = vrot.slane %v2669, 7
    %v2788 = vrot.slane %v2787, 2
    %v2789 = vrot.slane %v2670, 7
    %v2790 = vrot.slane %v2789, 2
    %v2791 = vrot.slane %v2671, 7
    %v2792 = vrot.slane %v2791, 2
    %v2793 = vrot.slane %v2609, 7
    %v2794 = vrot.slane %v2793, 2
    %v2795 = vrot.slane %v2672, 7
    %v2796 = vrot.slane %v2795, 2
    %v2797 = vrot.slane %v2673, 7
    %v2798 = vrot.slane %v2797, 2
    %v2799 = vrot.slane %v2674, 7
    %v2800 = vrot.slane %v2799, 2
    %v2801 = vrot.slane %v2612, 7
    %v2802 = vrot.slane %v2801, 2
    %v2803 = vrot.slane %v2675, 7
    %v2804 = vrot.slane %v2803, 2
    %v2805 = vrot.slane %v2676, 7
    %v2806 = vrot.slane %v2805, 2
    %v2807 = vrot.slane %v2677, 7
    %v2808 = vrot.slane %v2807, 2
    %v2809 = vrot.slane %v2615, 7
    %v2810 = vrot.slane %v2809, 2
    %v2811 = vrot.slane %v2678, 7
    %v2812 = vrot.slane %v2811, 2
    %v2813 = vrot.slane %v2679, 7
    %v2814 = vrot.slane %v2813, 2
    %v2815 = vrot.slane %v2680, 7
    %v2816 = vrot.slane %v2815, 2
    %v2817 = vrot.slane %v2618, 7
    %v2818 = vrot.slane %v2817, 2
    %v2819 = vrot.slane %v2681, 7
    %v2820 = vrot.slane %v2819, 2
    %v2821 = vrot.slane %v2682, 7
    %v2822 = vrot.slane %v2821, 2
    %v2823 = vrot.slane %v2683, 7
    %v2824 = vrot.slane %v2823, 2
    %v2825 = vrot.slane %v2621, 7
    %v2826 = vrot.slane %v2825, 2
    %v2827 = vrot.slane %v2684, 7
    %v2828 = vrot.slane %v2827, 2
    %v2829 = vrot.slane %v2685, 7
    %v2830 = vrot.slane %v2829, 2
    %v2831 = vrot.slane %v2686, 7
    %v2832 = vrot.slane %v2831, 2
    %v2833 = vrot.slane %v2624, 7
    %v2834 = vrot.slane %v2833, 2
    %v2835 = vrot.slane %v2687, 7
    %v2836 = vrot.slane %v2835, 2
    %v2837 = vrot.slane %v2688, 7
    %v2838 = vrot.slane %v2837, 2
    %v2839 = vrot.slane %v2689, 7
    %v2840 = vrot.slane %v2839, 2
    %v2841 = vrot.slane %v2627, 7
    %v2842 = vrot.slane %v2841, 2
    %v2843 = vrot.slane %v2690, 7
    %v2844 = vrot.slane %v2843, 2
    %v2845 = vrot.slane %v2691, 7
    %v2846 = vrot.slane %v2845, 2
    %v2847 = vrot.slane %v2692, 7
    %v2848 = vrot.slane %v2847, 2
    %v2849 = vrot.slane %v2630, 7
    %v2850 = vrot.slane %v2849, 2
    %v2851 = vrot.slane %v2693, 7
    %v2852 = vrot.slane %v2851, 2
    %v2853 = vrot.slane %v2694, 7
    %v2854 = vrot.slane %v2853, 2
    %v2855 = vrot.slane %v2695, 7
    %v2856 = vrot.slane %v2855, 2
    %v2857 = vrot.slane %v2633, 7
    %v2858 = vrot.slane %v2857, 2
    %v2859 = vrot.slane %v2696, 7
    %v2860 = vrot.slane %v2859, 2
    %v2861 = vrot.slane %v2697, 7
    %v2862 = vrot.slane %v2861, 2
    %v2863 = vrot.slane %v2698, 7
    %v2864 = vrot.slane %v2863, 2
    %v2865 = vrot.slane %v2636, 7
    %v2866 = vrot.slane %v2865, 2
    %v2867 = vrot.slane %v2699, 7
    %v2868 = vrot.slane %v2867, 2
    %v2869 = vrot.slane %v2700, 7
    %v2870 = vrot.slane %v2869, 2
    %v2871 = vrot.slane %v2701, 7
    %v2872 = vrot.slane %v2871, 2
    %v2873 = vrot.slane %v2639, 7
    %v2874 = vrot.slane %v2873, 2
    %v2875 = vrot.slane %v2702, 7
    %v2876 = vrot.slane %v2875, 2
    %v2877 = vrot.slane %v2703, 7
    %v2878 = vrot.slane %v2877, 2
    %v2879 = vrot.slane %v2704, 7
    %v2880 = vrot.slane %v2879, 2
    %v2945 = vmax.f32 %v2594, %v2754
    %v2946 = vmax.f32 %v2657, %v2756
    %v2947 = vmax.f32 %v2658, %v2758
    %v2948 = vmax.f32 %v2659, %v2760
    %v2949 = vmax.f32 %v2597, %v2762
    %v2950 = vmax.f32 %v2660, %v2764
    %v2951 = vmax.f32 %v2661, %v2766
    %v2952 = vmax.f32 %v2662, %v2768
    %v2953 = vmax.f32 %v2600, %v2770
    %v2954 = vmax.f32 %v2663, %v2772
    %v2955 = vmax.f32 %v2664, %v2774
    %v2956 = vmax.f32 %v2665, %v2776
    %v2957 = vmax.f32 %v2603, %v2778
    %v2958 = vmax.f32 %v2666, %v2780
    %v2959 = vmax.f32 %v2667, %v2782
    %v2960 = vmax.f32 %v2668, %v2784
    %v2961 = vmax.f32 %v2606, %v2786
    %v2962 = vmax.f32 %v2669, %v2788
    %v2963 = vmax.f32 %v2670, %v2790
    %v2964 = vmax.f32 %v2671, %v2792
    %v2965 = vmax.f32 %v2609, %v2794
    %v2966 = vmax.f32 %v2672, %v2796
    %v2967 = vmax.f32 %v2673, %v2798
    %v2968 = vmax.f32 %v2674, %v2800
    %v2969 = vmax.f32 %v2612, %v2802
    %v2970 = vmax.f32 %v2675, %v2804
    %v2971 = vmax.f32 %v2676, %v2806
    %v2972 = vmax.f32 %v2677, %v2808
    %v2973 = vmax.f32 %v2615, %v2810
    %v2974 = vmax.f32 %v2678, %v2812
    %v2975 = vmax.f32 %v2679, %v2814
    %v2976 = vmax.f32 %v2680, %v2816
    %v2977 = vmax.f32 %v2618, %v2818
    %v2978 = vmax.f32 %v2681, %v2820
    %v2979 = vmax.f32 %v2682, %v2822
    %v2980 = vmax.f32 %v2683, %v2824
    %v2981 = vmax.f32 %v2621, %v2826
    %v2982 = vmax.f32 %v2684, %v2828
    %v2983 = vmax.f32 %v2685, %v2830
    %v2984 = vmax.f32 %v2686, %v2832
    %v2985 = vmax.f32 %v2624, %v2834
    %v2986 = vmax.f32 %v2687, %v2836
    %v2987 = vmax.f32 %v2688, %v2838
    %v2988 = vmax.f32 %v2689, %v2840
    %v2989 = vmax.f32 %v2627, %v2842
    %v2990 = vmax.f32 %v2690, %v2844
    %v2991 = vmax.f32 %v2691, %v2846
    %v2992 = vmax.f32 %v2692, %v2848
    %v2993 = vmax.f32 %v2630, %v2850
    %v2994 = vmax.f32 %v2693, %v2852
    %v2995 = vmax.f32 %v2694, %v2854
    %v2996 = vmax.f32 %v2695, %v2856
    %v2997 = vmax.f32 %v2633, %v2858
    %v2998 = vmax.f32 %v2696, %v2860
    %v2999 = vmax.f32 %v2697, %v2862
    %v3000 = vmax.f32 %v2698, %v2864
    %v3001 = vmax.f32 %v2636, %v2866
    %v3002 = vmax.f32 %v2699, %v2868
    %v3003 = vmax.f32 %v2700, %v2870
    %v3004 = vmax.f32 %v2701, %v2872
    %v3005 = vmax.f32 %v2639, %v2874
    %v3006 = vmax.f32 %v2702, %v2876
    %v3007 = vmax.f32 %v2703, %v2878
    %v3008 = vmax.f32 %v2704, %v2880
    %vm3009 = vcmask 130048
    %3010 = vst.msk [vmem:[#allocation2] sm:$0xff] %vm3009, 0.0
    %vm3011 = vcmask 129024
    %3012 = vst.msk [vmem:[#allocation2 + $0x8] sm:$0x7f] %vm3011, 0.0
    %3013 = vst.msk [vmem:[#allocation2 + $0x60] sm:$0xff] %vm3009, 0.0
    %3014 = vst.msk [vmem:[#allocation2 + $0x68] sm:$0x7f] %vm3011, 0.0
    %3015 = vst.msk [vmem:[#allocation2 + $0x2f] sm:$0xff] %vm3009, 0.0
    %3016 = vst.msk [vmem:[#allocation2 + $0x37] sm:$0xff] %vm3009, 0.0
    %3017 = vst.msk [vmem:[#allocation2 + $0x8f] sm:$0xff] %vm3009, 0.0
    %3018 = vst.msk [vmem:[#allocation2 + $0x97] sm:$0xff] %vm3009, 0.0
    %v3083 = vperm.slane %v2945, 0
    %v3084 = vperm.slane %v2946, 0
    %v3085 = vperm.slane %v2947, 0
    %v3086 = vperm.slane %v2948, 0
    %v3087 = vperm.slane %v2949, 0
    %v3088 = vperm.slane %v2950, 0
    %v3089 = vperm.slane %v2951, 0
    %v3090 = vperm.slane %v2952, 0
    %v3091 = vperm.slane %v2953, 0
    %v3092 = vperm.slane %v2954, 0
    %v3093 = vperm.slane %v2955, 0
    %v3094 = vperm.slane %v2956, 0
    %v3095 = vperm.slane %v2957, 0
    %v3096 = vperm.slane %v2958, 0
    %v3097 = vperm.slane %v2959, 0
    %v3098 = vperm.slane %v2960, 0
    %v3099 = vperm.slane %v2961, 0
    %v3100 = vperm.slane %v2962, 0
    %v3101 = vperm.slane %v2963, 0
    %v3102 = vperm.slane %v2964, 0
    %v3103 = vperm.slane %v2965, 0
    %v3104 = vperm.slane %v2966, 0
    %v3105 = vperm.slane %v2967, 0
    %v3106 = vperm.slane %v2968, 0
    %v3107 = vperm.slane %v2969, 0
    %v3108 = vperm.slane %v2970, 0
    %v3109 = vperm.slane %v2971, 0
    %v3110 = vperm.slane %v2972, 0
    %v3111 = vperm.slane %v2973, 0
    %v3112 = vperm.slane %v2974, 0
    %v3113 = vperm.slane %v2975, 0
    %v3114 = vperm.slane %v2976, 0
    %v3115 = vperm.slane %v2977, 0
    %v3116 = vperm.slane %v2978, 0
    %v3117 = vperm.slane %v2979, 0
    %v3118 = vperm.slane %v2980, 0
    %v3119 = vperm.slane %v2981, 0
    %v3120 = vperm.slane %v2982, 0
    %v3121 = vperm.slane %v2983, 0
    %v3122 = vperm.slane %v2984, 0
    %v3123 = vperm.slane %v2985, 0
    %v3124 = vperm.slane %v2986, 0
    %v3125 = vperm.slane %v2987, 0
    %v3126 = vperm.slane %v2988, 0
    %v3127 = vperm.slane %v2989, 0
    %v3128 = vperm.slane %v2990, 0
    %v3129 = vperm.slane %v2991, 0
    %v3130 = vperm.slane %v2992, 0
    %v3131 = vperm.slane %v2993, 0
    %v3132 = vperm.slane %v2994, 0
    %v3133 = vperm.slane %v2995, 0
    %v3134 = vperm.slane %v2996, 0
    %v3135 = vperm.slane %v2997, 0
    %v3136 = vperm.slane %v2998, 0
    %v3137 = vperm.slane %v2999, 0
    %v3138 = vperm.slane %v3000, 0
    %v3139 = vperm.slane %v3001, 0
    %v3140 = vperm.slane %v3002, 0
    %v3141 = vperm.slane %v3003, 0
    %v3142 = vperm.slane %v3004, 0
    %v3143 = vperm.slane %v3005, 0
    %v3144 = vperm.slane %v3006, 0
    %v3145 = vperm.slane %v3007, 0
    %v3146 = vperm.slane %v3008, 0
    %vm3147 = vcmask 1041409
    %v3148 = vsel %vm3147, %v3084, %v3083
    %vm3149 = vcmask 1042434
    %v3150 = vsel %vm3149, %v3085, %v3148
    %vm3151 = vcmask 1043459
    %v3152 = vsel %vm3151, %v3086, %v3150
    %vm3153 = vcmask 1044484
    %v3154 = vsel %vm3153, %v3087, %v3152
    %vm3155 = vcmask 1045509
    %v3156 = vsel %vm3155, %v3088, %v3154
    %vm3157 = vcmask 1046534
    %v3158 = vsel %vm3157, %v3089, %v3156
    %vm3159 = vcmask 1047559
    %v3160 = vsel %vm3159, %v3090, %v3158
    %v3161 = vsel %vm3147, %v3092, %v3091
    %v3162 = vsel %vm3149, %v3093, %v3161
    %v3163 = vsel %vm3151, %v3094, %v3162
    %v3164 = vsel %vm3153, %v3095, %v3163
    %v3165 = vsel %vm3155, %v3096, %v3164
    %v3166 = vsel %vm3157, %v3097, %v3165
    %v3167 = vsel %vm3159, %v3098, %v3166
    %v3168 = vsel %vm3147, %v3100, %v3099
    %v3169 = vsel %vm3149, %v3101, %v3168
    %v3170 = vsel %vm3151, %v3102, %v3169
    %v3171 = vsel %vm3153, %v3103, %v3170
    %v3172 = vsel %vm3155, %v3104, %v3171
    %v3173 = vsel %vm3157, %v3105, %v3172
    %v3174 = vsel %vm3159, %v3106, %v3173
    %v3175 = vsel %vm3147, %v3108, %v3107
    %v3176 = vsel %vm3149, %v3109, %v3175
    %v3177 = vsel %vm3151, %v3110, %v3176
    %v3178 = vsel %vm3153, %v3111, %v3177
    %v3179 = vsel %vm3155, %v3112, %v3178
    %v3180 = vsel %vm3157, %v3113, %v3179
    %v3181 = vsel %vm3159, %v3114, %v3180
    %v3182 = vsel %vm3147, %v3116, %v3115
    %v3183 = vsel %vm3149, %v3117, %v3182
    %v3184 = vsel %vm3151, %v3118, %v3183
    %v3185 = vsel %vm3153, %v3119, %v3184
    %v3186 = vsel %vm3155, %v3120, %v3185
    %v3187 = vsel %vm3157, %v3121, %v3186
    %v3188 = vsel %vm3159, %v3122, %v3187
    %v3189 = vsel %vm3147, %v3124, %v3123
    %v3190 = vsel %vm3149, %v3125, %v3189
    %v3191 = vsel %vm3151, %v3126, %v3190
    %v3192 = vsel %vm3153, %v3127, %v3191
    %v3193 = vsel %vm3155, %v3128, %v3192
    %v3194 = vsel %vm3157, %v3129, %v3193
    %v3195 = vsel %vm3159, %v3130, %v3194
    %v3196 = vsel %vm3147, %v3132, %v3131
    %v3197 = vsel %vm3149, %v3133, %v3196
    %v3198 = vsel %vm3151, %v3134, %v3197
    %v3199 = vsel %vm3153, %v3135, %v3198
    %v3200 = vsel %vm3155, %v3136, %v3199
    %v3201 = vsel %vm3157, %v3137, %v3200
    %v3202 = vsel %vm3159, %v3138, %v3201
    %v3203 = vsel %vm3147, %v3140, %v3139
    %v3204 = vsel %vm3149, %v3141, %v3203
    %v3205 = vsel %vm3151, %v3142, %v3204
    %v3206 = vsel %vm3153, %v3143, %v3205
    %v3207 = vsel %vm3155, %v3144, %v3206
    %v3208 = vsel %vm3157, %v3145, %v3207
    %v3209 = vsel %vm3159, %v3146, %v3208
    %3218 = vst.msk [vmem:[#allocation2 + $0xf] sm:$0xff] %vm3009, %v3160
    %3219 = vst.msk [vmem:[#allocation2 + $0x17] sm:$0xff] %vm3009, %v3167
    %3220 = vst.msk [vmem:[#allocation2 + $0x1f] sm:$0xff] %vm3009, %v3174
    %3221 = vst.msk [vmem:[#allocation2 + $0x27] sm:$0xff] %vm3009, %v3181
    %3222 = vst.msk [vmem:[#allocation2 + $0x6f] sm:$0xff] %vm3009, %v3188
    %3223 = vst.msk [vmem:[#allocation2 + $0x77] sm:$0xff] %vm3009, %v3195
    %3224 = vst.msk [vmem:[#allocation2 + $0x7f] sm:$0xff] %vm3009, %v3202
    %3225 = vst.msk [vmem:[#allocation2 + $0x87] sm:$0xff] %vm3009, %v3209
    %v3226 = vld [vmem:[#allocation2] sm:$0xff]
    %v3227 = vld [vmem:[#allocation2 + $0x8] sm:$0xff]
    %v3228 = vld [vmem:[#allocation2 + $0x10] sm:$0xff]
    %v3229 = vld [vmem:[#allocation2 + $0x18] sm:$0xff]
    %v3230 = vld [vmem:[#allocation2 + $0x20] sm:$0xff]
    %v3231 = vld [vmem:[#allocation2 + $0x28] sm:$0xff]
    %v3232 = vld [vmem:[#allocation2 + $0x30] sm:$0xff]
    %v3233 = vld [vmem:[#allocation2 + $0x38] sm:$0x7f]
    %v3234 = vld [vmem:[#allocation2 + $0x60] sm:$0xff]
    %v3235 = vld [vmem:[#allocation2 + $0x68] sm:$0xff]
    %v3236 = vld [vmem:[#allocation2 + $0x70] sm:$0xff]
    %v3237 = vld [vmem:[#allocation2 + $0x78] sm:$0xff]
    %v3238 = vld [vmem:[#allocation2 + $0x80] sm:$0xff]
    %v3239 = vld [vmem:[#allocation2 + $0x88] sm:$0xff]
    %v3240 = vld [vmem:[#allocation2 + $0x90] sm:$0xff]
    %v3241 = vld [vmem:[#allocation2 + $0x98] sm:$0x7f]
    %3242 = vst.msk [vmem:[#allocation3] sm:$0xff] %vm3009, %v3226
    %3243 = vst.msk [vmem:[#allocation3 + $0x20] sm:$0xff] %vm3009, %v3227
    %3244 = vst.msk [vmem:[#allocation3 + $0x40] sm:$0xff] %vm3009, %v3228
    %3245 = vst.msk [vmem:[#allocation3 + $0x60] sm:$0xff] %vm3009, %v3229
    %3246 = vst.msk [vmem:[#allocation3 + $0x80] sm:$0xff] %vm3009, %v3234
    %3247 = vst.msk [vmem:[#allocation3 + $0xa0] sm:$0xff] %vm3009, %v3235
    %3248 = vst.msk [vmem:[#allocation3 + $0xc0] sm:$0xff] %vm3009, %v3236
    %3249 = vst.msk [vmem:[#allocation3 + $0xe0] sm:$0xff] %vm3009, %v3237
    %v3260 = vrot.slane %v3226, 1
    %v3261 = vrot.slane %v3227, 1
    %v3262 = vsel %vm153, %v3260, %v3261
    %v3263 = vrot.slane %v3228, 1
    %v3264 = vsel %vm153, %v3261, %v3263
    %v3265 = vrot.slane %v3229, 1
    %v3266 = vsel %vm153, %v3263, %v3265
    %v3267 = vrot.slane %v3230, 1
    %v3268 = vsel %vm153, %v3265, %v3267
    %v3269 = vrot.slane %v3234, 1
    %v3270 = vrot.slane %v3235, 1
    %v3271 = vsel %vm153, %v3269, %v3270
    %v3272 = vrot.slane %v3236, 1
    %v3273 = vsel %vm153, %v3270, %v3272
    %v3274 = vrot.slane %v3237, 1
    %v3275 = vsel %vm153, %v3272, %v3274
    %v3276 = vrot.slane %v3238, 1
    %v3277 = vsel %vm153, %v3274, %v3276
    %3278 = vrot.lane.b32.xlu0 %v3262, 16
    %v3279 = vpop.permute.xlu0 %3278
    %3280 = vrot.lane.b32.xlu0 %v3264, 16
    %v3281 = vpop.permute.xlu0 %3280
    %3282 = vrot.lane.b32.xlu0 %v3266, 16
    %v3283 = vpop.permute.xlu0 %3282
    %3284 = vrot.lane.b32.xlu0 %v3268, 16
    %v3285 = vpop.permute.xlu0 %3284
    %3286 = vrot.lane.b32.xlu0 %v3271, 16
    %v3287 = vpop.permute.xlu0 %3286
    %3288 = vrot.lane.b32.xlu0 %v3273, 16
    %v3289 = vpop.permute.xlu0 %3288
    %3290 = vrot.lane.b32.xlu0 %v3275, 16
    %v3291 = vpop.permute.xlu0 %3290
    %3292 = vrot.lane.b32.xlu0 %v3277, 16
    %v3293 = vpop.permute.xlu0 %3292
    %vm3302 = vcmask 261248
    %3303 = vst.msk [vmem:[#allocation3] sm:$0xff] %vm3302, %v3279
    %3304 = vst.msk [vmem:[#allocation3 + $0x20] sm:$0xff] %vm3302, %v3281
    %3305 = vst.msk [vmem:[#allocation3 + $0x40] sm:$0xff] %vm3302, %v3283
    %3306 = vst.msk [vmem:[#allocation3 + $0x60] sm:$0xff] %vm3302, %v3285
    %3307 = vst.msk [vmem:[#allocation3 + $0x80] sm:$0xff] %vm3302, %v3287
    %3308 = vst.msk [vmem:[#allocation3 + $0xa0] sm:$0xff] %vm3302, %v3289
    %3309 = vst.msk [vmem:[#allocation3 + $0xc0] sm:$0xff] %vm3302, %v3291
    %3310 = vst.msk [vmem:[#allocation3 + $0xe0] sm:$0xff] %vm3302, %v3293
    %v3311 = vrot.slane %v3226, 2
    %v3312 = vrot.slane %v3227, 2
    %v3313 = vsel %vm253, %v3311, %v3312
    %v3314 = vrot.slane %v3228, 2
    %v3315 = vsel %vm253, %v3312, %v3314
    %v3316 = vrot.slane %v3229, 2
    %v3317 = vsel %vm253, %v3314, %v3316
    %v3318 = vrot.slane %v3230, 2
    %v3319 = vsel %vm253, %v3316, %v3318
    %v3320 = vrot.slane %v3234, 2
    %v3321 = vrot.slane %v3235, 2
    %v3322 = vsel %vm253, %v3320, %v3321
    %v3323 = vrot.slane %v3236, 2
    %v3324 = vsel %vm253, %v3321, %v3323
    %v3325 = vrot.slane %v3237, 2
    %v3326 = vsel %vm253, %v3323, %v3325
    %v3327 = vrot.slane %v3238, 2
    %v3328 = vsel %vm253, %v3325, %v3327
    %3329 = vrot.lane.b32.xlu0 %v3313, 32
    %v3330 = vpop.permute.xlu0 %3329
    %3331 = vrot.lane.b32.xlu0 %v3315, 32
    %v3332 = vpop.permute.xlu0 %3331
    %3333 = vrot.lane.b32.xlu0 %v3317, 32
    %v3334 = vpop.permute.xlu0 %3333
    %3335 = vrot.lane.b32.xlu0 %v3319, 32
    %v3336 = vpop.permute.xlu0 %3335
    %3337 = vrot.lane.b32.xlu0 %v3322, 32
    %v3338 = vpop.permute.xlu0 %3337
    %3339 = vrot.lane.b32.xlu0 %v3324, 32
    %v3340 = vpop.permute.xlu0 %3339
    %3341 = vrot.lane.b32.xlu0 %v3326, 32
    %v3342 = vpop.permute.xlu0 %3341
    %3343 = vrot.lane.b32.xlu0 %v3328, 32
    %v3344 = vpop.permute.xlu0 %3343
    %vm3353 = vcmask 392448
    %3354 = vst.msk [vmem:[#allocation3] sm:$0xff] %vm3353, %v3330
    %3355 = vst.msk [vmem:[#allocation3 + $0x20] sm:$0xff] %vm3353, %v3332
    %3356 = vst.msk [vmem:[#allocation3 + $0x40] sm:$0xff] %vm3353, %v3334
    %3357 = vst.msk [vmem:[#allocation3 + $0x60] sm:$0xff] %vm3353, %v3336
    %3358 = vst.msk [vmem:[#allocation3 + $0x80] sm:$0xff] %vm3353, %v3338
    %3359 = vst.msk [vmem:[#allocation3 + $0xa0] sm:$0xff] %vm3353, %v3340
    %3360 = vst.msk [vmem:[#allocation3 + $0xc0] sm:$0xff] %vm3353, %v3342
    %3361 = vst.msk [vmem:[#allocation3 + $0xe0] sm:$0xff] %vm3353, %v3344
    %v3362 = vrot.slane %v3226, 3
    %v3363 = vrot.slane %v3227, 3
    %v3364 = vsel %vm353, %v3362, %v3363
    %v3365 = vrot.slane %v3228, 3
    %v3366 = vsel %vm353, %v3363, %v3365
    %v3367 = vrot.slane %v3229, 3
    %v3368 = vsel %vm353, %v3365, %v3367
    %v3369 = vrot.slane %v3230, 3
    %v3370 = vsel %vm353, %v3367, %v3369
    %v3371 = vrot.slane %v3234, 3
    %v3372 = vrot.slane %v3235, 3
    %v3373 = vsel %vm353, %v3371, %v3372
    %v3374 = vrot.slane %v3236, 3
    %v3375 = vsel %vm353, %v3372, %v3374
    %v3376 = vrot.slane %v3237, 3
    %v3377 = vsel %vm353, %v3374, %v3376
    %v3378 = vrot.slane %v3238, 3
    %v3379 = vsel %vm353, %v3376, %v3378
    %3380 = vrot.lane.b32.xlu0 %v3364, 48
    %v3381 = vpop.permute.xlu0 %3380
    %3382 = vrot.lane.b32.xlu0 %v3366, 48
    %v3383 = vpop.permute.xlu0 %3382
    %3384 = vrot.lane.b32.xlu0 %v3368, 48
    %v3385 = vpop.permute.xlu0 %3384
    %3386 = vrot.lane.b32.xlu0 %v3370, 48
    %v3387 = vpop.permute.xlu0 %3386
    %3388 = vrot.lane.b32.xlu0 %v3373, 48
    %v3389 = vpop.permute.xlu0 %3388
    %3390 = vrot.lane.b32.xlu0 %v3375, 48
    %v3391 = vpop.permute.xlu0 %3390
    %3392 = vrot.lane.b32.xlu0 %v3377, 48
    %v3393 = vpop.permute.xlu0 %3392
    %3394 = vrot.lane.b32.xlu0 %v3379, 48
    %v3395 = vpop.permute.xlu0 %3394
    %vm3404 = vcmask 523648
    %3405 = vst.msk [vmem:[#allocation3] sm:$0xff] %vm3404, %v3381
    %3406 = vst.msk [vmem:[#allocation3 + $0x20] sm:$0xff] %vm3404, %v3383
    %3407 = vst.msk [vmem:[#allocation3 + $0x40] sm:$0xff] %vm3404, %v3385
    %3408 = vst.msk [vmem:[#allocation3 + $0x60] sm:$0xff] %vm3404, %v3387
    %3409 = vst.msk [vmem:[#allocation3 + $0x80] sm:$0xff] %vm3404, %v3389
    %3410 = vst.msk [vmem:[#allocation3 + $0xa0] sm:$0xff] %vm3404, %v3391
    %3411 = vst.msk [vmem:[#allocation3 + $0xc0] sm:$0xff] %vm3404, %v3393
    %3412 = vst.msk [vmem:[#allocation3 + $0xe0] sm:$0xff] %vm3404, %v3395
    %v3413 = vrot.slane %v3226, 4
    %v3414 = vrot.slane %v3227, 4
    %v3415 = vsel %vm453, %v3413, %v3414
    %v3416 = vrot.slane %v3228, 4
    %v3417 = vsel %vm453, %v3414, %v3416
    %v3418 = vrot.slane %v3229, 4
    %v3419 = vsel %vm453, %v3416, %v3418
    %v3420 = vrot.slane %v3230, 4
    %v3421 = vsel %vm453, %v3418, %v3420
    %v3422 = vrot.slane %v3234, 4
    %v3423 = vrot.slane %v3235, 4
    %v3424 = vsel %vm453, %v3422, %v3423
    %v3425 = vrot.slane %v3236, 4
    %v3426 = vsel %vm453, %v3423, %v3425
    %v3427 = vrot.slane %v3237, 4
    %v3428 = vsel %vm453, %v3425, %v3427
    %v3429 = vrot.slane %v3238, 4
    %v3430 = vsel %vm453, %v3427, %v3429
    %3431 = vrot.lane.b32.xlu0 %v3415, 64
    %v3432 = vpop.permute.xlu0 %3431
    %3433 = vrot.lane.b32.xlu0 %v3417, 64
    %v3434 = vpop.permute.xlu0 %3433
    %3435 = vrot.lane.b32.xlu0 %v3419, 64
    %v3436 = vpop.permute.xlu0 %3435
    %3437 = vrot.lane.b32.xlu0 %v3421, 64
    %v3438 = vpop.permute.xlu0 %3437
    %3439 = vrot.lane.b32.xlu0 %v3424, 64
    %v3440 = vpop.permute.xlu0 %3439
    %3441 = vrot.lane.b32.xlu0 %v3426, 64
    %v3442 = vpop.permute.xlu0 %3441
    %3443 = vrot.lane.b32.xlu0 %v3428, 64
    %v3444 = vpop.permute.xlu0 %3443
    %3445 = vrot.lane.b32.xlu0 %v3430, 64
    %v3446 = vpop.permute.xlu0 %3445
    %vm3455 = vcmask 654848
    %3456 = vst.msk [vmem:[#allocation3] sm:$0xff] %vm3455, %v3432
    %3457 = vst.msk [vmem:[#allocation3 + $0x20] sm:$0xff] %vm3455, %v3434
    %3458 = vst.msk [vmem:[#allocation3 + $0x40] sm:$0xff] %vm3455, %v3436
    %3459 = vst.msk [vmem:[#allocation3 + $0x60] sm:$0xff] %vm3455, %v3438
    %3460 = vst.msk [vmem:[#allocation3 + $0x80] sm:$0xff] %vm3455, %v3440
    %3461 = vst.msk [vmem:[#allocation3 + $0xa0] sm:$0xff] %vm3455, %v3442
    %3462 = vst.msk [vmem:[#allocation3 + $0xc0] sm:$0xff] %vm3455, %v3444
    %3463 = vst.msk [vmem:[#allocation3 + $0xe0] sm:$0xff] %vm3455, %v3446
    %v3464 = vrot.slane %v3226, 5
    %v3465 = vrot.slane %v3227, 5
    %v3466 = vsel %vm553, %v3464, %v3465
    %v3467 = vrot.slane %v3228, 5
    %v3468 = vsel %vm553, %v3465, %v3467
    %v3469 = vrot.slane %v3229, 5
    %v3470 = vsel %vm553, %v3467, %v3469
    %v3471 = vrot.slane %v3230, 5
    %v3472 = vsel %vm553, %v3469, %v3471
    %v3473 = vrot.slane %v3234, 5
    %v3474 = vrot.slane %v3235, 5
    %v3475 = vsel %vm553, %v3473, %v3474
    %v3476 = vrot.slane %v3236, 5
    %v3477 = vsel %vm553, %v3474, %v3476
    %v3478 = vrot.slane %v3237, 5
    %v3479 = vsel %vm553, %v3476, %v3478
    %v3480 = vrot.slane %v3238, 5
    %v3481 = vsel %vm553, %v3478, %v3480
    %3482 = vrot.lane.b32.xlu0 %v3466, 80
    %v3483 = vpop.permute.xlu0 %3482
    %3484 = vrot.lane.b32.xlu0 %v3468, 80
    %v3485 = vpop.permute.xlu0 %3484
    %3486 = vrot.lane.b32.xlu0 %v3470, 80
    %v3487 = vpop.permute.xlu0 %3486
    %3488 = vrot.lane.b32.xlu0 %v3472, 80
    %v3489 = vpop.permute.xlu0 %3488
    %3490 = vrot.lane.b32.xlu0 %v3475, 80
    %v3491 = vpop.permute.xlu0 %3490
    %3492 = vrot.lane.b32.xlu0 %v3477, 80
    %v3493 = vpop.permute.xlu0 %3492
    %3494 = vrot.lane.b32.xlu0 %v3479, 80
    %v3495 = vpop.permute.xlu0 %3494
    %3496 = vrot.lane.b32.xlu0 %v3481, 80
    %v3497 = vpop.permute.xlu0 %3496
    %vm3506 = vcmask 786048
    %3507 = vst.msk [vmem:[#allocation3] sm:$0xff] %vm3506, %v3483
    %3508 = vst.msk [vmem:[#allocation3 + $0x20] sm:$0xff] %vm3506, %v3485
    %3509 = vst.msk [vmem:[#allocation3 + $0x40] sm:$0xff] %vm3506, %v3487
    %3510 = vst.msk [vmem:[#allocation3 + $0x60] sm:$0xff] %vm3506, %v3489
    %3511 = vst.msk [vmem:[#allocation3 + $0x80] sm:$0xff] %vm3506, %v3491
    %3512 = vst.msk [vmem:[#allocation3 + $0xa0] sm:$0xff] %vm3506, %v3493
    %3513 = vst.msk [vmem:[#allocation3 + $0xc0] sm:$0xff] %vm3506, %v3495
    %3514 = vst.msk [vmem:[#allocation3 + $0xe0] sm:$0xff] %vm3506, %v3497
    %v3515 = vrot.slane %v3226, 6
    %v3516 = vrot.slane %v3227, 6
    %v3517 = vsel %vm653, %v3515, %v3516
    %v3518 = vrot.slane %v3228, 6
    %v3519 = vsel %vm653, %v3516, %v3518
    %v3520 = vrot.slane %v3229, 6
    %v3521 = vsel %vm653, %v3518, %v3520
    %v3522 = vrot.slane %v3230, 6
    %v3523 = vsel %vm653, %v3520, %v3522
    %v3524 = vrot.slane %v3234, 6
    %v3525 = vrot.slane %v3235, 6
    %v3526 = vsel %vm653, %v3524, %v3525
    %v3527 = vrot.slane %v3236, 6
    %v3528 = vsel %vm653, %v3525, %v3527
    %v3529 = vrot.slane %v3237, 6
    %v3530 = vsel %vm653, %v3527, %v3529
    %v3531 = vrot.slane %v3238, 6
    %v3532 = vsel %vm653, %v3529, %v3531
    %3533 = vrot.lane.b32.xlu0 %v3517, 96
    %v3534 = vpop.permute.xlu0 %3533
    %3535 = vrot.lane.b32.xlu0 %v3519, 96
    %v3536 = vpop.permute.xlu0 %3535
    %3537 = vrot.lane.b32.xlu0 %v3521, 96
    %v3538 = vpop.permute.xlu0 %3537
    %3539 = vrot.lane.b32.xlu0 %v3523, 96
    %v3540 = vpop.permute.xlu0 %3539
    %3541 = vrot.lane.b32.xlu0 %v3526, 96
    %v3542 = vpop.permute.xlu0 %3541
    %3543 = vrot.lane.b32.xlu0 %v3528, 96
    %v3544 = vpop.permute.xlu0 %3543
    %3545 = vrot.lane.b32.xlu0 %v3530, 96
    %v3546 = vpop.permute.xlu0 %3545
    %3547 = vrot.lane.b32.xlu0 %v3532, 96
    %v3548 = vpop.permute.xlu0 %3547
    %vm3557 = vcmask 917248
    %3558 = vst.msk [vmem:[#allocation3] sm:$0xff] %vm3557, %v3534
    %3559 = vst.msk [vmem:[#allocation3 + $0x20] sm:$0xff] %vm3557, %v3536
    %3560 = vst.msk [vmem:[#allocation3 + $0x40] sm:$0xff] %vm3557, %v3538
    %3561 = vst.msk [vmem:[#allocation3 + $0x60] sm:$0xff] %vm3557, %v3540
    %3562 = vst.msk [vmem:[#allocation3 + $0x80] sm:$0xff] %vm3557, %v3542
    %3563 = vst.msk [vmem:[#allocation3 + $0xa0] sm:$0xff] %vm3557, %v3544
    %3564 = vst.msk [vmem:[#allocation3 + $0xc0] sm:$0xff] %vm3557, %v3546
    %3565 = vst.msk [vmem:[#allocation3 + $0xe0] sm:$0xff] %vm3557, %v3548
    %v3566 = vrot.slane %v3226, 7
    %v3567 = vrot.slane %v3227, 7
    %v3568 = vsel %vm753, %v3566, %v3567
    %v3569 = vrot.slane %v3228, 7
    %v3570 = vsel %vm753, %v3567, %v3569
    %v3571 = vrot.slane %v3229, 7
    %v3572 = vsel %vm753, %v3569, %v3571
    %v3573 = vrot.slane %v3230, 7
    %v3574 = vsel %vm753, %v3571, %v3573
    %v3575 = vrot.slane %v3234, 7
    %v3576 = vrot.slane %v3235, 7
    %v3577 = vsel %vm753, %v3575, %v3576
    %v3578 = vrot.slane %v3236, 7
    %v3579 = vsel %vm753, %v3576, %v3578
    %v3580 = vrot.slane %v3237, 7
    %v3581 = vsel %vm753, %v3578, %v3580
    %v3582 = vrot.slane %v3238, 7
    %v3583 = vsel %vm753, %v3580, %v3582
    %3584 = vrot.lane.b32.xlu0 %v3568, 112
    %v3585 = vpop.permute.xlu0 %3584
    %3586 = vrot.lane.b32.xlu0 %v3570, 112
    %v3587 = vpop.permute.xlu0 %3586
    %3588 = vrot.lane.b32.xlu0 %v3572, 112
    %v3589 = vpop.permute.xlu0 %3588
    %3590 = vrot.lane.b32.xlu0 %v3574, 112
    %v3591 = vpop.permute.xlu0 %3590
    %3592 = vrot.lane.b32.xlu0 %v3577, 112
    %v3593 = vpop.permute.xlu0 %3592
    %3594 = vrot.lane.b32.xlu0 %v3579, 112
    %v3595 = vpop.permute.xlu0 %3594
    %3596 = vrot.lane.b32.xlu0 %v3581, 112
    %v3597 = vpop.permute.xlu0 %3596
    %3598 = vrot.lane.b32.xlu0 %v3583, 112
    %v3599 = vpop.permute.xlu0 %3598
    %vm3608 = vcmask 1048448
    %3609 = vst.msk [vmem:[#allocation3] sm:$0xff] %vm3608, %v3585
    %3610 = vst.msk [vmem:[#allocation3 + $0x20] sm:$0xff] %vm3608, %v3587
    %3611 = vst.msk [vmem:[#allocation3 + $0x40] sm:$0xff] %vm3608, %v3589
    %3612 = vst.msk [vmem:[#allocation3 + $0x60] sm:$0xff] %vm3608, %v3591
    %3613 = vst.msk [vmem:[#allocation3 + $0x80] sm:$0xff] %vm3608, %v3593
    %3614 = vst.msk [vmem:[#allocation3 + $0xa0] sm:$0xff] %vm3608, %v3595
    %3615 = vst.msk [vmem:[#allocation3 + $0xc0] sm:$0xff] %vm3608, %v3597
    %3616 = vst.msk [vmem:[#allocation3 + $0xe0] sm:$0xff] %vm3608, %v3599
    %3617 = vst.msk [vmem:[#allocation3 + $0x8] sm:$0xff] %vm3009, %v3227
    %3618 = vst.msk [vmem:[#allocation3 + $0x28] sm:$0xff] %vm3009, %v3228
    %3619 = vst.msk [vmem:[#allocation3 + $0x48] sm:$0xff] %vm3009, %v3229
    %3620 = vst.msk [vmem:[#allocation3 + $0x68] sm:$0xff] %vm3009, %v3230
    %3621 = vst.msk [vmem:[#allocation3 + $0x88] sm:$0xff] %vm3009, %v3235
    %3622 = vst.msk [vmem:[#allocation3 + $0xa8] sm:$0xff] %vm3009, %v3236
    %3623 = vst.msk [vmem:[#allocation3 + $0xc8] sm:$0xff] %vm3009, %v3237
    %3624 = vst.msk [vmem:[#allocation3 + $0xe8] sm:$0xff] %vm3009, %v3238
    %v3627 = vrot.slane %v3231, 1
    %v3628 = vsel %vm153, %v3267, %v3627
    %v3629 = vrot.slane %v3239, 1
    %v3630 = vsel %vm153, %v3276, %v3629
    %3631 = vrot.lane.b32.xlu0 %v3628, 16
    %v3632 = vpop.permute.xlu0 %3631
    %3633 = vrot.lane.b32.xlu0 %v3630, 16
    %v3634 = vpop.permute.xlu0 %3633
    %3637 = vst.msk [vmem:[#allocation3 + $0x8] sm:$0xff] %vm3302, %v3281
    %3638 = vst.msk [vmem:[#allocation3 + $0x28] sm:$0xff] %vm3302, %v3283
    %3639 = vst.msk [vmem:[#allocation3 + $0x48] sm:$0xff] %vm3302, %v3285
    %3640 = vst.msk [vmem:[#allocation3 + $0x68] sm:$0xff] %vm3302, %v3632
    %3641 = vst.msk [vmem:[#allocation3 + $0x88] sm:$0xff] %vm3302, %v3289
    %3642 = vst.msk [vmem:[#allocation3 + $0xa8] sm:$0xff] %vm3302, %v3291
    %3643 = vst.msk [vmem:[#allocation3 + $0xc8] sm:$0xff] %vm3302, %v3293
    %3644 = vst.msk [vmem:[#allocation3 + $0xe8] sm:$0xff] %vm3302, %v3634
    %v3645 = vrot.slane %v3231, 2
    %v3646 = vsel %vm253, %v3318, %v3645
    %v3647 = vrot.slane %v3239, 2
    %v3648 = vsel %vm253, %v3327, %v3647
    %3649 = vrot.lane.b32.xlu0 %v3646, 32
    %v3650 = vpop.permute.xlu0 %3649
    %3651 = vrot.lane.b32.xlu0 %v3648, 32
    %v3652 = vpop.permute.xlu0 %3651
    %3655 = vst.msk [vmem:[#allocation3 + $0x8] sm:$0xff] %vm3353, %v3332
    %3656 = vst.msk [vmem:[#allocation3 + $0x28] sm:$0xff] %vm3353, %v3334
    %3657 = vst.msk [vmem:[#allocation3 + $0x48] sm:$0xff] %vm3353, %v3336
    %3658 = vst.msk [vmem:[#allocation3 + $0x68] sm:$0xff] %vm3353, %v3650
    %3659 = vst.msk [vmem:[#allocation3 + $0x88] sm:$0xff] %vm3353, %v3340
    %3660 = vst.msk [vmem:[#allocation3 + $0xa8] sm:$0xff] %vm3353, %v3342
    %3661 = vst.msk [vmem:[#allocation3 + $0xc8] sm:$0xff] %vm3353, %v3344
    %3662 = vst.msk [vmem:[#allocation3 + $0xe8] sm:$0xff] %vm3353, %v3652
    %v3663 = vrot.slane %v3231, 3
    %v3664 = vsel %vm353, %v3369, %v3663
    %v3665 = vrot.slane %v3239, 3
    %v3666 = vsel %vm353, %v3378, %v3665
    %3667 = vrot.lane.b32.xlu0 %v3664, 48
    %v3668 = vpop.permute.xlu0 %3667
    %3669 = vrot.lane.b32.xlu0 %v3666, 48
    %v3670 = vpop.permute.xlu0 %3669
    %3673 = vst.msk [vmem:[#allocation3 + $0x8] sm:$0xff] %vm3404, %v3383
    %3674 = vst.msk [vmem:[#allocation3 + $0x28] sm:$0xff] %vm3404, %v3385
    %3675 = vst.msk [vmem:[#allocation3 + $0x48] sm:$0xff] %vm3404, %v3387
    %3676 = vst.msk [vmem:[#allocation3 + $0x68] sm:$0xff] %vm3404, %v3668
    %3677 = vst.msk [vmem:[#allocation3 + $0x88] sm:$0xff] %vm3404, %v3391
    %3678 = vst.msk [vmem:[#allocation3 + $0xa8] sm:$0xff] %vm3404, %v3393
    %3679 = vst.msk [vmem:[#allocation3 + $0xc8] sm:$0xff] %vm3404, %v3395
    %3680 = vst.msk [vmem:[#allocation3 + $0xe8] sm:$0xff] %vm3404, %v3670
    %v3681 = vrot.slane %v3231, 4
    %v3682 = vsel %vm453, %v3420, %v3681
    %v3683 = vrot.slane %v3239, 4
    %v3684 = vsel %vm453, %v3429, %v3683
    %3685 = vrot.lane.b32.xlu0 %v3682, 64
    %v3686 = vpop.permute.xlu0 %3685
    %3687 = vrot.lane.b32.xlu0 %v3684, 64
    %v3688 = vpop.permute.xlu0 %3687
    %3691 = vst.msk [vmem:[#allocation3 + $0x8] sm:$0xff] %vm3455, %v3434
    %3692 = vst.msk [vmem:[#allocation3 + $0x28] sm:$0xff] %vm3455, %v3436
    %3693 = vst.msk [vmem:[#allocation3 + $0x48] sm:$0xff] %vm3455, %v3438
    %3694 = vst.msk [vmem:[#allocation3 + $0x68] sm:$0xff] %vm3455, %v3686
    %3695 = vst.msk [vmem:[#allocation3 + $0x88] sm:$0xff] %vm3455, %v3442
    %3696 = vst.msk [vmem:[#allocation3 + $0xa8] sm:$0xff] %vm3455, %v3444
    %3697 = vst.msk [vmem:[#allocation3 + $0xc8] sm:$0xff] %vm3455, %v3446
    %3698 = vst.msk [vmem:[#allocation3 + $0xe8] sm:$0xff] %vm3455, %v3688
    %v3699 = vrot.slane %v3231, 5
    %v3700 = vsel %vm553, %v3471, %v3699
    %v3701 = vrot.slane %v3239, 5
    %v3702 = vsel %vm553, %v3480, %v3701
    %3703 = vrot.lane.b32.xlu0 %v3700, 80
    %v3704 = vpop.permute.xlu0 %3703
    %3705 = vrot.lane.b32.xlu0 %v3702, 80
    %v3706 = vpop.permute.xlu0 %3705
    %3709 = vst.msk [vmem:[#allocation3 + $0x8] sm:$0xff] %vm3506, %v3485
    %3710 = vst.msk [vmem:[#allocation3 + $0x28] sm:$0xff] %vm3506, %v3487
    %3711 = vst.msk [vmem:[#allocation3 + $0x48] sm:$0xff] %vm3506, %v3489
    %3712 = vst.msk [vmem:[#allocation3 + $0x68] sm:$0xff] %vm3506, %v3704
    %3713 = vst.msk [vmem:[#allocation3 + $0x88] sm:$0xff] %vm3506, %v3493
    %3714 = vst.msk [vmem:[#allocation3 + $0xa8] sm:$0xff] %vm3506, %v3495
    %3715 = vst.msk [vmem:[#allocation3 + $0xc8] sm:$0xff] %vm3506, %v3497
    %3716 = vst.msk [vmem:[#allocation3 + $0xe8] sm:$0xff] %vm3506, %v3706
    %v3717 = vrot.slane %v3231, 6
    %v3718 = vsel %vm653, %v3522, %v3717
    %v3719 = vrot.slane %v3239, 6
    %v3720 = vsel %vm653, %v3531, %v3719
    %3721 = vrot.lane.b32.xlu0 %v3718, 96
    %v3722 = vpop.permute.xlu0 %3721
    %3723 = vrot.lane.b32.xlu0 %v3720, 96
    %v3724 = vpop.permute.xlu0 %3723
    %3727 = vst.msk [vmem:[#allocation3 + $0x8] sm:$0xff] %vm3557, %v3536
    %3728 = vst.msk [vmem:[#allocation3 + $0x28] sm:$0xff] %vm3557, %v3538
    %3729 = vst.msk [vmem:[#allocation3 + $0x48] sm:$0xff] %vm3557, %v3540
    %3730 = vst.msk [vmem:[#allocation3 + $0x68] sm:$0xff] %vm3557, %v3722
    %3731 = vst.msk [vmem:[#allocation3 + $0x88] sm:$0xff] %vm3557, %v3544
    %3732 = vst.msk [vmem:[#allocation3 + $0xa8] sm:$0xff] %vm3557, %v3546
    %3733 = vst.msk [vmem:[#allocation3 + $0xc8] sm:$0xff] %vm3557, %v3548
    %3734 = vst.msk [vmem:[#allocation3 + $0xe8] sm:$0xff] %vm3557, %v3724
    %v3735 = vrot.slane %v3231, 7
    %v3736 = vsel %vm753, %v3573, %v3735
    %v3737 = vrot.slane %v3239, 7
    %v3738 = vsel %vm753, %v3582, %v3737
    %3739 = vrot.lane.b32.xlu0 %v3736, 112
    %v3740 = vpop.permute.xlu0 %3739
    %3741 = vrot.lane.b32.xlu0 %v3738, 112
    %v3742 = vpop.permute.xlu0 %3741
    %3745 = vst.msk [vmem:[#allocation3 + $0x8] sm:$0xff] %vm3608, %v3587
    %3746 = vst.msk [vmem:[#allocation3 + $0x28] sm:$0xff] %vm3608, %v3589
    %3747 = vst.msk [vmem:[#allocation3 + $0x48] sm:$0xff] %vm3608, %v3591
    %3748 = vst.msk [vmem:[#allocation3 + $0x68] sm:$0xff] %vm3608, %v3740
    %3749 = vst.msk [vmem:[#allocation3 + $0x88] sm:$0xff] %vm3608, %v3595
    %3750 = vst.msk [vmem:[#allocation3 + $0xa8] sm:$0xff] %vm3608, %v3597
    %3751 = vst.msk [vmem:[#allocation3 + $0xc8] sm:$0xff] %vm3608, %v3599
    %3752 = vst.msk [vmem:[#allocation3 + $0xe8] sm:$0xff] %vm3608, %v3742
    %3753 = vst.msk [vmem:[#allocation3 + $0x10] sm:$0xff] %vm3009, %v3228
    %3754 = vst.msk [vmem:[#allocation3 + $0x30] sm:$0xff] %vm3009, %v3229
    %3755 = vst.msk [vmem:[#allocation3 + $0x50] sm:$0xff] %vm3009, %v3230
    %3756 = vst.msk [vmem:[#allocation3 + $0x70] sm:$0xff] %vm3009, %v3231
    %3757 = vst.msk [vmem:[#allocation3 + $0x90] sm:$0xff] %vm3009, %v3236
    %3758 = vst.msk [vmem:[#allocation3 + $0xb0] sm:$0xff] %vm3009, %v3237
    %3759 = vst.msk [vmem:[#allocation3 + $0xd0] sm:$0xff] %vm3009, %v3238
    %3760 = vst.msk [vmem:[#allocation3 + $0xf0] sm:$0xff] %vm3009, %v3239
    %v3763 = vrot.slane %v3232, 1
    %v3764 = vsel %vm153, %v3627, %v3763
    %v3765 = vrot.slane %v3240, 1
    %v3766 = vsel %vm153, %v3629, %v3765
    %3767 = vrot.lane.b32.xlu0 %v3764, 16
    %v3768 = vpop.permute.xlu0 %3767
    %3769 = vrot.lane.b32.xlu0 %v3766, 16
    %v3770 = vpop.permute.xlu0 %3769
    %3773 = vst.msk [vmem:[#allocation3 + $0x10] sm:$0xff] %vm3302, %v3283
    %3774 = vst.msk [vmem:[#allocation3 + $0x30] sm:$0xff] %vm3302, %v3285
    %3775 = vst.msk [vmem:[#allocation3 + $0x50] sm:$0xff] %vm3302, %v3632
    %3776 = vst.msk [vmem:[#allocation3 + $0x70] sm:$0xff] %vm3302, %v3768
    %3777 = vst.msk [vmem:[#allocation3 + $0x90] sm:$0xff] %vm3302, %v3291
    %3778 = vst.msk [vmem:[#allocation3 + $0xb0] sm:$0xff] %vm3302, %v3293
    %3779 = vst.msk [vmem:[#allocation3 + $0xd0] sm:$0xff] %vm3302, %v3634
    %3780 = vst.msk [vmem:[#allocation3 + $0xf0] sm:$0xff] %vm3302, %v3770
    %v3781 = vrot.slane %v3232, 2
    %v3782 = vsel %vm253, %v3645, %v3781
    %v3783 = vrot.slane %v3240, 2
    %v3784 = vsel %vm253, %v3647, %v3783
    %3785 = vrot.lane.b32.xlu0 %v3782, 32
    %v3786 = vpop.permute.xlu0 %3785
    %3787 = vrot.lane.b32.xlu0 %v3784, 32
    %v3788 = vpop.permute.xlu0 %3787
    %3791 = vst.msk [vmem:[#allocation3 + $0x10] sm:$0xff] %vm3353, %v3334
    %3792 = vst.msk [vmem:[#allocation3 + $0x30] sm:$0xff] %vm3353, %v3336
    %3793 = vst.msk [vmem:[#allocation3 + $0x50] sm:$0xff] %vm3353, %v3650
    %3794 = vst.msk [vmem:[#allocation3 + $0x70] sm:$0xff] %vm3353, %v3786
    %3795 = vst.msk [vmem:[#allocation3 + $0x90] sm:$0xff] %vm3353, %v3342
    %3796 = vst.msk [vmem:[#allocation3 + $0xb0] sm:$0xff] %vm3353, %v3344
    %3797 = vst.msk [vmem:[#allocation3 + $0xd0] sm:$0xff] %vm3353, %v3652
    %3798 = vst.msk [vmem:[#allocation3 + $0xf0] sm:$0xff] %vm3353, %v3788
    %v3799 = vrot.slane %v3232, 3
    %v3800 = vsel %vm353, %v3663, %v3799
    %v3801 = vrot.slane %v3240, 3
    %v3802 = vsel %vm353, %v3665, %v3801
    %3803 = vrot.lane.b32.xlu0 %v3800, 48
    %v3804 = vpop.permute.xlu0 %3803
    %3805 = vrot.lane.b32.xlu0 %v3802, 48
    %v3806 = vpop.permute.xlu0 %3805
    %3809 = vst.msk [vmem:[#allocation3 + $0x10] sm:$0xff] %vm3404, %v3385
    %3810 = vst.msk [vmem:[#allocation3 + $0x30] sm:$0xff] %vm3404, %v3387
    %3811 = vst.msk [vmem:[#allocation3 + $0x50] sm:$0xff] %vm3404, %v3668
    %3812 = vst.msk [vmem:[#allocation3 + $0x70] sm:$0xff] %vm3404, %v3804
    %3813 = vst.msk [vmem:[#allocation3 + $0x90] sm:$0xff] %vm3404, %v3393
    %3814 = vst.msk [vmem:[#allocation3 + $0xb0] sm:$0xff] %vm3404, %v3395
    %3815 = vst.msk [vmem:[#allocation3 + $0xd0] sm:$0xff] %vm3404, %v3670
    %3816 = vst.msk [vmem:[#allocation3 + $0xf0] sm:$0xff] %vm3404, %v3806
    %v3817 = vrot.slane %v3232, 4
    %v3818 = vsel %vm453, %v3681, %v3817
    %v3819 = vrot.slane %v3240, 4
    %v3820 = vsel %vm453, %v3683, %v3819
    %3821 = vrot.lane.b32.xlu0 %v3818, 64
    %v3822 = vpop.permute.xlu0 %3821
    %3823 = vrot.lane.b32.xlu0 %v3820, 64
    %v3824 = vpop.permute.xlu0 %3823
    %3827 = vst.msk [vmem:[#allocation3 + $0x10] sm:$0xff] %vm3455, %v3436
    %3828 = vst.msk [vmem:[#allocation3 + $0x30] sm:$0xff] %vm3455, %v3438
    %3829 = vst.msk [vmem:[#allocation3 + $0x50] sm:$0xff] %vm3455, %v3686
    %3830 = vst.msk [vmem:[#allocation3 + $0x70] sm:$0xff] %vm3455, %v3822
    %3831 = vst.msk [vmem:[#allocation3 + $0x90] sm:$0xff] %vm3455, %v3444
    %3832 = vst.msk [vmem:[#allocation3 + $0xb0] sm:$0xff] %vm3455, %v3446
    %3833 = vst.msk [vmem:[#allocation3 + $0xd0] sm:$0xff] %vm3455, %v3688
    %3834 = vst.msk [vmem:[#allocation3 + $0xf0] sm:$0xff] %vm3455, %v3824
    %v3835 = vrot.slane %v3232, 5
    %v3836 = vsel %vm553, %v3699, %v3835
    %v3837 = vrot.slane %v3240, 5
    %v3838 = vsel %vm553, %v3701, %v3837
    %3839 = vrot.lane.b32.xlu0 %v3836, 80
    %v3840 = vpop.permute.xlu0 %3839
    %3841 = vrot.lane.b32.xlu0 %v3838, 80
    %v3842 = vpop.permute.xlu0 %3841
    %3845 = vst.msk [vmem:[#allocation3 + $0x10] sm:$0xff] %vm3506, %v3487
    %3846 = vst.msk [vmem:[#allocation3 + $0x30] sm:$0xff] %vm3506, %v3489
    %3847 = vst.msk [vmem:[#allocation3 + $0x50] sm:$0xff] %vm3506, %v3704
    %3848 = vst.msk [vmem:[#allocation3 + $0x70] sm:$0xff] %vm3506, %v3840
    %3849 = vst.msk [vmem:[#allocation3 + $0x90] sm:$0xff] %vm3506, %v3495
    %3850 = vst.msk [vmem:[#allocation3 + $0xb0] sm:$0xff] %vm3506, %v3497
    %3851 = vst.msk [vmem:[#allocation3 + $0xd0] sm:$0xff] %vm3506, %v3706
    %3852 = vst.msk [vmem:[#allocation3 + $0xf0] sm:$0xff] %vm3506, %v3842
    %v3853 = vrot.slane %v3232, 6
    %v3854 = vsel %vm653, %v3717, %v3853
    %v3855 = vrot.slane %v3240, 6
    %v3856 = vsel %vm653, %v3719, %v3855
    %3857 = vrot.lane.b32.xlu0 %v3854, 96
    %v3858 = vpop.permute.xlu0 %3857
    %3859 = vrot.lane.b32.xlu0 %v3856, 96
    %v3860 = vpop.permute.xlu0 %3859
    %3863 = vst.msk [vmem:[#allocation3 + $0x10] sm:$0xff] %vm3557, %v3538
    %3864 = vst.msk [vmem:[#allocation3 + $0x30] sm:$0xff] %vm3557, %v3540
    %3865 = vst.msk [vmem:[#allocation3 + $0x50] sm:$0xff] %vm3557, %v3722
    %3866 = vst.msk [vmem:[#allocation3 + $0x70] sm:$0xff] %vm3557, %v3858
    %3867 = vst.msk [vmem:[#allocation3 + $0x90] sm:$0xff] %vm3557, %v3546
    %3868 = vst.msk [vmem:[#allocation3 + $0xb0] sm:$0xff] %vm3557, %v3548
    %3869 = vst.msk [vmem:[#allocation3 + $0xd0] sm:$0xff] %vm3557, %v3724
    %3870 = vst.msk [vmem:[#allocation3 + $0xf0] sm:$0xff] %vm3557, %v3860
    %v3871 = vrot.slane %v3232, 7
    %v3872 = vsel %vm753, %v3735, %v3871
    %v3873 = vrot.slane %v3240, 7
    %v3874 = vsel %vm753, %v3737, %v3873
    %3875 = vrot.lane.b32.xlu0 %v3872, 112
    %v3876 = vpop.permute.xlu0 %3875
    %3877 = vrot.lane.b32.xlu0 %v3874, 112
    %v3878 = vpop.permute.xlu0 %3877
    %3881 = vst.msk [vmem:[#allocation3 + $0x10] sm:$0xff] %vm3608, %v3589
    %3882 = vst.msk [vmem:[#allocation3 + $0x30] sm:$0xff] %vm3608, %v3591
    %3883 = vst.msk [vmem:[#allocation3 + $0x50] sm:$0xff] %vm3608, %v3740
    %3884 = vst.msk [vmem:[#allocation3 + $0x70] sm:$0xff] %vm3608, %v3876
    %3885 = vst.msk [vmem:[#allocation3 + $0x90] sm:$0xff] %vm3608, %v3597
    %3886 = vst.msk [vmem:[#allocation3 + $0xb0] sm:$0xff] %vm3608, %v3599
    %3887 = vst.msk [vmem:[#allocation3 + $0xd0] sm:$0xff] %vm3608, %v3742
    %3888 = vst.msk [vmem:[#allocation3 + $0xf0] sm:$0xff] %vm3608, %v3878
    %3889 = vst.msk [vmem:[#allocation3 + $0x18] sm:$0xff] %vm3009, %v3229
    %3890 = vst.msk [vmem:[#allocation3 + $0x38] sm:$0xff] %vm3009, %v3230
    %3891 = vst.msk [vmem:[#allocation3 + $0x58] sm:$0xff] %vm3009, %v3231
    %3892 = vst.msk [vmem:[#allocation3 + $0x78] sm:$0xff] %vm3009, %v3232
    %3893 = vst.msk [vmem:[#allocation3 + $0x98] sm:$0xff] %vm3009, %v3237
    %3894 = vst.msk [vmem:[#allocation3 + $0xb8] sm:$0xff] %vm3009, %v3238
    %3895 = vst.msk [vmem:[#allocation3 + $0xd8] sm:$0xff] %vm3009, %v3239
    %3896 = vst.msk [vmem:[#allocation3 + $0xf8] sm:$0xff] %vm3009, %v3240
    %v3899 = vrot.slane %v3233, 1
    %v3900 = vsel %vm153, %v3763, %v3899
    %v3901 = vrot.slane %v3241, 1
    %v3902 = vsel %vm153, %v3765, %v3901
    %3903 = vrot.lane.b32.xlu0 %v3900, 16
    %v3904 = vpop.permute.xlu0 %3903
    %3905 = vrot.lane.b32.xlu0 %v3902, 16
    %v3906 = vpop.permute.xlu0 %3905
    %3909 = vst.msk [vmem:[#allocation3 + $0x18] sm:$0xff] %vm3302, %v3285
    %3910 = vst.msk [vmem:[#allocation3 + $0x38] sm:$0xff] %vm3302, %v3632
    %3911 = vst.msk [vmem:[#allocation3 + $0x58] sm:$0xff] %vm3302, %v3768
    %3912 = vst.msk [vmem:[#allocation3 + $0x78] sm:$0xff] %vm3302, %v3904
    %3913 = vst.msk [vmem:[#allocation3 + $0x98] sm:$0xff] %vm3302, %v3293
    %3914 = vst.msk [vmem:[#allocation3 + $0xb8] sm:$0xff] %vm3302, %v3634
    %3915 = vst.msk [vmem:[#allocation3 + $0xd8] sm:$0xff] %vm3302, %v3770
    %3916 = vst.msk [vmem:[#allocation3 + $0xf8] sm:$0xff] %vm3302, %v3906
    %v3917 = vrot.slane %v3233, 2
    %v3918 = vsel %vm253, %v3781, %v3917
    %v3919 = vrot.slane %v3241, 2
    %v3920 = vsel %vm253, %v3783, %v3919
    %3921 = vrot.lane.b32.xlu0 %v3918, 32
    %v3922 = vpop.permute.xlu0 %3921
    %3923 = vrot.lane.b32.xlu0 %v3920, 32
    %v3924 = vpop.permute.xlu0 %3923
    %3927 = vst.msk [vmem:[#allocation3 + $0x18] sm:$0xff] %vm3353, %v3336
    %3928 = vst.msk [vmem:[#allocation3 + $0x38] sm:$0xff] %vm3353, %v3650
    %3929 = vst.msk [vmem:[#allocation3 + $0x58] sm:$0xff] %vm3353, %v3786
    %3930 = vst.msk [vmem:[#allocation3 + $0x78] sm:$0xff] %vm3353, %v3922
    %3931 = vst.msk [vmem:[#allocation3 + $0x98] sm:$0xff] %vm3353, %v3344
    %3932 = vst.msk [vmem:[#allocation3 + $0xb8] sm:$0xff] %vm3353, %v3652
    %3933 = vst.msk [vmem:[#allocation3 + $0xd8] sm:$0xff] %vm3353, %v3788
    %3934 = vst.msk [vmem:[#allocation3 + $0xf8] sm:$0xff] %vm3353, %v3924
    %v3935 = vrot.slane %v3233, 3
    %v3936 = vsel %vm353, %v3799, %v3935
    %v3937 = vrot.slane %v3241, 3
    %v3938 = vsel %vm353, %v3801, %v3937
    %3939 = vrot.lane.b32.xlu0 %v3936, 48
    %v3940 = vpop.permute.xlu0 %3939
    %3941 = vrot.lane.b32.xlu0 %v3938, 48
    %v3942 = vpop.permute.xlu0 %3941
    %3945 = vst.msk [vmem:[#allocation3 + $0x18] sm:$0xff] %vm3404, %v3387
    %3946 = vst.msk [vmem:[#allocation3 + $0x38] sm:$0xff] %vm3404, %v3668
    %3947 = vst.msk [vmem:[#allocation3 + $0x58] sm:$0xff] %vm3404, %v3804
    %3948 = vst.msk [vmem:[#allocation3 + $0x78] sm:$0xff] %vm3404, %v3940
    %3949 = vst.msk [vmem:[#allocation3 + $0x98] sm:$0xff] %vm3404, %v3395
    %3950 = vst.msk [vmem:[#allocation3 + $0xb8] sm:$0xff] %vm3404, %v3670
    %3951 = vst.msk [vmem:[#allocation3 + $0xd8] sm:$0xff] %vm3404, %v3806
    %3952 = vst.msk [vmem:[#allocation3 + $0xf8] sm:$0xff] %vm3404, %v3942
    %v3953 = vrot.slane %v3233, 4
    %v3954 = vsel %vm453, %v3817, %v3953
    %v3955 = vrot.slane %v3241, 4
    %v3956 = vsel %vm453, %v3819, %v3955
    %3957 = vrot.lane.b32.xlu0 %v3954, 64
    %v3958 = vpop.permute.xlu0 %3957
    %3959 = vrot.lane.b32.xlu0 %v3956, 64
    %v3960 = vpop.permute.xlu0 %3959
    %3963 = vst.msk [vmem:[#allocation3 + $0x18] sm:$0xff] %vm3455, %v3438
    %3964 = vst.msk [vmem:[#allocation3 + $0x38] sm:$0xff] %vm3455, %v3686
    %3965 = vst.msk [vmem:[#allocation3 + $0x58] sm:$0xff] %vm3455, %v3822
    %3966 = vst.msk [vmem:[#allocation3 + $0x78] sm:$0xff] %vm3455, %v3958
    %3967 = vst.msk [vmem:[#allocation3 + $0x98] sm:$0xff] %vm3455, %v3446
    %3968 = vst.msk [vmem:[#allocation3 + $0xb8] sm:$0xff] %vm3455, %v3688
    %3969 = vst.msk [vmem:[#allocation3 + $0xd8] sm:$0xff] %vm3455, %v3824
    %3970 = vst.msk [vmem:[#allocation3 + $0xf8] sm:$0xff] %vm3455, %v3960
    %v3971 = vrot.slane %v3233, 5
    %v3972 = vsel %vm553, %v3835, %v3971
    %v3973 = vrot.slane %v3241, 5
    %v3974 = vsel %vm553, %v3837, %v3973
    %3975 = vrot.lane.b32.xlu0 %v3972, 80
    %v3976 = vpop.permute.xlu0 %3975
    %3977 = vrot.lane.b32.xlu0 %v3974, 80
    %v3978 = vpop.permute.xlu0 %3977
    %3981 = vst.msk [vmem:[#allocation3 + $0x18] sm:$0xff] %vm3506, %v3489
    %3982 = vst.msk [vmem:[#allocation3 + $0x38] sm:$0xff] %vm3506, %v3704
    %3983 = vst.msk [vmem:[#allocation3 + $0x58] sm:$0xff] %vm3506, %v3840
    %3984 = vst.msk [vmem:[#allocation3 + $0x78] sm:$0xff] %vm3506, %v3976
    %3985 = vst.msk [vmem:[#allocation3 + $0x98] sm:$0xff] %vm3506, %v3497
    %3986 = vst.msk [vmem:[#allocation3 + $0xb8] sm:$0xff] %vm3506, %v3706
    %3987 = vst.msk [vmem:[#allocation3 + $0xd8] sm:$0xff] %vm3506, %v3842
    %3988 = vst.msk [vmem:[#allocation3 + $0xf8] sm:$0xff] %vm3506, %v3978
    %v3989 = vrot.slane %v3233, 6
    %v3990 = vsel %vm653, %v3853, %v3989
    %v3991 = vrot.slane %v3241, 6
    %v3992 = vsel %vm653, %v3855, %v3991
    %3993 = vrot.lane.b32.xlu0 %v3990, 96
    %v3994 = vpop.permute.xlu0 %3993
    %3995 = vrot.lane.b32.xlu0 %v3992, 96
    %v3996 = vpop.permute.xlu0 %3995
    %3999 = vst.msk [vmem:[#allocation3 + $0x18] sm:$0xff] %vm3557, %v3540
    %4000 = vst.msk [vmem:[#allocation3 + $0x38] sm:$0xff] %vm3557, %v3722
    %4001 = vst.msk [vmem:[#allocation3 + $0x58] sm:$0xff] %vm3557, %v3858
    %4002 = vst.msk [vmem:[#allocation3 + $0x78] sm:$0xff] %vm3557, %v3994
    %4003 = vst.msk [vmem:[#allocation3 + $0x98] sm:$0xff] %vm3557, %v3548
    %4004 = vst.msk [vmem:[#allocation3 + $0xb8] sm:$0xff] %vm3557, %v3724
    %4005 = vst.msk [vmem:[#allocation3 + $0xd8] sm:$0xff] %vm3557, %v3860
    %4006 = vst.msk [vmem:[#allocation3 + $0xf8] sm:$0xff] %vm3557, %v3996
    %v4007 = vrot.slane %v3233, 7
    %v4008 = vsel %vm753, %v3871, %v4007
    %v4009 = vrot.slane %v3241, 7
    %v4010 = vsel %vm753, %v3873, %v4009
    %4011 = vrot.lane.b32.xlu0 %v4008, 112
    %v4012 = vpop.permute.xlu0 %4011
    %4013 = vrot.lane.b32.xlu0 %v4010, 112
    %v4014 = vpop.permute.xlu0 %4013
    %4017 = vst.msk [vmem:[#allocation3 + $0x18] sm:$0xff] %vm3608, %v3591
    %4018 = vst.msk [vmem:[#allocation3 + $0x38] sm:$0xff] %vm3608, %v3740
    %4019 = vst.msk [vmem:[#allocation3 + $0x58] sm:$0xff] %vm3608, %v3876
    %4020 = vst.msk [vmem:[#allocation3 + $0x78] sm:$0xff] %vm3608, %v4012
    %4021 = vst.msk [vmem:[#allocation3 + $0x98] sm:$0xff] %vm3608, %v3599
    %4022 = vst.msk [vmem:[#allocation3 + $0xb8] sm:$0xff] %vm3608, %v3742
    %4023 = vst.msk [vmem:[#allocation3 + $0xd8] sm:$0xff] %vm3608, %v3878
    %4024 = vst.msk [vmem:[#allocation3 + $0xf8] sm:$0xff] %vm3608, %v4014
    %v4025 = vld [vmem:[#allocation3] sm:$0xff]
    %v4026 = vld [vmem:[#allocation3 + $0x8] sm:$0xff]
    %v4027 = vld [vmem:[#allocation3 + $0x10] sm:$0xff]
    %v4028 = vld [vmem:[#allocation3 + $0x18] sm:$0xff]
    %v4029 = vld [vmem:[#allocation3 + $0x20] sm:$0xff]
    %v4030 = vld [vmem:[#allocation3 + $0x28] sm:$0xff]
    %v4031 = vld [vmem:[#allocation3 + $0x30] sm:$0xff]
    %v4032 = vld [vmem:[#allocation3 + $0x38] sm:$0xff]
    %v4033 = vld [vmem:[#allocation3 + $0x40] sm:$0xff]
    %v4034 = vld [vmem:[#allocation3 + $0x48] sm:$0xff]
    %v4035 = vld [vmem:[#allocation3 + $0x50] sm:$0xff]
    %v4036 = vld [vmem:[#allocation3 + $0x58] sm:$0xff]
    %v4037 = vld [vmem:[#allocation3 + $0x60] sm:$0xff]
    %v4038 = vld [vmem:[#allocation3 + $0x68] sm:$0xff]
    %v4039 = vld [vmem:[#allocation3 + $0x70] sm:$0xff]
    %v4040 = vld [vmem:[#allocation3 + $0x78] sm:$0xff]
    %v4041 = vld [vmem:[#allocation3 + $0x80] sm:$0xff]
    %v4042 = vld [vmem:[#allocation3 + $0x88] sm:$0xff]
    %v4043 = vld [vmem:[#allocation3 + $0x90] sm:$0xff]
    %v4044 = vld [vmem:[#allocation3 + $0x98] sm:$0xff]
    %v4045 = vld [vmem:[#allocation3 + $0xa0] sm:$0xff]
    %v4046 = vld [vmem:[#allocation3 + $0xa8] sm:$0xff]
    %v4047 = vld [vmem:[#allocation3 + $0xb0] sm:$0xff]
    %v4048 = vld [vmem:[#allocation3 + $0xb8] sm:$0xff]
    %v4049 = vld [vmem:[#allocation3 + $0xc0] sm:$0xff]
    %v4050 = vld [vmem:[#allocation3 + $0xc8] sm:$0xff]
    %v4051 = vld [vmem:[#allocation3 + $0xd0] sm:$0xff]
    %v4052 = vld [vmem:[#allocation3 + $0xd8] sm:$0xff]
    %v4053 = vld [vmem:[#allocation3 + $0xe0] sm:$0xff]
    %v4054 = vld [vmem:[#allocation3 + $0xe8] sm:$0xff]
    %v4055 = vld [vmem:[#allocation3 + $0xf0] sm:$0xff]
    %v4056 = vld [vmem:[#allocation3 + $0xf8] sm:$0xff]
    %v4057 = vld [vmem:[%s3] sm:$0xff]
    %v4058 = vld [vmem:[%s3 + $0x8] sm:$0xff]
    %v4059 = vld [vmem:[%s3 + $0x10] sm:$0xff]
    %v4060 = vld [vmem:[%s3 + $0x18] sm:$0xff]
    %v4061 = vld [vmem:[%s3 + $0x20] sm:$0xff]
    %v4062 = vld [vmem:[%s3 + $0x28] sm:$0xff]
    %v4063 = vld [vmem:[%s3 + $0x30] sm:$0xff]
    %v4064 = vld [vmem:[%s3 + $0x38] sm:$0xff]
    %v4065 = vld [vmem:[%s3 + $0x40] sm:$0xff]
    %v4066 = vld [vmem:[%s3 + $0x48] sm:$0xff]
    %v4067 = vld [vmem:[%s3 + $0x50] sm:$0xff]
    %v4068 = vld [vmem:[%s3 + $0x58] sm:$0xff]
    %v4069 = vld [vmem:[%s3 + $0x60] sm:$0xff]
    %v4070 = vld [vmem:[%s3 + $0x68] sm:$0xff]
    %v4071 = vld [vmem:[%s3 + $0x70] sm:$0xff]
    %v4072 = vld [vmem:[%s3 + $0x78] sm:$0xff]
    %v4073 = vld [vmem:[%s3 + $0x80] sm:$0xff]
    %v4074 = vld [vmem:[%s3 + $0x88] sm:$0xff]
    %v4075 = vld [vmem:[%s3 + $0x90] sm:$0xff]
    %v4076 = vld [vmem:[%s3 + $0x98] sm:$0xff]
    %v4077 = vld [vmem:[%s3 + $0xa0] sm:$0xff]
    %v4078 = vld [vmem:[%s3 + $0xa8] sm:$0xff]
    %v4079 = vld [vmem:[%s3 + $0xb0] sm:$0xff]
    %v4080 = vld [vmem:[%s3 + $0xb8] sm:$0xff]
    %v4081 = vld [vmem:[%s3 + $0xc0] sm:$0xff]
    %v4082 = vld [vmem:[%s3 + $0xc8] sm:$0xff]
    %v4083 = vld [vmem:[%s3 + $0xd0] sm:$0xff]
    %v4084 = vld [vmem:[%s3 + $0xd8] sm:$0xff]
    %v4085 = vld [vmem:[%s3 + $0xe0] sm:$0xff]
    %v4086 = vld [vmem:[%s3 + $0xe8] sm:$0xff]
    %v4087 = vld [vmem:[%s3 + $0xf0] sm:$0xff]
    %v4088 = vld [vmem:[%s3 + $0xf8] sm:$0xff]
    %v4089 = vld [vmem:[%s3 + $0x100] sm:$0xff]
    %v4090 = vld [vmem:[%s3 + $0x108] sm:$0xff]
    %v4091 = vld [vmem:[%s3 + $0x110] sm:$0xff]
    %v4092 = vld [vmem:[%s3 + $0x118] sm:$0xff]
    %v4093 = vld [vmem:[%s3 + $0x120] sm:$0xff]
    %v4094 = vld [vmem:[%s3 + $0x128] sm:$0xff]
    %v4095 = vld [vmem:[%s3 + $0x130] sm:$0xff]
    %v4096 = vld [vmem:[%s3 + $0x138] sm:$0xff]
    %v4097 = vld [vmem:[%s3 + $0x140] sm:$0xff]
    %v4098 = vld [vmem:[%s3 + $0x148] sm:$0xff]
    %v4099 = vld [vmem:[%s3 + $0x150] sm:$0xff]
    %v4100 = vld [vmem:[%s3 + $0x158] sm:$0xff]
    %v4101 = vld [vmem:[%s3 + $0x160] sm:$0xff]
    %v4102 = vld [vmem:[%s3 + $0x168] sm:$0xff]
    %v4103 = vld [vmem:[%s3 + $0x170] sm:$0xff]
    %v4104 = vld [vmem:[%s3 + $0x178] sm:$0xff]
    %v4105 = vld [vmem:[%s3 + $0x180] sm:$0xff]
    %v4106 = vld [vmem:[%s3 + $0x188] sm:$0xff]
    %v4107 = vld [vmem:[%s3 + $0x190] sm:$0xff]
    %v4108 = vld [vmem:[%s3 + $0x198] sm:$0xff]
    %v4109 = vld [vmem:[%s3 + $0x1a0] sm:$0xff]
    %v4110 = vld [vmem:[%s3 + $0x1a8] sm:$0xff]
    %v4111 = vld [vmem:[%s3 + $0x1b0] sm:$0xff]
    %v4112 = vld [vmem:[%s3 + $0x1b8] sm:$0xff]
    %v4113 = vld [vmem:[%s3 + $0x1c0] sm:$0xff]
    %v4114 = vld [vmem:[%s3 + $0x1c8] sm:$0xff]
    %v4115 = vld [vmem:[%s3 + $0x1d0] sm:$0xff]
    %v4116 = vld [vmem:[%s3 + $0x1d8] sm:$0xff]
    %v4117 = vld [vmem:[%s3 + $0x1e0] sm:$0xff]
    %v4118 = vld [vmem:[%s3 + $0x1e8] sm:$0xff]
    %v4119 = vld [vmem:[%s3 + $0x1f0] sm:$0xff]
    %v4120 = vld [vmem:[%s3 + $0x1f8] sm:$0xff]
    %v4121 = vld [vmem:[%s4] sm:$0x1]
    %v4123 = vperm.slane %v4121, 0
    %4125 = vmatpush.msra.mxu0 %v4072
    %4126 = vmatpush.msra.mxu0 %v4071
    %4127 = vmatpush.msra.mxu0 %v4070
    %4128 = vmatpush.msra.mxu0 %v4069
    %4129 = vmatpush.msra.mxu0 %v4068
    %4130 = vmatpush.msra.mxu0 %v4067
    %4131 = vmatpush.msra.mxu0 %v4066
    %4132 = vmatpush.msra.mxu0 %v4065
    %4133 = vmatpush.msra.mxu0 %v4064
    %4134 = vmatpush.msra.mxu0 %v4063
    %4135 = vmatpush.msra.mxu0 %v4062
    %4136 = vmatpush.msra.mxu0 %v4061
    %4137 = vmatpush.msra.mxu0 %v4060
    %4138 = vmatpush.msra.mxu0 %v4059
    %4139 = vmatpush.msra.mxu0 %v4058
    %4140 = vmatpush.msra.mxu0 %v4057
    %4141 = vmatmul.f32.gmra.mxu0 %v4025
    %v4142 = vpop.f32.mrf.mxu0
    %v4143 = vadd.f32 %v4123, %v4142
    %4144 = vmatmul.f32.gmra.mxu0 %v4029
    %v4145 = vpop.f32.mrf.mxu0
    %v4146 = vadd.f32 %v4123, %v4145
    %4147 = vmatmul.f32.gmra.mxu0 %v4033
    %v4148 = vpop.f32.mrf.mxu0
    %v4149 = vadd.f32 %v4123, %v4148
    %4150 = vmatmul.f32.gmra.mxu0 %v4037
    %v4151 = vpop.f32.mrf.mxu0
    %v4152 = vadd.f32 %v4123, %v4151
    %4153 = vmatmul.f32.gmra.mxu0 %v4041
    %v4154 = vpop.f32.mrf.mxu0
    %v4155 = vadd.f32 %v4123, %v4154
    %4156 = vmatmul.f32.gmra.mxu0 %v4045
    %v4157 = vpop.f32.mrf.mxu0
    %v4158 = vadd.f32 %v4123, %v4157
    %4159 = vmatmul.f32.gmra.mxu0 %v4049
    %v4160 = vpop.f32.mrf.mxu0
    %v4161 = vadd.f32 %v4123, %v4160
    %4162 = vmatmul.f32.gmra.mxu0 %v4053
    %v4163 = vpop.f32.mrf.mxu0
    %v4164 = vadd.f32 %v4123, %v4163
    %4165 = vdwg.mxu0
    %4166 = vmatpush.msra.mxu0 %v4088
    %4167 = vmatpush.msra.mxu0 %v4087
    %4168 = vmatpush.msra.mxu0 %v4086
    %4169 = vmatpush.msra.mxu0 %v4085
    %4170 = vmatpush.msra.mxu0 %v4084
    %4171 = vmatpush.msra.mxu0 %v4083
    %4172 = vmatpush.msra.mxu0 %v4082
    %4173 = vmatpush.msra.mxu0 %v4081
    %4174 = vmatpush.msra.mxu0 %v4080
    %4175 = vmatpush.msra.mxu0 %v4079
    %4176 = vmatpush.msra.mxu0 %v4078
    %4177 = vmatpush.msra.mxu0 %v4077
    %4178 = vmatpush.msra.mxu0 %v4076
    %4179 = vmatpush.msra.mxu0 %v4075
    %4180 = vmatpush.msra.mxu0 %v4074
    %4181 = vmatpush.msra.mxu0 %v4073
    %4182 = vmatmul.f32.gmra.mxu0 %v4026
    %v4183 = vpop.f32.mrf.mxu0
    %v4184 = vadd.f32 %v4143, %v4183
    %4185 = vmatmul.f32.gmra.mxu0 %v4030
    %v4186 = vpop.f32.mrf.mxu0
    %v4187 = vadd.f32 %v4146, %v4186
    %4188 = vmatmul.f32.gmra.mxu0 %v4034
    %v4189 = vpop.f32.mrf.mxu0
    %v4190 = vadd.f32 %v4149, %v4189
    %4191 = vmatmul.f32.gmra.mxu0 %v4038
    %v4192 = vpop.f32.mrf.mxu0
    %v4193 = vadd.f32 %v4152, %v4192
    %4194 = vmatmul.f32.gmra.mxu0 %v4042
    %v4195 = vpop.f32.mrf.mxu0
    %v4196 = vadd.f32 %v4155, %v4195
    %4197 = vmatmul.f32.gmra.mxu0 %v4046
    %v4198 = vpop.f32.mrf.mxu0
    %v4199 = vadd.f32 %v4158, %v4198
    %4200 = vmatmul.f32.gmra.mxu0 %v4050
    %v4201 = vpop.f32.mrf.mxu0
    %v4202 = vadd.f32 %v4161, %v4201
    %4203 = vmatmul.f32.gmra.mxu0 %v4054
    %v4204 = vpop.f32.mrf.mxu0
    %v4205 = vadd.f32 %v4164, %v4204
    %4206 = vdwg.mxu0
    %4207 = vmatpush.msra.mxu0 %v4104
    %4208 = vmatpush.msra.mxu0 %v4103
    %4209 = vmatpush.msra.mxu0 %v4102
    %4210 = vmatpush.msra.mxu0 %v4101
    %4211 = vmatpush.msra.mxu0 %v4100
    %4212 = vmatpush.msra.mxu0 %v4099
    %4213 = vmatpush.msra.mxu0 %v4098
    %4214 = vmatpush.msra.mxu0 %v4097
    %4215 = vmatpush.msra.mxu0 %v4096
    %4216 = vmatpush.msra.mxu0 %v4095
    %4217 = vmatpush.msra.mxu0 %v4094
    %4218 = vmatpush.msra.mxu0 %v4093
    %4219 = vmatpush.msra.mxu0 %v4092
    %4220 = vmatpush.msra.mxu0 %v4091
    %4221 = vmatpush.msra.mxu0 %v4090
    %4222 = vmatpush.msra.mxu0 %v4089
    %4223 = vmatmul.f32.gmra.mxu0 %v4027
    %v4224 = vpop.f32.mrf.mxu0
    %v4225 = vadd.f32 %v4184, %v4224
    %4226 = vmatmul.f32.gmra.mxu0 %v4031
    %v4227 = vpop.f32.mrf.mxu0
    %v4228 = vadd.f32 %v4187, %v4227
    %4229 = vmatmul.f32.gmra.mxu0 %v4035
    %v4230 = vpop.f32.mrf.mxu0
    %v4231 = vadd.f32 %v4190, %v4230
    %4232 = vmatmul.f32.gmra.mxu0 %v4039
    %v4233 = vpop.f32.mrf.mxu0
    %v4234 = vadd.f32 %v4193, %v4233
    %4235 = vmatmul.f32.gmra.mxu0 %v4043
    %v4236 = vpop.f32.mrf.mxu0
    %v4237 = vadd.f32 %v4196, %v4236
    %4238 = vmatmul.f32.gmra.mxu0 %v4047
    %v4239 = vpop.f32.mrf.mxu0
    %v4240 = vadd.f32 %v4199, %v4239
    %4241 = vmatmul.f32.gmra.mxu0 %v4051
    %v4242 = vpop.f32.mrf.mxu0
    %v4243 = vadd.f32 %v4202, %v4242
    %4244 = vmatmul.f32.gmra.mxu0 %v4055
    %v4245 = vpop.f32.mrf.mxu0
    %v4246 = vadd.f32 %v4205, %v4245
    %4247 = vdwg.mxu0
    %4248 = vmatpush.msra.mxu0 %v4120
    %4249 = vmatpush.msra.mxu0 %v4119
    %4250 = vmatpush.msra.mxu0 %v4118
    %4251 = vmatpush.msra.mxu0 %v4117
    %4252 = vmatpush.msra.mxu0 %v4116
    %4253 = vmatpush.msra.mxu0 %v4115
    %4254 = vmatpush.msra.mxu0 %v4114
    %4255 = vmatpush.msra.mxu0 %v4113
    %4256 = vmatpush.msra.mxu0 %v4112
    %4257 = vmatpush.msra.mxu0 %v4111
    %4258 = vmatpush.msra.mxu0 %v4110
    %4259 = vmatpush.msra.mxu0 %v4109
    %4260 = vmatpush.msra.mxu0 %v4108
    %4261 = vmatpush.msra.mxu0 %v4107
    %4262 = vmatpush.msra.mxu0 %v4106
    %4263 = vmatpush.msra.mxu0 %v4105
    %4264 = vmatmul.f32.gmra.mxu0 %v4028
    %v4265 = vpop.f32.mrf.mxu0
    %v4266 = vadd.f32 %v4225, %v4265
    %4267 = vmatmul.f32.gmra.mxu0 %v4032
    %v4268 = vpop.f32.mrf.mxu0
    %v4269 = vadd.f32 %v4228, %v4268
    %4270 = vmatmul.f32.gmra.mxu0 %v4036
    %v4271 = vpop.f32.mrf.mxu0
    %v4272 = vadd.f32 %v4231, %v4271
    %4273 = vmatmul.f32.gmra.mxu0 %v4040
    %v4274 = vpop.f32.mrf.mxu0
    %v4275 = vadd.f32 %v4234, %v4274
    %4276 = vmatmul.f32.gmra.mxu0 %v4044
    %v4277 = vpop.f32.mrf.mxu0
    %v4278 = vadd.f32 %v4237, %v4277
    %4279 = vmatmul.f32.gmra.mxu0 %v4048
    %v4280 = vpop.f32.mrf.mxu0
    %v4281 = vadd.f32 %v4240, %v4280
    %4282 = vmatmul.f32.gmra.mxu0 %v4052
    %v4283 = vpop.f32.mrf.mxu0
    %v4284 = vadd.f32 %v4243, %v4283
    %4285 = vmatmul.f32.gmra.mxu0 %v4056
    %v4286 = vpop.f32.mrf.mxu0
    %v4287 = vadd.f32 %v4246, %v4286
    %4288 = vdwg.mxu0
    %v4297 = vrot.slane %v4266, 2
    %v4298 = vrot.slane %v4266, 4
    %v4299 = vrot.slane %v4266, 6
    %v4300 = vrot.slane %v4269, 2
    %v4301 = vrot.slane %v4269, 4
    %v4302 = vrot.slane %v4269, 6
    %v4303 = vrot.slane %v4272, 2
    %v4304 = vrot.slane %v4272, 4
    %v4305 = vrot.slane %v4272, 6
    %v4306 = vrot.slane %v4275, 2
    %v4307 = vrot.slane %v4275, 4
    %v4308 = vrot.slane %v4275, 6
    %v4309 = vrot.slane %v4278, 2
    %v4310 = vrot.slane %v4278, 4
    %v4311 = vrot.slane %v4278, 6
    %v4312 = vrot.slane %v4281, 2
    %v4313 = vrot.slane %v4281, 4
    %v4314 = vrot.slane %v4281, 6
    %v4315 = vrot.slane %v4284, 2
    %v4316 = vrot.slane %v4284, 4
    %v4317 = vrot.slane %v4284, 6
    %v4318 = vrot.slane %v4287, 2
    %v4319 = vrot.slane %v4287, 4
    %v4320 = vrot.slane %v4287, 6
    %v4345 = vrot.slane %v4266, 7
    %v4346 = vrot.slane %v4345, 2
    %v4347 = vrot.slane %v4297, 7
    %v4348 = vrot.slane %v4347, 2
    %v4349 = vrot.slane %v4298, 7
    %v4350 = vrot.slane %v4349, 2
    %v4351 = vrot.slane %v4299, 7
    %v4352 = vrot.slane %v4351, 2
    %v4353 = vrot.slane %v4269, 7
    %v4354 = vrot.slane %v4353, 2
    %v4355 = vrot.slane %v4300, 7
    %v4356 = vrot.slane %v4355, 2
    %v4357 = vrot.slane %v4301, 7
    %v4358 = vrot.slane %v4357, 2
    %v4359 = vrot.slane %v4302, 7
    %v4360 = vrot.slane %v4359, 2
    %v4361 = vrot.slane %v4272, 7
    %v4362 = vrot.slane %v4361, 2
    %v4363 = vrot.slane %v4303, 7
    %v4364 = vrot.slane %v4363, 2
    %v4365 = vrot.slane %v4304, 7
    %v4366 = vrot.slane %v4365, 2
    %v4367 = vrot.slane %v4305, 7
    %v4368 = vrot.slane %v4367, 2
    %v4369 = vrot.slane %v4275, 7
    %v4370 = vrot.slane %v4369, 2
    %v4371 = vrot.slane %v4306, 7
    %v4372 = vrot.slane %v4371, 2
    %v4373 = vrot.slane %v4307, 7
    %v4374 = vrot.slane %v4373, 2
    %v4375 = vrot.slane %v4308, 7
    %v4376 = vrot.slane %v4375, 2
    %v4377 = vrot.slane %v4278, 7
    %v4378 = vrot.slane %v4377, 2
    %v4379 = vrot.slane %v4309, 7
    %v4380 = vrot.slane %v4379, 2
    %v4381 = vrot.slane %v4310, 7
    %v4382 = vrot.slane %v4381, 2
    %v4383 = vrot.slane %v4311, 7
    %v4384 = vrot.slane %v4383, 2
    %v4385 = vrot.slane %v4281, 7
    %v4386 = vrot.slane %v4385, 2
    %v4387 = vrot.slane %v4312, 7
    %v4388 = vrot.slane %v4387, 2
    %v4389 = vrot.slane %v4313, 7
    %v4390 = vrot.slane %v4389, 2
    %v4391 = vrot.slane %v4314, 7
    %v4392 = vrot.slane %v4391, 2
    %v4393 = vrot.slane %v4284, 7
    %v4394 = vrot.slane %v4393, 2
    %v4395 = vrot.slane %v4315, 7
    %v4396 = vrot.slane %v4395, 2
    %v4397 = vrot.slane %v4316, 7
    %v4398 = vrot.slane %v4397, 2
    %v4399 = vrot.slane %v4317, 7
    %v4400 = vrot.slane %v4399, 2
    %v4401 = vrot.slane %v4287, 7
    %v4402 = vrot.slane %v4401, 2
    %v4403 = vrot.slane %v4318, 7
    %v4404 = vrot.slane %v4403, 2
    %v4405 = vrot.slane %v4319, 7
    %v4406 = vrot.slane %v4405, 2
    %v4407 = vrot.slane %v4320, 7
    %v4408 = vrot.slane %v4407, 2
    %v4441 = vmax.f32 %v4266, %v4346
    %v4442 = vmax.f32 %v4297, %v4348
    %v4443 = vmax.f32 %v4298, %v4350
    %v4444 = vmax.f32 %v4299, %v4352
    %v4445 = vmax.f32 %v4269, %v4354
    %v4446 = vmax.f32 %v4300, %v4356
    %v4447 = vmax.f32 %v4301, %v4358
    %v4448 = vmax.f32 %v4302, %v4360
    %v4449 = vmax.f32 %v4272, %v4362
    %v4450 = vmax.f32 %v4303, %v4364
    %v4451 = vmax.f32 %v4304, %v4366
    %v4452 = vmax.f32 %v4305, %v4368
    %v4453 = vmax.f32 %v4275, %v4370
    %v4454 = vmax.f32 %v4306, %v4372
    %v4455 = vmax.f32 %v4307, %v4374
    %v4456 = vmax.f32 %v4308, %v4376
    %v4457 = vmax.f32 %v4278, %v4378
    %v4458 = vmax.f32 %v4309, %v4380
    %v4459 = vmax.f32 %v4310, %v4382
    %v4460 = vmax.f32 %v4311, %v4384
    %v4461 = vmax.f32 %v4281, %v4386
    %v4462 = vmax.f32 %v4312, %v4388
    %v4463 = vmax.f32 %v4313, %v4390
    %v4464 = vmax.f32 %v4314, %v4392
    %v4465 = vmax.f32 %v4284, %v4394
    %v4466 = vmax.f32 %v4315, %v4396
    %v4467 = vmax.f32 %v4316, %v4398
    %v4468 = vmax.f32 %v4317, %v4400
    %v4469 = vmax.f32 %v4287, %v4402
    %v4470 = vmax.f32 %v4318, %v4404
    %v4471 = vmax.f32 %v4319, %v4406
    %v4472 = vmax.f32 %v4320, %v4408
    %vm4473 = vcmask 122880
    %4474 = vst.msk [vmem:[#allocation2] sm:$0x1] %vm4473, 0.0
    %4475 = vst.msk [vmem:[#allocation2 + $0x60] sm:$0x1] %vm4473, 0.0
    %4476 = vst.msk [vmem:[#allocation2 + $0x11] sm:$0x1] %vm4473, 0.0
    %4477 = vst.msk [vmem:[#allocation2 + $0x71] sm:$0x1] %vm4473, 0.0
    %v4510 = vperm.slane %v4441, 0
    %v4511 = vperm.slane %v4442, 0
    %v4512 = vperm.slane %v4443, 0
    %v4513 = vperm.slane %v4444, 0
    %v4514 = vperm.slane %v4445, 0
    %v4515 = vperm.slane %v4446, 0
    %v4516 = vperm.slane %v4447, 0
    %v4517 = vperm.slane %v4448, 0
    %v4518 = vperm.slane %v4449, 0
    %v4519 = vperm.slane %v4450, 0
    %v4520 = vperm.slane %v4451, 0
    %v4521 = vperm.slane %v4452, 0
    %v4522 = vperm.slane %v4453, 0
    %v4523 = vperm.slane %v4454, 0
    %v4524 = vperm.slane %v4455, 0
    %v4525 = vperm.slane %v4456, 0
    %v4526 = vperm.slane %v4457, 0
    %v4527 = vperm.slane %v4458, 0
    %v4528 = vperm.slane %v4459, 0
    %v4529 = vperm.slane %v4460, 0
    %v4530 = vperm.slane %v4461, 0
    %v4531 = vperm.slane %v4462, 0
    %v4532 = vperm.slane %v4463, 0
    %v4533 = vperm.slane %v4464, 0
    %v4534 = vperm.slane %v4465, 0
    %v4535 = vperm.slane %v4466, 0
    %v4536 = vperm.slane %v4467, 0
    %v4537 = vperm.slane %v4468, 0
    %v4538 = vperm.slane %v4469, 0
    %v4539 = vperm.slane %v4470, 0
    %v4540 = vperm.slane %v4471, 0
    %v4541 = vperm.slane %v4472, 0
    %v4542 = vsel %vm3147, %v4511, %v4510
    %v4543 = vsel %vm3149, %v4512, %v4542
    %v4544 = vsel %vm3151, %v4513, %v4543
    %v4545 = vsel %vm3153, %v4514, %v4544
    %v4546 = vsel %vm3155, %v4515, %v4545
    %v4547 = vsel %vm3157, %v4516, %v4546
    %v4548 = vsel %vm3159, %v4517, %v4547
    %v4549 = vsel %vm3147, %v4519, %v4518
    %v4550 = vsel %vm3149, %v4520, %v4549
    %v4551 = vsel %vm3151, %v4521, %v4550
    %v4552 = vsel %vm3153, %v4522, %v4551
    %v4553 = vsel %vm3155, %v4523, %v4552
    %v4554 = vsel %vm3157, %v4524, %v4553
    %v4555 = vsel %vm3159, %v4525, %v4554
    %v4556 = vsel %vm3147, %v4527, %v4526
    %v4557 = vsel %vm3149, %v4528, %v4556
    %v4558 = vsel %vm3151, %v4529, %v4557
    %v4559 = vsel %vm3153, %v4530, %v4558
    %v4560 = vsel %vm3155, %v4531, %v4559
    %v4561 = vsel %vm3157, %v4532, %v4560
    %v4562 = vsel %vm3159, %v4533, %v4561
    %v4563 = vsel %vm3147, %v4535, %v4534
    %v4564 = vsel %vm3149, %v4536, %v4563
    %v4565 = vsel %vm3151, %v4537, %v4564
    %v4566 = vsel %vm3153, %v4538, %v4565
    %v4567 = vsel %vm3155, %v4539, %v4566
    %v4568 = vsel %vm3157, %v4540, %v4567
    %v4569 = vsel %vm3159, %v4541, %v4568
    %4574 = vst.msk [vmem:[#allocation2 + $0x1] sm:$0xff] %vm3009, %v4548
    %4575 = vst.msk [vmem:[#allocation2 + $0x9] sm:$0xff] %vm3009, %v4555
    %4576 = vst.msk [vmem:[#allocation2 + $0x61] sm:$0xff] %vm3009, %v4562
    %4577 = vst.msk [vmem:[#allocation2 + $0x69] sm:$0xff] %vm3009, %v4569
    %v4578 = vld [vmem:[#allocation2] sm:$0xff]
    %v4579 = vld [vmem:[#allocation2 + $0x8] sm:$0xff]
    %v4580 = vld [vmem:[#allocation2 + $0x10] sm:$0x3]
    %v4581 = vld [vmem:[#allocation2 + $0x60] sm:$0xff]
    %v4582 = vld [vmem:[#allocation2 + $0x68] sm:$0xff]
    %v4583 = vld [vmem:[#allocation2 + $0x70] sm:$0x3]
    %4584 = vst.msk [vmem:[#allocation3] sm:$0xff] %vm3009, %v4578
    %4585 = vst.msk [vmem:[#allocation3 + $0x20] sm:$0xff] %vm3009, %v4579
    %4586 = vst.msk [vmem:[#allocation3 + $0x40] sm:$0xff] %vm3009, %v4581
    %4587 = vst.msk [vmem:[#allocation3 + $0x60] sm:$0xff] %vm3009, %v4582
    %v4594 = vrot.slane %v4578, 1
    %v4595 = vrot.slane %v4579, 1
    %v4596 = vsel %vm153, %v4594, %v4595
    %v4597 = vrot.slane %v4580, 1
    %v4598 = vsel %vm153, %v4595, %v4597
    %v4599 = vrot.slane %v4581, 1
    %v4600 = vrot.slane %v4582, 1
    %v4601 = vsel %vm153, %v4599, %v4600
    %v4602 = vrot.slane %v4583, 1
    %v4603 = vsel %vm153, %v4600, %v4602
    %4604 = vrot.lane.b32.xlu0 %v4596, 16
    %v4605 = vpop.permute.xlu0 %4604
    %4606 = vrot.lane.b32.xlu0 %v4598, 16
    %v4607 = vpop.permute.xlu0 %4606
    %4608 = vrot.lane.b32.xlu0 %v4601, 16
    %v4609 = vpop.permute.xlu0 %4608
    %4610 = vrot.lane.b32.xlu0 %v4603, 16
    %v4611 = vpop.permute.xlu0 %4610
    %4616 = vst.msk [vmem:[#allocation3] sm:$0xff] %vm3302, %v4605
    %4617 = vst.msk [vmem:[#allocation3 + $0x20] sm:$0xff] %vm3302, %v4607
    %4618 = vst.msk [vmem:[#allocation3 + $0x40] sm:$0xff] %vm3302, %v4609
    %4619 = vst.msk [vmem:[#allocation3 + $0x60] sm:$0xff] %vm3302, %v4611
    %v4620 = vrot.slane %v4578, 2
    %v4621 = vrot.slane %v4579, 2
    %v4622 = vsel %vm253, %v4620, %v4621
    %v4623 = vrot.slane %v4580, 2
    %v4624 = vsel %vm253, %v4621, %v4623
    %v4625 = vrot.slane %v4581, 2
    %v4626 = vrot.slane %v4582, 2
    %v4627 = vsel %vm253, %v4625, %v4626
    %v4628 = vrot.slane %v4583, 2
    %v4629 = vsel %vm253, %v4626, %v4628
    %4630 = vrot.lane.b32.xlu0 %v4622, 32
    %v4631 = vpop.permute.xlu0 %4630
    %4632 = vrot.lane.b32.xlu0 %v4624, 32
    %v4633 = vpop.permute.xlu0 %4632
    %4634 = vrot.lane.b32.xlu0 %v4627, 32
    %v4635 = vpop.permute.xlu0 %4634
    %4636 = vrot.lane.b32.xlu0 %v4629, 32
    %v4637 = vpop.permute.xlu0 %4636
    %4642 = vst.msk [vmem:[#allocation3] sm:$0xff] %vm3353, %v4631
    %4643 = vst.msk [vmem:[#allocation3 + $0x20] sm:$0xff] %vm3353, %v4633
    %4644 = vst.msk [vmem:[#allocation3 + $0x40] sm:$0xff] %vm3353, %v4635
    %4645 = vst.msk [vmem:[#allocation3 + $0x60] sm:$0xff] %vm3353, %v4637
    %v4646 = vld [vmem:[#allocation3] sm:$0xff]
    %v4647 = vld [vmem:[#allocation3 + $0x20] sm:$0xff]
    %v4648 = vld [vmem:[#allocation3 + $0x40] sm:$0xff]
    %v4649 = vld [vmem:[#allocation3 + $0x60] sm:$0xff]
    %v4650 = vld [vmem:[%s5] sm:$0xff]
    %v4651 = vld [vmem:[%s5 + $0x8] sm:$0xff]
    %v4652 = vld [vmem:[%s5 + $0x10] sm:$0xff]
    %v4653 = vld [vmem:[%s5 + $0x18] sm:$0xff]
    %v4654 = vld [vmem:[%s5 + $0x20] sm:$0xff]
    %v4655 = vld [vmem:[%s5 + $0x28] sm:$0xff]
    %v4656 = vld [vmem:[%s6] sm:$0x1]
    %v4658 = vperm.slane %v4656, 0
    %vm4660 = vcmask 392192
    %v4662 = vsel %vm4660, %v4646, 0
    %v4665 = vsel %vm4660, %v4647, 0
    %v4668 = vsel %vm4660, %v4648, 0
    %v4671 = vsel %vm4660, %v4649, 0
    %4673 = vmatpush.msra.mxu0 0.0
    %4674 = vmatpush.msra.mxu0 0.0
    %4675 = vmatpush.msra.mxu0 0.0
    %4676 = vmatpush.msra.mxu0 0.0
    %4677 = vmatpush.msra.mxu0 0.0
    %4678 = vmatpush.msra.mxu0 0.0
    %4679 = vmatpush.msra.mxu0 0.0
    %4680 = vmatpush.msra.mxu0 0.0
    %4681 = vmatpush.msra.mxu0 0.0
    %4682 = vmatpush.msra.mxu0 0.0
    %4683 = vmatpush.msra.mxu0 %v4655
    %4684 = vmatpush.msra.mxu0 %v4654
    %4685 = vmatpush.msra.mxu0 %v4653
    %4686 = vmatpush.msra.mxu0 %v4652
    %4687 = vmatpush.msra.mxu0 %v4651
    %4688 = vmatpush.msra.mxu0 %v4650
    %4689 = vmatmul.f32.gmra.mxu0 %v4662
    %v4690 = vpop.f32.mrf.mxu0
    %v4691 = vadd.f32 %v4658, %v4690
    %4692 = vmatmul.f32.gmra.mxu0 %v4665
    %v4693 = vpop.f32.mrf.mxu0
    %v4694 = vadd.f32 %v4658, %v4693
    %4695 = vmatmul.f32.gmra.mxu0 %v4668
    %v4696 = vpop.f32.mrf.mxu0
    %v4697 = vadd.f32 %v4658, %v4696
    %4698 = vmatmul.f32.gmra.mxu0 %v4671
    %v4699 = vpop.f32.mrf.mxu0
    %v4700 = vadd.f32 %v4658, %v4699
    %4701 = vdwg.mxu0
    %v4706 = vrot.slane %v4691, 2
    %v4707 = vrot.slane %v4691, 4
    %v4708 = vrot.slane %v4691, 6
    %v4709 = vrot.slane %v4694, 2
    %v4710 = vrot.slane %v4694, 4
    %v4711 = vrot.slane %v4694, 6
    %v4712 = vrot.slane %v4697, 2
    %v4713 = vrot.slane %v4697, 4
    %v4714 = vrot.slane %v4697, 6
    %v4715 = vrot.slane %v4700, 2
    %v4716 = vrot.slane %v4700, 4
    %v4717 = vrot.slane %v4700, 6
    %v4730 = vrot.slane %v4691, 7
    %v4731 = vrot.slane %v4730, 2
    %v4732 = vrot.slane %v4706, 7
    %v4733 = vrot.slane %v4732, 2
    %v4734 = vrot.slane %v4707, 7
    %v4735 = vrot.slane %v4734, 2
    %v4736 = vrot.slane %v4708, 7
    %v4737 = vrot.slane %v4736, 2
    %v4738 = vrot.slane %v4694, 7
    %v4739 = vrot.slane %v4738, 2
    %v4740 = vrot.slane %v4709, 7
    %v4741 = vrot.slane %v4740, 2
    %v4742 = vrot.slane %v4710, 7
    %v4743 = vrot.slane %v4742, 2
    %v4744 = vrot.slane %v4711, 7
    %v4745 = vrot.slane %v4744, 2
    %v4746 = vrot.slane %v4697, 7
    %v4747 = vrot.slane %v4746, 2
    %v4748 = vrot.slane %v4712, 7
    %v4749 = vrot.slane %v4748, 2
    %v4750 = vrot.slane %v4713, 7
    %v4751 = vrot.slane %v4750, 2
    %v4752 = vrot.slane %v4714, 7
    %v4753 = vrot.slane %v4752, 2
    %v4754 = vrot.slane %v4700, 7
    %v4755 = vrot.slane %v4754, 2
    %v4756 = vrot.slane %v4715, 7
    %v4757 = vrot.slane %v4756, 2
    %v4758 = vrot.slane %v4716, 7
    %v4759 = vrot.slane %v4758, 2
    %v4760 = vrot.slane %v4717, 7
    %v4761 = vrot.slane %v4760, 2
    %v4778 = vmax.f32 %v4691, %v4731
    %v4779 = vmax.f32 %v4706, %v4733
    %v4780 = vmax.f32 %v4707, %v4735
    %v4781 = vmax.f32 %v4708, %v4737
    %v4782 = vmax.f32 %v4694, %v4739
    %v4783 = vmax.f32 %v4709, %v4741
    %v4784 = vmax.f32 %v4710, %v4743
    %v4785 = vmax.f32 %v4711, %v4745
    %v4786 = vmax.f32 %v4697, %v4747
    %v4787 = vmax.f32 %v4712, %v4749
    %v4788 = vmax.f32 %v4713, %v4751
    %v4789 = vmax.f32 %v4714, %v4753
    %v4790 = vmax.f32 %v4700, %v4755
    %v4791 = vmax.f32 %v4715, %v4757
    %v4792 = vmax.f32 %v4716, %v4759
    %v4793 = vmax.f32 %v4717, %v4761
    %v4794 = vld [vmem:[%s7] sm:$0xff]
    %v4795 = vld [vmem:[%s7 + $0x8] sm:$0xff]
    %v4796 = vld [vmem:[%s7 + $0x10] sm:$0xff]
    %v4797 = vld [vmem:[%s7 + $0x18] sm:$0xff]
    %v4798 = vld [vmem:[%s8] sm:$0x1]
    %v4800 = vperm.slane %v4798, 0
    %v4818 = vperm.slane %v4778, 0
    %v4819 = vperm.slane %v4779, 0
    %v4820 = vperm.slane %v4780, 0
    %v4821 = vperm.slane %v4781, 0
    %v4822 = vperm.slane %v4782, 0
    %v4823 = vperm.slane %v4783, 0
    %v4824 = vperm.slane %v4784, 0
    %v4825 = vperm.slane %v4785, 0
    %v4826 = vperm.slane %v4786, 0
    %v4827 = vperm.slane %v4787, 0
    %v4828 = vperm.slane %v4788, 0
    %v4829 = vperm.slane %v4789, 0
    %v4830 = vperm.slane %v4790, 0
    %v4831 = vperm.slane %v4791, 0
    %v4832 = vperm.slane %v4792, 0
    %v4833 = vperm.slane %v4793, 0
    %v4834 = vsel %vm3147, %v4819, %v4818
    %v4835 = vsel %vm3149, %v4820, %v4834
    %v4836 = vsel %vm3151, %v4821, %v4835
    %v4837 = vsel %vm3153, %v4822, %v4836
    %v4838 = vsel %vm3155, %v4823, %v4837
    %v4839 = vsel %vm3157, %v4824, %v4838
    %v4840 = vsel %vm3159, %v4825, %v4839
    %v4841 = vsel %vm3147, %v4827, %v4826
    %v4842 = vsel %vm3149, %v4828, %v4841
    %v4843 = vsel %vm3151, %v4829, %v4842
    %v4844 = vsel %vm3153, %v4830, %v4843
    %v4845 = vsel %vm3155, %v4831, %v4844
    %v4846 = vsel %vm3157, %v4832, %v4845
    %v4847 = vsel %vm3159, %v4833, %v4846
    %v4848 = vsel %vm2527, %v4840, 0
    %v4850 = vsel %vm2527, %v4847, 0
    %4852 = vmatpush.msra.mxu0 0.0
    %4853 = vmatpush.msra.mxu0 0.0
    %4854 = vmatpush.msra.mxu0 0.0
    %4855 = vmatpush.msra.mxu0 0.0
    %4856 = vmatpush.msra.mxu0 0.0
    %4857 = vmatpush.msra.mxu0 0.0
    %4858 = vmatpush.msra.mxu0 0.0
    %4859 = vmatpush.msra.mxu0 0.0
    %4860 = vmatpush.msra.mxu0 0.0
    %4861 = vmatpush.msra.mxu0 0.0
    %4862 = vmatpush.msra.mxu0 0.0
    %4863 = vmatpush.msra.mxu0 0.0
    %4864 = vmatpush.msra.mxu0 %v4797
    %4865 = vmatpush.msra.mxu0 %v4796
    %4866 = vmatpush.msra.mxu0 %v4795
    %4867 = vmatpush.msra.mxu0 %v4794
    %4868 = vmatmul.f32.gmra.mxu0 %v4848
    %v4869 = vpop.f32.mrf.mxu0
    %v4870 = vadd.f32 %v4800, %v4869
    %4871 = vmatmul.f32.gmra.mxu0 %v4850
    %v4872 = vpop.f32.mrf.mxu0
    %v4873 = vadd.f32 %v4800, %v4872
    %4874 = vdwg.mxu0
    %v4875 = vld [vmem:[%s9] sm:$0xff]
    %v4876 = vld [vmem:[%s9 + $0x8] sm:$0xff]
    %v4877 = vld [vmem:[%s10] sm:$0x1]
    %vm4878 = vcmask 123904
    %4879 = vst.msk [vmem:[#allocation4] sm:$0x3] %vm4878, 0.0
    %v4880 = vld [vmem:[#allocation4] sm:$0x3]
    %v4882 = vsel %vm3009, %v4880, 0
    %4884 = vmatpush.msra.mxu0 0.0
    %4885 = vmatpush.msra.mxu0 0.0
    %4886 = vmatpush.msra.mxu0 0.0
    %4887 = vmatpush.msra.mxu0 0.0
    %4888 = vmatpush.msra.mxu0 0.0
    %4889 = vmatpush.msra.mxu0 0.0
    %4890 = vmatpush.msra.mxu0 0.0
    %4891 = vmatpush.msra.mxu0 0.0
    %4892 = vmatpush.msra.mxu0 0.0
    %4893 = vmatpush.msra.mxu0 0.0
    %4894 = vmatpush.msra.mxu0 0.0
    %4895 = vmatpush.msra.mxu0 0.0
    %4896 = vmatpush.msra.mxu0 0.0
    %4897 = vmatpush.msra.mxu0 0.0
    %4898 = vmatpush.msra.mxu0 %v4876
    %4899 = vmatpush.msra.mxu0 %v4875
    %4900 = vmatmul.f32.gmra.mxu0 %v4882
    %v4901 = vpop.f32.mrf.mxu0
    %v4902 = vadd.f32 0.0, %v4901
    %4903 = vdwg.mxu0
    %v4905 = vrot.slane %v4902, 1
    %v4908 = vadd.f32 %v4870, %v4902
    %v4909 = vadd.f32 %v4873, %v4905
    %v4910 = vmul.f32 %v4908, 0.5
    %v4911 = vmul.f32 %v4909, 0.5
    %v4912 = vtanh.pop %v4910
    %v4913 = vtanh.pop %v4911
    %v4914 = vadd.f32 %v4912, 1.0
    %v4915 = vadd.f32 %v4913, 1.0
    %v4916 = vmul.f32 %v4914, 0.5
    %v4917 = vmul.f32 %v4915, 0.5
    %v4919 = vperm.slane %v4877, 0
    %4920 = vrot.lane.b32.xlu0 %v4919, 16
    %v4921 = vpop.permute.xlu0 %4920
    %v4923 = vadd.f32 %v4902, %v4921
    %v4925 = vrot.slane %v4923, 1
    %4926 = vrot.lane.b32.xlu0 %v4923, 112
    %v4927 = vpop.permute.xlu0 %4926
    %4928 = vrot.lane.b32.xlu0 %v4925, 112
    %v4929 = vpop.permute.xlu0 %4928
    %v4932 = vmul.f32 %v4916, %v4927
    %v4933 = vmul.f32 %v4917, %v4929
    %4936 = vrot.lane.b32.xlu0 %v4932, 16
    %v4937 = vpop.permute.xlu0 %4936
    %4938 = vrot.lane.b32.xlu0 %v4933, 16
    %v4939 = vpop.permute.xlu0 %4938
    %v4942 = vadd.f32 %v4870, %v4937
    %v4943 = vadd.f32 %v4873, %v4939
    %v4944 = vtanh.pop %v4942
    %v4945 = vtanh.pop %v4943
    %v4946 = vrot.slane %v4902, 2
    %v4948 = vadd.f32 %v4870, %v4905
    %v4949 = vadd.f32 %v4873, %v4946
    %v4950 = vmul.f32 %v4948, 0.5
    %v4951 = vmul.f32 %v4949, 0.5
    %v4952 = vtanh.pop %v4950
    %v4953 = vtanh.pop %v4951
    %v4954 = vadd.f32 %v4952, 1.0
    %v4955 = vadd.f32 %v4953, 1.0
    %v4956 = vmul.f32 %v4954, 0.5
    %v4957 = vmul.f32 %v4955, 0.5
    %4958 = vrot.lane.b32.xlu0 %v4919, 32
    %v4959 = vpop.permute.xlu0 %4958
    %v4961 = vadd.f32 %v4902, %v4959
    %v4963 = vrot.slane %v4961, 1
    %v4964 = vrot.slane %v4961, 2
    %4965 = vrot.lane.b32.xlu0 %v4963, 112
    %v4966 = vpop.permute.xlu0 %4965
    %4967 = vrot.lane.b32.xlu0 %v4964, 112
    %v4968 = vpop.permute.xlu0 %4967
    %v4971 = vmul.f32 %v4956, %v4966
    %v4972 = vmul.f32 %v4957, %v4968
    %4975 = vrot.lane.b32.xlu0 %v4971, 16
    %v4976 = vpop.permute.xlu0 %4975
    %4977 = vrot.lane.b32.xlu0 %v4972, 16
    %v4978 = vpop.permute.xlu0 %4977
    %v4981 = vadd.f32 %v4870, %v4976
    %v4982 = vadd.f32 %v4873, %v4978
    %v4983 = vtanh.pop %v4981
    %v4984 = vtanh.pop %v4982
    %v4985 = vsub.f32 1.0, %v4916
    %v4986 = vsub.f32 1.0, %v4917
    %4989 = vrot.lane.b32.xlu0 %v4944, 120
    %v4990 = vpop.permute.xlu0 %4989
    %4991 = vrot.lane.b32.xlu0 %v4945, 120
    %v4992 = vpop.permute.xlu0 %4991
    %v4995 = vmul.f32 %v4985, %v4990
    %v4996 = vmul.f32 %v4986, %v4992
    %v4997 = vrot.slane %v4880, 1
    %4998 = vrot.lane.b32.xlu0 %v4880, 8
    %v4999 = vpop.permute.xlu0 %4998
    %5000 = vrot.lane.b32.xlu0 %v4997, 8
    %v5001 = vpop.permute.xlu0 %5000
    %v5004 = vmul.f32 %v4916, %v4999
    %v5005 = vmul.f32 %v4917, %v5001
    %v5006 = vadd.f32 %v4995, %v5004
    %v5007 = vadd.f32 %v4996, %v5005
    %v5008 = vsub.f32 1.0, %v4956
    %v5009 = vsub.f32 1.0, %v4957
    %5012 = vrot.lane.b32.xlu0 %v4983, 120
    %v5013 = vpop.permute.xlu0 %5012
    %5014 = vrot.lane.b32.xlu0 %v4984, 120
    %v5015 = vpop.permute.xlu0 %5014
    %v5018 = vmul.f32 %v5008, %v5013
    %v5019 = vmul.f32 %v5009, %v5015
    %v5020 = vrot.slane %v4880, 2
    %5021 = vrot.lane.b32.xlu0 %v4997, 24
    %v5022 = vpop.permute.xlu0 %5021
    %5023 = vrot.lane.b32.xlu0 %v5020, 24
    %v5024 = vpop.permute.xlu0 %5023
    %v5027 = vmul.f32 %v4956, %v5022
    %v5028 = vmul.f32 %v4957, %v5024
    %v5029 = vadd.f32 %v5018, %v5027
    %v5030 = vadd.f32 %v5019, %v5028
    %v5033 = vrot.slane %v5007, 7
    %v5034 = vsel %vm3147, %v5033, %v5006
    %5035 = vrot.lane.b32.xlu0 %v5034, 120
    %v5036 = vpop.permute.xlu0 %5035
    %vm5038 = vcmask 58368
    %5039 = vst.msk [vmem:[#allocation4] sm:$0x3] %vm5038, %v5036
    %v5042 = vrot.slane %v5030, 7
    %5043 = vrot.lane.b32.xlu0 %v5029, 104
    %v5044 = vpop.permute.xlu0 %5043
    %5045 = vrot.lane.b32.xlu0 %v5042, 104
    %v5046 = vpop.permute.xlu0 %5045
    %vm5049 = vcmask 130119
    %5050 = vst.msk [vmem:[#allocation4 - $0x7] sm:$0x80] %vm5049, %v5044
    %vm5051 = vcmask 122944
    %5052 = vst.msk [vmem:[#allocation4 + $0x1] sm:$0x1] %vm5051, %v5046
    %5053 = vrot.lane.b32.xlu0 %v5006, 120
    %v5054 = vpop.permute.xlu0 %5053
    %v5056 = vlaneseq
    %vm5057 = vcmp.ge.s32.totalorder %v5056, 0
    %vm5058 = vcmp.lt.s32.totalorder %v5056, 8
    %vm5059 = vmand %vm5057, %vm5058
    %5060 = vst.msk [vmem:[#allocation5] sm:$0x1] %vm5059, %v5054
    %5061 = vst [vmem:[#allocation1] sm:$0xff] %v5029
    %s5062 = scalar_lea.vmem [#allocation1], 7
    %v5063 = vld [vmem:[%s5062] ss:$9 sm:$0xff]
    %5064 = vrot.lane.b32.xlu0 %v5063, 72
    %v5065 = vpop.permute.xlu0 %5064
    %vm5067 = vcmp.ge.s32.totalorder %v5056, 104
    %vm5068 = vcmp.lt.s32.totalorder %v5056, 112
    %vm5069 = vmand %vm5067, %vm5068
    %5070 = vst.msk [vmem:[#allocation5 + $0x1] sm:$0x1] %vm5069, %v5065
    %5071 = vrot.lane.b32.xlu0 %v5007, 8
    %v5072 = vpop.permute.xlu0 %5071
    %vm5074 = vcmp.ge.s32.totalorder %v5056, 16
    %vm5075 = vcmp.lt.s32.totalorder %v5056, 24
    %vm5076 = vmand %vm5074, %vm5075
    %5077 = vst.msk [vmem:[#allocation5] sm:$0x1] %vm5076, %v5072
    %5078 = vst [vmem:[#allocation1] sm:$0xff] %v5030
    %s5079 = scalar_lea.vmem [#allocation1], 7
    %v5080 = vld [vmem:[%s5079] ss:$9 sm:$0xff]
    %5081 = vrot.lane.b32.xlu0 %v5080, 88
    %v5082 = vpop.permute.xlu0 %5081
    %vm5084 = vcmp.ge.s32.totalorder %v5056, 120
    %vm5085 = vcmp.lt.s32.totalorder %v5056, 128
    %vm5086 = vmand %vm5084, %vm5085
    %5087 = vst.msk [vmem:[#allocation5 + $0x1] sm:$0x1] %vm5086, %v5082
    %v5088 = vld [vmem:[#allocation4] sm:$0x3]
    %v5090 = vsel %vm3009, %v5088, 0
    %5092 = vmatpush.msra.mxu0 0.0
    %5093 = vmatpush.msra.mxu0 0.0
    %5094 = vmatpush.msra.mxu0 0.0
    %5095 = vmatpush.msra.mxu0 0.0
    %5096 = vmatpush.msra.mxu0 0.0
    %5097 = vmatpush.msra.mxu0 0.0
    %5098 = vmatpush.msra.mxu0 0.0
    %5099 = vmatpush.msra.mxu0 0.0
    %5100 = vmatpush.msra.mxu0 0.0
    %5101 = vmatpush.msra.mxu0 0.0
    %5102 = vmatpush.msra.mxu0 0.0
    %5103 = vmatpush.msra.mxu0 0.0
    %5104 = vmatpush.msra.mxu0 0.0
    %5105 = vmatpush.msra.mxu0 0.0
    %5106 = vmatpush.msra.mxu0 %v4876
    %5107 = vmatpush.msra.mxu0 %v4875
    %5108 = vmatmul.f32.gmra.mxu0 %v5090
    %v5109 = vpop.f32.mrf.mxu0
    %v5110 = vadd.f32 0.0, %v5109
    %5111 = vdwg.mxu0
    %v5113 = vrot.slane %v5110, 7
    %v5116 = vadd.f32 %v4870, %v5113
    %v5117 = vadd.f32 %v4873, %v5110
    %v5118 = vmul.f32 %v5116, 0.5
    %v5119 = vmul.f32 %v5117, 0.5
    %v5120 = vtanh.pop %v5118
    %v5121 = vtanh.pop %v5119
    %v5122 = vadd.f32 %v5120, 1.0
    %v5123 = vadd.f32 %v5121, 1.0
    %v5124 = vmul.f32 %v5122, 0.5
    %v5125 = vmul.f32 %v5123, 0.5
    %v5126 = vadd.f32 %v5110, %v4921
    %v5128 = vrot.slane %v5126, 7
    %5129 = vrot.lane.b32.xlu0 %v5128, 112
    %v5130 = vpop.permute.xlu0 %5129
    %5131 = vrot.lane.b32.xlu0 %v5126, 112
    %v5132 = vpop.permute.xlu0 %5131
    %v5135 = vmul.f32 %v5124, %v5130
    %v5136 = vmul.f32 %v5125, %v5132
    %5139 = vrot.lane.b32.xlu0 %v5135, 16
    %v5140 = vpop.permute.xlu0 %5139
    %5141 = vrot.lane.b32.xlu0 %v5136, 16
    %v5142 = vpop.permute.xlu0 %5141
    %v5145 = vadd.f32 %v4870, %v5140
    %v5146 = vadd.f32 %v4873, %v5142
    %v5147 = vtanh.pop %v5145
    %v5148 = vtanh.pop %v5146
    %v5149 = vrot.slane %v5110, 2
    %v5150 = vrot.slane %v5110, 3
    %v5153 = vadd.f32 %v4870, %v5149
    %v5154 = vadd.f32 %v4873, %v5150
    %v5155 = vmul.f32 %v5153, 0.5
    %v5156 = vmul.f32 %v5154, 0.5
    %v5157 = vtanh.pop %v5155
    %v5158 = vtanh.pop %v5156
    %v5159 = vadd.f32 %v5157, 1.0
    %v5160 = vadd.f32 %v5158, 1.0
    %v5161 = vmul.f32 %v5159, 0.5
    %v5162 = vmul.f32 %v5160, 0.5
    %v5163 = vadd.f32 %v5110, %v4959
    %v5165 = vrot.slane %v5163, 2
    %v5166 = vrot.slane %v5163, 3
    %5167 = vrot.lane.b32.xlu0 %v5165, 112
    %v5168 = vpop.permute.xlu0 %5167
    %5169 = vrot.lane.b32.xlu0 %v5166, 112
    %v5170 = vpop.permute.xlu0 %5169
    %v5173 = vmul.f32 %v5161, %v5168
    %v5174 = vmul.f32 %v5162, %v5170
    %5177 = vrot.lane.b32.xlu0 %v5173, 16
    %v5178 = vpop.permute.xlu0 %5177
    %5179 = vrot.lane.b32.xlu0 %v5174, 16
    %v5180 = vpop.permute.xlu0 %5179
    %v5183 = vadd.f32 %v4870, %v5178
    %v5184 = vadd.f32 %v4873, %v5180
    %v5185 = vtanh.pop %v5183
    %v5186 = vtanh.pop %v5184
    %v5187 = vsub.f32 1.0, %v5124
    %v5188 = vsub.f32 1.0, %v5125
    %5191 = vrot.lane.b32.xlu0 %v5147, 120
    %v5192 = vpop.permute.xlu0 %5191
    %5193 = vrot.lane.b32.xlu0 %v5148, 120
    %v5194 = vpop.permute.xlu0 %5193
    %v5197 = vmul.f32 %v5187, %v5192
    %v5198 = vmul.f32 %v5188, %v5194
    %v5199 = vrot.slane %v5088, 7
    %5200 = vrot.lane.b32.xlu0 %v5199, 8
    %v5201 = vpop.permute.xlu0 %5200
    %5202 = vrot.lane.b32.xlu0 %v5088, 8
    %v5203 = vpop.permute.xlu0 %5202
    %v5206 = vmul.f32 %v5124, %v5201
    %v5207 = vmul.f32 %v5125, %v5203
    %v5208 = vadd.f32 %v5197, %v5206
    %v5209 = vadd.f32 %v5198, %v5207
    %v5210 = vsub.f32 1.0, %v5161
    %v5211 = vsub.f32 1.0, %v5162
    %5214 = vrot.lane.b32.xlu0 %v5185, 120
    %v5215 = vpop.permute.xlu0 %5214
    %5216 = vrot.lane.b32.xlu0 %v5186, 120
    %v5217 = vpop.permute.xlu0 %5216
    %v5220 = vmul.f32 %v5210, %v5215
    %v5221 = vmul.f32 %v5211, %v5217
    %v5222 = vrot.slane %v5088, 2
    %v5223 = vrot.slane %v5088, 3
    %5224 = vrot.lane.b32.xlu0 %v5222, 24
    %v5225 = vpop.permute.xlu0 %5224
    %5226 = vrot.lane.b32.xlu0 %v5223, 24
    %v5227 = vpop.permute.xlu0 %5226
    %v5230 = vmul.f32 %v5161, %v5225
    %v5231 = vmul.f32 %v5162, %v5227
    %v5232 = vadd.f32 %v5220, %v5230
    %v5233 = vadd.f32 %v5221, %v5231
    %v5236 = vrot.slane %v5209, 7
    %v5237 = vsel %vm3149, %v5236, %v5208
    %5238 = vrot.lane.b32.xlu0 %v5237, 120
    %v5239 = vpop.permute.xlu0 %5238
    %vm5241 = vcmask 59393
    %5242 = vst.msk [vmem:[#allocation4 - $0x1] sm:$0x6] %vm5241, %v5239
    %v5245 = vrot.slane %v5233, 7
    %v5246 = vsel %vm3159, %v5245, %v5232
    %5247 = vrot.lane.b32.xlu0 %v5246, 104
    %v5248 = vpop.permute.xlu0 %5247
    %vm5250 = vcmask 130118
    %5251 = vst.msk [vmem:[#allocation4 - $0x6] sm:$0xc0] %vm5250, %v5248
    %5252 = vst [vmem:[#allocation1] sm:$0xff] %v5208
    %s5253 = scalar_lea.vmem [#allocation1], 1
    %v5254 = vld [vmem:[%s5253] ss:$9 sm:$0xff]
    %5255 = vrot.lane.b32.xlu0 %v5254, 24
    %v5256 = vpop.permute.xlu0 %5255
    %vm5258 = vcmp.ge.s32.totalorder %v5056, 32
    %vm5259 = vcmp.lt.s32.totalorder %v5056, 40
    %vm5260 = vmand %vm5258, %vm5259
    %5261 = vst.msk [vmem:[#allocation5] sm:$0x1] %vm5260, %v5256
    %5262 = vst [vmem:[#allocation1] sm:$0xff] %v5232
    %s5263 = scalar_lea.vmem [#allocation1], 6
    %v5264 = vld [vmem:[%s5263] ss:$9 sm:$0xff]
    %5265 = vrot.lane.b32.xlu0 %v5264, 40
    %v5266 = vpop.permute.xlu0 %5265
    %vm5268 = vcmp.ge.s32.totalorder %v5056, 72
    %vm5269 = vcmp.lt.s32.totalorder %v5056, 80
    %vm5270 = vmand %vm5268, %vm5269
    %5271 = vst.msk [vmem:[#allocation5 + $0x1] sm:$0x1] %vm5270, %v5266
    %5272 = vst [vmem:[#allocation1] sm:$0xff] %v5209
    %s5273 = scalar_lea.vmem [#allocation1], 1
    %v5274 = vld [vmem:[%s5273] ss:$9 sm:$0xff]
    %5275 = vrot.lane.b32.xlu0 %v5274, 40
    %v5276 = vpop.permute.xlu0 %5275
    %vm5278 = vcmp.ge.s32.totalorder %v5056, 48
    %vm5279 = vcmp.lt.s32.totalorder %v5056, 56
    %vm5280 = vmand %vm5278, %vm5279
    %5281 = vst.msk [vmem:[#allocation5] sm:$0x1] %vm5280, %v5276
    %5282 = vst [vmem:[#allocation1] sm:$0xff] %v5233
    %s5283 = scalar_lea.vmem [#allocation1], 6
    %v5284 = vld [vmem:[%s5283] ss:$9 sm:$0xff]
    %5285 = vrot.lane.b32.xlu0 %v5284, 56
    %v5286 = vpop.permute.xlu0 %5285
    %vm5288 = vcmp.ge.s32.totalorder %v5056, 88
    %vm5289 = vcmp.lt.s32.totalorder %v5056, 96
    %vm5290 = vmand %vm5288, %vm5289
    %5291 = vst.msk [vmem:[#allocation5 + $0x1] sm:$0x1] %vm5290, %v5286
    %v5292 = vld [vmem:[#allocation4] sm:$0x3]
    %v5294 = vsel %vm3009, %v5292, 0
    %5296 = vmatpush.msra.mxu0 0.0
    %5297 = vmatpush.msra.mxu0 0.0
    %5298 = vmatpush.msra.mxu0 0.0
    %5299 = vmatpush.msra.mxu0 0.0
    %5300 = vmatpush.msra.mxu0 0.0
    %5301 = vmatpush.msra.mxu0 0.0
    %5302 = vmatpush.msra.mxu0 0.0
    %5303 = vmatpush.msra.mxu0 0.0
    %5304 = vmatpush.msra.mxu0 0.0
    %5305 = vmatpush.msra.mxu0 0.0
    %5306 = vmatpush.msra.mxu0 0.0
    %5307 = vmatpush.msra.mxu0 0.0
    %5308 = vmatpush.msra.mxu0 0.0
    %5309 = vmatpush.msra.mxu0 0.0
    %5310 = vmatpush.msra.mxu0 %v4876
    %5311 = vmatpush.msra.mxu0 %v4875
    %5312 = vmatmul.f32.gmra.mxu0 %v5294
    %v5313 = vpop.f32.mrf.mxu0
    %v5314 = vadd.f32 0.0, %v5313
    %5315 = vdwg.mxu0
    %v5317 = vrot.slane %v5314, 6
    %v5318 = vrot.slane %v5314, 7
    %v5321 = vadd.f32 %v4870, %v5317
    %v5322 = vadd.f32 %v4873, %v5318
    %v5323 = vmul.f32 %v5321, 0.5
    %v5324 = vmul.f32 %v5322, 0.5
    %v5325 = vtanh.pop %v5323
    %v5326 = vtanh.pop %v5324
    %v5327 = vadd.f32 %v5325, 1.0
    %v5328 = vadd.f32 %v5326, 1.0
    %v5329 = vmul.f32 %v5327, 0.5
    %v5330 = vmul.f32 %v5328, 0.5
    %v5331 = vadd.f32 %v5314, %v4921
    %v5333 = vrot.slane %v5331, 6
    %v5334 = vrot.slane %v5331, 7
    %5335 = vrot.lane.b32.xlu0 %v5333, 112
    %v5336 = vpop.permute.xlu0 %5335
    %5337 = vrot.lane.b32.xlu0 %v5334, 112
    %v5338 = vpop.permute.xlu0 %5337
    %v5341 = vmul.f32 %v5329, %v5336
    %v5342 = vmul.f32 %v5330, %v5338
    %5345 = vrot.lane.b32.xlu0 %v5341, 16
    %v5346 = vpop.permute.xlu0 %5345
    %5347 = vrot.lane.b32.xlu0 %v5342, 16
    %v5348 = vpop.permute.xlu0 %5347
    %v5351 = vadd.f32 %v4870, %v5346
    %v5352 = vadd.f32 %v4873, %v5348
    %v5353 = vtanh.pop %v5351
    %v5354 = vtanh.pop %v5352
    %v5355 = vrot.slane %v5314, 3
    %v5356 = vrot.slane %v5314, 4
    %v5359 = vadd.f32 %v4870, %v5355
    %v5360 = vadd.f32 %v4873, %v5356
    %v5361 = vmul.f32 %v5359, 0.5
    %v5362 = vmul.f32 %v5360, 0.5
    %v5363 = vtanh.pop %v5361
    %v5364 = vtanh.pop %v5362
    %v5365 = vadd.f32 %v5363, 1.0
    %v5366 = vadd.f32 %v5364, 1.0
    %v5367 = vmul.f32 %v5365, 0.5
    %v5368 = vmul.f32 %v5366, 0.5
    %v5369 = vadd.f32 %v5314, %v4959
    %v5371 = vrot.slane %v5369, 3
    %v5372 = vrot.slane %v5369, 4
    %5373 = vrot.lane.b32.xlu0 %v5371, 112
    %v5374 = vpop.permute.xlu0 %5373
    %5375 = vrot.lane.b32.xlu0 %v5372, 112
    %v5376 = vpop.permute.xlu0 %5375
    %v5379 = vmul.f32 %v5367, %v5374
    %v5380 = vmul.f32 %v5368, %v5376
    %5383 = vrot.lane.b32.xlu0 %v5379, 16
    %v5384 = vpop.permute.xlu0 %5383
    %5385 = vrot.lane.b32.xlu0 %v5380, 16
    %v5386 = vpop.permute.xlu0 %5385
    %v5389 = vadd.f32 %v4870, %v5384
    %v5390 = vadd.f32 %v4873, %v5386
    %v5391 = vtanh.pop %v5389
    %v5392 = vtanh.pop %v5390
    %v5393 = vsub.f32 1.0, %v5329
    %v5394 = vsub.f32 1.0, %v5330
    %5397 = vrot.lane.b32.xlu0 %v5353, 120
    %v5398 = vpop.permute.xlu0 %5397
    %5399 = vrot.lane.b32.xlu0 %v5354, 120
    %v5400 = vpop.permute.xlu0 %5399
    %v5403 = vmul.f32 %v5393, %v5398
    %v5404 = vmul.f32 %v5394, %v5400
    %v5405 = vrot.slane %v5292, 6
    %v5406 = vrot.slane %v5292, 7
    %5407 = vrot.lane.b32.xlu0 %v5405, 8
    %v5408 = vpop.permute.xlu0 %5407
    %5409 = vrot.lane.b32.xlu0 %v5406, 8
    %v5410 = vpop.permute.xlu0 %5409
    %v5413 = vmul.f32 %v5329, %v5408
    %v5414 = vmul.f32 %v5330, %v5410
    %v5415 = vadd.f32 %v5403, %v5413
    %v5416 = vadd.f32 %v5404, %v5414
    %v5417 = vsub.f32 1.0, %v5367
    %v5418 = vsub.f32 1.0, %v5368
    %5421 = vrot.lane.b32.xlu0 %v5391, 120
    %v5422 = vpop.permute.xlu0 %5421
    %5423 = vrot.lane.b32.xlu0 %v5392, 120
    %v5424 = vpop.permute.xlu0 %5423
    %v5427 = vmul.f32 %v5417, %v5422
    %v5428 = vmul.f32 %v5418, %v5424
    %v5429 = vrot.slane %v5292, 3
    %v5430 = vrot.slane %v5292, 4
    %5431 = vrot.lane.b32.xlu0 %v5429, 24
    %v5432 = vpop.permute.xlu0 %5431
    %5433 = vrot.lane.b32.xlu0 %v5430, 24
    %v5434 = vpop.permute.xlu0 %5433
    %v5437 = vmul.f32 %v5367, %v5432
    %v5438 = vmul.f32 %v5368, %v5434
    %v5439 = vadd.f32 %v5427, %v5437
    %v5440 = vadd.f32 %v5428, %v5438
    %v5443 = vrot.slane %v5416, 7
    %v5444 = vsel %vm3151, %v5443, %v5415
    %5445 = vrot.lane.b32.xlu0 %v5444, 120
    %v5446 = vpop.permute.xlu0 %5445
    %vm5448 = vcmask 60418
    %5449 = vst.msk [vmem:[#allocation4 - $0x2] sm:$0xc] %vm5448, %v5446
    %v5452 = vrot.slane %v5440, 7
    %v5453 = vsel %vm3157, %v5452, %v5439
    %5454 = vrot.lane.b32.xlu0 %v5453, 104
    %v5455 = vpop.permute.xlu0 %5454
    %vm5457 = vcmask 129093
    %5458 = vst.msk [vmem:[#allocation4 - $0x5] sm:$0x60] %vm5457, %v5455
    %5459 = vst [vmem:[#allocation1] sm:$0xff] %v5415
    %s5460 = scalar_lea.vmem [#allocation1], 2
    %v5461 = vld [vmem:[%s5460] ss:$9 sm:$0xff]
    %5462 = vrot.lane.b32.xlu0 %v5461, 56
    %v5463 = vpop.permute.xlu0 %5462
    %vm5465 = vcmp.ge.s32.totalorder %v5056, 64
    %vm5466 = vcmp.lt.s32.totalorder %v5056, 72
    %vm5467 = vmand %vm5465, %vm5466
    %5468 = vst.msk [vmem:[#allocation5] sm:$0x1] %vm5467, %v5463
    %5469 = vst [vmem:[#allocation1] sm:$0xff] %v5439
    %s5470 = scalar_lea.vmem [#allocation1], 5
    %v5471 = vld [vmem:[%s5470] ss:$9 sm:$0xff]
    %5472 = vrot.lane.b32.xlu0 %v5471, 8
    %v5473 = vpop.permute.xlu0 %5472
    %vm5475 = vcmp.ge.s32.totalorder %v5056, 40
    %vm5476 = vcmp.lt.s32.totalorder %v5056, 48
    %vm5477 = vmand %vm5475, %vm5476
    %5478 = vst.msk [vmem:[#allocation5 + $0x1] sm:$0x1] %vm5477, %v5473
    %5479 = vst [vmem:[#allocation1] sm:$0xff] %v5416
    %s5480 = scalar_lea.vmem [#allocation1], 2
    %v5481 = vld [vmem:[%s5480] ss:$9 sm:$0xff]
    %5482 = vrot.lane.b32.xlu0 %v5481, 72
    %v5483 = vpop.permute.xlu0 %5482
    %vm5485 = vcmp.ge.s32.totalorder %v5056, 80
    %vm5486 = vcmp.lt.s32.totalorder %v5056, 88
    %vm5487 = vmand %vm5485, %vm5486
    %5488 = vst.msk [vmem:[#allocation5] sm:$0x1] %vm5487, %v5483
    %5489 = vst [vmem:[#allocation1] sm:$0xff] %v5440
    %s5490 = scalar_lea.vmem [#allocation1], 5
    %v5491 = vld [vmem:[%s5490] ss:$9 sm:$0xff]
    %5492 = vrot.lane.b32.xlu0 %v5491, 24
    %v5493 = vpop.permute.xlu0 %5492
    %vm5495 = vcmp.ge.s32.totalorder %v5056, 56
    %vm5496 = vcmp.lt.s32.totalorder %v5056, 64
    %vm5497 = vmand %vm5495, %vm5496
    %5498 = vst.msk [vmem:[#allocation5 + $0x1] sm:$0x1] %vm5497, %v5493
    %v5499 = vld [vmem:[#allocation4] sm:$0x3]
    %v5501 = vsel %vm3009, %v5499, 0
    %5503 = vmatpush.msra.mxu0 0.0
    %5504 = vmatpush.msra.mxu0 0.0
    %5505 = vmatpush.msra.mxu0 0.0
    %5506 = vmatpush.msra.mxu0 0.0
    %5507 = vmatpush.msra.mxu0 0.0
    %5508 = vmatpush.msra.mxu0 0.0
    %5509 = vmatpush.msra.mxu0 0.0
    %5510 = vmatpush.msra.mxu0 0.0
    %5511 = vmatpush.msra.mxu0 0.0
    %5512 = vmatpush.msra.mxu0 0.0
    %5513 = vmatpush.msra.mxu0 0.0
    %5514 = vmatpush.msra.mxu0 0.0
    %5515 = vmatpush.msra.mxu0 0.0
    %5516 = vmatpush.msra.mxu0 0.0
    %5517 = vmatpush.msra.mxu0 %v4876
    %5518 = vmatpush.msra.mxu0 %v4875
    %5519 = vmatmul.f32.gmra.mxu0 %v5501
    %v5520 = vpop.f32.mrf.mxu0
    %v5521 = vadd.f32 0.0, %v5520
    %5522 = vdwg.mxu0
    %v5524 = vrot.slane %v5521, 5
    %v5525 = vrot.slane %v5521, 6
    %v5528 = vadd.f32 %v4870, %v5524
    %v5529 = vadd.f32 %v4873, %v5525
    %v5530 = vmul.f32 %v5528, 0.5
    %v5531 = vmul.f32 %v5529, 0.5
    %v5532 = vtanh.pop %v5530
    %v5533 = vtanh.pop %v5531
    %v5534 = vadd.f32 %v5532, 1.0
    %v5535 = vadd.f32 %v5533, 1.0
    %v5536 = vmul.f32 %v5534, 0.5
    %v5537 = vmul.f32 %v5535, 0.5
    %v5538 = vadd.f32 %v5521, %v4921
    %v5540 = vrot.slane %v5538, 5
    %v5541 = vrot.slane %v5538, 6
    %5542 = vrot.lane.b32.xlu0 %v5540, 112
    %v5543 = vpop.permute.xlu0 %5542
    %5544 = vrot.lane.b32.xlu0 %v5541, 112
    %v5545 = vpop.permute.xlu0 %5544
    %v5548 = vmul.f32 %v5536, %v5543
    %v5549 = vmul.f32 %v5537, %v5545
    %5552 = vrot.lane.b32.xlu0 %v5548, 16
    %v5553 = vpop.permute.xlu0 %5552
    %5554 = vrot.lane.b32.xlu0 %v5549, 16
    %v5555 = vpop.permute.xlu0 %5554
    %v5558 = vadd.f32 %v4870, %v5553
    %v5559 = vadd.f32 %v4873, %v5555
    %v5560 = vtanh.pop %v5558
    %v5561 = vtanh.pop %v5559
    %v5562 = vrot.slane %v5521, 4
    %v5564 = vadd.f32 %v4870, %v5562
    %v5565 = vadd.f32 %v4873, %v5524
    %v5566 = vmul.f32 %v5564, 0.5
    %v5567 = vmul.f32 %v5565, 0.5
    %v5568 = vtanh.pop %v5566
    %v5569 = vtanh.pop %v5567
    %v5570 = vadd.f32 %v5568, 1.0
    %v5571 = vadd.f32 %v5569, 1.0
    %v5572 = vmul.f32 %v5570, 0.5
    %v5573 = vmul.f32 %v5571, 0.5
    %v5574 = vadd.f32 %v5521, %v4959
    %v5576 = vrot.slane %v5574, 4
    %v5577 = vrot.slane %v5574, 5
    %5578 = vrot.lane.b32.xlu0 %v5576, 112
    %v5579 = vpop.permute.xlu0 %5578
    %5580 = vrot.lane.b32.xlu0 %v5577, 112
    %v5581 = vpop.permute.xlu0 %5580
    %v5584 = vmul.f32 %v5572, %v5579
    %v5585 = vmul.f32 %v5573, %v5581
    %5588 = vrot.lane.b32.xlu0 %v5584, 16
    %v5589 = vpop.permute.xlu0 %5588
    %5590 = vrot.lane.b32.xlu0 %v5585, 16
    %v5591 = vpop.permute.xlu0 %5590
    %v5594 = vadd.f32 %v4870, %v5589
    %v5595 = vadd.f32 %v4873, %v5591
    %v5596 = vtanh.pop %v5594
    %v5597 = vtanh.pop %v5595
    %v5598 = vsub.f32 1.0, %v5536
    %v5599 = vsub.f32 1.0, %v5537
    %5602 = vrot.lane.b32.xlu0 %v5560, 120
    %v5603 = vpop.permute.xlu0 %5602
    %5604 = vrot.lane.b32.xlu0 %v5561, 120
    %v5605 = vpop.permute.xlu0 %5604
    %v5608 = vmul.f32 %v5598, %v5603
    %v5609 = vmul.f32 %v5599, %v5605
    %v5610 = vrot.slane %v5499, 5
    %v5611 = vrot.slane %v5499, 6
    %5612 = vrot.lane.b32.xlu0 %v5610, 8
    %v5613 = vpop.permute.xlu0 %5612
    %5614 = vrot.lane.b32.xlu0 %v5611, 8
    %v5615 = vpop.permute.xlu0 %5614
    %v5618 = vmul.f32 %v5536, %v5613
    %v5619 = vmul.f32 %v5537, %v5615
    %v5620 = vadd.f32 %v5608, %v5618
    %v5621 = vadd.f32 %v5609, %v5619
    %v5622 = vsub.f32 1.0, %v5572
    %v5623 = vsub.f32 1.0, %v5573
    %5626 = vrot.lane.b32.xlu0 %v5596, 120
    %v5627 = vpop.permute.xlu0 %5626
    %5628 = vrot.lane.b32.xlu0 %v5597, 120
    %v5629 = vpop.permute.xlu0 %5628
    %v5632 = vmul.f32 %v5622, %v5627
    %v5633 = vmul.f32 %v5623, %v5629
    %v5634 = vrot.slane %v5499, 4
    %5635 = vrot.lane.b32.xlu0 %v5634, 24
    %v5636 = vpop.permute.xlu0 %5635
    %5637 = vrot.lane.b32.xlu0 %v5610, 24
    %v5638 = vpop.permute.xlu0 %5637
    %v5641 = vmul.f32 %v5572, %v5636
    %v5642 = vmul.f32 %v5573, %v5638
    %v5643 = vadd.f32 %v5632, %v5641
    %v5644 = vadd.f32 %v5633, %v5642
    %v5647 = vrot.slane %v5621, 7
    %v5648 = vsel %vm3153, %v5647, %v5620
    %5649 = vrot.lane.b32.xlu0 %v5648, 120
    %v5650 = vpop.permute.xlu0 %5649
    %vm5652 = vcmask 61443
    %5653 = vst.msk [vmem:[#allocation4 - $0x3] sm:$0x18] %vm5652, %v5650
    %v5656 = vrot.slane %v5644, 7
    %v5657 = vsel %vm3155, %v5656, %v5643
    %5658 = vrot.lane.b32.xlu0 %v5657, 104
    %v5659 = vpop.permute.xlu0 %5658
    %vm5661 = vcmask 128068
    %5662 = vst.msk [vmem:[#allocation4 - $0x4] sm:$0x30] %vm5661, %v5659
    %5663 = vst [vmem:[#allocation1] sm:$0xff] %v5620
    %s5664 = scalar_lea.vmem [#allocation1], 3
    %v5665 = vld [vmem:[%s5664] ss:$9 sm:$0xff]
    %5666 = vrot.lane.b32.xlu0 %v5665, 88
    %v5667 = vpop.permute.xlu0 %5666
    %vm5669 = vcmp.ge.s32.totalorder %v5056, 96
    %vm5670 = vcmp.lt.s32.totalorder %v5056, 104
    %vm5671 = vmand %vm5669, %vm5670
    %5672 = vst.msk [vmem:[#allocation5] sm:$0x1] %vm5671, %v5667
    %5673 = vst [vmem:[#allocation1] sm:$0xff] %v5643
    %s5674 = scalar_lea.vmem [#allocation1], 4
    %v5675 = vld [vmem:[%s5674] ss:$9 sm:$0xff]
    %5676 = vrot.lane.b32.xlu0 %v5675, 104
    %v5677 = vpop.permute.xlu0 %5676
    %vm5679 = vcmp.ge.s32.totalorder %v5056, 8
    %vm5680 = vcmp.lt.s32.totalorder %v5056, 16
    %vm5681 = vmand %vm5679, %vm5680
    %5682 = vst.msk [vmem:[#allocation5 + $0x1] sm:$0x1] %vm5681, %v5677
    %5683 = vst [vmem:[#allocation1] sm:$0xff] %v5621
    %s5684 = scalar_lea.vmem [#allocation1], 3
    %v5685 = vld [vmem:[%s5684] ss:$9 sm:$0xff]
    %5686 = vrot.lane.b32.xlu0 %v5685, 104
    %v5687 = vpop.permute.xlu0 %5686
    %vm5689 = vcmp.ge.s32.totalorder %v5056, 112
    %vm5690 = vcmp.lt.s32.totalorder %v5056, 120
    %vm5691 = vmand %vm5689, %vm5690
    %5692 = vst.msk [vmem:[#allocation5] sm:$0x1] %vm5691, %v5687
    %5693 = vst [vmem:[#allocation1] sm:$0xff] %v5644
    %s5694 = scalar_lea.vmem [#allocation1], 4
    %v5695 = vld [vmem:[%s5694] ss:$9 sm:$0xff]
    %5696 = vrot.lane.b32.xlu0 %v5695, 120
    %v5697 = vpop.permute.xlu0 %5696
    %vm5699 = vcmp.ge.s32.totalorder %v5056, 24
    %vm5700 = vcmp.lt.s32.totalorder %v5056, 32
    %vm5701 = vmand %vm5699, %vm5700
    %5702 = vst.msk [vmem:[#allocation5 + $0x1] sm:$0x1] %vm5701, %v5697
    %v5703 = vld [vmem:[#allocation4] sm:$0x3]
    %v5705 = vsel %vm3009, %v5703, 0
    %5707 = vmatpush.msra.mxu0 0.0
    %5708 = vmatpush.msra.mxu0 0.0
    %5709 = vmatpush.msra.mxu0 0.0
    %5710 = vmatpush.msra.mxu0 0.0
    %5711 = vmatpush.msra.mxu0 0.0
    %5712 = vmatpush.msra.mxu0 0.0
    %5713 = vmatpush.msra.mxu0 0.0
    %5714 = vmatpush.msra.mxu0 0.0
    %5715 = vmatpush.msra.mxu0 0.0
    %5716 = vmatpush.msra.mxu0 0.0
    %5717 = vmatpush.msra.mxu0 0.0
    %5718 = vmatpush.msra.mxu0 0.0
    %5719 = vmatpush.msra.mxu0 0.0
    %5720 = vmatpush.msra.mxu0 0.0
    %5721 = vmatpush.msra.mxu0 %v4876
    %5722 = vmatpush.msra.mxu0 %v4875
    %5723 = vmatmul.f32.gmra.mxu0 %v5705
    %v5724 = vpop.f32.mrf.mxu0
    %v5725 = vadd.f32 0.0, %v5724
    %5726 = vdwg.mxu0
    %v5728 = vrot.slane %v5725, 4
    %v5729 = vrot.slane %v5725, 5
    %v5732 = vadd.f32 %v4870, %v5728
    %v5733 = vadd.f32 %v4873, %v5729
    %v5734 = vmul.f32 %v5732, 0.5
    %v5735 = vmul.f32 %v5733, 0.5
    %v5736 = vtanh.pop %v5734
    %v5737 = vtanh.pop %v5735
    %v5738 = vadd.f32 %v5736, 1.0
    %v5739 = vadd.f32 %v5737, 1.0
    %v5740 = vmul.f32 %v5738, 0.5
    %v5741 = vmul.f32 %v5739, 0.5
    %v5742 = vadd.f32 %v5725, %v4921
    %v5744 = vrot.slane %v5742, 4
    %v5745 = vrot.slane %v5742, 5
    %5746 = vrot.lane.b32.xlu0 %v5744, 112
    %v5747 = vpop.permute.xlu0 %5746
    %5748 = vrot.lane.b32.xlu0 %v5745, 112
    %v5749 = vpop.permute.xlu0 %5748
    %v5752 = vmul.f32 %v5740, %v5747
    %v5753 = vmul.f32 %v5741, %v5749
    %5756 = vrot.lane.b32.xlu0 %v5752, 16
    %v5757 = vpop.permute.xlu0 %5756
    %5758 = vrot.lane.b32.xlu0 %v5753, 16
    %v5759 = vpop.permute.xlu0 %5758
    %v5762 = vadd.f32 %v4870, %v5757
    %v5763 = vadd.f32 %v4873, %v5759
    %v5764 = vtanh.pop %v5762
    %v5765 = vtanh.pop %v5763
    %v5766 = vrot.slane %v5725, 6
    %v5768 = vadd.f32 %v4870, %v5729
    %v5769 = vadd.f32 %v4873, %v5766
    %v5770 = vmul.f32 %v5768, 0.5
    %v5771 = vmul.f32 %v5769, 0.5
    %v5772 = vtanh.pop %v5770
    %v5773 = vtanh.pop %v5771
    %v5774 = vadd.f32 %v5772, 1.0
    %v5775 = vadd.f32 %v5773, 1.0
    %v5776 = vmul.f32 %v5774, 0.5
    %v5777 = vmul.f32 %v5775, 0.5
    %v5778 = vadd.f32 %v5725, %v4959
    %v5780 = vrot.slane %v5778, 5
    %v5781 = vrot.slane %v5778, 6
    %5782 = vrot.lane.b32.xlu0 %v5780, 112
    %v5783 = vpop.permute.xlu0 %5782
    %5784 = vrot.lane.b32.xlu0 %v5781, 112
    %v5785 = vpop.permute.xlu0 %5784
    %v5788 = vmul.f32 %v5776, %v5783
    %v5789 = vmul.f32 %v5777, %v5785
    %5792 = vrot.lane.b32.xlu0 %v5788, 16
    %v5793 = vpop.permute.xlu0 %5792
    %5794 = vrot.lane.b32.xlu0 %v5789, 16
    %v5795 = vpop.permute.xlu0 %5794
    %v5798 = vadd.f32 %v4870, %v5793
    %v5799 = vadd.f32 %v4873, %v5795
    %v5800 = vtanh.pop %v5798
    %v5801 = vtanh.pop %v5799
    %v5802 = vsub.f32 1.0, %v5740
    %v5803 = vsub.f32 1.0, %v5741
    %5806 = vrot.lane.b32.xlu0 %v5764, 120
    %v5807 = vpop.permute.xlu0 %5806
    %5808 = vrot.lane.b32.xlu0 %v5765, 120
    %v5809 = vpop.permute.xlu0 %5808
    %v5812 = vmul.f32 %v5802, %v5807
    %v5813 = vmul.f32 %v5803, %v5809
    %v5814 = vrot.slane %v5703, 4
    %v5815 = vrot.slane %v5703, 5
    %5816 = vrot.lane.b32.xlu0 %v5814, 8
    %v5817 = vpop.permute.xlu0 %5816
    %5818 = vrot.lane.b32.xlu0 %v5815, 8
    %v5819 = vpop.permute.xlu0 %5818
    %v5822 = vmul.f32 %v5740, %v5817
    %v5823 = vmul.f32 %v5741, %v5819
    %v5824 = vadd.f32 %v5812, %v5822
    %v5825 = vadd.f32 %v5813, %v5823
    %v5826 = vsub.f32 1.0, %v5776
    %v5827 = vsub.f32 1.0, %v5777
    %5830 = vrot.lane.b32.xlu0 %v5800, 120
    %v5831 = vpop.permute.xlu0 %5830
    %5832 = vrot.lane.b32.xlu0 %v5801, 120
    %v5833 = vpop.permute.xlu0 %5832
    %v5836 = vmul.f32 %v5826, %v5831
    %v5837 = vmul.f32 %v5827, %v5833
    %v5838 = vrot.slane %v5703, 6
    %5839 = vrot.lane.b32.xlu0 %v5815, 24
    %v5840 = vpop.permute.xlu0 %5839
    %5841 = vrot.lane.b32.xlu0 %v5838, 24
    %v5842 = vpop.permute.xlu0 %5841
    %v5845 = vmul.f32 %v5776, %v5840
    %v5846 = vmul.f32 %v5777, %v5842
    %v5847 = vadd.f32 %v5836, %v5845
    %v5848 = vadd.f32 %v5837, %v5846
    %v5851 = vrot.slane %v5825, 7
    %v5852 = vsel %vm3155, %v5851, %v5824
    %5853 = vrot.lane.b32.xlu0 %v5852, 120
    %v5854 = vpop.permute.xlu0 %5853
    %vm5856 = vcmask 62468
    %5857 = vst.msk [vmem:[#allocation4 - $0x4] sm:$0x30] %vm5856, %v5854
    %v5860 = vrot.slane %v5848, 7
    %v5861 = vsel %vm3153, %v5860, %v5847
    %5862 = vrot.lane.b32.xlu0 %v5861, 104
    %v5863 = vpop.permute.xlu0 %5862
    %vm5865 = vcmask 127043
    %5866 = vst.msk [vmem:[#allocation4 - $0x3] sm:$0x18] %vm5865, %v5863
    %5867 = vst [vmem:[#allocation1] sm:$0xff] %v5824
    %s5868 = scalar_lea.vmem [#allocation1], 4
    %v5869 = vld [vmem:[%s5868] ss:$9 sm:$0xff]
    %5870 = vrot.lane.b32.xlu0 %v5869, 120
    %v5871 = vpop.permute.xlu0 %5870
    %5873 = vst.msk [vmem:[#allocation5 + $0x1] sm:$0x1] %vm5059, %v5871
    %5874 = vst [vmem:[#allocation1] sm:$0xff] %v5847
    %s5875 = scalar_lea.vmem [#allocation1], 3
    %v5876 = vld [vmem:[%s5875] ss:$9 sm:$0xff]
    %5877 = vrot.lane.b32.xlu0 %v5876, 72
    %v5878 = vpop.permute.xlu0 %5877
    %5880 = vst.msk [vmem:[#allocation5] sm:$0x1] %vm5069, %v5878
    %5881 = vst [vmem:[#allocation1] sm:$0xff] %v5825
    %s5882 = scalar_lea.vmem [#allocation1], 4
    %v5883 = vld [vmem:[%s5882] ss:$9 sm:$0xff]
    %5884 = vrot.lane.b32.xlu0 %v5883, 8
    %v5885 = vpop.permute.xlu0 %5884
    %5887 = vst.msk [vmem:[#allocation5 + $0x1] sm:$0x1] %vm5076, %v5885
    %5888 = vst [vmem:[#allocation1] sm:$0xff] %v5848
    %s5889 = scalar_lea.vmem [#allocation1], 3
    %v5890 = vld [vmem:[%s5889] ss:$9 sm:$0xff]
    %5891 = vrot.lane.b32.xlu0 %v5890, 88
    %v5892 = vpop.permute.xlu0 %5891
    %5894 = vst.msk [vmem:[#allocation5] sm:$0x1] %vm5086, %v5892
    %v5895 = vld [vmem:[#allocation4] sm:$0x3]
    %v5897 = vsel %vm3009, %v5895, 0
    %5899 = vmatpush.msra.mxu0 0.0
    %5900 = vmatpush.msra.mxu0 0.0
    %5901 = vmatpush.msra.mxu0 0.0
    %5902 = vmatpush.msra.mxu0 0.0
    %5903 = vmatpush.msra.mxu0 0.0
    %5904 = vmatpush.msra.mxu0 0.0
    %5905 = vmatpush.msra.mxu0 0.0
    %5906 = vmatpush.msra.mxu0 0.0
    %5907 = vmatpush.msra.mxu0 0.0
    %5908 = vmatpush.msra.mxu0 0.0
    %5909 = vmatpush.msra.mxu0 0.0
    %5910 = vmatpush.msra.mxu0 0.0
    %5911 = vmatpush.msra.mxu0 0.0
    %5912 = vmatpush.msra.mxu0 0.0
    %5913 = vmatpush.msra.mxu0 %v4876
    %5914 = vmatpush.msra.mxu0 %v4875
    %5915 = vmatmul.f32.gmra.mxu0 %v5897
    %v5916 = vpop.f32.mrf.mxu0
    %v5917 = vadd.f32 0.0, %v5916
    %5918 = vdwg.mxu0
    %v5920 = vrot.slane %v5917, 3
    %v5921 = vrot.slane %v5917, 4
    %v5924 = vadd.f32 %v4870, %v5920
    %v5925 = vadd.f32 %v4873, %v5921
    %v5926 = vmul.f32 %v5924, 0.5
    %v5927 = vmul.f32 %v5925, 0.5
    %v5928 = vtanh.pop %v5926
    %v5929 = vtanh.pop %v5927
    %v5930 = vadd.f32 %v5928, 1.0
    %v5931 = vadd.f32 %v5929, 1.0
    %v5932 = vmul.f32 %v5930, 0.5
    %v5933 = vmul.f32 %v5931, 0.5
    %v5934 = vadd.f32 %v5917, %v4921
    %v5936 = vrot.slane %v5934, 3
    %v5937 = vrot.slane %v5934, 4
    %5938 = vrot.lane.b32.xlu0 %v5936, 112
    %v5939 = vpop.permute.xlu0 %5938
    %5940 = vrot.lane.b32.xlu0 %v5937, 112
    %v5941 = vpop.permute.xlu0 %5940
    %v5944 = vmul.f32 %v5932, %v5939
    %v5945 = vmul.f32 %v5933, %v5941
    %5948 = vrot.lane.b32.xlu0 %v5944, 16
    %v5949 = vpop.permute.xlu0 %5948
    %5950 = vrot.lane.b32.xlu0 %v5945, 16
    %v5951 = vpop.permute.xlu0 %5950
    %v5954 = vadd.f32 %v4870, %v5949
    %v5955 = vadd.f32 %v4873, %v5951
    %v5956 = vtanh.pop %v5954
    %v5957 = vtanh.pop %v5955
    %v5958 = vrot.slane %v5917, 6
    %v5959 = vrot.slane %v5917, 7
    %v5962 = vadd.f32 %v4870, %v5958
    %v5963 = vadd.f32 %v4873, %v5959
    %v5964 = vmul.f32 %v5962, 0.5
    %v5965 = vmul.f32 %v5963, 0.5
    %v5966 = vtanh.pop %v5964
    %v5967 = vtanh.pop %v5965
    %v5968 = vadd.f32 %v5966, 1.0
    %v5969 = vadd.f32 %v5967, 1.0
    %v5970 = vmul.f32 %v5968, 0.5
    %v5971 = vmul.f32 %v5969, 0.5
    %v5972 = vadd.f32 %v5917, %v4959
    %v5974 = vrot.slane %v5972, 6
    %v5975 = vrot.slane %v5972, 7
    %5976 = vrot.lane.b32.xlu0 %v5974, 112
    %v5977 = vpop.permute.xlu0 %5976
    %5978 = vrot.lane.b32.xlu0 %v5975, 112
    %v5979 = vpop.permute.xlu0 %5978
    %v5982 = vmul.f32 %v5970, %v5977
    %v5983 = vmul.f32 %v5971, %v5979
    %5986 = vrot.lane.b32.xlu0 %v5982, 16
    %v5987 = vpop.permute.xlu0 %5986
    %5988 = vrot.lane.b32.xlu0 %v5983, 16
    %v5989 = vpop.permute.xlu0 %5988
    %v5992 = vadd.f32 %v4870, %v5987
    %v5993 = vadd.f32 %v4873, %v5989
    %v5994 = vtanh.pop %v5992
    %v5995 = vtanh.pop %v5993
    %v5996 = vsub.f32 1.0, %v5932
    %v5997 = vsub.f32 1.0, %v5933
    %6000 = vrot.lane.b32.xlu0 %v5956, 120
    %v6001 = vpop.permute.xlu0 %6000
    %6002 = vrot.lane.b32.xlu0 %v5957, 120
    %v6003 = vpop.permute.xlu0 %6002
    %v6006 = vmul.f32 %v5996, %v6001
    %v6007 = vmul.f32 %v5997, %v6003
    %v6008 = vrot.slane %v5895, 3
    %v6009 = vrot.slane %v5895, 4
    %6010 = vrot.lane.b32.xlu0 %v6008, 8
    %v6011 = vpop.permute.xlu0 %6010
    %6012 = vrot.lane.b32.xlu0 %v6009, 8
    %v6013 = vpop.permute.xlu0 %6012
    %v6016 = vmul.f32 %v5932, %v6011
    %v6017 = vmul.f32 %v5933, %v6013
    %v6018 = vadd.f32 %v6006, %v6016
    %v6019 = vadd.f32 %v6007, %v6017
    %v6020 = vsub.f32 1.0, %v5970
    %v6021 = vsub.f32 1.0, %v5971
    %6024 = vrot.lane.b32.xlu0 %v5994, 120
    %v6025 = vpop.permute.xlu0 %6024
    %6026 = vrot.lane.b32.xlu0 %v5995, 120
    %v6027 = vpop.permute.xlu0 %6026
    %v6030 = vmul.f32 %v6020, %v6025
    %v6031 = vmul.f32 %v6021, %v6027
    %v6032 = vrot.slane %v5895, 6
    %v6033 = vrot.slane %v5895, 7
    %6034 = vrot.lane.b32.xlu0 %v6032, 24
    %v6035 = vpop.permute.xlu0 %6034
    %6036 = vrot.lane.b32.xlu0 %v6033, 24
    %v6037 = vpop.permute.xlu0 %6036
    %v6040 = vmul.f32 %v5970, %v6035
    %v6041 = vmul.f32 %v5971, %v6037
    %v6042 = vadd.f32 %v6030, %v6040
    %v6043 = vadd.f32 %v6031, %v6041
    %v6046 = vrot.slane %v6019, 7
    %v6047 = vsel %vm3157, %v6046, %v6018
    %6048 = vrot.lane.b32.xlu0 %v6047, 120
    %v6049 = vpop.permute.xlu0 %6048
    %vm6051 = vcmask 63493
    %6052 = vst.msk [vmem:[#allocation4 - $0x5] sm:$0x60] %vm6051, %v6049
    %v6055 = vrot.slane %v6043, 7
    %v6056 = vsel %vm3151, %v6055, %v6042
    %6057 = vrot.lane.b32.xlu0 %v6056, 104
    %v6058 = vpop.permute.xlu0 %6057
    %vm6060 = vcmask 126018
    %6061 = vst.msk [vmem:[#allocation4 - $0x2] sm:$0xc] %vm6060, %v6058
    %6062 = vst [vmem:[#allocation1] sm:$0xff] %v6018
    %s6063 = scalar_lea.vmem [#allocation1], 5
    %v6064 = vld [vmem:[%s6063] ss:$9 sm:$0xff]
    %6065 = vrot.lane.b32.xlu0 %v6064, 24
    %v6066 = vpop.permute.xlu0 %6065
    %6068 = vst.msk [vmem:[#allocation5 + $0x1] sm:$0x1] %vm5260, %v6066
    %6069 = vst [vmem:[#allocation1] sm:$0xff] %v6042
    %s6070 = scalar_lea.vmem [#allocation1], 2
    %v6071 = vld [vmem:[%s6070] ss:$9 sm:$0xff]
    %6072 = vrot.lane.b32.xlu0 %v6071, 40
    %v6073 = vpop.permute.xlu0 %6072
    %6075 = vst.msk [vmem:[#allocation5] sm:$0x1] %vm5270, %v6073
    %6076 = vst [vmem:[#allocation1] sm:$0xff] %v6019
    %s6077 = scalar_lea.vmem [#allocation1], 5
    %v6078 = vld [vmem:[%s6077] ss:$9 sm:$0xff]
    %6079 = vrot.lane.b32.xlu0 %v6078, 40
    %v6080 = vpop.permute.xlu0 %6079
    %6082 = vst.msk [vmem:[#allocation5 + $0x1] sm:$0x1] %vm5280, %v6080
    %6083 = vst [vmem:[#allocation1] sm:$0xff] %v6043
    %s6084 = scalar_lea.vmem [#allocation1], 2
    %v6085 = vld [vmem:[%s6084] ss:$9 sm:$0xff]
    %6086 = vrot.lane.b32.xlu0 %v6085, 56
    %v6087 = vpop.permute.xlu0 %6086
    %6089 = vst.msk [vmem:[#allocation5] sm:$0x1] %vm5290, %v6087
    %v6090 = vld [vmem:[#allocation4] sm:$0x3]
    %v6092 = vsel %vm3009, %v6090, 0
    %6094 = vmatpush.msra.mxu0 0.0
    %6095 = vmatpush.msra.mxu0 0.0
    %6096 = vmatpush.msra.mxu0 0.0
    %6097 = vmatpush.msra.mxu0 0.0
    %6098 = vmatpush.msra.mxu0 0.0
    %6099 = vmatpush.msra.mxu0 0.0
    %6100 = vmatpush.msra.mxu0 0.0
    %6101 = vmatpush.msra.mxu0 0.0
    %6102 = vmatpush.msra.mxu0 0.0
    %6103 = vmatpush.msra.mxu0 0.0
    %6104 = vmatpush.msra.mxu0 0.0
    %6105 = vmatpush.msra.mxu0 0.0
    %6106 = vmatpush.msra.mxu0 0.0
    %6107 = vmatpush.msra.mxu0 0.0
    %6108 = vmatpush.msra.mxu0 %v4876
    %6109 = vmatpush.msra.mxu0 %v4875
    %6110 = vmatmul.f32.gmra.mxu0 %v6092
    %v6111 = vpop.f32.mrf.mxu0
    %v6112 = vadd.f32 0.0, %v6111
    %6113 = vdwg.mxu0
    %v6115 = vrot.slane %v6112, 2
    %v6116 = vrot.slane %v6112, 3
    %v6119 = vadd.f32 %v4870, %v6115
    %v6120 = vadd.f32 %v4873, %v6116
    %v6121 = vmul.f32 %v6119, 0.5
    %v6122 = vmul.f32 %v6120, 0.5
    %v6123 = vtanh.pop %v6121
    %v6124 = vtanh.pop %v6122
    %v6125 = vadd.f32 %v6123, 1.0
    %v6126 = vadd.f32 %v6124, 1.0
    %v6127 = vmul.f32 %v6125, 0.5
    %v6128 = vmul.f32 %v6126, 0.5
    %v6129 = vadd.f32 %v6112, %v4921
    %v6131 = vrot.slane %v6129, 2
    %v6132 = vrot.slane %v6129, 3
    %6133 = vrot.lane.b32.xlu0 %v6131, 112
    %v6134 = vpop.permute.xlu0 %6133
    %6135 = vrot.lane.b32.xlu0 %v6132, 112
    %v6136 = vpop.permute.xlu0 %6135
    %v6139 = vmul.f32 %v6127, %v6134
    %v6140 = vmul.f32 %v6128, %v6136
    %6143 = vrot.lane.b32.xlu0 %v6139, 16
    %v6144 = vpop.permute.xlu0 %6143
    %6145 = vrot.lane.b32.xlu0 %v6140, 16
    %v6146 = vpop.permute.xlu0 %6145
    %v6149 = vadd.f32 %v4870, %v6144
    %v6150 = vadd.f32 %v4873, %v6146
    %v6151 = vtanh.pop %v6149
    %v6152 = vtanh.pop %v6150
    %v6153 = vrot.slane %v6112, 7
    %v6156 = vadd.f32 %v4870, %v6153
    %v6157 = vadd.f32 %v4873, %v6112
    %v6158 = vmul.f32 %v6156, 0.5
    %v6159 = vmul.f32 %v6157, 0.5
    %v6160 = vtanh.pop %v6158
    %v6161 = vtanh.pop %v6159
    %v6162 = vadd.f32 %v6160, 1.0
    %v6163 = vadd.f32 %v6161, 1.0
    %v6164 = vmul.f32 %v6162, 0.5
    %v6165 = vmul.f32 %v6163, 0.5
    %v6166 = vadd.f32 %v6112, %v4959
    %v6168 = vrot.slane %v6166, 7
    %6169 = vrot.lane.b32.xlu0 %v6168, 112
    %v6170 = vpop.permute.xlu0 %6169
    %6171 = vrot.lane.b32.xlu0 %v6166, 112
    %v6172 = vpop.permute.xlu0 %6171
    %v6175 = vmul.f32 %v6164, %v6170
    %v6176 = vmul.f32 %v6165, %v6172
    %6179 = vrot.lane.b32.xlu0 %v6175, 16
    %v6180 = vpop.permute.xlu0 %6179
    %6181 = vrot.lane.b32.xlu0 %v6176, 16
    %v6182 = vpop.permute.xlu0 %6181
    %v6185 = vadd.f32 %v4870, %v6180
    %v6186 = vadd.f32 %v4873, %v6182
    %v6187 = vtanh.pop %v6185
    %v6188 = vtanh.pop %v6186
    %v6189 = vsub.f32 1.0, %v6127
    %v6190 = vsub.f32 1.0, %v6128
    %6193 = vrot.lane.b32.xlu0 %v6151, 120
    %v6194 = vpop.permute.xlu0 %6193
    %6195 = vrot.lane.b32.xlu0 %v6152, 120
    %v6196 = vpop.permute.xlu0 %6195
    %v6199 = vmul.f32 %v6189, %v6194
    %v6200 = vmul.f32 %v6190, %v6196
    %v6201 = vrot.slane %v6090, 2
    %v6202 = vrot.slane %v6090, 3
    %6203 = vrot.lane.b32.xlu0 %v6201, 8
    %v6204 = vpop.permute.xlu0 %6203
    %6205 = vrot.lane.b32.xlu0 %v6202, 8
    %v6206 = vpop.permute.xlu0 %6205
    %v6209 = vmul.f32 %v6127, %v6204
    %v6210 = vmul.f32 %v6128, %v6206
    %v6211 = vadd.f32 %v6199, %v6209
    %v6212 = vadd.f32 %v6200, %v6210
    %v6213 = vsub.f32 1.0, %v6164
    %v6214 = vsub.f32 1.0, %v6165
    %6217 = vrot.lane.b32.xlu0 %v6187, 120
    %v6218 = vpop.permute.xlu0 %6217
    %6219 = vrot.lane.b32.xlu0 %v6188, 120
    %v6220 = vpop.permute.xlu0 %6219
    %v6223 = vmul.f32 %v6213, %v6218
    %v6224 = vmul.f32 %v6214, %v6220
    %v6225 = vrot.slane %v6090, 7
    %6226 = vrot.lane.b32.xlu0 %v6225, 24
    %v6227 = vpop.permute.xlu0 %6226
    %6228 = vrot.lane.b32.xlu0 %v6090, 24
    %v6229 = vpop.permute.xlu0 %6228
    %v6232 = vmul.f32 %v6164, %v6227
    %v6233 = vmul.f32 %v6165, %v6229
    %v6234 = vadd.f32 %v6223, %v6232
    %v6235 = vadd.f32 %v6224, %v6233
    %v6238 = vrot.slane %v6212, 7
    %v6239 = vsel %vm3159, %v6238, %v6211
    %6240 = vrot.lane.b32.xlu0 %v6239, 120
    %v6241 = vpop.permute.xlu0 %6240
    %vm6243 = vcmask 64518
    %6244 = vst.msk [vmem:[#allocation4 - $0x6] sm:$0xc0] %vm6243, %v6241
    %v6247 = vrot.slane %v6235, 7
    %v6248 = vsel %vm3149, %v6247, %v6234
    %6249 = vrot.lane.b32.xlu0 %v6248, 104
    %v6250 = vpop.permute.xlu0 %6249
    %vm6252 = vcmask 124993
    %6253 = vst.msk [vmem:[#allocation4 - $0x1] sm:$0x6] %vm6252, %v6250
    %6254 = vst [vmem:[#allocation1] sm:$0xff] %v6211
    %s6255 = scalar_lea.vmem [#allocation1], 6
    %v6256 = vld [vmem:[%s6255] ss:$9 sm:$0xff]
    %6257 = vrot.lane.b32.xlu0 %v6256, 56
    %v6258 = vpop.permute.xlu0 %6257
    %6260 = vst.msk [vmem:[#allocation5 + $0x1] sm:$0x1] %vm5467, %v6258
    %6261 = vst [vmem:[#allocation1] sm:$0xff] %v6234
    %s6262 = scalar_lea.vmem [#allocation1], 1
    %v6263 = vld [vmem:[%s6262] ss:$9 sm:$0xff]
    %6264 = vrot.lane.b32.xlu0 %v6263, 8
    %v6265 = vpop.permute.xlu0 %6264
    %6267 = vst.msk [vmem:[#allocation5] sm:$0x1] %vm5477, %v6265
    %6268 = vst [vmem:[#allocation1] sm:$0xff] %v6212
    %s6269 = scalar_lea.vmem [#allocation1], 6
    %v6270 = vld [vmem:[%s6269] ss:$9 sm:$0xff]
    %6271 = vrot.lane.b32.xlu0 %v6270, 72
    %v6272 = vpop.permute.xlu0 %6271
    %6274 = vst.msk [vmem:[#allocation5 + $0x1] sm:$0x1] %vm5487, %v6272
    %6275 = vst [vmem:[#allocation1] sm:$0xff] %v6235
    %s6276 = scalar_lea.vmem [#allocation1], 1
    %v6277 = vld [vmem:[%s6276] ss:$9 sm:$0xff]
    %6278 = vrot.lane.b32.xlu0 %v6277, 24
    %v6279 = vpop.permute.xlu0 %6278
    %6281 = vst.msk [vmem:[#allocation5] sm:$0x1] %vm5497, %v6279
    %v6282 = vld [vmem:[#allocation4] sm:$0x3]
    %v6284 = vsel %vm3009, %v6282, 0
    %6286 = vmatpush.msra.mxu0 0.0
    %6287 = vmatpush.msra.mxu0 0.0
    %6288 = vmatpush.msra.mxu0 0.0
    %6289 = vmatpush.msra.mxu0 0.0
    %6290 = vmatpush.msra.mxu0 0.0
    %6291 = vmatpush.msra.mxu0 0.0
    %6292 = vmatpush.msra.mxu0 0.0
    %6293 = vmatpush.msra.mxu0 0.0
    %6294 = vmatpush.msra.mxu0 0.0
    %6295 = vmatpush.msra.mxu0 0.0
    %6296 = vmatpush.msra.mxu0 0.0
    %6297 = vmatpush.msra.mxu0 0.0
    %6298 = vmatpush.msra.mxu0 0.0
    %6299 = vmatpush.msra.mxu0 0.0
    %6300 = vmatpush.msra.mxu0 %v4876
    %6301 = vmatpush.msra.mxu0 %v4875
    %6302 = vmatmul.f32.gmra.mxu0 %v6284
    %v6303 = vpop.f32.mrf.mxu0
    %v6304 = vadd.f32 0.0, %v6303
    %6305 = vdwg.mxu0
    %v6307 = vrot.slane %v6304, 1
    %v6308 = vrot.slane %v6304, 2
    %v6311 = vadd.f32 %v4870, %v6307
    %v6312 = vadd.f32 %v4873, %v6308
    %v6313 = vmul.f32 %v6311, 0.5
    %v6314 = vmul.f32 %v6312, 0.5
    %v6315 = vtanh.pop %v6313
    %v6316 = vtanh.pop %v6314
    %v6317 = vadd.f32 %v6315, 1.0
    %v6318 = vadd.f32 %v6316, 1.0
    %v6319 = vmul.f32 %v6317, 0.5
    %v6320 = vmul.f32 %v6318, 0.5
    %v6321 = vadd.f32 %v6304, %v4921
    %v6323 = vrot.slane %v6321, 1
    %v6324 = vrot.slane %v6321, 2
    %6325 = vrot.lane.b32.xlu0 %v6323, 112
    %v6326 = vpop.permute.xlu0 %6325
    %6327 = vrot.lane.b32.xlu0 %v6324, 112
    %v6328 = vpop.permute.xlu0 %6327
    %v6331 = vmul.f32 %v6319, %v6326
    %v6332 = vmul.f32 %v6320, %v6328
    %6335 = vrot.lane.b32.xlu0 %v6331, 16
    %v6336 = vpop.permute.xlu0 %6335
    %6337 = vrot.lane.b32.xlu0 %v6332, 16
    %v6338 = vpop.permute.xlu0 %6337
    %v6341 = vadd.f32 %v4870, %v6336
    %v6342 = vadd.f32 %v4873, %v6338
    %v6343 = vtanh.pop %v6341
    %v6344 = vtanh.pop %v6342
    %v6346 = vadd.f32 %v4870, %v6304
    %v6347 = vadd.f32 %v4873, %v6307
    %v6348 = vmul.f32 %v6346, 0.5
    %v6349 = vmul.f32 %v6347, 0.5
    %v6350 = vtanh.pop %v6348
    %v6351 = vtanh.pop %v6349
    %v6352 = vadd.f32 %v6350, 1.0
    %v6353 = vadd.f32 %v6351, 1.0
    %v6354 = vmul.f32 %v6352, 0.5
    %v6355 = vmul.f32 %v6353, 0.5
    %v6356 = vadd.f32 %v6304, %v4959
    %v6358 = vrot.slane %v6356, 1
    %6359 = vrot.lane.b32.xlu0 %v6356, 112
    %v6360 = vpop.permute.xlu0 %6359
    %6361 = vrot.lane.b32.xlu0 %v6358, 112
    %v6362 = vpop.permute.xlu0 %6361
    %v6365 = vmul.f32 %v6354, %v6360
    %v6366 = vmul.f32 %v6355, %v6362
    %6369 = vrot.lane.b32.xlu0 %v6365, 16
    %v6370 = vpop.permute.xlu0 %6369
    %6371 = vrot.lane.b32.xlu0 %v6366, 16
    %v6372 = vpop.permute.xlu0 %6371
    %v6375 = vadd.f32 %v4870, %v6370
    %v6376 = vadd.f32 %v4873, %v6372
    %v6377 = vtanh.pop %v6375
    %v6378 = vtanh.pop %v6376
    %v6379 = vsub.f32 1.0, %v6319
    %v6380 = vsub.f32 1.0, %v6320
    %6383 = vrot.lane.b32.xlu0 %v6343, 120
    %v6384 = vpop.permute.xlu0 %6383
    %6385 = vrot.lane.b32.xlu0 %v6344, 120
    %v6386 = vpop.permute.xlu0 %6385
    %v6389 = vmul.f32 %v6379, %v6384
    %v6390 = vmul.f32 %v6380, %v6386
    %v6391 = vrot.slane %v6282, 1
    %v6392 = vrot.slane %v6282, 2
    %6393 = vrot.lane.b32.xlu0 %v6391, 8
    %v6394 = vpop.permute.xlu0 %6393
    %6395 = vrot.lane.b32.xlu0 %v6392, 8
    %v6396 = vpop.permute.xlu0 %6395
    %v6399 = vmul.f32 %v6319, %v6394
    %v6400 = vmul.f32 %v6320, %v6396
    %v6401 = vadd.f32 %v6389, %v6399
    %v6402 = vadd.f32 %v6390, %v6400
    %v6403 = vsub.f32 1.0, %v6354
    %v6404 = vsub.f32 1.0, %v6355
    %6407 = vrot.lane.b32.xlu0 %v6377, 120
    %v6408 = vpop.permute.xlu0 %6407
    %6409 = vrot.lane.b32.xlu0 %v6378, 120
    %v6410 = vpop.permute.xlu0 %6409
    %v6413 = vmul.f32 %v6403, %v6408
    %v6414 = vmul.f32 %v6404, %v6410
    %6415 = vrot.lane.b32.xlu0 %v6282, 24
    %v6416 = vpop.permute.xlu0 %6415
    %6417 = vrot.lane.b32.xlu0 %v6391, 24
    %v6418 = vpop.permute.xlu0 %6417
    %v6421 = vmul.f32 %v6354, %v6416
    %v6422 = vmul.f32 %v6355, %v6418
    %v6423 = vadd.f32 %v6413, %v6421
    %v6424 = vadd.f32 %v6414, %v6422
    %v6427 = vrot.slane %v6402, 7
    %6428 = vrot.lane.b32.xlu0 %v6401, 120
    %v6429 = vpop.permute.xlu0 %6428
    %6430 = vrot.lane.b32.xlu0 %v6427, 120
    %v6431 = vpop.permute.xlu0 %6430
    %vm6434 = vcmask 64519
    %6435 = vst.msk [vmem:[#allocation4 - $0x7] sm:$0x80] %vm6434, %v6429
    %vm6436 = vcmask 57344
    %6437 = vst.msk [vmem:[#allocation4 + $0x1] sm:$0x1] %vm6436, %v6431
    %v6440 = vrot.slane %v6424, 7
    %v6441 = vsel %vm3147, %v6440, %v6423
    %6442 = vrot.lane.b32.xlu0 %v6441, 104
    %v6443 = vpop.permute.xlu0 %6442
    %vm6445 = vcmask 123968
    %6446 = vst.msk [vmem:[#allocation4] sm:$0x3] %vm6445, %v6443
    %6447 = vst [vmem:[#allocation1] sm:$0xff] %v6401
    %s6448 = scalar_lea.vmem [#allocation1], 7
    %v6449 = vld [vmem:[%s6448] ss:$9 sm:$0xff]
    %6450 = vrot.lane.b32.xlu0 %v6449, 88
    %v6451 = vpop.permute.xlu0 %6450
    %6453 = vst.msk [vmem:[#allocation5 + $0x1] sm:$0x1] %vm5671, %v6451
    %6454 = vrot.lane.b32.xlu0 %v6423, 104
    %v6455 = vpop.permute.xlu0 %6454
    %6457 = vst.msk [vmem:[#allocation5] sm:$0x1] %vm5681, %v6455
    %6458 = vst [vmem:[#allocation1] sm:$0xff] %v6402
    %s6459 = scalar_lea.vmem [#allocation1], 7
    %v6460 = vld [vmem:[%s6459] ss:$9 sm:$0xff]
    %6461 = vrot.lane.b32.xlu0 %v6460, 104
    %v6462 = vpop.permute.xlu0 %6461
    %6464 = vst.msk [vmem:[#allocation5 + $0x1] sm:$0x1] %vm5691, %v6462
    %6465 = vrot.lane.b32.xlu0 %v6424, 120
    %v6466 = vpop.permute.xlu0 %6465
    %6468 = vst.msk [vmem:[#allocation5] sm:$0x1] %vm5701, %v6466
    %v6469 = vld [vmem:[#allocation5] sm:$0x3]
    %v6470 = vld [vmem:[%s11] sm:$0xff]
    %v6471 = vld [vmem:[%s11 + $0x8] sm:$0xff]
    %v6472 = vld [vmem:[%s11 + $0x10] sm:$0xff]
    %v6473 = vld [vmem:[%s11 + $0x18] sm:$0xff]
    %v6474 = vld [vmem:[%s11 + $0x20] sm:$0xff]
    %v6475 = vld [vmem:[%s11 + $0x28] sm:$0xff]
    %v6476 = vld [vmem:[%s11 + $0x30] sm:$0xff]
    %v6477 = vld [vmem:[%s11 + $0x38] sm:$0xff]
    %v6478 = vld [vmem:[%s11 + $0x40] sm:$0xff]
    %v6479 = vld [vmem:[%s11 + $0x48] sm:$0xff]
    %v6480 = vld [vmem:[%s11 + $0x50] sm:$0xff]
    %v6481 = vld [vmem:[%s11 + $0x58] sm:$0xff]
    %v6482 = vld [vmem:[%s11 + $0x60] sm:$0xff]
    %v6483 = vld [vmem:[%s11 + $0x68] sm:$0xff]
    %v6484 = vld [vmem:[%s11 + $0x70] sm:$0xff]
    %v6485 = vld [vmem:[%s11 + $0x78] sm:$0xff]
    %v6486 = vld [vmem:[%s11 + $0x80] sm:$0xff]
    %v6487 = vld [vmem:[%s11 + $0x88] sm:$0xff]
    %v6488 = vld [vmem:[%s11 + $0x90] sm:$0xff]
    %v6489 = vld [vmem:[%s11 + $0x98] sm:$0xff]
    %v6490 = vld [vmem:[%s11 + $0xa0] sm:$0xff]
    %v6491 = vld [vmem:[%s11 + $0xa8] sm:$0xff]
    %v6492 = vld [vmem:[%s11 + $0xb0] sm:$0xff]
    %v6493 = vld [vmem:[%s11 + $0xb8] sm:$0xff]
    %v6494 = vld [vmem:[%s11 + $0xc0] sm:$0xff]
    %v6495 = vld [vmem:[%s11 + $0xc8] sm:$0xff]
    %v6496 = vld [vmem:[%s11 + $0xd0] sm:$0xff]
    %v6497 = vld [vmem:[%s11 + $0xd8] sm:$0xff]
    %v6498 = vld [vmem:[%s11 + $0xe0] sm:$0xff]
    %v6499 = vld [vmem:[%s11 + $0xe8] sm:$0xff]
    %v6500 = vld [vmem:[%s11 + $0xf0] sm:$0xff]
    %v6501 = vld [vmem:[%s11 + $0xf8] sm:$0xff]
    %v6502 = vld [vmem:[%s12] sm:$0x1]
    %v6504 = vperm.slane %v6469, 0
    %v6505 = vperm.slane %v6469, 1
    %6508 = vmatpush.msra.mxu0 %v6485
    %6509 = vmatpush.msra.mxu0 %v6484
    %6510 = vmatpush.msra.mxu0 %v6483
    %6511 = vmatpush.msra.mxu0 %v6482
    %6512 = vmatpush.msra.mxu0 %v6481
    %6513 = vmatpush.msra.mxu0 %v6480
    %6514 = vmatpush.msra.mxu0 %v6479
    %6515 = vmatpush.msra.mxu0 %v6478
    %6516 = vmatpush.msra.mxu0 %v6477
    %6517 = vmatpush.msra.mxu0 %v6476
    %6518 = vmatpush.msra.mxu0 %v6475
    %6519 = vmatpush.msra.mxu0 %v6474
    %6520 = vmatpush.msra.mxu0 %v6473
    %6521 = vmatpush.msra.mxu0 %v6472
    %6522 = vmatpush.msra.mxu0 %v6471
    %6523 = vmatpush.msra.mxu0 %v6470
    %6524 = vmatmul.f32.gmra.mxu0 %v6504
    %v6525 = vpop.f32.mrf.mxu0
    %v6526 = vadd.f32 %v6502, %v6525
    %6527 = vdwg.mxu0
    %6528 = vmatpush.msra.mxu0 %v6501
    %6529 = vmatpush.msra.mxu0 %v6500
    %6530 = vmatpush.msra.mxu0 %v6499
    %6531 = vmatpush.msra.mxu0 %v6498
    %6532 = vmatpush.msra.mxu0 %v6497
    %6533 = vmatpush.msra.mxu0 %v6496
    %6534 = vmatpush.msra.mxu0 %v6495
    %6535 = vmatpush.msra.mxu0 %v6494
    %6536 = vmatpush.msra.mxu0 %v6493
    %6537 = vmatpush.msra.mxu0 %v6492
    %6538 = vmatpush.msra.mxu0 %v6491
    %6539 = vmatpush.msra.mxu0 %v6490
    %6540 = vmatpush.msra.mxu0 %v6489
    %6541 = vmatpush.msra.mxu0 %v6488
    %6542 = vmatpush.msra.mxu0 %v6487
    %6543 = vmatpush.msra.mxu0 %v6486
    %6544 = vmatmul.f32.gmra.mxu0 %v6505
    %v6545 = vpop.f32.mrf.mxu0
    %v6546 = vadd.f32 %v6526, %v6545
    %6547 = vdwg.mxu0
    %v6548 = vmax.f32 %v6546, 0.0
    %v6549 = vld [vmem:[%s13] sm:$0xff]
    %v6550 = vld [vmem:[%s13 + $0x8] sm:$0xff]
    %v6551 = vld [vmem:[%s13 + $0x10] sm:$0xff]
    %v6552 = vld [vmem:[%s13 + $0x18] sm:$0xff]
    %v6553 = vld [vmem:[%s13 + $0x20] sm:$0xff]
    %v6554 = vld [vmem:[%s13 + $0x28] sm:$0xff]
    %v6555 = vld [vmem:[%s13 + $0x30] sm:$0xff]
    %v6556 = vld [vmem:[%s13 + $0x38] sm:$0xff]
    %v6557 = vld [vmem:[#allocation6] sm:$0x1]
    %vm6558 = vcmask 523264
    %v6560 = vsel %vm6558, %v6548, 0
    %6562 = vmatpush.msra.mxu0 0.0
    %6563 = vmatpush.msra.mxu0 0.0
    %6564 = vmatpush.msra.mxu0 0.0
    %6565 = vmatpush.msra.mxu0 0.0
    %6566 = vmatpush.msra.mxu0 0.0
    %6567 = vmatpush.msra.mxu0 0.0
    %6568 = vmatpush.msra.mxu0 0.0
    %6569 = vmatpush.msra.mxu0 0.0
    %6570 = vmatpush.msra.mxu0 %v6556
    %6571 = vmatpush.msra.mxu0 %v6555
    %6572 = vmatpush.msra.mxu0 %v6554
    %6573 = vmatpush.msra.mxu0 %v6553
    %6574 = vmatpush.msra.mxu0 %v6552
    %6575 = vmatpush.msra.mxu0 %v6551
    %6576 = vmatpush.msra.mxu0 %v6550
    %6577 = vmatpush.msra.mxu0 %v6549
    %6578 = vmatmul.f32.gmra.mxu0 %v6560
    %v6579 = vpop.f32.mrf.mxu0
    %v6580 = vadd.f32 %v6557, %v6579
    %6581 = vdwg.mxu0
    %v6582 = vmul.f32 %v6580, 0.5
    %v6583 = vtanh.pop %v6582
    %v6584 = vadd.f32 %v6583, 1.0
    %v6585 = vmul.f32 %v6584, 0.5
    %vm6586 = vcmask 0
    %6587 = vst.msk [vmem:[#allocation7] sm:$0x1] %vm6586, %v6585
    // Predicated region
    $region62: #{cnn_gru_forward.1} parent=1 // pred_check
      _
    $region63: #{cnn_gru_forward.1} parent=1 // pred_check_branch
      %6589 = sbr.rel (0) target = $region65
    $region64: #{cnn_gru_forward.1} parent=1 // pred_region
      %6591 = vsyncadd [#allocation8], 0
      %s6593 = sshll.u32 [#allocation7], 4
      %s6594 = int_to_ptr.vmem [resolvable:$true] %s6593
      %s6595 = sshll.u32 %s15, 4
      %s6596 = int_to_ptr.hbm [resolvable:$true] %s6595
      %6598 = dma.vmem_to_hbm [thread:$0]  %s6594, 16, %s6596, [#allocation8]
    $region65: #{cnn_gru_forward.1} parent=1 // pred_fallthru
      _
    // Predicated region
    $region66: #{cnn_gru_forward.1} parent=1 // pred_check
      _
    $region67: #{cnn_gru_forward.1} parent=1 // pred_check_branch
      %6600 = sbr.rel (0) target = $region69
    $region68: #{cnn_gru_forward.1} parent=1 // pred_region
      %6602 = dma.done [#allocation8], 16
    $region69: #{cnn_gru_forward.1} parent=1 // pred_fallthru
      _
    %6603 = vsyncpa [#allocation8], 1

</llo_original>
